<compile_context>
chip_gen: v5e
topology: v5e:2x2
jax: 0.10.0
libtpu: 0.0.40
codegen_flags: <defaults>
</compile_context>

<pallas_src>
import jax
import jax.numpy as jnp
from jax.experimental import pallas as pl
from jax.experimental.pallas import tpu as pltpu

EPS = 1e-5
BLOCK_M = 256   # M-tile of the fused matmul kernel (divides every M used here)


# ----------------------------------------------------------------------------
# Pallas kernel: fused matmul + affine (+residual) (+ReLU) (+sigmoid gate)
# ----------------------------------------------------------------------------
def _make_mm_kernel(relu, with_residual, with_gate):
    """(tm,K)x(K,Cout) MXU matmul, fused BN affine, optional res/ReLU/gate."""
    def kernel(*refs):
        x_ref, w_ref, sb_ref = refs[0], refs[1], refs[2]
        o_ref = refs[-1]
        extras = refs[3:-1]
        y = jnp.dot(x_ref[...], w_ref[...], preferred_element_type=jnp.float32)
        y = y * sb_ref[0] + sb_ref[1]              # folded BN (+conv bias), f32
        i = 0
        if with_residual:
            y = y + extras[i][...]
            i += 1
        if relu:
            y = jnp.maximum(y, 0.0)
        if with_gate:                              # SCConv calibration epilogue
            g = extras[i][...]
            y = y * (1.0 / (1.0 + jnp.exp(-g)))    # sigmoid on the EUP slot
        o_ref[...] = y
    return kernel


def fused_matmul(x2d, w2d, scale, bias, *, relu, residual=None, gate=None):
    """x2d: (M,K), w2d: (K,Cout). Returns (M,Cout) float32."""
    M, K = x2d.shape
    Cout = w2d.shape[-1]
    tm = BLOCK_M if (M > BLOCK_M and M % BLOCK_M == 0) else M
    sb = jnp.stack([scale, bias]).reshape(2, 1, Cout).astype(jnp.float32)

    in_specs = [
        pl.BlockSpec((tm, K), lambda i: (i, 0)),
        pl.BlockSpec((K, Cout), lambda i: (0, 0)),
        pl.BlockSpec((2, 1, Cout), lambda i: (0, 0, 0)),
    ]
    args = [x2d.astype(jnp.bfloat16), w2d.astype(jnp.bfloat16), sb]
    if residual is not None:
        in_specs.append(pl.BlockSpec((tm, Cout), lambda i: (i, 0)))
        args.append(residual.astype(jnp.float32))
    if gate is not None:
        in_specs.append(pl.BlockSpec((tm, Cout), lambda i: (i, 0)))
        args.append(gate.astype(jnp.float32))

    out = pl.pallas_call(
        _make_mm_kernel(relu, residual is not None, gate is not None),
        out_shape=jax.ShapeDtypeStruct((M, Cout), jnp.float32),
        grid=(M // tm,),
        in_specs=in_specs,
        out_specs=pl.BlockSpec((tm, Cout), lambda i: (i, 0)),
        compiler_params=pltpu.CompilerParams(
            dimension_semantics=("parallel",)),
    )(*args)
    return out


# ----------------------------------------------------------------------------
# Conv wrappers (im2col / flatten are XLA layout glue)
# ----------------------------------------------------------------------------
def im2col3x3(x):
    """(N,H,W,C) -> (N*H*W, 9*C) patches of a 3x3 / stride-1 / pad-1 conv."""
    N, H, W, C = x.shape
    xp = jnp.pad(x, ((0, 0), (1, 1), (1, 1), (0, 0)))
    cols = [xp[:, dh:dh + H, dw:dw + W, :] for dh in range(3) for dw in range(3)]
    return jnp.concatenate(cols, axis=-1).reshape(N * H * W, 9 * C)


def conv3x3_bn(x, w, scale, bias, *, relu, gate=None):
    """x: (N,H,W,Cin), w: (3,3,Cin,Cout).  Optional calibration gate (N,H,W,Cout)."""
    N, H, W, Cin = x.shape
    Cout = w.shape[-1]
    patches = im2col3x3(x)                       # (M, 9*Cin)
    wf = w.reshape(9 * Cin, Cout)                # tap-major rows match im2col order
    g = None if gate is None else gate.reshape(N * H * W, Cout)
    y = fused_matmul(patches, wf, scale, bias, relu=relu, gate=g)
    return y.reshape(N, H, W, Cout)


def conv1x1_bn(x, w, scale, bias, *, relu, residual=None):
    """x: (N,H,W,Cin), w: (Cin,Cout). Optional residual (N,H,W,Cout)."""
    N, H, W, Cin = x.shape
    Cout = w.shape[-1]
    xf = x.reshape(N * H * W, Cin)
    r = None if residual is None else residual.reshape(N * H * W, Cout)
    y = fused_matmul(xf, w, scale, bias, relu=relu, residual=r)
    return y.reshape(N, H, W, Cout)


# ----------------------------------------------------------------------------
# Module forward
# ----------------------------------------------------------------------------
def sc_bottleneck(x, p):
    """SCBottleneck(128, 32, stride=1): group_width=16, pooling_r=4, expansion=4."""
    N, H, W, _ = x.shape

    # conv1_a | conv1_b merged into one 128->32 matmul (+BN+ReLU), then split.
    ab = conv1x1_bn(x, p['w1ab'], p['s1ab'], p['b1ab'], relu=True)   # (N,H,W,32)
    out_a = ab[..., :16]
    out_b = ab[..., 16:]

    # k1 branch: 3x3 conv + BN + ReLU
    out_a = conv3x3_bn(out_a, p['wk1'], p['sk1'], p['bk1'], relu=True)

    # SCConv branch (pooling_r = 4)
    pooled = out_b.reshape(N, H // 4, 4, W // 4, 4, 16).mean(axis=(2, 4))
    k2 = conv3x3_bn(pooled, p['wk2'], p['sk2'], p['bk2'], relu=False)
    rh = H // k2.shape[1]
    rw = W // k2.shape[2]
    up = jnp.repeat(jnp.repeat(k2, rh, axis=1), rw, axis=2)   # nearest upsample
    gate = out_b + up                                          # pre-sigmoid gate
    # k3 conv + BN with fused calibration epilogue: k3 * sigmoid(identity + up)
    cal = conv3x3_bn(out_b, p['wk3'], p['sk3'], p['bk3'], relu=False, gate=gate)
    out_b = conv3x3_bn(cal, p['wk4'], p['sk4'], p['bk4'], relu=True)  # k4 + ReLU

    # conv3 (1x1, 32 -> 128) + bn3 + residual + ReLU, all fused
    cat = jnp.concatenate([out_a, out_b], axis=-1)
    return conv1x1_bn(cat, p['w3'], p['s3'], p['b3'], relu=True, residual=x)


def up_deconv_bn_relu(x, w, scale, bias):
    """ConvTranspose2d(128,128,2,2) + BN + ReLU as ONE stacked-tap matmul.

    Kernel 2 / stride 2 => each output pixel receives exactly one tap, so the
    four taps are stacked along Cout into a single (128, 512) lane-dense matmul,
    followed by a pixel interleave (pure reshape/transpose glue).
    w: (2,2,Cin,Cout) with scale/bias already including the deconv bias.
    """
    # TODO(synk): when porting real PyTorch ConvTranspose2d IOHW weights, the
    # (dh, dw) tap order must match this stacking/interleave.
    N, H, W, Cin = x.shape
    Cout = w.shape[-1]
    wst = jnp.concatenate([w[dh, dw] for dh in range(2) for dw in range(2)],
                          axis=-1)                     # (Cin, 4*Cout)
    y = conv1x1_bn(x, wst, jnp.tile(scale, 4), jnp.tile(bias, 4), relu=True)
    y = y.reshape(N, H, W, 2, 2, Cout)
    y = y.transpose(0, 1, 3, 2, 4, 5).reshape(N, 2 * H, 2 * W, Cout)
    return y


def multiscale_scconv2d(params, spatial_features, spatial_4x_features):
    """Forward of MultiSCONVv2.  Inputs are NHWC."""
    s8 = conv3x3_bn(spatial_features, params['g8']['w'],
                    params['g8']['scale'], params['g8']['bias'], relu=True)
    s4 = conv3x3_bn(spatial_4x_features, params['g4']['w'],
                    params['g4']['scale'], params['g4']['bias'], relu=True)
    for p in params['blocks4']:          # 1 SCBottleneck (per reference module)
        s4 = sc_bottleneck(s4, p)
    for p in params['blocks8']:          # 4 SCBottlenecks
        s8 = sc_bottleneck(s8, p)
    s8_4 = up_deconv_bn_relu(s8, params['up']['w'],
                             params['up']['scale'], params['up']['bias'])
    out = jnp.concatenate([s4, s8_4], axis=-1)   # spatial_features_2d, C=256
    return out


# ----------------------------------------------------------------------------
# Deterministic synthetic parameters
# ----------------------------------------------------------------------------
class ParamGen:
    def __init__(self, seed):
        self.key = jax.random.PRNGKey(seed)
        self.count = 0

    def _next(self):
        self.count += 1
        return jax.random.fold_in(self.key, self.count)

    def conv_w(self, kh, kw, cin, cout):
        fan_in = kh * kw * cin
        return (jax.random.normal(self._next(), (kh, kw, cin, cout),
                                  jnp.float32) / jnp.sqrt(fan_in))

    def bias(self, c):
        return 0.05 * jax.random.normal(self._next(), (c,), jnp.float32)

    def bn(self, c):
        g = 1.0 + 0.1 * jax.random.normal(self._next(), (c,), jnp.float32)
        b = 0.1 * jax.random.normal(self._next(), (c,), jnp.float32)
        m = 0.1 * jax.random.normal(self._next(), (c,), jnp.float32)
        v = 0.5 + jnp.abs(jax.random.normal(self._next(), (c,), jnp.float32))
        scale = g / jnp.sqrt(v + EPS)
        bias = b - m * scale
        return scale, bias


def build_params(input_channels, pg):
    def stride_group(cin):
        w = pg.conv_w(3, 3, cin, 128)
        cb = pg.bias(128)
        s, b = pg.bn(128)
        return dict(w=w, scale=s, bias=b + s * cb)   # fold conv bias into BN

    def bottleneck():
        p = {}
        w1a = pg.conv_w(1, 1, 128, 16)[0, 0]
        s1a, b1a = pg.bn(16)
        w1b = pg.conv_w(1, 1, 128, 16)[0, 0]
        s1b, b1b = pg.bn(16)
        # merged conv1_a / conv1_b (channels [0:16] = a, [16:32] = b)
        p['w1ab'] = jnp.concatenate([w1a, w1b], axis=-1)
        p['s1ab'] = jnp.concatenate([s1a, s1b])
        p['b1ab'] = jnp.concatenate([b1a, b1b])
        for name in ('k1', 'k2', 'k3', 'k4'):
            p['w' + name] = pg.conv_w(3, 3, 16, 16)
            p['s' + name], p['b' + name] = pg.bn(16)
        p['w3'] = pg.conv_w(1, 1, 32, 128)[0, 0]
        p['s3'], p['b3'] = pg.bn(128)
        return p

    params = dict(
        g8=stride_group(input_channels),
        g4=stride_group(input_channels),
        blocks4=[bottleneck()],                        # group_4x_block: 1 block
        blocks8=[bottleneck() for _ in range(4)],      # group_8x_block: 4 blocks
    )
    wde = pg.conv_w(2, 2, 128, 128)
    bde = pg.bias(128)
    sde, bbde = pg.bn(128)
    params['up'] = dict(w=wde, scale=sde, bias=bbde + sde * bde)
    return params


# ----------------------------------------------------------------------------
if __name__ == "__main__":
    key = jax.random.PRNGKey(0)
    k_a, k_b = jax.random.split(key)

    N, Cin = 2, 32
    H8, W8 = 8, 8        # "spatial_features"     (stride-8x map)
    H4, W4 = 16, 16      # "spatial_4x_features"  (stride-4x map)

    spatial_features = jax.random.normal(k_a, (N, H8, W8, Cin), jnp.float32)
    spatial_4x_features = jax.random.normal(k_b, (N, H4, W4, Cin), jnp.float32)

    params = build_params(Cin, ParamGen(42))

    fwd = jax.jit(multiscale_scconv2d)
    out = fwd(params, spatial_features, spatial_4x_features)
    out = jax.block_until_ready(out)

    assert out.shape == (N, H4, W4, 256), out.shape
    assert bool(jnp.all(jnp.isfinite(out)))
    print("KERNEL_OK")
</pallas_src>

<mosaic_0001>
module attributes {stable_mosaic.version = 11 : i64} {
  func.func @kernel(%arg0: i32, %arg1: memref<256x288xbf16, #tpu.memory_space<vmem>>, %arg2: memref<288x128xbf16, #tpu.memory_space<vmem>>, %arg3: memref<2x1x128xf32, #tpu.memory_space<vmem>>, %arg4: memref<256x128xf32, #tpu.memory_space<vmem>>) attributes {dimension_semantics = [#tpu.dimension_semantics<parallel>], iteration_bounds = array<i64: 2>, scalar_prefetch = 0 : i64, scratch_operands = 0 : i64, tpu.core_type = #tpu.core_type<tc>, window_params = [{transform_indices = @transform_0, window_bounds = array<i64: 256, 288>}, {pipeline_mode = #tpu.pipeline_mode<synchronous>, transform_indices = @transform_1, window_bounds = array<i64: 288, 128>}, {pipeline_mode = #tpu.pipeline_mode<synchronous>, transform_indices = @transform_2, window_bounds = array<i64: 2, 1, 128>}, {transform_indices = @transform_3, window_bounds = array<i64: 256, 128>}]} {
    %c0 = arith.constant 0 : index
    %c0_0 = arith.constant 0 : index
    %0 = vector.load %arg1[%c0, %c0_0] : memref<256x288xbf16, #tpu.memory_space<vmem>>, vector<256x288xbf16>
    %c0_1 = arith.constant 0 : index
    %c0_2 = arith.constant 0 : index
    %1 = vector.load %arg2[%c0_1, %c0_2] : memref<288x128xbf16, #tpu.memory_space<vmem>>, vector<288x128xbf16>
    %cst = arith.constant dense<0.000000e+00> : vector<256x128xf32>
    %2 = tpu.matmul %0, %1, %cst {dimension_numbers = #tpu.dot_dimension_numbers<[1], [0], [0], [1], [0, 0, 1, 1], [], []>} : vector<256x288xbf16>, vector<288x128xbf16>, vector<256x128xf32> -> vector<256x128xf32>
    %c0_3 = arith.constant 0 : index
    %c0_4 = arith.constant 0 : index
    %c0_5 = arith.constant 0 : index
    %3 = vector.load %arg3[%c0_3, %c0_4, %c0_5] : memref<2x1x128xf32, #tpu.memory_space<vmem>>, vector<1x1x128xf32>
    %4 = vector.shape_cast %3 : vector<1x1x128xf32> to vector<1x128xf32>
    %5 = vector.broadcast %4 : vector<1x128xf32> to vector<256x128xf32>
    %6 = arith.mulf %2, %5 : vector<256x128xf32>
    %c1 = arith.constant 1 : index
    %c0_6 = arith.constant 0 : index
    %c0_7 = arith.constant 0 : index
    %7 = vector.load %arg3[%c1, %c0_6, %c0_7] : memref<2x1x128xf32, #tpu.memory_space<vmem>>, vector<1x1x128xf32>
    %8 = vector.shape_cast %7 : vector<1x1x128xf32> to vector<1x128xf32>
    %9 = vector.broadcast %8 : vector<1x128xf32> to vector<256x128xf32>
    %10 = arith.addf %6, %9 : vector<256x128xf32>
    %cst_8 = arith.constant 0.000000e+00 : f32
    %11 = vector.broadcast %cst_8 : f32 to vector<256x128xf32>
    %12 = arith.maximumf %10, %11 : vector<256x128xf32>
    %c0_9 = arith.constant 0 : index
    %c0_10 = arith.constant 0 : index
    %13 = vector.load %arg4[%c0_9, %c0_10] : memref<256x128xf32, #tpu.memory_space<vmem>>, vector<256x128xf32>
    tpu.vector_store %arg4[%c0_9, %c0_10], %12 {strides = array<i32>} : memref<256x128xf32, #tpu.memory_space<vmem>>, vector<256x128xf32>,
    return
  }
  func.func @transform_0(%arg0: i32) -> (i32, i32) {
    %c0_i32 = arith.constant 0 : i32
    %c0_i32_0 = arith.constant 0 : i32
    return %arg0, %c0_i32 : i32, i32
  }
  func.func @transform_1(%arg0: i32) -> (i32, i32) {
    %c0_i32 = arith.constant 0 : i32
    %c0_i32_0 = arith.constant 0 : i32
    %c0_i32_1 = arith.constant 0 : i32
    return %c0_i32, %c0_i32_0 : i32, i32
  }
  func.func @transform_2(%arg0: i32) -> (i32, i32, i32) {
    %c0_i32 = arith.constant 0 : i32
    %c0_i32_0 = arith.constant 0 : i32
    %c0_i32_1 = arith.constant 0 : i32
    %c0_i32_2 = arith.constant 0 : i32
    return %c0_i32, %c0_i32_0, %c0_i32_1 : i32, i32, i32
  }
  func.func @transform_3(%arg0: i32) -> (i32, i32) {
    %c0_i32 = arith.constant 0 : i32
    %c0_i32_0 = arith.constant 0 : i32
    return %arg0, %c0_i32 : i32, i32
  }
}

module attributes {stable_mosaic.version = 11 : i64} {
  func.func @kernel(%arg0: i32, %arg1: memref<256x128xbf16, #tpu.memory_space<vmem>>, %arg2: memref<128x32xbf16, #tpu.memory_space<vmem>>, %arg3: memref<2x1x32xf32, #tpu.memory_space<vmem>>, %arg4: memref<256x32xf32, #tpu.memory_space<vmem>>) attributes {dimension_semantics = [#tpu.dimension_semantics<parallel>], iteration_bounds = array<i64: 2>, scalar_prefetch = 0 : i64, scratch_operands = 0 : i64, tpu.core_type = #tpu.core_type<tc>, window_params = [{transform_indices = @transform_0, window_bounds = array<i64: 256, 128>}, {pipeline_mode = #tpu.pipeline_mode<synchronous>, transform_indices = @transform_1, window_bounds = array<i64: 128, 32>}, {pipeline_mode = #tpu.pipeline_mode<synchronous>, transform_indices = @transform_2, window_bounds = array<i64: 2, 1, 32>}, {transform_indices = @transform_3, window_bounds = array<i64: 256, 32>}]} {
    %c0 = arith.constant 0 : index
    %c0_0 = arith.constant 0 : index
    %0 = vector.load %arg1[%c0, %c0_0] : memref<256x128xbf16, #tpu.memory_space<vmem>>, vector<256x128xbf16>
    %c0_1 = arith.constant 0 : index
    %c0_2 = arith.constant 0 : index
    %1 = vector.load %arg2[%c0_1, %c0_2] : memref<128x32xbf16, #tpu.memory_space<vmem>>, vector<128x32xbf16>
    %cst = arith.constant dense<0.000000e+00> : vector<256x32xf32>
    %2 = tpu.matmul %0, %1, %cst {dimension_numbers = #tpu.dot_dimension_numbers<[1], [0], [0], [1], [0, 0, 1, 1], [], []>} : vector<256x128xbf16>, vector<128x32xbf16>, vector<256x32xf32> -> vector<256x32xf32>
    %c0_3 = arith.constant 0 : index
    %c0_4 = arith.constant 0 : index
    %c0_5 = arith.constant 0 : index
    %3 = vector.load %arg3[%c0_3, %c0_4, %c0_5] : memref<2x1x32xf32, #tpu.memory_space<vmem>>, vector<1x1x32xf32>
    %4 = vector.shape_cast %3 : vector<1x1x32xf32> to vector<1x32xf32>
    %5 = vector.broadcast %4 : vector<1x32xf32> to vector<256x32xf32>
    %6 = arith.mulf %2, %5 : vector<256x32xf32>
    %c1 = arith.constant 1 : index
    %c0_6 = arith.constant 0 : index
    %c0_7 = arith.constant 0 : index
    %7 = vector.load %arg3[%c1, %c0_6, %c0_7] : memref<2x1x32xf32, #tpu.memory_space<vmem>>, vector<1x1x32xf32>
    %8 = vector.shape_cast %7 : vector<1x1x32xf32> to vector<1x32xf32>
    %9 = vector.broadcast %8 : vector<1x32xf32> to vector<256x32xf32>
    %10 = arith.addf %6, %9 : vector<256x32xf32>
    %cst_8 = arith.constant 0.000000e+00 : f32
    %11 = vector.broadcast %cst_8 : f32 to vector<256x32xf32>
    %12 = arith.maximumf %10, %11 : vector<256x32xf32>
    %c0_9 = arith.constant 0 : index
    %c0_10 = arith.constant 0 : index
    %13 = vector.load %arg4[%c0_9, %c0_10] : memref<256x32xf32, #tpu.memory_space<vmem>>, vector<256x32xf32>
    tpu.vector_store %arg4[%c0_9, %c0_10], %12 {strides = array<i32>} : memref<256x32xf32, #tpu.memory_space<vmem>>, vector<256x32xf32>,
    return
  }
  func.func @transform_0(%arg0: i32) -> (i32, i32) {
    %c0_i32 = arith.constant 0 : i32
    %c0_i32_0 = arith.constant 0 : i32
    return %arg0, %c0_i32 : i32, i32
  }
  func.func @transform_1(%arg0: i32) -> (i32, i32) {
    %c0_i32 = arith.constant 0 : i32
    %c0_i32_0 = arith.constant 0 : i32
    %c0_i32_1 = arith.constant 0 : i32
    return %c0_i32, %c0_i32_0 : i32, i32
  }
  func.func @transform_2(%arg0: i32) -> (i32, i32, i32) {
    %c0_i32 = arith.constant 0 : i32
    %c0_i32_0 = arith.constant 0 : i32
    %c0_i32_1 = arith.constant 0 : i32
    %c0_i32_2 = arith.constant 0 : i32
    return %c0_i32, %c0_i32_0, %c0_i32_1 : i32, i32, i32
  }
  func.func @transform_3(%arg0: i32) -> (i32, i32) {
    %c0_i32 = arith.constant 0 : i32
    %c0_i32_0 = arith.constant 0 : i32
    return %arg0, %c0_i32 : i32, i32
  }
}

module attributes {stable_mosaic.version = 11 : i64} {
  func.func @kernel(%arg0: i32, %arg1: memref<32x144xbf16, #tpu.memory_space<vmem>>, %arg2: memref<144x16xbf16, #tpu.memory_space<vmem>>, %arg3: memref<2x1x16xf32, #tpu.memory_space<vmem>>, %arg4: memref<32x16xf32, #tpu.memory_space<vmem>>) attributes {dimension_semantics = [#tpu.dimension_semantics<parallel>], iteration_bounds = array<i64: 1>, scalar_prefetch = 0 : i64, scratch_operands = 0 : i64, tpu.core_type = #tpu.core_type<tc>, window_params = [{transform_indices = @transform_0, window_bounds = array<i64: 32, 144>}, {pipeline_mode = #tpu.pipeline_mode<synchronous>, transform_indices = @transform_1, window_bounds = array<i64: 144, 16>}, {pipeline_mode = #tpu.pipeline_mode<synchronous>, transform_indices = @transform_2, window_bounds = array<i64: 2, 1, 16>}, {transform_indices = @transform_3, window_bounds = array<i64: 32, 16>}]} {
    %c0 = arith.constant 0 : index
    %c0_0 = arith.constant 0 : index
    %0 = vector.load %arg1[%c0, %c0_0] : memref<32x144xbf16, #tpu.memory_space<vmem>>, vector<32x144xbf16>
    %c0_1 = arith.constant 0 : index
    %c0_2 = arith.constant 0 : index
    %1 = vector.load %arg2[%c0_1, %c0_2] : memref<144x16xbf16, #tpu.memory_space<vmem>>, vector<144x16xbf16>
    %cst = arith.constant dense<0.000000e+00> : vector<32x16xf32>
    %2 = tpu.matmul %0, %1, %cst {dimension_numbers = #tpu.dot_dimension_numbers<[1], [0], [0], [1], [0, 0, 1, 1], [], []>} : vector<32x144xbf16>, vector<144x16xbf16>, vector<32x16xf32> -> vector<32x16xf32>
    %c0_3 = arith.constant 0 : index
    %c0_4 = arith.constant 0 : index
    %c0_5 = arith.constant 0 : index
    %3 = vector.load %arg3[%c0_3, %c0_4, %c0_5] : memref<2x1x16xf32, #tpu.memory_space<vmem>>, vector<1x1x16xf32>
    %4 = vector.shape_cast %3 : vector<1x1x16xf32> to vector<1x16xf32>
    %5 = vector.broadcast %4 : vector<1x16xf32> to vector<32x16xf32>
    %6 = arith.mulf %2, %5 : vector<32x16xf32>
    %c1 = arith.constant 1 : index
    %c0_6 = arith.constant 0 : index
    %c0_7 = arith.constant 0 : index
    %7 = vector.load %arg3[%c1, %c0_6, %c0_7] : memref<2x1x16xf32, #tpu.memory_space<vmem>>, vector<1x1x16xf32>
    %8 = vector.shape_cast %7 : vector<1x1x16xf32> to vector<1x16xf32>
    %9 = vector.broadcast %8 : vector<1x16xf32> to vector<32x16xf32>
    %10 = arith.addf %6, %9 : vector<32x16xf32>
    %c0_8 = arith.constant 0 : index
    %c0_9 = arith.constant 0 : index
    %11 = vector.load %arg4[%c0_8, %c0_9] : memref<32x16xf32, #tpu.memory_space<vmem>>, vector<32x16xf32>
    tpu.vector_store %arg4[%c0_8, %c0_9], %10 {strides = array<i32>} : memref<32x16xf32, #tpu.memory_space<vmem>>, vector<32x16xf32>,
    return
  }
  func.func @transform_0(%arg0: i32) -> (i32, i32) {
    %c0_i32 = arith.constant 0 : i32
    %c0_i32_0 = arith.constant 0 : i32
    return %arg0, %c0_i32 : i32, i32
  }
  func.func @transform_1(%arg0: i32) -> (i32, i32) {
    %c0_i32 = arith.constant 0 : i32
    %c0_i32_0 = arith.constant 0 : i32
    %c0_i32_1 = arith.constant 0 : i32
    return %c0_i32, %c0_i32_0 : i32, i32
  }
  func.func @transform_2(%arg0: i32) -> (i32, i32, i32) {
    %c0_i32 = arith.constant 0 : i32
    %c0_i32_0 = arith.constant 0 : i32
    %c0_i32_1 = arith.constant 0 : i32
    %c0_i32_2 = arith.constant 0 : i32
    return %c0_i32, %c0_i32_0, %c0_i32_1 : i32, i32, i32
  }
  func.func @transform_3(%arg0: i32) -> (i32, i32) {
    %c0_i32 = arith.constant 0 : i32
    %c0_i32_0 = arith.constant 0 : i32
    return %arg0, %c0_i32 : i32, i32
  }
}

module attributes {stable_mosaic.version = 11 : i64} {
  func.func @kernel(%arg0: i32, %arg1: memref<256x144xbf16, #tpu.memory_space<vmem>>, %arg2: memref<144x16xbf16, #tpu.memory_space<vmem>>, %arg3: memref<2x1x16xf32, #tpu.memory_space<vmem>>, %arg4: memref<256x16xf32, #tpu.memory_space<vmem>>, %arg5: memref<256x16xf32, #tpu.memory_space<vmem>>) attributes {dimension_semantics = [#tpu.dimension_semantics<parallel>], iteration_bounds = array<i64: 2>, scalar_prefetch = 0 : i64, scratch_operands = 0 : i64, tpu.core_type = #tpu.core_type<tc>, window_params = [{transform_indices = @transform_0, window_bounds = array<i64: 256, 144>}, {pipeline_mode = #tpu.pipeline_mode<synchronous>, transform_indices = @transform_1, window_bounds = array<i64: 144, 16>}, {pipeline_mode = #tpu.pipeline_mode<synchronous>, transform_indices = @transform_2, window_bounds = array<i64: 2, 1, 16>}, {transform_indices = @transform_3, window_bounds = array<i64: 256, 16>}, {transform_indices = @transform_4, window_bounds = array<i64: 256, 16>}]} {
    %c0 = arith.constant 0 : index
    %c0_0 = arith.constant 0 : index
    %0 = vector.load %arg1[%c0, %c0_0] : memref<256x144xbf16, #tpu.memory_space<vmem>>, vector<256x144xbf16>
    %c0_1 = arith.constant 0 : index
    %c0_2 = arith.constant 0 : index
    %1 = vector.load %arg2[%c0_1, %c0_2] : memref<144x16xbf16, #tpu.memory_space<vmem>>, vector<144x16xbf16>
    %cst = arith.constant dense<0.000000e+00> : vector<256x16xf32>
    %2 = tpu.matmul %0, %1, %cst {dimension_numbers = #tpu.dot_dimension_numbers<[1], [0], [0], [1], [0, 0, 1, 1], [], []>} : vector<256x144xbf16>, vector<144x16xbf16>, vector<256x16xf32> -> vector<256x16xf32>
    %c0_3 = arith.constant 0 : index
    %c0_4 = arith.constant 0 : index
    %c0_5 = arith.constant 0 : index
    %3 = vector.load %arg3[%c0_3, %c0_4, %c0_5] : memref<2x1x16xf32, #tpu.memory_space<vmem>>, vector<1x1x16xf32>
    %4 = vector.shape_cast %3 : vector<1x1x16xf32> to vector<1x16xf32>
    %5 = vector.broadcast %4 : vector<1x16xf32> to vector<256x16xf32>
    %6 = arith.mulf %2, %5 : vector<256x16xf32>
    %c1 = arith.constant 1 : index
    %c0_6 = arith.constant 0 : index
    %c0_7 = arith.constant 0 : index
    %7 = vector.load %arg3[%c1, %c0_6, %c0_7] : memref<2x1x16xf32, #tpu.memory_space<vmem>>, vector<1x1x16xf32>
    %8 = vector.shape_cast %7 : vector<1x1x16xf32> to vector<1x16xf32>
    %9 = vector.broadcast %8 : vector<1x16xf32> to vector<256x16xf32>
    %10 = arith.addf %6, %9 : vector<256x16xf32>
    %c0_8 = arith.constant 0 : index
    %c0_9 = arith.constant 0 : index
    %11 = vector.load %arg4[%c0_8, %c0_9] : memref<256x16xf32, #tpu.memory_space<vmem>>, vector<256x16xf32>
    %cst_10 = arith.constant 0.000000e+00 : f32
    %12 = vector.broadcast %cst_10 : f32 to vector<256x16xf32>
    %13 = arith.subf %12, %11 : vector<256x16xf32>
    %14 = math.exp %13 : vector<256x16xf32>
    %cst_11 = arith.constant 1.000000e+00 : f32
    %15 = vector.broadcast %cst_11 : f32 to vector<256x16xf32>
    %16 = arith.addf %15, %14 : vector<256x16xf32>
    %cst_12 = arith.constant 1.000000e+00 : f32
    %17 = vector.broadcast %cst_12 : f32 to vector<256x16xf32>
    %18 = arith.divf %17, %16 : vector<256x16xf32>
    %19 = arith.mulf %10, %18 : vector<256x16xf32>
    %c0_13 = arith.constant 0 : index
    %c0_14 = arith.constant 0 : index
    %20 = vector.load %arg5[%c0_13, %c0_14] : memref<256x16xf32, #tpu.memory_space<vmem>>, vector<256x16xf32>
    tpu.vector_store %arg5[%c0_13, %c0_14], %19 {strides = array<i32>} : memref<256x16xf32, #tpu.memory_space<vmem>>, vector<256x16xf32>,
    return
  }
  func.func @transform_0(%arg0: i32) -> (i32, i32) {
    %c0_i32 = arith.constant 0 : i32
    %c0_i32_0 = arith.constant 0 : i32
    return %arg0, %c0_i32 : i32, i32
  }
  func.func @transform_1(%arg0: i32) -> (i32, i32) {
    %c0_i32 = arith.constant 0 : i32
    %c0_i32_0 = arith.constant 0 : i32
    %c0_i32_1 = arith.constant 0 : i32
    return %c0_i32, %c0_i32_0 : i32, i32
  }
  func.func @transform_2(%arg0: i32) -> (i32, i32, i32) {
    %c0_i32 = arith.constant 0 : i32
    %c0_i32_0 = arith.constant 0 : i32
    %c0_i32_1 = arith.constant 0 : i32
    %c0_i32_2 = arith.constant 0 : i32
    return %c0_i32, %c0_i32_0, %c0_i32_1 : i32, i32, i32
  }
  func.func @transform_3(%arg0: i32) -> (i32, i32) {
    %c0_i32 = arith.constant 0 : i32
    %c0_i32_0 = arith.constant 0 : i32
    return %arg0, %c0_i32 : i32, i32
  }
  func.func @transform_4(%arg0: i32) -> (i32, i32) {
    %c0_i32 = arith.constant 0 : i32
    %c0_i32_0 = arith.constant 0 : i32
    return %arg0, %c0_i32 : i32, i32
  }
}

module attributes {stable_mosaic.version = 11 : i64} {
  func.func @kernel(%arg0: i32, %arg1: memref<256x144xbf16, #tpu.memory_space<vmem>>, %arg2: memref<144x16xbf16, #tpu.memory_space<vmem>>, %arg3: memref<2x1x16xf32, #tpu.memory_space<vmem>>, %arg4: memref<256x16xf32, #tpu.memory_space<vmem>>) attributes {dimension_semantics = [#tpu.dimension_semantics<parallel>], iteration_bounds = array<i64: 2>, scalar_prefetch = 0 : i64, scratch_operands = 0 : i64, tpu.core_type = #tpu.core_type<tc>, window_params = [{transform_indices = @transform_0, window_bounds = array<i64: 256, 144>}, {pipeline_mode = #tpu.pipeline_mode<synchronous>, transform_indices = @transform_1, window_bounds = array<i64: 144, 16>}, {pipeline_mode = #tpu.pipeline_mode<synchronous>, transform_indices = @transform_2, window_bounds = array<i64: 2, 1, 16>}, {transform_indices = @transform_3, window_bounds = array<i64: 256, 16>}]} {
    %c0 = arith.constant 0 : index
    %c0_0 = arith.constant 0 : index
    %0 = vector.load %arg1[%c0, %c0_0] : memref<256x144xbf16, #tpu.memory_space<vmem>>, vector<256x144xbf16>
    %c0_1 = arith.constant 0 : index
    %c0_2 = arith.constant 0 : index
    %1 = vector.load %arg2[%c0_1, %c0_2] : memref<144x16xbf16, #tpu.memory_space<vmem>>, vector<144x16xbf16>
    %cst = arith.constant dense<0.000000e+00> : vector<256x16xf32>
    %2 = tpu.matmul %0, %1, %cst {dimension_numbers = #tpu.dot_dimension_numbers<[1], [0], [0], [1], [0, 0, 1, 1], [], []>} : vector<256x144xbf16>, vector<144x16xbf16>, vector<256x16xf32> -> vector<256x16xf32>
    %c0_3 = arith.constant 0 : index
    %c0_4 = arith.constant 0 : index
    %c0_5 = arith.constant 0 : index
    %3 = vector.load %arg3[%c0_3, %c0_4, %c0_5] : memref<2x1x16xf32, #tpu.memory_space<vmem>>, vector<1x1x16xf32>
    %4 = vector.shape_cast %3 : vector<1x1x16xf32> to vector<1x16xf32>
    %5 = vector.broadcast %4 : vector<1x16xf32> to vector<256x16xf32>
    %6 = arith.mulf %2, %5 : vector<256x16xf32>
    %c1 = arith.constant 1 : index
    %c0_6 = arith.constant 0 : index
    %c0_7 = arith.constant 0 : index
    %7 = vector.load %arg3[%c1, %c0_6, %c0_7] : memref<2x1x16xf32, #tpu.memory_space<vmem>>, vector<1x1x16xf32>
    %8 = vector.shape_cast %7 : vector<1x1x16xf32> to vector<1x16xf32>
    %9 = vector.broadcast %8 : vector<1x16xf32> to vector<256x16xf32>
    %10 = arith.addf %6, %9 : vector<256x16xf32>
    %cst_8 = arith.constant 0.000000e+00 : f32
    %11 = vector.broadcast %cst_8 : f32 to vector<256x16xf32>
    %12 = arith.maximumf %10, %11 : vector<256x16xf32>
    %c0_9 = arith.constant 0 : index
    %c0_10 = arith.constant 0 : index
    %13 = vector.load %arg4[%c0_9, %c0_10] : memref<256x16xf32, #tpu.memory_space<vmem>>, vector<256x16xf32>
    tpu.vector_store %arg4[%c0_9, %c0_10], %12 {strides = array<i32>} : memref<256x16xf32, #tpu.memory_space<vmem>>, vector<256x16xf32>,
    return
  }
  func.func @transform_0(%arg0: i32) -> (i32, i32) {
    %c0_i32 = arith.constant 0 : i32
    %c0_i32_0 = arith.constant 0 : i32
    return %arg0, %c0_i32 : i32, i32
  }
  func.func @transform_1(%arg0: i32) -> (i32, i32) {
    %c0_i32 = arith.constant 0 : i32
    %c0_i32_0 = arith.constant 0 : i32
    %c0_i32_1 = arith.constant 0 : i32
    return %c0_i32, %c0_i32_0 : i32, i32
  }
  func.func @transform_2(%arg0: i32) -> (i32, i32, i32) {
    %c0_i32 = arith.constant 0 : i32
    %c0_i32_0 = arith.constant 0 : i32
    %c0_i32_1 = arith.constant 0 : i32
    %c0_i32_2 = arith.constant 0 : i32
    return %c0_i32, %c0_i32_0, %c0_i32_1 : i32, i32, i32
  }
  func.func @transform_3(%arg0: i32) -> (i32, i32) {
    %c0_i32 = arith.constant 0 : i32
    %c0_i32_0 = arith.constant 0 : i32
    return %arg0, %c0_i32 : i32, i32
  }
}

module attributes {stable_mosaic.version = 11 : i64} {
  func.func @kernel(%arg0: i32, %arg1: memref<256x32xbf16, #tpu.memory_space<vmem>>, %arg2: memref<32x128xbf16, #tpu.memory_space<vmem>>, %arg3: memref<2x1x128xf32, #tpu.memory_space<vmem>>, %arg4: memref<256x128xf32, #tpu.memory_space<vmem>>, %arg5: memref<256x128xf32, #tpu.memory_space<vmem>>) attributes {dimension_semantics = [#tpu.dimension_semantics<parallel>], iteration_bounds = array<i64: 2>, scalar_prefetch = 0 : i64, scratch_operands = 0 : i64, tpu.core_type = #tpu.core_type<tc>, window_params = [{transform_indices = @transform_0, window_bounds = array<i64: 256, 32>}, {pipeline_mode = #tpu.pipeline_mode<synchronous>, transform_indices = @transform_1, window_bounds = array<i64: 32, 128>}, {pipeline_mode = #tpu.pipeline_mode<synchronous>, transform_indices = @transform_2, window_bounds = array<i64: 2, 1, 128>}, {transform_indices = @transform_3, window_bounds = array<i64: 256, 128>}, {transform_indices = @transform_4, window_bounds = array<i64: 256, 128>}]} {
    %c0 = arith.constant 0 : index
    %c0_0 = arith.constant 0 : index
    %0 = vector.load %arg1[%c0, %c0_0] : memref<256x32xbf16, #tpu.memory_space<vmem>>, vector<256x32xbf16>
    %c0_1 = arith.constant 0 : index
    %c0_2 = arith.constant 0 : index
    %1 = vector.load %arg2[%c0_1, %c0_2] : memref<32x128xbf16, #tpu.memory_space<vmem>>, vector<32x128xbf16>
    %cst = arith.constant dense<0.000000e+00> : vector<256x128xf32>
    %2 = tpu.matmul %0, %1, %cst {dimension_numbers = #tpu.dot_dimension_numbers<[1], [0], [0], [1], [0, 0, 1, 1], [], []>} : vector<256x32xbf16>, vector<32x128xbf16>, vector<256x128xf32> -> vector<256x128xf32>
    %c0_3 = arith.constant 0 : index
    %c0_4 = arith.constant 0 : index
    %c0_5 = arith.constant 0 : index
    %3 = vector.load %arg3[%c0_3, %c0_4, %c0_5] : memref<2x1x128xf32, #tpu.memory_space<vmem>>, vector<1x1x128xf32>
    %4 = vector.shape_cast %3 : vector<1x1x128xf32> to vector<1x128xf32>
    %5 = vector.broadcast %4 : vector<1x128xf32> to vector<256x128xf32>
    %6 = arith.mulf %2, %5 : vector<256x128xf32>
    %c1 = arith.constant 1 : index
    %c0_6 = arith.constant 0 : index
    %c0_7 = arith.constant 0 : index
    %7 = vector.load %arg3[%c1, %c0_6, %c0_7] : memref<2x1x128xf32, #tpu.memory_space<vmem>>, vector<1x1x128xf32>
    %8 = vector.shape_cast %7 : vector<1x1x128xf32> to vector<1x128xf32>
    %9 = vector.broadcast %8 : vector<1x128xf32> to vector<256x128xf32>
    %10 = arith.addf %6, %9 : vector<256x128xf32>
    %c0_8 = arith.constant 0 : index
    %c0_9 = arith.constant 0 : index
    %11 = vector.load %arg4[%c0_8, %c0_9] : memref<256x128xf32, #tpu.memory_space<vmem>>, vector<256x128xf32>
    %12 = arith.addf %10, %11 : vector<256x128xf32>
    %cst_10 = arith.constant 0.000000e+00 : f32
    %13 = vector.broadcast %cst_10 : f32 to vector<256x128xf32>
    %14 = arith.maximumf %12, %13 : vector<256x128xf32>
    %c0_11 = arith.constant 0 : index
    %c0_12 = arith.constant 0 : index
    %15 = vector.load %arg5[%c0_11, %c0_12] : memref<256x128xf32, #tpu.memory_space<vmem>>, vector<256x128xf32>
    tpu.vector_store %arg5[%c0_11, %c0_12], %14 {strides = array<i32>} : memref<256x128xf32, #tpu.memory_space<vmem>>, vector<256x128xf32>,
    return
  }
  func.func @transform_0(%arg0: i32) -> (i32, i32) {
    %c0_i32 = arith.constant 0 : i32
    %c0_i32_0 = arith.constant 0 : i32
    return %arg0, %c0_i32 : i32, i32
  }
  func.func @transform_1(%arg0: i32) -> (i32, i32) {
    %c0_i32 = arith.constant 0 : i32
    %c0_i32_0 = arith.constant 0 : i32
    %c0_i32_1 = arith.constant 0 : i32
    return %c0_i32, %c0_i32_0 : i32, i32
  }
  func.func @transform_2(%arg0: i32) -> (i32, i32, i32) {
    %c0_i32 = arith.constant 0 : i32
    %c0_i32_0 = arith.constant 0 : i32
    %c0_i32_1 = arith.constant 0 : i32
    %c0_i32_2 = arith.constant 0 : i32
    return %c0_i32, %c0_i32_0, %c0_i32_1 : i32, i32, i32
  }
  func.func @transform_3(%arg0: i32) -> (i32, i32) {
    %c0_i32 = arith.constant 0 : i32
    %c0_i32_0 = arith.constant 0 : i32
    return %arg0, %c0_i32 : i32, i32
  }
  func.func @transform_4(%arg0: i32) -> (i32, i32) {
    %c0_i32 = arith.constant 0 : i32
    %c0_i32_0 = arith.constant 0 : i32
    return %arg0, %c0_i32 : i32, i32
  }
}

module attributes {stable_mosaic.version = 11 : i64} {
  func.func @kernel(%arg0: i32, %arg1: memref<128x288xbf16, #tpu.memory_space<vmem>>, %arg2: memref<288x128xbf16, #tpu.memory_space<vmem>>, %arg3: memref<2x1x128xf32, #tpu.memory_space<vmem>>, %arg4: memref<128x128xf32, #tpu.memory_space<vmem>>) attributes {dimension_semantics = [#tpu.dimension_semantics<parallel>], iteration_bounds = array<i64: 1>, scalar_prefetch = 0 : i64, scratch_operands = 0 : i64, tpu.core_type = #tpu.core_type<tc>, window_params = [{transform_indices = @transform_0, window_bounds = array<i64: 128, 288>}, {pipeline_mode = #tpu.pipeline_mode<synchronous>, transform_indices = @transform_1, window_bounds = array<i64: 288, 128>}, {pipeline_mode = #tpu.pipeline_mode<synchronous>, transform_indices = @transform_2, window_bounds = array<i64: 2, 1, 128>}, {transform_indices = @transform_3, window_bounds = array<i64: 128, 128>}]} {
    %c0 = arith.constant 0 : index
    %c0_0 = arith.constant 0 : index
    %0 = vector.load %arg1[%c0, %c0_0] : memref<128x288xbf16, #tpu.memory_space<vmem>>, vector<128x288xbf16>
    %c0_1 = arith.constant 0 : index
    %c0_2 = arith.constant 0 : index
    %1 = vector.load %arg2[%c0_1, %c0_2] : memref<288x128xbf16, #tpu.memory_space<vmem>>, vector<288x128xbf16>
    %cst = arith.constant dense<0.000000e+00> : vector<128x128xf32>
    %2 = tpu.matmul %0, %1, %cst {dimension_numbers = #tpu.dot_dimension_numbers<[1], [0], [0], [1], [0, 0, 1, 1], [], []>} : vector<128x288xbf16>, vector<288x128xbf16>, vector<128x128xf32> -> vector<128x128xf32>
    %c0_3 = arith.constant 0 : index
    %c0_4 = arith.constant 0 : index
    %c0_5 = arith.constant 0 : index
    %3 = vector.load %arg3[%c0_3, %c0_4, %c0_5] : memref<2x1x128xf32, #tpu.memory_space<vmem>>, vector<1x1x128xf32>
    %4 = vector.shape_cast %3 : vector<1x1x128xf32> to vector<1x128xf32>
    %5 = vector.broadcast %4 : vector<1x128xf32> to vector<128x128xf32>
    %6 = arith.mulf %2, %5 : vector<128x128xf32>
    %c1 = arith.constant 1 : index
    %c0_6 = arith.constant 0 : index
    %c0_7 = arith.constant 0 : index
    %7 = vector.load %arg3[%c1, %c0_6, %c0_7] : memref<2x1x128xf32, #tpu.memory_space<vmem>>, vector<1x1x128xf32>
    %8 = vector.shape_cast %7 : vector<1x1x128xf32> to vector<1x128xf32>
    %9 = vector.broadcast %8 : vector<1x128xf32> to vector<128x128xf32>
    %10 = arith.addf %6, %9 : vector<128x128xf32>
    %cst_8 = arith.constant 0.000000e+00 : f32
    %11 = vector.broadcast %cst_8 : f32 to vector<128x128xf32>
    %12 = arith.maximumf %10, %11 : vector<128x128xf32>
    %c0_9 = arith.constant 0 : index
    %c0_10 = arith.constant 0 : index
    %13 = vector.load %arg4[%c0_9, %c0_10] : memref<128x128xf32, #tpu.memory_space<vmem>>, vector<128x128xf32>
    tpu.vector_store %arg4[%c0_9, %c0_10], %12 {strides = array<i32>} : memref<128x128xf32, #tpu.memory_space<vmem>>, vector<128x128xf32>,
    return
  }
  func.func @transform_0(%arg0: i32) -> (i32, i32) {
    %c0_i32 = arith.constant 0 : i32
    %c0_i32_0 = arith.constant 0 : i32
    return %arg0, %c0_i32 : i32, i32
  }
  func.func @transform_1(%arg0: i32) -> (i32, i32) {
    %c0_i32 = arith.constant 0 : i32
    %c0_i32_0 = arith.constant 0 : i32
    %c0_i32_1 = arith.constant 0 : i32
    return %c0_i32, %c0_i32_0 : i32, i32
  }
  func.func @transform_2(%arg0: i32) -> (i32, i32, i32) {
    %c0_i32 = arith.constant 0 : i32
    %c0_i32_0 = arith.constant 0 : i32
    %c0_i32_1 = arith.constant 0 : i32
    %c0_i32_2 = arith.constant 0 : i32
    return %c0_i32, %c0_i32_0, %c0_i32_1 : i32, i32, i32
  }
  func.func @transform_3(%arg0: i32) -> (i32, i32) {
    %c0_i32 = arith.constant 0 : i32
    %c0_i32_0 = arith.constant 0 : i32
    return %arg0, %c0_i32 : i32, i32
  }
}

module attributes {stable_mosaic.version = 11 : i64} {
  func.func @kernel(%arg0: i32, %arg1: memref<128x128xbf16, #tpu.memory_space<vmem>>, %arg2: memref<128x32xbf16, #tpu.memory_space<vmem>>, %arg3: memref<2x1x32xf32, #tpu.memory_space<vmem>>, %arg4: memref<128x32xf32, #tpu.memory_space<vmem>>) attributes {dimension_semantics = [#tpu.dimension_semantics<parallel>], iteration_bounds = array<i64: 1>, scalar_prefetch = 0 : i64, scratch_operands = 0 : i64, tpu.core_type = #tpu.core_type<tc>, window_params = [{transform_indices = @transform_0, window_bounds = array<i64: 128, 128>}, {pipeline_mode = #tpu.pipeline_mode<synchronous>, transform_indices = @transform_1, window_bounds = array<i64: 128, 32>}, {pipeline_mode = #tpu.pipeline_mode<synchronous>, transform_indices = @transform_2, window_bounds = array<i64: 2, 1, 32>}, {transform_indices = @transform_3, window_bounds = array<i64: 128, 32>}]} {
    %c0 = arith.constant 0 : index
    %c0_0 = arith.constant 0 : index
    %0 = vector.load %arg1[%c0, %c0_0] : memref<128x128xbf16, #tpu.memory_space<vmem>>, vector<128x128xbf16>
    %c0_1 = arith.constant 0 : index
    %c0_2 = arith.constant 0 : index
    %1 = vector.load %arg2[%c0_1, %c0_2] : memref<128x32xbf16, #tpu.memory_space<vmem>>, vector<128x32xbf16>
    %cst = arith.constant dense<0.000000e+00> : vector<128x32xf32>
    %2 = tpu.matmul %0, %1, %cst {dimension_numbers = #tpu.dot_dimension_numbers<[1], [0], [0], [1], [0, 0, 1, 1], [], []>} : vector<128x128xbf16>, vector<128x32xbf16>, vector<128x32xf32> -> vector<128x32xf32>
    %c0_3 = arith.constant 0 : index
    %c0_4 = arith.constant 0 : index
    %c0_5 = arith.constant 0 : index
    %3 = vector.load %arg3[%c0_3, %c0_4, %c0_5] : memref<2x1x32xf32, #tpu.memory_space<vmem>>, vector<1x1x32xf32>
    %4 = vector.shape_cast %3 : vector<1x1x32xf32> to vector<1x32xf32>
    %5 = vector.broadcast %4 : vector<1x32xf32> to vector<128x32xf32>
    %6 = arith.mulf %2, %5 : vector<128x32xf32>
    %c1 = arith.constant 1 : index
    %c0_6 = arith.constant 0 : index
    %c0_7 = arith.constant 0 : index
    %7 = vector.load %arg3[%c1, %c0_6, %c0_7] : memref<2x1x32xf32, #tpu.memory_space<vmem>>, vector<1x1x32xf32>
    %8 = vector.shape_cast %7 : vector<1x1x32xf32> to vector<1x32xf32>
    %9 = vector.broadcast %8 : vector<1x32xf32> to vector<128x32xf32>
    %10 = arith.addf %6, %9 : vector<128x32xf32>
    %cst_8 = arith.constant 0.000000e+00 : f32
    %11 = vector.broadcast %cst_8 : f32 to vector<128x32xf32>
    %12 = arith.maximumf %10, %11 : vector<128x32xf32>
    %c0_9 = arith.constant 0 : index
    %c0_10 = arith.constant 0 : index
    %13 = vector.load %arg4[%c0_9, %c0_10] : memref<128x32xf32, #tpu.memory_space<vmem>>, vector<128x32xf32>
    tpu.vector_store %arg4[%c0_9, %c0_10], %12 {strides = array<i32>} : memref<128x32xf32, #tpu.memory_space<vmem>>, vector<128x32xf32>,
    return
  }
  func.func @transform_0(%arg0: i32) -> (i32, i32) {
    %c0_i32 = arith.constant 0 : i32
    %c0_i32_0 = arith.constant 0 : i32
    return %arg0, %c0_i32 : i32, i32
  }
  func.func @transform_1(%arg0: i32) -> (i32, i32) {
    %c0_i32 = arith.constant 0 : i32
    %c0_i32_0 = arith.constant 0 : i32
    %c0_i32_1 = arith.constant 0 : i32
    return %c0_i32, %c0_i32_0 : i32, i32
  }
  func.func @transform_2(%arg0: i32) -> (i32, i32, i32) {
    %c0_i32 = arith.constant 0 : i32
    %c0_i32_0 = arith.constant 0 : i32
    %c0_i32_1 = arith.constant 0 : i32
    %c0_i32_2 = arith.constant 0 : i32
    return %c0_i32, %c0_i32_0, %c0_i32_1 : i32, i32, i32
  }
  func.func @transform_3(%arg0: i32) -> (i32, i32) {
    %c0_i32 = arith.constant 0 : i32
    %c0_i32_0 = arith.constant 0 : i32
    return %arg0, %c0_i32 : i32, i32
  }
}

module attributes {stable_mosaic.version = 11 : i64} {
  func.func @kernel(%arg0: i32, %arg1: memref<8x144xbf16, #tpu.memory_space<vmem>>, %arg2: memref<144x16xbf16, #tpu.memory_space<vmem>>, %arg3: memref<2x1x16xf32, #tpu.memory_space<vmem>>, %arg4: memref<8x16xf32, #tpu.memory_space<vmem>>) attributes {dimension_semantics = [#tpu.dimension_semantics<parallel>], iteration_bounds = array<i64: 1>, scalar_prefetch = 0 : i64, scratch_operands = 0 : i64, tpu.core_type = #tpu.core_type<tc>, window_params = [{transform_indices = @transform_0, window_bounds = array<i64: 8, 144>}, {pipeline_mode = #tpu.pipeline_mode<synchronous>, transform_indices = @transform_1, window_bounds = array<i64: 144, 16>}, {pipeline_mode = #tpu.pipeline_mode<synchronous>, transform_indices = @transform_2, window_bounds = array<i64: 2, 1, 16>}, {transform_indices = @transform_3, window_bounds = array<i64: 8, 16>}]} {
    %c0 = arith.constant 0 : index
    %c0_0 = arith.constant 0 : index
    %0 = vector.load %arg1[%c0, %c0_0] : memref<8x144xbf16, #tpu.memory_space<vmem>>, vector<8x144xbf16>
    %c0_1 = arith.constant 0 : index
    %c0_2 = arith.constant 0 : index
    %1 = vector.load %arg2[%c0_1, %c0_2] : memref<144x16xbf16, #tpu.memory_space<vmem>>, vector<144x16xbf16>
    %cst = arith.constant dense<0.000000e+00> : vector<8x16xf32>
    %2 = tpu.matmul %0, %1, %cst {dimension_numbers = #tpu.dot_dimension_numbers<[1], [0], [0], [1], [0, 0, 1, 1], [], []>} : vector<8x144xbf16>, vector<144x16xbf16>, vector<8x16xf32> -> vector<8x16xf32>
    %c0_3 = arith.constant 0 : index
    %c0_4 = arith.constant 0 : index
    %c0_5 = arith.constant 0 : index
    %3 = vector.load %arg3[%c0_3, %c0_4, %c0_5] : memref<2x1x16xf32, #tpu.memory_space<vmem>>, vector<1x1x16xf32>
    %4 = vector.shape_cast %3 : vector<1x1x16xf32> to vector<1x16xf32>
    %5 = vector.broadcast %4 : vector<1x16xf32> to vector<8x16xf32>
    %6 = arith.mulf %2, %5 : vector<8x16xf32>
    %c1 = arith.constant 1 : index
    %c0_6 = arith.constant 0 : index
    %c0_7 = arith.constant 0 : index
    %7 = vector.load %arg3[%c1, %c0_6, %c0_7] : memref<2x1x16xf32, #tpu.memory_space<vmem>>, vector<1x1x16xf32>
    %8 = vector.shape_cast %7 : vector<1x1x16xf32> to vector<1x16xf32>
    %9 = vector.broadcast %8 : vector<1x16xf32> to vector<8x16xf32>
    %10 = arith.addf %6, %9 : vector<8x16xf32>
    %c0_8 = arith.constant 0 : index
    %c0_9 = arith.constant 0 : index
    %11 = vector.load %arg4[%c0_8, %c0_9] : memref<8x16xf32, #tpu.memory_space<vmem>>, vector<8x16xf32>
    tpu.vector_store %arg4[%c0_8, %c0_9], %10 {strides = array<i32>} : memref<8x16xf32, #tpu.memory_space<vmem>>, vector<8x16xf32>,
    return
  }
  func.func @transform_0(%arg0: i32) -> (i32, i32) {
    %c0_i32 = arith.constant 0 : i32
    %c0_i32_0 = arith.constant 0 : i32
    return %arg0, %c0_i32 : i32, i32
  }
  func.func @transform_1(%arg0: i32) -> (i32, i32) {
    %c0_i32 = arith.constant 0 : i32
    %c0_i32_0 = arith.constant 0 : i32
    %c0_i32_1 = arith.constant 0 : i32
    return %c0_i32, %c0_i32_0 : i32, i32
  }
  func.func @transform_2(%arg0: i32) -> (i32, i32, i32) {
    %c0_i32 = arith.constant 0 : i32
    %c0_i32_0 = arith.constant 0 : i32
    %c0_i32_1 = arith.constant 0 : i32
    %c0_i32_2 = arith.constant 0 : i32
    return %c0_i32, %c0_i32_0, %c0_i32_1 : i32, i32, i32
  }
  func.func @transform_3(%arg0: i32) -> (i32, i32) {
    %c0_i32 = arith.constant 0 : i32
    %c0_i32_0 = arith.constant 0 : i32
    return %arg0, %c0_i32 : i32, i32
  }
}

module attributes {stable_mosaic.version = 11 : i64} {
  func.func @kernel(%arg0: i32, %arg1: memref<128x144xbf16, #tpu.memory_space<vmem>>, %arg2: memref<144x16xbf16, #tpu.memory_space<vmem>>, %arg3: memref<2x1x16xf32, #tpu.memory_space<vmem>>, %arg4: memref<128x16xf32, #tpu.memory_space<vmem>>, %arg5: memref<128x16xf32, #tpu.memory_space<vmem>>) attributes {dimension_semantics = [#tpu.dimension_semantics<parallel>], iteration_bounds = array<i64: 1>, scalar_prefetch = 0 : i64, scratch_operands = 0 : i64, tpu.core_type = #tpu.core_type<tc>, window_params = [{transform_indices = @transform_0, window_bounds = array<i64: 128, 144>}, {pipeline_mode = #tpu.pipeline_mode<synchronous>, transform_indices = @transform_1, window_bounds = array<i64: 144, 16>}, {pipeline_mode = #tpu.pipeline_mode<synchronous>, transform_indices = @transform_2, window_bounds = array<i64: 2, 1, 16>}, {transform_indices = @transform_3, window_bounds = array<i64: 128, 16>}, {transform_indices = @transform_4, window_bounds = array<i64: 128, 16>}]} {
    %c0 = arith.constant 0 : index
    %c0_0 = arith.constant 0 : index
    %0 = vector.load %arg1[%c0, %c0_0] : memref<128x144xbf16, #tpu.memory_space<vmem>>, vector<128x144xbf16>
    %c0_1 = arith.constant 0 : index
    %c0_2 = arith.constant 0 : index
    %1 = vector.load %arg2[%c0_1, %c0_2] : memref<144x16xbf16, #tpu.memory_space<vmem>>, vector<144x16xbf16>
    %cst = arith.constant dense<0.000000e+00> : vector<128x16xf32>
    %2 = tpu.matmul %0, %1, %cst {dimension_numbers = #tpu.dot_dimension_numbers<[1], [0], [0], [1], [0, 0, 1, 1], [], []>} : vector<128x144xbf16>, vector<144x16xbf16>, vector<128x16xf32> -> vector<128x16xf32>
    %c0_3 = arith.constant 0 : index
    %c0_4 = arith.constant 0 : index
    %c0_5 = arith.constant 0 : index
    %3 = vector.load %arg3[%c0_3, %c0_4, %c0_5] : memref<2x1x16xf32, #tpu.memory_space<vmem>>, vector<1x1x16xf32>
    %4 = vector.shape_cast %3 : vector<1x1x16xf32> to vector<1x16xf32>
    %5 = vector.broadcast %4 : vector<1x16xf32> to vector<128x16xf32>
    %6 = arith.mulf %2, %5 : vector<128x16xf32>
    %c1 = arith.constant 1 : index
    %c0_6 = arith.constant 0 : index
    %c0_7 = arith.constant 0 : index
    %7 = vector.load %arg3[%c1, %c0_6, %c0_7] : memref<2x1x16xf32, #tpu.memory_space<vmem>>, vector<1x1x16xf32>
    %8 = vector.shape_cast %7 : vector<1x1x16xf32> to vector<1x16xf32>
    %9 = vector.broadcast %8 : vector<1x16xf32> to vector<128x16xf32>
    %10 = arith.addf %6, %9 : vector<128x16xf32>
    %c0_8 = arith.constant 0 : index
    %c0_9 = arith.constant 0 : index
    %11 = vector.load %arg4[%c0_8, %c0_9] : memref<128x16xf32, #tpu.memory_space<vmem>>, vector<128x16xf32>
    %cst_10 = arith.constant 0.000000e+00 : f32
    %12 = vector.broadcast %cst_10 : f32 to vector<128x16xf32>
    %13 = arith.subf %12, %11 : vector<128x16xf32>
    %14 = math.exp %13 : vector<128x16xf32>
    %cst_11 = arith.constant 1.000000e+00 : f32
    %15 = vector.broadcast %cst_11 : f32 to vector<128x16xf32>
    %16 = arith.addf %15, %14 : vector<128x16xf32>
    %cst_12 = arith.constant 1.000000e+00 : f32
    %17 = vector.broadcast %cst_12 : f32 to vector<128x16xf32>
    %18 = arith.divf %17, %16 : vector<128x16xf32>
    %19 = arith.mulf %10, %18 : vector<128x16xf32>
    %c0_13 = arith.constant 0 : index
    %c0_14 = arith.constant 0 : index
    %20 = vector.load %arg5[%c0_13, %c0_14] : memref<128x16xf32, #tpu.memory_space<vmem>>, vector<128x16xf32>
    tpu.vector_store %arg5[%c0_13, %c0_14], %19 {strides = array<i32>} : memref<128x16xf32, #tpu.memory_space<vmem>>, vector<128x16xf32>,
    return
  }
  func.func @transform_0(%arg0: i32) -> (i32, i32) {
    %c0_i32 = arith.constant 0 : i32
    %c0_i32_0 = arith.constant 0 : i32
    return %arg0, %c0_i32 : i32, i32
  }
  func.func @transform_1(%arg0: i32) -> (i32, i32) {
    %c0_i32 = arith.constant 0 : i32
    %c0_i32_0 = arith.constant 0 : i32
    %c0_i32_1 = arith.constant 0 : i32
    return %c0_i32, %c0_i32_0 : i32, i32
  }
  func.func @transform_2(%arg0: i32) -> (i32, i32, i32) {
    %c0_i32 = arith.constant 0 : i32
    %c0_i32_0 = arith.constant 0 : i32
    %c0_i32_1 = arith.constant 0 : i32
    %c0_i32_2 = arith.constant 0 : i32
    return %c0_i32, %c0_i32_0, %c0_i32_1 : i32, i32, i32
  }
  func.func @transform_3(%arg0: i32) -> (i32, i32) {
    %c0_i32 = arith.constant 0 : i32
    %c0_i32_0 = arith.constant 0 : i32
    return %arg0, %c0_i32 : i32, i32
  }
  func.func @transform_4(%arg0: i32) -> (i32, i32) {
    %c0_i32 = arith.constant 0 : i32
    %c0_i32_0 = arith.constant 0 : i32
    return %arg0, %c0_i32 : i32, i32
  }
}

module attributes {stable_mosaic.version = 11 : i64} {
  func.func @kernel(%arg0: i32, %arg1: memref<128x144xbf16, #tpu.memory_space<vmem>>, %arg2: memref<144x16xbf16, #tpu.memory_space<vmem>>, %arg3: memref<2x1x16xf32, #tpu.memory_space<vmem>>, %arg4: memref<128x16xf32, #tpu.memory_space<vmem>>) attributes {dimension_semantics = [#tpu.dimension_semantics<parallel>], iteration_bounds = array<i64: 1>, scalar_prefetch = 0 : i64, scratch_operands = 0 : i64, tpu.core_type = #tpu.core_type<tc>, window_params = [{transform_indices = @transform_0, window_bounds = array<i64: 128, 144>}, {pipeline_mode = #tpu.pipeline_mode<synchronous>, transform_indices = @transform_1, window_bounds = array<i64: 144, 16>}, {pipeline_mode = #tpu.pipeline_mode<synchronous>, transform_indices = @transform_2, window_bounds = array<i64: 2, 1, 16>}, {transform_indices = @transform_3, window_bounds = array<i64: 128, 16>}]} {
    %c0 = arith.constant 0 : index
    %c0_0 = arith.constant 0 : index
    %0 = vector.load %arg1[%c0, %c0_0] : memref<128x144xbf16, #tpu.memory_space<vmem>>, vector<128x144xbf16>
    %c0_1 = arith.constant 0 : index
    %c0_2 = arith.constant 0 : index
    %1 = vector.load %arg2[%c0_1, %c0_2] : memref<144x16xbf16, #tpu.memory_space<vmem>>, vector<144x16xbf16>
    %cst = arith.constant dense<0.000000e+00> : vector<128x16xf32>
    %2 = tpu.matmul %0, %1, %cst {dimension_numbers = #tpu.dot_dimension_numbers<[1], [0], [0], [1], [0, 0, 1, 1], [], []>} : vector<128x144xbf16>, vector<144x16xbf16>, vector<128x16xf32> -> vector<128x16xf32>
    %c0_3 = arith.constant 0 : index
    %c0_4 = arith.constant 0 : index
    %c0_5 = arith.constant 0 : index
    %3 = vector.load %arg3[%c0_3, %c0_4, %c0_5] : memref<2x1x16xf32, #tpu.memory_space<vmem>>, vector<1x1x16xf32>
    %4 = vector.shape_cast %3 : vector<1x1x16xf32> to vector<1x16xf32>
    %5 = vector.broadcast %4 : vector<1x16xf32> to vector<128x16xf32>
    %6 = arith.mulf %2, %5 : vector<128x16xf32>
    %c1 = arith.constant 1 : index
    %c0_6 = arith.constant 0 : index
    %c0_7 = arith.constant 0 : index
    %7 = vector.load %arg3[%c1, %c0_6, %c0_7] : memref<2x1x16xf32, #tpu.memory_space<vmem>>, vector<1x1x16xf32>
    %8 = vector.shape_cast %7 : vector<1x1x16xf32> to vector<1x16xf32>
    %9 = vector.broadcast %8 : vector<1x16xf32> to vector<128x16xf32>
    %10 = arith.addf %6, %9 : vector<128x16xf32>
    %cst_8 = arith.constant 0.000000e+00 : f32
    %11 = vector.broadcast %cst_8 : f32 to vector<128x16xf32>
    %12 = arith.maximumf %10, %11 : vector<128x16xf32>
    %c0_9 = arith.constant 0 : index
    %c0_10 = arith.constant 0 : index
    %13 = vector.load %arg4[%c0_9, %c0_10] : memref<128x16xf32, #tpu.memory_space<vmem>>, vector<128x16xf32>
    tpu.vector_store %arg4[%c0_9, %c0_10], %12 {strides = array<i32>} : memref<128x16xf32, #tpu.memory_space<vmem>>, vector<128x16xf32>,
    return
  }
  func.func @transform_0(%arg0: i32) -> (i32, i32) {
    %c0_i32 = arith.constant 0 : i32
    %c0_i32_0 = arith.constant 0 : i32
    return %arg0, %c0_i32 : i32, i32
  }
  func.func @transform_1(%arg0: i32) -> (i32, i32) {
    %c0_i32 = arith.constant 0 : i32
    %c0_i32_0 = arith.constant 0 : i32
    %c0_i32_1 = arith.constant 0 : i32
    return %c0_i32, %c0_i32_0 : i32, i32
  }
  func.func @transform_2(%arg0: i32) -> (i32, i32, i32) {
    %c0_i32 = arith.constant 0 : i32
    %c0_i32_0 = arith.constant 0 : i32
    %c0_i32_1 = arith.constant 0 : i32
    %c0_i32_2 = arith.constant 0 : i32
    return %c0_i32, %c0_i32_0, %c0_i32_1 : i32, i32, i32
  }
  func.func @transform_3(%arg0: i32) -> (i32, i32) {
    %c0_i32 = arith.constant 0 : i32
    %c0_i32_0 = arith.constant 0 : i32
    return %arg0, %c0_i32 : i32, i32
  }
}

module attributes {stable_mosaic.version = 11 : i64} {
  func.func @kernel(%arg0: i32, %arg1: memref<128x32xbf16, #tpu.memory_space<vmem>>, %arg2: memref<32x128xbf16, #tpu.memory_space<vmem>>, %arg3: memref<2x1x128xf32, #tpu.memory_space<vmem>>, %arg4: memref<128x128xf32, #tpu.memory_space<vmem>>, %arg5: memref<128x128xf32, #tpu.memory_space<vmem>>) attributes {dimension_semantics = [#tpu.dimension_semantics<parallel>], iteration_bounds = array<i64: 1>, scalar_prefetch = 0 : i64, scratch_operands = 0 : i64, tpu.core_type = #tpu.core_type<tc>, window_params = [{transform_indices = @transform_0, window_bounds = array<i64: 128, 32>}, {pipeline_mode = #tpu.pipeline_mode<synchronous>, transform_indices = @transform_1, window_bounds = array<i64: 32, 128>}, {pipeline_mode = #tpu.pipeline_mode<synchronous>, transform_indices = @transform_2, window_bounds = array<i64: 2, 1, 128>}, {transform_indices = @transform_3, window_bounds = array<i64: 128, 128>}, {transform_indices = @transform_4, window_bounds = array<i64: 128, 128>}]} {
    %c0 = arith.constant 0 : index
    %c0_0 = arith.constant 0 : index
    %0 = vector.load %arg1[%c0, %c0_0] : memref<128x32xbf16, #tpu.memory_space<vmem>>, vector<128x32xbf16>
    %c0_1 = arith.constant 0 : index
    %c0_2 = arith.constant 0 : index
    %1 = vector.load %arg2[%c0_1, %c0_2] : memref<32x128xbf16, #tpu.memory_space<vmem>>, vector<32x128xbf16>
    %cst = arith.constant dense<0.000000e+00> : vector<128x128xf32>
    %2 = tpu.matmul %0, %1, %cst {dimension_numbers = #tpu.dot_dimension_numbers<[1], [0], [0], [1], [0, 0, 1, 1], [], []>} : vector<128x32xbf16>, vector<32x128xbf16>, vector<128x128xf32> -> vector<128x128xf32>
    %c0_3 = arith.constant 0 : index
    %c0_4 = arith.constant 0 : index
    %c0_5 = arith.constant 0 : index
    %3 = vector.load %arg3[%c0_3, %c0_4, %c0_5] : memref<2x1x128xf32, #tpu.memory_space<vmem>>, vector<1x1x128xf32>
    %4 = vector.shape_cast %3 : vector<1x1x128xf32> to vector<1x128xf32>
    %5 = vector.broadcast %4 : vector<1x128xf32> to vector<128x128xf32>
    %6 = arith.mulf %2, %5 : vector<128x128xf32>
    %c1 = arith.constant 1 : index
    %c0_6 = arith.constant 0 : index
    %c0_7 = arith.constant 0 : index
    %7 = vector.load %arg3[%c1, %c0_6, %c0_7] : memref<2x1x128xf32, #tpu.memory_space<vmem>>, vector<1x1x128xf32>
    %8 = vector.shape_cast %7 : vector<1x1x128xf32> to vector<1x128xf32>
    %9 = vector.broadcast %8 : vector<1x128xf32> to vector<128x128xf32>
    %10 = arith.addf %6, %9 : vector<128x128xf32>
    %c0_8 = arith.constant 0 : index
    %c0_9 = arith.constant 0 : index
    %11 = vector.load %arg4[%c0_8, %c0_9] : memref<128x128xf32, #tpu.memory_space<vmem>>, vector<128x128xf32>
    %12 = arith.addf %10, %11 : vector<128x128xf32>
    %cst_10 = arith.constant 0.000000e+00 : f32
    %13 = vector.broadcast %cst_10 : f32 to vector<128x128xf32>
    %14 = arith.maximumf %12, %13 : vector<128x128xf32>
    %c0_11 = arith.constant 0 : index
    %c0_12 = arith.constant 0 : index
    %15 = vector.load %arg5[%c0_11, %c0_12] : memref<128x128xf32, #tpu.memory_space<vmem>>, vector<128x128xf32>
    tpu.vector_store %arg5[%c0_11, %c0_12], %14 {strides = array<i32>} : memref<128x128xf32, #tpu.memory_space<vmem>>, vector<128x128xf32>,
    return
  }
  func.func @transform_0(%arg0: i32) -> (i32, i32) {
    %c0_i32 = arith.constant 0 : i32
    %c0_i32_0 = arith.constant 0 : i32
    return %arg0, %c0_i32 : i32, i32
  }
  func.func @transform_1(%arg0: i32) -> (i32, i32) {
    %c0_i32 = arith.constant 0 : i32
    %c0_i32_0 = arith.constant 0 : i32
    %c0_i32_1 = arith.constant 0 : i32
    return %c0_i32, %c0_i32_0 : i32, i32
  }
  func.func @transform_2(%arg0: i32) -> (i32, i32, i32) {
    %c0_i32 = arith.constant 0 : i32
    %c0_i32_0 = arith.constant 0 : i32
    %c0_i32_1 = arith.constant 0 : i32
    %c0_i32_2 = arith.constant 0 : i32
    return %c0_i32, %c0_i32_0, %c0_i32_1 : i32, i32, i32
  }
  func.func @transform_3(%arg0: i32) -> (i32, i32) {
    %c0_i32 = arith.constant 0 : i32
    %c0_i32_0 = arith.constant 0 : i32
    return %arg0, %c0_i32 : i32, i32
  }
  func.func @transform_4(%arg0: i32) -> (i32, i32) {
    %c0_i32 = arith.constant 0 : i32
    %c0_i32_0 = arith.constant 0 : i32
    return %arg0, %c0_i32 : i32, i32
  }
}

module attributes {stable_mosaic.version = 11 : i64} {
  func.func @kernel(%arg0: i32, %arg1: memref<128x128xbf16, #tpu.memory_space<vmem>>, %arg2: memref<128x512xbf16, #tpu.memory_space<vmem>>, %arg3: memref<2x1x512xf32, #tpu.memory_space<vmem>>, %arg4: memref<128x512xf32, #tpu.memory_space<vmem>>) attributes {dimension_semantics = [#tpu.dimension_semantics<parallel>], iteration_bounds = array<i64: 1>, scalar_prefetch = 0 : i64, scratch_operands = 0 : i64, tpu.core_type = #tpu.core_type<tc>, window_params = [{transform_indices = @transform_0, window_bounds = array<i64: 128, 128>}, {pipeline_mode = #tpu.pipeline_mode<synchronous>, transform_indices = @transform_1, window_bounds = array<i64: 128, 512>}, {pipeline_mode = #tpu.pipeline_mode<synchronous>, transform_indices = @transform_2, window_bounds = array<i64: 2, 1, 512>}, {transform_indices = @transform_3, window_bounds = array<i64: 128, 512>}]} {
    %c0 = arith.constant 0 : index
    %c0_0 = arith.constant 0 : index
    %0 = vector.load %arg1[%c0, %c0_0] : memref<128x128xbf16, #tpu.memory_space<vmem>>, vector<128x128xbf16>
    %c0_1 = arith.constant 0 : index
    %c0_2 = arith.constant 0 : index
    %1 = vector.load %arg2[%c0_1, %c0_2] : memref<128x512xbf16, #tpu.memory_space<vmem>>, vector<128x512xbf16>
    %cst = arith.constant dense<0.000000e+00> : vector<128x512xf32>
    %2 = tpu.matmul %0, %1, %cst {dimension_numbers = #tpu.dot_dimension_numbers<[1], [0], [0], [1], [0, 0, 1, 1], [], []>} : vector<128x128xbf16>, vector<128x512xbf16>, vector<128x512xf32> -> vector<128x512xf32>
    %c0_3 = arith.constant 0 : index
    %c0_4 = arith.constant 0 : index
    %c0_5 = arith.constant 0 : index
    %3 = vector.load %arg3[%c0_3, %c0_4, %c0_5] : memref<2x1x512xf32, #tpu.memory_space<vmem>>, vector<1x1x512xf32>
    %4 = vector.shape_cast %3 : vector<1x1x512xf32> to vector<1x512xf32>
    %5 = vector.broadcast %4 : vector<1x512xf32> to vector<128x512xf32>
    %6 = arith.mulf %2, %5 : vector<128x512xf32>
    %c1 = arith.constant 1 : index
    %c0_6 = arith.constant 0 : index
    %c0_7 = arith.constant 0 : index
    %7 = vector.load %arg3[%c1, %c0_6, %c0_7] : memref<2x1x512xf32, #tpu.memory_space<vmem>>, vector<1x1x512xf32>
    %8 = vector.shape_cast %7 : vector<1x1x512xf32> to vector<1x512xf32>
    %9 = vector.broadcast %8 : vector<1x512xf32> to vector<128x512xf32>
    %10 = arith.addf %6, %9 : vector<128x512xf32>
    %cst_8 = arith.constant 0.000000e+00 : f32
    %11 = vector.broadcast %cst_8 : f32 to vector<128x512xf32>
    %12 = arith.maximumf %10, %11 : vector<128x512xf32>
    %c0_9 = arith.constant 0 : index
    %c0_10 = arith.constant 0 : index
    %13 = vector.load %arg4[%c0_9, %c0_10] : memref<128x512xf32, #tpu.memory_space<vmem>>, vector<128x512xf32>
    tpu.vector_store %arg4[%c0_9, %c0_10], %12 {strides = array<i32>} : memref<128x512xf32, #tpu.memory_space<vmem>>, vector<128x512xf32>,
    return
  }
  func.func @transform_0(%arg0: i32) -> (i32, i32) {
    %c0_i32 = arith.constant 0 : i32
    %c0_i32_0 = arith.constant 0 : i32
    return %arg0, %c0_i32 : i32, i32
  }
  func.func @transform_1(%arg0: i32) -> (i32, i32) {
    %c0_i32 = arith.constant 0 : i32
    %c0_i32_0 = arith.constant 0 : i32
    %c0_i32_1 = arith.constant 0 : i32
    return %c0_i32, %c0_i32_0 : i32, i32
  }
  func.func @transform_2(%arg0: i32) -> (i32, i32, i32) {
    %c0_i32 = arith.constant 0 : i32
    %c0_i32_0 = arith.constant 0 : i32
    %c0_i32_1 = arith.constant 0 : i32
    %c0_i32_2 = arith.constant 0 : i32
    return %c0_i32, %c0_i32_0, %c0_i32_1 : i32, i32, i32
  }
  func.func @transform_3(%arg0: i32) -> (i32, i32) {
    %c0_i32 = arith.constant 0 : i32
    %c0_i32_0 = arith.constant 0 : i32
    return %arg0, %c0_i32 : i32, i32
  }
}

</mosaic_0001>

<llo_original>
// kernel: multiscale_scconv2d.35
$region0: #{multiscale_scconv2d.35}
  #allocation0 [shape = 'u32[]', space=smem, size = 0x4, offset = 0x4, fixed_abs, tag = 'smem constant byte address 0x4 - core index']
  #allocation1 [shape = 'u32[72,128]{1,0:T(1,128)}', space=vmem, size = 0x9000, scoped, tag = 'internal scratch']
  %s0 = inlined_call_operand.vmem [shape: bf16[512,128], index: 0, kind: input, shape index: {}]
  %s1 = inlined_call_operand.vmem [shape: bf16[128,32], index: 1, kind: input, shape index: {}]
  %s2 = inlined_call_operand.vmem [shape: f32[2,1,32], index: 2, kind: input, shape index: {}]
  %s3 = inlined_call_operand.vmem [shape: f32[512,32], index: 3, kind: output, shape index: {}]
  %s4 = sld [smem:[#allocation0]]
  $region45: #{multiscale_scconv2d.35} parent=0
    _
  %s6 = ssub.s32 1, %s4
  %s7 = scalar_select 0, %s6, %s4
  loop: start=0, step=1, limit=4
  $region2: #{multiscale_scconv2d.35} parent=0 // loop_pre_header
    _
  $region3: #{multiscale_scconv2d.35} parent=0 // loop_header
    %s9 = sphi 0, %s13
    %p10 = scmp.ge.s32.totalorder %s9, 4
    %s19 = sphi 0, %s21
    %s22 = sphi 0, %s19
    %s23 = sphi 0, %s22
    %s39 = sphi 0, %s23
    %s43 = sphi 0, %s43
    %s45 = sphi 0, %s43
    %s46 = sphi 0, %s45
    %s60 = sphi 0, %s46
    %s64 = sphi 0, %s64
    %s66 = sphi 0, %s64
    %s67 = sphi 0, %s66
    %s81 = sphi 0, %s67
    %s87 = sphi 0, %s89
    %s90 = sphi 0, %s87
    %s91 = sphi 0, %s90
    %s107 = sphi 0, %s91
  $region4: #{multiscale_scconv2d.35} parent=0 // loop_header_branch
    %12 = sbr.rel (%p10) target = $region8
  $region5: #{multiscale_scconv2d.35} parent=0 // loop_body
    %s14 = ssub.s32 %s9, 1
    %s15 = ssub.s32 %s9, 2
    %s16 = sadd.s32 %s9, 1
    %s17 = ssub.s32 %s9, %s16
    %p18 = scmp.eq.s32.totalorder %s17, 0
    %s20 = sadd.s32 %s19, 1
    %s21 = scalar_select %p18, %s19, %s20
    %p24 = pneg %p18
    %p25 = scmp.eq.s32.totalorder %s9, 1
    %p26 = por %p24, %p25
    %p27 = scmp.ne.s32.totalorder %s19, %s22
    %p28 = scmp.eq.s32.totalorder %s9, 0
    %p29 = por %p27, %p28
    %p30 = scmp.ne.s32.totalorder %s19, %s22
    %p31 = scmp.eq.s32.totalorder %s14, 1
    %p32 = por %p30, %p31
    %p33 = scmp.ne.s32.totalorder %s22, %s23
    %p34 = scmp.eq.s32.totalorder %s14, 0
    %p35 = por %p33, %p34
    %p36 = scmp.ne.s32.totalorder %s22, %s23
    %p37 = scmp.eq.s32.totalorder %s15, 1
    %p38 = por %p36, %p37
    %p40 = scmp.ne.s32.totalorder %s23, %s39
    %p41 = scmp.eq.s32.totalorder %s15, 0
    %p42 = por %p40, %p41
    %s44 = sadd.s32 %s43, 1
    %p47 = scmp.eq.s32.totalorder %s9, 1
    %p48 = scmp.ne.s32.totalorder %s43, %s45
    %p49 = scmp.eq.s32.totalorder %s9, 0
    %p50 = por %p48, %p49
    %p51 = scmp.ne.s32.totalorder %s43, %s45
    %p52 = scmp.eq.s32.totalorder %s14, 1
    %p53 = por %p51, %p52
    %p54 = scmp.ne.s32.totalorder %s45, %s46
    %p55 = scmp.eq.s32.totalorder %s14, 0
    %p56 = por %p54, %p55
    %p57 = scmp.ne.s32.totalorder %s45, %s46
    %p58 = scmp.eq.s32.totalorder %s15, 1
    %p59 = por %p57, %p58
    %p61 = scmp.ne.s32.totalorder %s46, %s60
    %p62 = scmp.eq.s32.totalorder %s15, 0
    %p63 = por %p61, %p62
    %s65 = sadd.s32 %s64, 1
    %p68 = scmp.eq.s32.totalorder %s9, 1
    %p69 = scmp.ne.s32.totalorder %s64, %s66
    %p70 = scmp.eq.s32.totalorder %s9, 0
    %p71 = por %p69, %p70
    %p72 = scmp.ne.s32.totalorder %s64, %s66
    %p73 = scmp.eq.s32.totalorder %s14, 1
    %p74 = por %p72, %p73
    %p75 = scmp.ne.s32.totalorder %s66, %s67
    %p76 = scmp.eq.s32.totalorder %s14, 0
    %p77 = por %p75, %p76
    %p78 = scmp.ne.s32.totalorder %s66, %s67
    %p79 = scmp.eq.s32.totalorder %s15, 1
    %p80 = por %p78, %p79
    %p82 = scmp.ne.s32.totalorder %s67, %s81
    %p83 = scmp.eq.s32.totalorder %s15, 0
    %p84 = por %p82, %p83
    %s85 = ssub.s32 %s9, %s16
    %p86 = scmp.eq.s32.totalorder %s85, 0
    %s88 = sadd.s32 %s87, 1
    %s89 = scalar_select %p86, %s87, %s88
    %p92 = pneg %p86
    %p93 = scmp.eq.s32.totalorder %s9, 1
    %p94 = por %p92, %p93
    %p95 = scmp.ne.s32.totalorder %s87, %s90
    %p96 = scmp.eq.s32.totalorder %s9, 0
    %p97 = por %p95, %p96
    %p98 = scmp.ne.s32.totalorder %s87, %s90
    %p99 = scmp.eq.s32.totalorder %s14, 1
    %p100 = por %p98, %p99
    %p101 = scmp.ne.s32.totalorder %s90, %s91
    %p102 = scmp.eq.s32.totalorder %s14, 0
    %p103 = por %p101, %p102
    %p104 = scmp.ne.s32.totalorder %s90, %s91
    %p105 = scmp.eq.s32.totalorder %s15, 1
    %p106 = por %p104, %p105
    %p108 = scmp.ne.s32.totalorder %s91, %s107
    %p109 = scmp.eq.s32.totalorder %s15, 0
    %p110 = por %p108, %p109
    %p111 = scmp.le.s32.totalorder 1, %s9
    %p112 = scmp.lt.s32.totalorder %s9, 3
    %p113 = pnand %p111, %p112
    %p114 = pneg %p113
    // Predicated region
    $region9: #{multiscale_scconv2d.35} parent=5 // pred_check
      _
    $region10: #{multiscale_scconv2d.35} parent=5 // pred_check_branch
      %116 = sbr.rel (%p113) target = $region12
    $region11: #{multiscale_scconv2d.35} parent=5 // pred_region
      %s117 = ssub.s32 %s9, 1
      // Predicated region
      $region13: #{multiscale_scconv2d.35} parent=11 // pred_check
        %p118 = pneg %p56
      $region14: #{multiscale_scconv2d.35} parent=11 // pred_check_branch
        %120 = sbr.rel (%p118) target = $region16
      $region15: #{multiscale_scconv2d.35} parent=11 // pred_region
        _
      $region16: #{multiscale_scconv2d.35} parent=11 // pred_fallthru
        _
      // Predicated region
      $region17: #{multiscale_scconv2d.35} parent=11 // pred_check
        %p121 = pneg %p77
      $region18: #{multiscale_scconv2d.35} parent=11 // pred_check_branch
        %123 = sbr.rel (%p121) target = $region20
      $region19: #{multiscale_scconv2d.35} parent=11 // pred_region
        _
      $region20: #{multiscale_scconv2d.35} parent=11 // pred_fallthru
        _
    $region12: #{multiscale_scconv2d.35} parent=5 // pred_fallthru
      _
    %p124 = scmp.lt.s32.totalorder %s9, 2
    // Predicated region
    $region21: #{multiscale_scconv2d.35} parent=5 // pred_check
      %p125 = pneg %p124
    $region22: #{multiscale_scconv2d.35} parent=5 // pred_check_branch
      %127 = sbr.rel (%p125) target = $region24
    $region23: #{multiscale_scconv2d.35} parent=5 // pred_region
      // Predicated region
      $region25: #{multiscale_scconv2d.35} parent=23 // pred_check
        %p128 = pneg %p29
      $region26: #{multiscale_scconv2d.35} parent=23 // pred_check_branch
        %130 = sbr.rel (%p128) target = $region28
      $region27: #{multiscale_scconv2d.35} parent=23 // pred_region
        %s131 = smul.u32 32, %s9
        %p132 = scmp.lt.s32.totalorder %s131, 63
        %s133 = scalar_select %p132, %s131, 63
        %s134 = smul.addr %s133, 4
        %s135 = scalar_lea.vmem %s0, %s134
        %s136 = smul.u32 32, %s9
      $region28: #{multiscale_scconv2d.35} parent=23 // pred_fallthru
        _
    $region24: #{multiscale_scconv2d.35} parent=5 // pred_fallthru
      _
    %p137 = scmp.le.s32.totalorder 1, %s9
    %p138 = scmp.lt.s32.totalorder %s9, 3
    %p139 = pnand %p137, %p138
    %p140 = pneg %p139
    // Predicated region
    $region29: #{multiscale_scconv2d.35} parent=5 // pred_check
      _
    $region30: #{multiscale_scconv2d.35} parent=5 // pred_check_branch
      %142 = sbr.rel (%p139) target = $region32
    $region31: #{multiscale_scconv2d.35} parent=5 // pred_region
      %s143 = ssub.s32 %s9, 1
      %s144 = smul.u32 32, %s14
      %p145 = scmp.lt.s32.totalorder %s144, 63
      %s146 = scalar_select %p145, %s144, 63
      %s147 = smul.addr %s146, 4
      %s148 = scalar_lea.vmem %s0, %s147
      %p149 = pneg %p35
      %p150 = pneg %p32
      %p151 = pneg %p56
      %p152 = pneg %p53
      %p153 = pneg %p77
      %p154 = pneg %p74
      %p155 = pneg %p103
      %p156 = pneg %p100
      %s157 = smul.u32 32, %s14
      %p158 = scmp.lt.s32.totalorder %s157, 63
      %s159 = scalar_select %p158, %s157, 63
      %s160 = smul.addr %s159, 8
      %s161 = scalar_lea.vmem %s3, %s160
      %s162 = smul.u32 32, %s14
      %p163 = scmp.lt.s32.totalorder %s162, 63
      %s164 = scalar_select %p163, %s162, 63
      %s165 = smul.addr %s164, 4
      %s166 = scalar_lea.vmem %s0, %s165
      %s167 = smul.u32 32, %s14
      %s168 = smul.u32 32, %s14
      %p169 = scmp.lt.s32.totalorder %s168, 63
      %s170 = scalar_select %p169, %s168, 63
      %s171 = smul.addr %s170, 8
      %s172 = scalar_lea.vmem %s3, %s171
      %s173 = smul.u32 32, %s14
      %v174 = vld [vmem:[%s166] sm:$0xf]
      %v175 = vld [vmem:[%s166 + $0x4] sm:$0xf]
      %v176 = vld [vmem:[%s166 + $0x8] sm:$0xf]
      %v177 = vld [vmem:[%s166 + $0xc] sm:$0xf]
      %v178 = vld [vmem:[%s166 + $0x10] sm:$0xf]
      %v179 = vld [vmem:[%s166 + $0x14] sm:$0xf]
      %v180 = vld [vmem:[%s166 + $0x18] sm:$0xf]
      %v181 = vld [vmem:[%s166 + $0x1c] sm:$0xf]
      %v182 = vld [vmem:[%s166 + $0x20] sm:$0xf]
      %v183 = vld [vmem:[%s166 + $0x24] sm:$0xf]
      %v184 = vld [vmem:[%s166 + $0x28] sm:$0xf]
      %v185 = vld [vmem:[%s166 + $0x2c] sm:$0xf]
      %v186 = vld [vmem:[%s166 + $0x30] sm:$0xf]
      %v187 = vld [vmem:[%s166 + $0x34] sm:$0xf]
      %v188 = vld [vmem:[%s166 + $0x38] sm:$0xf]
      %v189 = vld [vmem:[%s166 + $0x3c] sm:$0xf]
      %v190 = vld [vmem:[%s166 + $0x40] sm:$0xf]
      %v191 = vld [vmem:[%s166 + $0x44] sm:$0xf]
      %v192 = vld [vmem:[%s166 + $0x48] sm:$0xf]
      %v193 = vld [vmem:[%s166 + $0x4c] sm:$0xf]
      %v194 = vld [vmem:[%s166 + $0x50] sm:$0xf]
      %v195 = vld [vmem:[%s166 + $0x54] sm:$0xf]
      %v196 = vld [vmem:[%s166 + $0x58] sm:$0xf]
      %v197 = vld [vmem:[%s166 + $0x5c] sm:$0xf]
      %v198 = vld [vmem:[%s166 + $0x60] sm:$0xf]
      %v199 = vld [vmem:[%s166 + $0x64] sm:$0xf]
      %v200 = vld [vmem:[%s166 + $0x68] sm:$0xf]
      %v201 = vld [vmem:[%s166 + $0x6c] sm:$0xf]
      %v202 = vld [vmem:[%s166 + $0x70] sm:$0xf]
      %v203 = vld [vmem:[%s166 + $0x74] sm:$0xf]
      %v204 = vld [vmem:[%s166 + $0x78] sm:$0xf]
      %v205 = vld [vmem:[%s166 + $0x7c] sm:$0xf]
      %v206 = vld [vmem:[%s1] sm:$0xf]
      %v207 = vld [vmem:[%s1 + $0x4] sm:$0xf]
      %v208 = vld [vmem:[%s1 + $0x8] sm:$0xf]
      %v209 = vld [vmem:[%s1 + $0xc] sm:$0xf]
      %v210 = vld [vmem:[%s1 + $0x10] sm:$0xf]
      %v211 = vld [vmem:[%s1 + $0x14] sm:$0xf]
      %v212 = vld [vmem:[%s1 + $0x18] sm:$0xf]
      %v213 = vld [vmem:[%s1 + $0x1c] sm:$0xf]
      %v214 = vld [vmem:[%s1 + $0x20] sm:$0xf]
      %v215 = vld [vmem:[%s1 + $0x24] sm:$0xf]
      %v216 = vld [vmem:[%s1 + $0x28] sm:$0xf]
      %v217 = vld [vmem:[%s1 + $0x2c] sm:$0xf]
      %v218 = vld [vmem:[%s1 + $0x30] sm:$0xf]
      %v219 = vld [vmem:[%s1 + $0x34] sm:$0xf]
      %v220 = vld [vmem:[%s1 + $0x38] sm:$0xf]
      %v221 = vld [vmem:[%s1 + $0x3c] sm:$0xf]
      %v254 = vunpack.c.l.b16 %v174
      %v255 = vunpack.c.l.b16 %v175
      %v256 = vunpack.c.l.b16 %v176
      %v257 = vunpack.c.l.b16 %v177
      %v258 = vunpack.c.l.b16 %v178
      %v259 = vunpack.c.l.b16 %v179
      %v260 = vunpack.c.l.b16 %v180
      %v261 = vunpack.c.l.b16 %v181
      %v262 = vunpack.c.l.b16 %v182
      %v263 = vunpack.c.l.b16 %v183
      %v264 = vunpack.c.l.b16 %v184
      %v265 = vunpack.c.l.b16 %v185
      %v266 = vunpack.c.l.b16 %v186
      %v267 = vunpack.c.l.b16 %v187
      %v268 = vunpack.c.l.b16 %v188
      %v269 = vunpack.c.l.b16 %v189
      %v270 = vunpack.c.l.b16 %v190
      %v271 = vunpack.c.l.b16 %v191
      %v272 = vunpack.c.l.b16 %v192
      %v273 = vunpack.c.l.b16 %v193
      %v274 = vunpack.c.l.b16 %v194
      %v275 = vunpack.c.l.b16 %v195
      %v276 = vunpack.c.l.b16 %v196
      %v277 = vunpack.c.l.b16 %v197
      %v278 = vunpack.c.l.b16 %v198
      %v279 = vunpack.c.l.b16 %v199
      %v280 = vunpack.c.l.b16 %v200
      %v281 = vunpack.c.l.b16 %v201
      %v282 = vunpack.c.l.b16 %v202
      %v283 = vunpack.c.l.b16 %v203
      %v284 = vunpack.c.l.b16 %v204
      %v285 = vunpack.c.l.b16 %v205
      %v286 = vpack.c.b16 %v255, %v254
      %v287 = vpack.c.b16 %v257, %v256
      %v288 = vpack.c.b16 %v259, %v258
      %v289 = vpack.c.b16 %v261, %v260
      %v290 = vpack.c.b16 %v263, %v262
      %v291 = vpack.c.b16 %v265, %v264
      %v292 = vpack.c.b16 %v267, %v266
      %v293 = vpack.c.b16 %v269, %v268
      %v294 = vpack.c.b16 %v271, %v270
      %v295 = vpack.c.b16 %v273, %v272
      %v296 = vpack.c.b16 %v275, %v274
      %v297 = vpack.c.b16 %v277, %v276
      %v298 = vpack.c.b16 %v279, %v278
      %v299 = vpack.c.b16 %v281, %v280
      %v300 = vpack.c.b16 %v283, %v282
      %v301 = vpack.c.b16 %v285, %v284
      %v334 = vunpack.c.l.b16 %v206
      %v335 = vunpack.c.l.b16 %v207
      %v336 = vunpack.c.l.b16 %v208
      %v337 = vunpack.c.l.b16 %v209
      %v338 = vunpack.c.l.b16 %v210
      %v339 = vunpack.c.l.b16 %v211
      %v340 = vunpack.c.l.b16 %v212
      %v341 = vunpack.c.l.b16 %v213
      %v342 = vunpack.c.l.b16 %v214
      %v343 = vunpack.c.l.b16 %v215
      %v344 = vunpack.c.l.b16 %v216
      %v345 = vunpack.c.l.b16 %v217
      %v346 = vunpack.c.l.b16 %v218
      %v347 = vunpack.c.l.b16 %v219
      %v348 = vunpack.c.l.b16 %v220
      %v349 = vunpack.c.l.b16 %v221
      %v350 = vpack.c.b16 %v335, %v334
      %v351 = vpack.c.b16 %v337, %v336
      %v352 = vpack.c.b16 %v339, %v338
      %v353 = vpack.c.b16 %v341, %v340
      %v354 = vpack.c.b16 %v343, %v342
      %v355 = vpack.c.b16 %v345, %v344
      %v356 = vpack.c.b16 %v347, %v346
      %v357 = vpack.c.b16 %v349, %v348
      %366 = vmatpush.bf16.msra.mxu0 %v357
      %367 = vmatpush.bf16.msra.mxu0 %v356
      %368 = vmatpush.bf16.msra.mxu0 %v355
      %369 = vmatpush.bf16.msra.mxu0 %v354
      %370 = vmatpush.bf16.msra.mxu0 %v353
      %371 = vmatpush.bf16.msra.mxu0 %v352
      %372 = vmatpush.bf16.msra.mxu0 %v351
      %373 = vmatpush.bf16.msra.mxu0 %v350
      %374 = vmatmul.bf16.gmra.mxu0 %v286
      %v375 = vpop.f32.mrf.mxu0
      %v376 = vadd.f32 0.0, %v375
      %v377 = vpop.f32.mrf.mxu0
      %v378 = vadd.f32 0.0, %v377
      %379 = vmatmul.bf16.gmra.mxu0 %v287
      %v380 = vpop.f32.mrf.mxu0
      %v381 = vadd.f32 0.0, %v380
      %v382 = vpop.f32.mrf.mxu0
      %v383 = vadd.f32 0.0, %v382
      %384 = vmatmul.bf16.gmra.mxu0 %v288
      %v385 = vpop.f32.mrf.mxu0
      %v386 = vadd.f32 0.0, %v385
      %v387 = vpop.f32.mrf.mxu0
      %v388 = vadd.f32 0.0, %v387
      %389 = vmatmul.bf16.gmra.mxu0 %v289
      %v390 = vpop.f32.mrf.mxu0
      %v391 = vadd.f32 0.0, %v390
      %v392 = vpop.f32.mrf.mxu0
      %v393 = vadd.f32 0.0, %v392
      %394 = vmatmul.bf16.gmra.mxu0 %v290
      %v395 = vpop.f32.mrf.mxu0
      %v396 = vadd.f32 0.0, %v395
      %v397 = vpop.f32.mrf.mxu0
      %v398 = vadd.f32 0.0, %v397
      %399 = vmatmul.bf16.gmra.mxu0 %v291
      %v400 = vpop.f32.mrf.mxu0
      %v401 = vadd.f32 0.0, %v400
      %v402 = vpop.f32.mrf.mxu0
      %v403 = vadd.f32 0.0, %v402
      %404 = vmatmul.bf16.gmra.mxu0 %v292
      %v405 = vpop.f32.mrf.mxu0
      %v406 = vadd.f32 0.0, %v405
      %v407 = vpop.f32.mrf.mxu0
      %v408 = vadd.f32 0.0, %v407
      %409 = vmatmul.bf16.gmra.mxu0 %v293
      %v410 = vpop.f32.mrf.mxu0
      %v411 = vadd.f32 0.0, %v410
      %v412 = vpop.f32.mrf.mxu0
      %v413 = vadd.f32 0.0, %v412
      %414 = vmatmul.bf16.gmra.mxu0 %v294
      %v415 = vpop.f32.mrf.mxu0
      %v416 = vadd.f32 0.0, %v415
      %v417 = vpop.f32.mrf.mxu0
      %v418 = vadd.f32 0.0, %v417
      %419 = vmatmul.bf16.gmra.mxu0 %v295
      %v420 = vpop.f32.mrf.mxu0
      %v421 = vadd.f32 0.0, %v420
      %v422 = vpop.f32.mrf.mxu0
      %v423 = vadd.f32 0.0, %v422
      %424 = vmatmul.bf16.gmra.mxu0 %v296
      %v425 = vpop.f32.mrf.mxu0
      %v426 = vadd.f32 0.0, %v425
      %v427 = vpop.f32.mrf.mxu0
      %v428 = vadd.f32 0.0, %v427
      %429 = vmatmul.bf16.gmra.mxu0 %v297
      %v430 = vpop.f32.mrf.mxu0
      %v431 = vadd.f32 0.0, %v430
      %v432 = vpop.f32.mrf.mxu0
      %v433 = vadd.f32 0.0, %v432
      %434 = vmatmul.bf16.gmra.mxu0 %v298
      %v435 = vpop.f32.mrf.mxu0
      %v436 = vadd.f32 0.0, %v435
      %v437 = vpop.f32.mrf.mxu0
      %v438 = vadd.f32 0.0, %v437
      %439 = vmatmul.bf16.gmra.mxu0 %v299
      %v440 = vpop.f32.mrf.mxu0
      %v441 = vadd.f32 0.0, %v440
      %v442 = vpop.f32.mrf.mxu0
      %v443 = vadd.f32 0.0, %v442
      %444 = vmatmul.bf16.gmra.mxu0 %v300
      %v445 = vpop.f32.mrf.mxu0
      %v446 = vadd.f32 0.0, %v445
      %v447 = vpop.f32.mrf.mxu0
      %v448 = vadd.f32 0.0, %v447
      %449 = vmatmul.bf16.gmra.mxu0 %v301
      %v450 = vpop.f32.mrf.mxu0
      %v451 = vadd.f32 0.0, %v450
      %v452 = vpop.f32.mrf.mxu0
      %v453 = vadd.f32 0.0, %v452
      %454 = vdwg.mxu0
      %v455 = vld [vmem:[%s2] sm:$0x1]
      %v457 = vperm.slane %v455, 0
      %v459 = vmul.f32 %v376, %v457
      %v460 = vmul.f32 %v378, %v457
      %v461 = vmul.f32 %v381, %v457
      %v462 = vmul.f32 %v383, %v457
      %v463 = vmul.f32 %v386, %v457
      %v464 = vmul.f32 %v388, %v457
      %v465 = vmul.f32 %v391, %v457
      %v466 = vmul.f32 %v393, %v457
      %v467 = vmul.f32 %v396, %v457
      %v468 = vmul.f32 %v398, %v457
      %v469 = vmul.f32 %v401, %v457
      %v470 = vmul.f32 %v403, %v457
      %v471 = vmul.f32 %v406, %v457
      %v472 = vmul.f32 %v408, %v457
      %v473 = vmul.f32 %v411, %v457
      %v474 = vmul.f32 %v413, %v457
      %v475 = vmul.f32 %v416, %v457
      %v476 = vmul.f32 %v418, %v457
      %v477 = vmul.f32 %v421, %v457
      %v478 = vmul.f32 %v423, %v457
      %v479 = vmul.f32 %v426, %v457
      %v480 = vmul.f32 %v428, %v457
      %v481 = vmul.f32 %v431, %v457
      %v482 = vmul.f32 %v433, %v457
      %v483 = vmul.f32 %v436, %v457
      %v484 = vmul.f32 %v438, %v457
      %v485 = vmul.f32 %v441, %v457
      %v486 = vmul.f32 %v443, %v457
      %v487 = vmul.f32 %v446, %v457
      %v488 = vmul.f32 %v448, %v457
      %v489 = vmul.f32 %v451, %v457
      %v490 = vmul.f32 %v453, %v457
      %s491 = scalar_lea.vmem %s2, 1
      %v492 = vld [vmem:[%s491] sm:$0x1]
      %v494 = vperm.slane %v492, 0
      %v496 = vadd.f32 %v459, %v494
      %v497 = vadd.f32 %v460, %v494
      %v498 = vadd.f32 %v461, %v494
      %v499 = vadd.f32 %v462, %v494
      %v500 = vadd.f32 %v463, %v494
      %v501 = vadd.f32 %v464, %v494
      %v502 = vadd.f32 %v465, %v494
      %v503 = vadd.f32 %v466, %v494
      %v504 = vadd.f32 %v467, %v494
      %v505 = vadd.f32 %v468, %v494
      %v506 = vadd.f32 %v469, %v494
      %v507 = vadd.f32 %v470, %v494
      %v508 = vadd.f32 %v471, %v494
      %v509 = vadd.f32 %v472, %v494
      %v510 = vadd.f32 %v473, %v494
      %v511 = vadd.f32 %v474, %v494
      %v512 = vadd.f32 %v475, %v494
      %v513 = vadd.f32 %v476, %v494
      %v514 = vadd.f32 %v477, %v494
      %v515 = vadd.f32 %v478, %v494
      %v516 = vadd.f32 %v479, %v494
      %v517 = vadd.f32 %v480, %v494
      %v518 = vadd.f32 %v481, %v494
      %v519 = vadd.f32 %v482, %v494
      %v520 = vadd.f32 %v483, %v494
      %v521 = vadd.f32 %v484, %v494
      %v522 = vadd.f32 %v485, %v494
      %v523 = vadd.f32 %v486, %v494
      %v524 = vadd.f32 %v487, %v494
      %v525 = vadd.f32 %v488, %v494
      %v526 = vadd.f32 %v489, %v494
      %v527 = vadd.f32 %v490, %v494
      %v528 = vmax.f32 %v496, 0.0
      %v529 = vmax.f32 %v497, 0.0
      %v530 = vmax.f32 %v498, 0.0
      %v531 = vmax.f32 %v499, 0.0
      %v532 = vmax.f32 %v500, 0.0
      %v533 = vmax.f32 %v501, 0.0
      %v534 = vmax.f32 %v502, 0.0
      %v535 = vmax.f32 %v503, 0.0
      %v536 = vmax.f32 %v504, 0.0
      %v537 = vmax.f32 %v505, 0.0
      %v538 = vmax.f32 %v506, 0.0
      %v539 = vmax.f32 %v507, 0.0
      %v540 = vmax.f32 %v508, 0.0
      %v541 = vmax.f32 %v509, 0.0
      %v542 = vmax.f32 %v510, 0.0
      %v543 = vmax.f32 %v511, 0.0
      %v544 = vmax.f32 %v512, 0.0
      %v545 = vmax.f32 %v513, 0.0
      %v546 = vmax.f32 %v514, 0.0
      %v547 = vmax.f32 %v515, 0.0
      %v548 = vmax.f32 %v516, 0.0
      %v549 = vmax.f32 %v517, 0.0
      %v550 = vmax.f32 %v518, 0.0
      %v551 = vmax.f32 %v519, 0.0
      %v552 = vmax.f32 %v520, 0.0
      %v553 = vmax.f32 %v521, 0.0
      %v554 = vmax.f32 %v522, 0.0
      %v555 = vmax.f32 %v523, 0.0
      %v556 = vmax.f32 %v524, 0.0
      %v557 = vmax.f32 %v525, 0.0
      %v558 = vmax.f32 %v526, 0.0
      %v559 = vmax.f32 %v527, 0.0
      %vm560 = vcmask 261120
      %561 = vst.msk [vmem:[%s172] sm:$0xff] %vm560, %v528
      %562 = vst.msk [vmem:[%s172 + $0x8] sm:$0xff] %vm560, %v529
      %563 = vst.msk [vmem:[%s172 + $0x10] sm:$0xff] %vm560, %v530
      %564 = vst.msk [vmem:[%s172 + $0x18] sm:$0xff] %vm560, %v531
      %565 = vst.msk [vmem:[%s172 + $0x20] sm:$0xff] %vm560, %v532
      %566 = vst.msk [vmem:[%s172 + $0x28] sm:$0xff] %vm560, %v533
      %567 = vst.msk [vmem:[%s172 + $0x30] sm:$0xff] %vm560, %v534
      %568 = vst.msk [vmem:[%s172 + $0x38] sm:$0xff] %vm560, %v535
      %569 = vst.msk [vmem:[%s172 + $0x40] sm:$0xff] %vm560, %v536
      %570 = vst.msk [vmem:[%s172 + $0x48] sm:$0xff] %vm560, %v537
      %571 = vst.msk [vmem:[%s172 + $0x50] sm:$0xff] %vm560, %v538
      %572 = vst.msk [vmem:[%s172 + $0x58] sm:$0xff] %vm560, %v539
      %573 = vst.msk [vmem:[%s172 + $0x60] sm:$0xff] %vm560, %v540
      %574 = vst.msk [vmem:[%s172 + $0x68] sm:$0xff] %vm560, %v541
      %575 = vst.msk [vmem:[%s172 + $0x70] sm:$0xff] %vm560, %v542
      %576 = vst.msk [vmem:[%s172 + $0x78] sm:$0xff] %vm560, %v543
      %577 = vst.msk [vmem:[%s172 + $0x80] sm:$0xff] %vm560, %v544
      %578 = vst.msk [vmem:[%s172 + $0x88] sm:$0xff] %vm560, %v545
      %579 = vst.msk [vmem:[%s172 + $0x90] sm:$0xff] %vm560, %v546
      %580 = vst.msk [vmem:[%s172 + $0x98] sm:$0xff] %vm560, %v547
      %581 = vst.msk [vmem:[%s172 + $0xa0] sm:$0xff] %vm560, %v548
      %582 = vst.msk [vmem:[%s172 + $0xa8] sm:$0xff] %vm560, %v549
      %583 = vst.msk [vmem:[%s172 + $0xb0] sm:$0xff] %vm560, %v550
      %584 = vst.msk [vmem:[%s172 + $0xb8] sm:$0xff] %vm560, %v551
      %585 = vst.msk [vmem:[%s172 + $0xc0] sm:$0xff] %vm560, %v552
      %586 = vst.msk [vmem:[%s172 + $0xc8] sm:$0xff] %vm560, %v553
      %587 = vst.msk [vmem:[%s172 + $0xd0] sm:$0xff] %vm560, %v554
      %588 = vst.msk [vmem:[%s172 + $0xd8] sm:$0xff] %vm560, %v555
      %589 = vst.msk [vmem:[%s172 + $0xe0] sm:$0xff] %vm560, %v556
      %590 = vst.msk [vmem:[%s172 + $0xe8] sm:$0xff] %vm560, %v557
      %591 = vst.msk [vmem:[%s172 + $0xf0] sm:$0xff] %vm560, %v558
      %592 = vst.msk [vmem:[%s172 + $0xf8] sm:$0xff] %vm560, %v559
      %s593 = smul.u32 32, %s14
      %p594 = scmp.lt.s32.totalorder %s593, 63
      %s595 = scalar_select %p594, %s593, 63
      %s596 = smul.addr %s595, 8
      %s597 = scalar_lea.vmem %s3, %s596
      // Predicated region
      $region33: #{multiscale_scconv2d.35} parent=31 // pred_check
        %p598 = pneg %p100
      $region34: #{multiscale_scconv2d.35} parent=31 // pred_check_branch
        %600 = sbr.rel (%p598) target = $region36
      $region35: #{multiscale_scconv2d.35} parent=31 // pred_region
        %s601 = smul.u32 32, %s14
      $region36: #{multiscale_scconv2d.35} parent=31 // pred_fallthru
        _
    $region32: #{multiscale_scconv2d.35} parent=5 // pred_fallthru
      _
    %p602 = scmp.le.s32.totalorder 2, %s9
    // Predicated region
    $region37: #{multiscale_scconv2d.35} parent=5 // pred_check
      %p603 = pneg %p602
    $region38: #{multiscale_scconv2d.35} parent=5 // pred_check_branch
      %605 = sbr.rel (%p603) target = $region40
    $region39: #{multiscale_scconv2d.35} parent=5 // pred_region
      %s606 = ssub.s32 %s9, 2
      // Predicated region
      $region41: #{multiscale_scconv2d.35} parent=39 // pred_check
        %p607 = pneg %p106
      $region42: #{multiscale_scconv2d.35} parent=39 // pred_check_branch
        %609 = sbr.rel (%p607) target = $region44
      $region43: #{multiscale_scconv2d.35} parent=39 // pred_region
        %s610 = smul.u32 32, %s15
        %p611 = scmp.lt.s32.totalorder %s610, 63
        %s612 = scalar_select %p611, %s610, 63
        %s613 = smul.addr %s612, 8
        %s614 = scalar_lea.vmem %s3, %s613
      $region44: #{multiscale_scconv2d.35} parent=39 // pred_fallthru
        _
    $region40: #{multiscale_scconv2d.35} parent=5 // pred_fallthru
      _
  $region6: #{multiscale_scconv2d.35} parent=0 // loop_footer
    %s13 = sadd.s32 1, %s9
  $region7: #{multiscale_scconv2d.35} parent=0 // loop_footer_branch
    %8 = sbr.rel target = $region3
  $region8: #{multiscale_scconv2d.35} parent=0 // loop_exit
    _

// kernel: multiscale_scconv2d.34
$region0: #{multiscale_scconv2d.34}
  #allocation0 [shape = 'u32[]', space=smem, size = 0x4, offset = 0x4, fixed_abs, tag = 'smem constant byte address 0x4 - core index']
  #allocation1 [shape = 'u32[72,128]{1,0:T(1,128)}', space=vmem, size = 0x9000, scoped, tag = 'internal scratch']
  %s0 = inlined_call_operand.vmem [shape: bf16[512,288], index: 0, kind: input, shape index: {}]
  %s1 = inlined_call_operand.vmem [shape: bf16[288,128], index: 1, kind: input, shape index: {}]
  %s2 = inlined_call_operand.vmem [shape: f32[2,1,128], index: 2, kind: input, shape index: {}]
  %s3 = inlined_call_operand.vmem [shape: f32[512,128], index: 3, kind: output, shape index: {}]
  %s4 = sld [smem:[#allocation0]]
  $region45: #{multiscale_scconv2d.34} parent=0
    _
  %s6 = ssub.s32 1, %s4
  %s7 = scalar_select 0, %s6, %s4
  loop: start=0, step=1, limit=4
  $region2: #{multiscale_scconv2d.34} parent=0 // loop_pre_header
    _
  $region3: #{multiscale_scconv2d.34} parent=0 // loop_header
    %s9 = sphi 0, %s13
    %p10 = scmp.ge.s32.totalorder %s9, 4
    %s19 = sphi 0, %s21
    %s22 = sphi 0, %s19
    %s23 = sphi 0, %s22
    %s39 = sphi 0, %s23
    %s43 = sphi 0, %s43
    %s45 = sphi 0, %s43
    %s46 = sphi 0, %s45
    %s60 = sphi 0, %s46
    %s64 = sphi 0, %s64
    %s66 = sphi 0, %s64
    %s67 = sphi 0, %s66
    %s81 = sphi 0, %s67
    %s87 = sphi 0, %s89
    %s90 = sphi 0, %s87
    %s91 = sphi 0, %s90
    %s107 = sphi 0, %s91
  $region4: #{multiscale_scconv2d.34} parent=0 // loop_header_branch
    %12 = sbr.rel (%p10) target = $region8
  $region5: #{multiscale_scconv2d.34} parent=0 // loop_body
    %s14 = ssub.s32 %s9, 1
    %s15 = ssub.s32 %s9, 2
    %s16 = sadd.s32 %s9, 1
    %s17 = ssub.s32 %s9, %s16
    %p18 = scmp.eq.s32.totalorder %s17, 0
    %s20 = sadd.s32 %s19, 1
    %s21 = scalar_select %p18, %s19, %s20
    %p24 = pneg %p18
    %p25 = scmp.eq.s32.totalorder %s9, 1
    %p26 = por %p24, %p25
    %p27 = scmp.ne.s32.totalorder %s19, %s22
    %p28 = scmp.eq.s32.totalorder %s9, 0
    %p29 = por %p27, %p28
    %p30 = scmp.ne.s32.totalorder %s19, %s22
    %p31 = scmp.eq.s32.totalorder %s14, 1
    %p32 = por %p30, %p31
    %p33 = scmp.ne.s32.totalorder %s22, %s23
    %p34 = scmp.eq.s32.totalorder %s14, 0
    %p35 = por %p33, %p34
    %p36 = scmp.ne.s32.totalorder %s22, %s23
    %p37 = scmp.eq.s32.totalorder %s15, 1
    %p38 = por %p36, %p37
    %p40 = scmp.ne.s32.totalorder %s23, %s39
    %p41 = scmp.eq.s32.totalorder %s15, 0
    %p42 = por %p40, %p41
    %s44 = sadd.s32 %s43, 1
    %p47 = scmp.eq.s32.totalorder %s9, 1
    %p48 = scmp.ne.s32.totalorder %s43, %s45
    %p49 = scmp.eq.s32.totalorder %s9, 0
    %p50 = por %p48, %p49
    %p51 = scmp.ne.s32.totalorder %s43, %s45
    %p52 = scmp.eq.s32.totalorder %s14, 1
    %p53 = por %p51, %p52
    %p54 = scmp.ne.s32.totalorder %s45, %s46
    %p55 = scmp.eq.s32.totalorder %s14, 0
    %p56 = por %p54, %p55
    %p57 = scmp.ne.s32.totalorder %s45, %s46
    %p58 = scmp.eq.s32.totalorder %s15, 1
    %p59 = por %p57, %p58
    %p61 = scmp.ne.s32.totalorder %s46, %s60
    %p62 = scmp.eq.s32.totalorder %s15, 0
    %p63 = por %p61, %p62
    %s65 = sadd.s32 %s64, 1
    %p68 = scmp.eq.s32.totalorder %s9, 1
    %p69 = scmp.ne.s32.totalorder %s64, %s66
    %p70 = scmp.eq.s32.totalorder %s9, 0
    %p71 = por %p69, %p70
    %p72 = scmp.ne.s32.totalorder %s64, %s66
    %p73 = scmp.eq.s32.totalorder %s14, 1
    %p74 = por %p72, %p73
    %p75 = scmp.ne.s32.totalorder %s66, %s67
    %p76 = scmp.eq.s32.totalorder %s14, 0
    %p77 = por %p75, %p76
    %p78 = scmp.ne.s32.totalorder %s66, %s67
    %p79 = scmp.eq.s32.totalorder %s15, 1
    %p80 = por %p78, %p79
    %p82 = scmp.ne.s32.totalorder %s67, %s81
    %p83 = scmp.eq.s32.totalorder %s15, 0
    %p84 = por %p82, %p83
    %s85 = ssub.s32 %s9, %s16
    %p86 = scmp.eq.s32.totalorder %s85, 0
    %s88 = sadd.s32 %s87, 1
    %s89 = scalar_select %p86, %s87, %s88
    %p92 = pneg %p86
    %p93 = scmp.eq.s32.totalorder %s9, 1
    %p94 = por %p92, %p93
    %p95 = scmp.ne.s32.totalorder %s87, %s90
    %p96 = scmp.eq.s32.totalorder %s9, 0
    %p97 = por %p95, %p96
    %p98 = scmp.ne.s32.totalorder %s87, %s90
    %p99 = scmp.eq.s32.totalorder %s14, 1
    %p100 = por %p98, %p99
    %p101 = scmp.ne.s32.totalorder %s90, %s91
    %p102 = scmp.eq.s32.totalorder %s14, 0
    %p103 = por %p101, %p102
    %p104 = scmp.ne.s32.totalorder %s90, %s91
    %p105 = scmp.eq.s32.totalorder %s15, 1
    %p106 = por %p104, %p105
    %p108 = scmp.ne.s32.totalorder %s91, %s107
    %p109 = scmp.eq.s32.totalorder %s15, 0
    %p110 = por %p108, %p109
    %p111 = scmp.le.s32.totalorder 1, %s9
    %p112 = scmp.lt.s32.totalorder %s9, 3
    %p113 = pnand %p111, %p112
    %p114 = pneg %p113
    // Predicated region
    $region9: #{multiscale_scconv2d.34} parent=5 // pred_check
      _
    $region10: #{multiscale_scconv2d.34} parent=5 // pred_check_branch
      %116 = sbr.rel (%p113) target = $region12
    $region11: #{multiscale_scconv2d.34} parent=5 // pred_region
      %s117 = ssub.s32 %s9, 1
      // Predicated region
      $region13: #{multiscale_scconv2d.34} parent=11 // pred_check
        %p118 = pneg %p56
      $region14: #{multiscale_scconv2d.34} parent=11 // pred_check_branch
        %120 = sbr.rel (%p118) target = $region16
      $region15: #{multiscale_scconv2d.34} parent=11 // pred_region
        _
      $region16: #{multiscale_scconv2d.34} parent=11 // pred_fallthru
        _
      // Predicated region
      $region17: #{multiscale_scconv2d.34} parent=11 // pred_check
        %p121 = pneg %p77
      $region18: #{multiscale_scconv2d.34} parent=11 // pred_check_branch
        %123 = sbr.rel (%p121) target = $region20
      $region19: #{multiscale_scconv2d.34} parent=11 // pred_region
        _
      $region20: #{multiscale_scconv2d.34} parent=11 // pred_fallthru
        _
    $region12: #{multiscale_scconv2d.34} parent=5 // pred_fallthru
      _
    %p124 = scmp.lt.s32.totalorder %s9, 2
    // Predicated region
    $region21: #{multiscale_scconv2d.34} parent=5 // pred_check
      %p125 = pneg %p124
    $region22: #{multiscale_scconv2d.34} parent=5 // pred_check_branch
      %127 = sbr.rel (%p125) target = $region24
    $region23: #{multiscale_scconv2d.34} parent=5 // pred_region
      // Predicated region
      $region25: #{multiscale_scconv2d.34} parent=23 // pred_check
        %p128 = pneg %p29
      $region26: #{multiscale_scconv2d.34} parent=23 // pred_check_branch
        %130 = sbr.rel (%p128) target = $region28
      $region27: #{multiscale_scconv2d.34} parent=23 // pred_region
        %s131 = smul.u32 32, %s9
        %p132 = scmp.lt.s32.totalorder %s131, 63
        %s133 = scalar_select %p132, %s131, 63
        %s134 = smul.addr %s133, 3
        %s135 = smul.addr %s134, 4
        %s136 = scalar_lea.vmem %s0, %s135
        %s137 = smul.u32 32, %s9
      $region28: #{multiscale_scconv2d.34} parent=23 // pred_fallthru
        _
    $region24: #{multiscale_scconv2d.34} parent=5 // pred_fallthru
      _
    %p138 = scmp.le.s32.totalorder 1, %s9
    %p139 = scmp.lt.s32.totalorder %s9, 3
    %p140 = pnand %p138, %p139
    %p141 = pneg %p140
    // Predicated region
    $region29: #{multiscale_scconv2d.34} parent=5 // pred_check
      _
    $region30: #{multiscale_scconv2d.34} parent=5 // pred_check_branch
      %143 = sbr.rel (%p140) target = $region32
    $region31: #{multiscale_scconv2d.34} parent=5 // pred_region
      %s144 = ssub.s32 %s9, 1
      %s145 = smul.u32 32, %s14
      %p146 = scmp.lt.s32.totalorder %s145, 63
      %s147 = scalar_select %p146, %s145, 63
      %s148 = smul.addr %s147, 3
      %s149 = smul.addr %s148, 4
      %s150 = scalar_lea.vmem %s0, %s149
      %p151 = pneg %p35
      %p152 = pneg %p32
      %p153 = pneg %p56
      %p154 = pneg %p53
      %p155 = pneg %p77
      %p156 = pneg %p74
      %p157 = pneg %p103
      %p158 = pneg %p100
      %s159 = smul.u32 32, %s14
      %p160 = scmp.lt.s32.totalorder %s159, 63
      %s161 = scalar_select %p160, %s159, 63
      %s162 = smul.addr %s161, 8
      %s163 = scalar_lea.vmem %s3, %s162
      %s164 = smul.u32 32, %s14
      %p165 = scmp.lt.s32.totalorder %s164, 63
      %s166 = scalar_select %p165, %s164, 63
      %s167 = smul.addr %s166, 3
      %s168 = smul.addr %s167, 4
      %s169 = scalar_lea.vmem %s0, %s168
      %s170 = smul.u32 32, %s14
      %s171 = smul.u32 32, %s14
      %p172 = scmp.lt.s32.totalorder %s171, 63
      %s173 = scalar_select %p172, %s171, 63
      %s174 = smul.addr %s173, 8
      %s175 = scalar_lea.vmem %s3, %s174
      %s176 = smul.u32 32, %s14
      %v178 = vld [vmem:[%s169] sm:$0xff]
      %v179 = vld [vmem:[%s169 + $0x8] sm:$0xf]
      %v180 = vld [vmem:[%s169 + $0xc] sm:$0xff]
      %v181 = vld [vmem:[%s169 + $0x14] sm:$0xf]
      %v182 = vld [vmem:[%s169 + $0x18] sm:$0xff]
      %v183 = vld [vmem:[%s169 + $0x20] sm:$0xf]
      %v184 = vld [vmem:[%s169 + $0x24] sm:$0xff]
      %v185 = vld [vmem:[%s169 + $0x2c] sm:$0xf]
      %v186 = vld [vmem:[%s169 + $0x30] sm:$0xff]
      %v187 = vld [vmem:[%s169 + $0x38] sm:$0xf]
      %v188 = vld [vmem:[%s169 + $0x3c] sm:$0xff]
      %v189 = vld [vmem:[%s169 + $0x44] sm:$0xf]
      %v190 = vld [vmem:[%s169 + $0x48] sm:$0xff]
      %v191 = vld [vmem:[%s169 + $0x50] sm:$0xf]
      %v192 = vld [vmem:[%s169 + $0x54] sm:$0xff]
      %v193 = vld [vmem:[%s169 + $0x5c] sm:$0xf]
      %v194 = vld [vmem:[%s169 + $0x60] sm:$0xff]
      %v195 = vld [vmem:[%s169 + $0x68] sm:$0xf]
      %v196 = vld [vmem:[%s169 + $0x6c] sm:$0xff]
      %v197 = vld [vmem:[%s169 + $0x74] sm:$0xf]
      %v198 = vld [vmem:[%s169 + $0x78] sm:$0xff]
      %v199 = vld [vmem:[%s169 + $0x80] sm:$0xf]
      %v200 = vld [vmem:[%s169 + $0x84] sm:$0xff]
      %v201 = vld [vmem:[%s169 + $0x8c] sm:$0xf]
      %v202 = vld [vmem:[%s169 + $0x90] sm:$0xff]
      %v203 = vld [vmem:[%s169 + $0x98] sm:$0xf]
      %v204 = vld [vmem:[%s169 + $0x9c] sm:$0xff]
      %v205 = vld [vmem:[%s169 + $0xa4] sm:$0xf]
      %v206 = vld [vmem:[%s169 + $0xa8] sm:$0xff]
      %v207 = vld [vmem:[%s169 + $0xb0] sm:$0xf]
      %v208 = vld [vmem:[%s169 + $0xb4] sm:$0xff]
      %v209 = vld [vmem:[%s169 + $0xbc] sm:$0xf]
      %v210 = vld [vmem:[%s169 + $0xc0] sm:$0xff]
      %v211 = vld [vmem:[%s169 + $0xc8] sm:$0xf]
      %v212 = vld [vmem:[%s169 + $0xcc] sm:$0xff]
      %v213 = vld [vmem:[%s169 + $0xd4] sm:$0xf]
      %v214 = vld [vmem:[%s169 + $0xd8] sm:$0xff]
      %v215 = vld [vmem:[%s169 + $0xe0] sm:$0xf]
      %v216 = vld [vmem:[%s169 + $0xe4] sm:$0xff]
      %v217 = vld [vmem:[%s169 + $0xec] sm:$0xf]
      %v218 = vld [vmem:[%s169 + $0xf0] sm:$0xff]
      %v219 = vld [vmem:[%s169 + $0xf8] sm:$0xf]
      %v220 = vld [vmem:[%s169 + $0xfc] sm:$0xff]
      %v221 = vld [vmem:[%s169 + $0x104] sm:$0xf]
      %v222 = vld [vmem:[%s169 + $0x108] sm:$0xff]
      %v223 = vld [vmem:[%s169 + $0x110] sm:$0xf]
      %v224 = vld [vmem:[%s169 + $0x114] sm:$0xff]
      %v225 = vld [vmem:[%s169 + $0x11c] sm:$0xf]
      %v226 = vld [vmem:[%s169 + $0x120] sm:$0xff]
      %v227 = vld [vmem:[%s169 + $0x128] sm:$0xf]
      %v228 = vld [vmem:[%s169 + $0x12c] sm:$0xff]
      %v229 = vld [vmem:[%s169 + $0x134] sm:$0xf]
      %v230 = vld [vmem:[%s169 + $0x138] sm:$0xff]
      %v231 = vld [vmem:[%s169 + $0x140] sm:$0xf]
      %v232 = vld [vmem:[%s169 + $0x144] sm:$0xff]
      %v233 = vld [vmem:[%s169 + $0x14c] sm:$0xf]
      %v234 = vld [vmem:[%s169 + $0x150] sm:$0xff]
      %v235 = vld [vmem:[%s169 + $0x158] sm:$0xf]
      %v236 = vld [vmem:[%s169 + $0x15c] sm:$0xff]
      %v237 = vld [vmem:[%s169 + $0x164] sm:$0xf]
      %v238 = vld [vmem:[%s169 + $0x168] sm:$0xff]
      %v239 = vld [vmem:[%s169 + $0x170] sm:$0xf]
      %v240 = vld [vmem:[%s169 + $0x174] sm:$0xff]
      %v241 = vld [vmem:[%s169 + $0x17c] sm:$0xf]
      %v242 = vld [vmem:[%s1] sm:$0xf]
      %v243 = vld [vmem:[%s1 + $0x4] sm:$0xf]
      %v244 = vld [vmem:[%s1 + $0x8] sm:$0xf]
      %v245 = vld [vmem:[%s1 + $0xc] sm:$0xf]
      %v246 = vld [vmem:[%s1 + $0x10] sm:$0xf]
      %v247 = vld [vmem:[%s1 + $0x14] sm:$0xf]
      %v248 = vld [vmem:[%s1 + $0x18] sm:$0xf]
      %v249 = vld [vmem:[%s1 + $0x1c] sm:$0xf]
      %v250 = vld [vmem:[%s1 + $0x20] sm:$0xf]
      %v251 = vld [vmem:[%s1 + $0x24] sm:$0xf]
      %v252 = vld [vmem:[%s1 + $0x28] sm:$0xf]
      %v253 = vld [vmem:[%s1 + $0x2c] sm:$0xf]
      %v254 = vld [vmem:[%s1 + $0x30] sm:$0xf]
      %v255 = vld [vmem:[%s1 + $0x34] sm:$0xf]
      %v256 = vld [vmem:[%s1 + $0x38] sm:$0xf]
      %v257 = vld [vmem:[%s1 + $0x3c] sm:$0xf]
      %v258 = vld [vmem:[%s1 + $0x40] sm:$0xf]
      %v259 = vld [vmem:[%s1 + $0x44] sm:$0xf]
      %v260 = vld [vmem:[%s1 + $0x48] sm:$0xf]
      %v261 = vld [vmem:[%s1 + $0x4c] sm:$0xf]
      %v262 = vld [vmem:[%s1 + $0x50] sm:$0xf]
      %v263 = vld [vmem:[%s1 + $0x54] sm:$0xf]
      %v264 = vld [vmem:[%s1 + $0x58] sm:$0xf]
      %v265 = vld [vmem:[%s1 + $0x5c] sm:$0xf]
      %v266 = vld [vmem:[%s1 + $0x60] sm:$0xf]
      %v267 = vld [vmem:[%s1 + $0x64] sm:$0xf]
      %v268 = vld [vmem:[%s1 + $0x68] sm:$0xf]
      %v269 = vld [vmem:[%s1 + $0x6c] sm:$0xf]
      %v270 = vld [vmem:[%s1 + $0x70] sm:$0xf]
      %v271 = vld [vmem:[%s1 + $0x74] sm:$0xf]
      %v272 = vld [vmem:[%s1 + $0x78] sm:$0xf]
      %v273 = vld [vmem:[%s1 + $0x7c] sm:$0xf]
      %v274 = vld [vmem:[%s1 + $0x80] sm:$0xf]
      %v275 = vld [vmem:[%s1 + $0x84] sm:$0xf]
      %v276 = vld [vmem:[%s1 + $0x88] sm:$0xf]
      %v277 = vld [vmem:[%s1 + $0x8c] sm:$0xf]
      %v342 = vunpack.c.l.b16 %v178
      %v343 = vunpack.c.h.b16 %v178
      %v344 = vunpack.c.l.b16 %v179
      %v345 = vunpack.c.l.b16 %v180
      %v346 = vunpack.c.h.b16 %v180
      %v347 = vunpack.c.l.b16 %v181
      %v348 = vunpack.c.l.b16 %v182
      %v349 = vunpack.c.h.b16 %v182
      %v350 = vunpack.c.l.b16 %v183
      %v351 = vunpack.c.l.b16 %v184
      %v352 = vunpack.c.h.b16 %v184
      %v353 = vunpack.c.l.b16 %v185
      %v354 = vunpack.c.l.b16 %v186
      %v355 = vunpack.c.h.b16 %v186
      %v356 = vunpack.c.l.b16 %v187
      %v357 = vunpack.c.l.b16 %v188
      %v358 = vunpack.c.h.b16 %v188
      %v359 = vunpack.c.l.b16 %v189
      %v360 = vunpack.c.l.b16 %v190
      %v361 = vunpack.c.h.b16 %v190
      %v362 = vunpack.c.l.b16 %v191
      %v363 = vunpack.c.l.b16 %v192
      %v364 = vunpack.c.h.b16 %v192
      %v365 = vunpack.c.l.b16 %v193
      %v366 = vunpack.c.l.b16 %v194
      %v367 = vunpack.c.h.b16 %v194
      %v368 = vunpack.c.l.b16 %v195
      %v369 = vunpack.c.l.b16 %v196
      %v370 = vunpack.c.h.b16 %v196
      %v371 = vunpack.c.l.b16 %v197
      %v372 = vunpack.c.l.b16 %v198
      %v373 = vunpack.c.h.b16 %v198
      %v374 = vunpack.c.l.b16 %v199
      %v375 = vunpack.c.l.b16 %v200
      %v376 = vunpack.c.h.b16 %v200
      %v377 = vunpack.c.l.b16 %v201
      %v378 = vunpack.c.l.b16 %v202
      %v379 = vunpack.c.h.b16 %v202
      %v380 = vunpack.c.l.b16 %v203
      %v381 = vunpack.c.l.b16 %v204
      %v382 = vunpack.c.h.b16 %v204
      %v383 = vunpack.c.l.b16 %v205
      %v384 = vunpack.c.l.b16 %v206
      %v385 = vunpack.c.h.b16 %v206
      %v386 = vunpack.c.l.b16 %v207
      %v387 = vunpack.c.l.b16 %v208
      %v388 = vunpack.c.h.b16 %v208
      %v389 = vunpack.c.l.b16 %v209
      %v390 = vunpack.c.l.b16 %v210
      %v391 = vunpack.c.h.b16 %v210
      %v392 = vunpack.c.l.b16 %v211
      %v393 = vunpack.c.l.b16 %v212
      %v394 = vunpack.c.h.b16 %v212
      %v395 = vunpack.c.l.b16 %v213
      %v396 = vunpack.c.l.b16 %v214
      %v397 = vunpack.c.h.b16 %v214
      %v398 = vunpack.c.l.b16 %v215
      %v399 = vunpack.c.l.b16 %v216
      %v400 = vunpack.c.h.b16 %v216
      %v401 = vunpack.c.l.b16 %v217
      %v402 = vunpack.c.l.b16 %v218
      %v403 = vunpack.c.h.b16 %v218
      %v404 = vunpack.c.l.b16 %v219
      %v405 = vunpack.c.l.b16 %v220
      %v406 = vunpack.c.h.b16 %v220
      %v407 = vunpack.c.l.b16 %v221
      %v408 = vunpack.c.l.b16 %v222
      %v409 = vunpack.c.h.b16 %v222
      %v410 = vunpack.c.l.b16 %v223
      %v411 = vunpack.c.l.b16 %v224
      %v412 = vunpack.c.h.b16 %v224
      %v413 = vunpack.c.l.b16 %v225
      %v414 = vunpack.c.l.b16 %v226
      %v415 = vunpack.c.h.b16 %v226
      %v416 = vunpack.c.l.b16 %v227
      %v417 = vunpack.c.l.b16 %v228
      %v418 = vunpack.c.h.b16 %v228
      %v419 = vunpack.c.l.b16 %v229
      %v420 = vunpack.c.l.b16 %v230
      %v421 = vunpack.c.h.b16 %v230
      %v422 = vunpack.c.l.b16 %v231
      %v423 = vunpack.c.l.b16 %v232
      %v424 = vunpack.c.h.b16 %v232
      %v425 = vunpack.c.l.b16 %v233
      %v426 = vunpack.c.l.b16 %v234
      %v427 = vunpack.c.h.b16 %v234
      %v428 = vunpack.c.l.b16 %v235
      %v429 = vunpack.c.l.b16 %v236
      %v430 = vunpack.c.h.b16 %v236
      %v431 = vunpack.c.l.b16 %v237
      %v432 = vunpack.c.l.b16 %v238
      %v433 = vunpack.c.h.b16 %v238
      %v434 = vunpack.c.l.b16 %v239
      %v435 = vunpack.c.l.b16 %v240
      %v436 = vunpack.c.h.b16 %v240
      %v437 = vunpack.c.l.b16 %v241
      %v438 = vpack.c.b16 %v345, %v342
      %v439 = vpack.c.b16 %v346, %v343
      %v440 = vpack.c.b16 %v347, %v344
      %v441 = vpack.c.b16 %v351, %v348
      %v442 = vpack.c.b16 %v352, %v349
      %v443 = vpack.c.b16 %v353, %v350
      %v444 = vpack.c.b16 %v357, %v354
      %v445 = vpack.c.b16 %v358, %v355
      %v446 = vpack.c.b16 %v359, %v356
      %v447 = vpack.c.b16 %v363, %v360
      %v448 = vpack.c.b16 %v364, %v361
      %v449 = vpack.c.b16 %v365, %v362
      %v450 = vpack.c.b16 %v369, %v366
      %v451 = vpack.c.b16 %v370, %v367
      %v452 = vpack.c.b16 %v371, %v368
      %v453 = vpack.c.b16 %v375, %v372
      %v454 = vpack.c.b16 %v376, %v373
      %v455 = vpack.c.b16 %v377, %v374
      %v456 = vpack.c.b16 %v381, %v378
      %v457 = vpack.c.b16 %v382, %v379
      %v458 = vpack.c.b16 %v383, %v380
      %v459 = vpack.c.b16 %v387, %v384
      %v460 = vpack.c.b16 %v388, %v385
      %v461 = vpack.c.b16 %v389, %v386
      %v462 = vpack.c.b16 %v393, %v390
      %v463 = vpack.c.b16 %v394, %v391
      %v464 = vpack.c.b16 %v395, %v392
      %v465 = vpack.c.b16 %v399, %v396
      %v466 = vpack.c.b16 %v400, %v397
      %v467 = vpack.c.b16 %v401, %v398
      %v468 = vpack.c.b16 %v405, %v402
      %v469 = vpack.c.b16 %v406, %v403
      %v470 = vpack.c.b16 %v407, %v404
      %v471 = vpack.c.b16 %v411, %v408
      %v472 = vpack.c.b16 %v412, %v409
      %v473 = vpack.c.b16 %v413, %v410
      %v474 = vpack.c.b16 %v417, %v414
      %v475 = vpack.c.b16 %v418, %v415
      %v476 = vpack.c.b16 %v419, %v416
      %v477 = vpack.c.b16 %v423, %v420
      %v478 = vpack.c.b16 %v424, %v421
      %v479 = vpack.c.b16 %v425, %v422
      %v480 = vpack.c.b16 %v429, %v426
      %v481 = vpack.c.b16 %v430, %v427
      %v482 = vpack.c.b16 %v431, %v428
      %v483 = vpack.c.b16 %v435, %v432
      %v484 = vpack.c.b16 %v436, %v433
      %v485 = vpack.c.b16 %v437, %v434
      %v554 = vunpack.c.l.b16 %v242
      %v555 = vunpack.c.l.b16 %v243
      %v556 = vunpack.c.l.b16 %v244
      %v557 = vunpack.c.l.b16 %v245
      %v558 = vunpack.c.l.b16 %v246
      %v559 = vunpack.c.l.b16 %v247
      %v560 = vunpack.c.l.b16 %v248
      %v561 = vunpack.c.l.b16 %v249
      %v562 = vunpack.c.l.b16 %v250
      %v563 = vunpack.c.l.b16 %v251
      %v564 = vunpack.c.l.b16 %v252
      %v565 = vunpack.c.l.b16 %v253
      %v566 = vunpack.c.l.b16 %v254
      %v567 = vunpack.c.l.b16 %v255
      %v568 = vunpack.c.l.b16 %v256
      %v569 = vunpack.c.l.b16 %v257
      %v570 = vunpack.c.l.b16 %v258
      %v571 = vunpack.c.l.b16 %v259
      %v572 = vunpack.c.l.b16 %v260
      %v573 = vunpack.c.l.b16 %v261
      %v574 = vunpack.c.l.b16 %v262
      %v575 = vunpack.c.l.b16 %v263
      %v576 = vunpack.c.l.b16 %v264
      %v577 = vunpack.c.l.b16 %v265
      %v578 = vunpack.c.l.b16 %v266
      %v579 = vunpack.c.l.b16 %v267
      %v580 = vunpack.c.l.b16 %v268
      %v581 = vunpack.c.l.b16 %v269
      %v582 = vunpack.c.l.b16 %v270
      %v583 = vunpack.c.l.b16 %v271
      %v584 = vunpack.c.l.b16 %v272
      %v585 = vunpack.c.l.b16 %v273
      %v586 = vunpack.c.l.b16 %v274
      %v587 = vunpack.c.l.b16 %v275
      %v588 = vunpack.c.l.b16 %v276
      %v589 = vunpack.c.l.b16 %v277
      %v590 = vpack.c.b16 %v555, %v554
      %v591 = vpack.c.b16 %v557, %v556
      %v592 = vpack.c.b16 %v559, %v558
      %v593 = vpack.c.b16 %v561, %v560
      %v594 = vpack.c.b16 %v563, %v562
      %v595 = vpack.c.b16 %v565, %v564
      %v596 = vpack.c.b16 %v567, %v566
      %v597 = vpack.c.b16 %v569, %v568
      %v598 = vpack.c.b16 %v571, %v570
      %v599 = vpack.c.b16 %v573, %v572
      %v600 = vpack.c.b16 %v575, %v574
      %v601 = vpack.c.b16 %v577, %v576
      %v602 = vpack.c.b16 %v579, %v578
      %v603 = vpack.c.b16 %v581, %v580
      %v604 = vpack.c.b16 %v583, %v582
      %v605 = vpack.c.b16 %v585, %v584
      %v606 = vpack.c.b16 %v587, %v586
      %v607 = vpack.c.b16 %v589, %v588
      %vm626 = vcmask 261120
      %v628 = vsel %vm626, %v440, 0
      %v631 = vsel %vm626, %v443, 0
      %v634 = vsel %vm626, %v446, 0
      %v637 = vsel %vm626, %v449, 0
      %v640 = vsel %vm626, %v452, 0
      %v643 = vsel %vm626, %v455, 0
      %v646 = vsel %vm626, %v458, 0
      %v649 = vsel %vm626, %v461, 0
      %v652 = vsel %vm626, %v464, 0
      %v655 = vsel %vm626, %v467, 0
      %v658 = vsel %vm626, %v470, 0
      %v661 = vsel %vm626, %v473, 0
      %v664 = vsel %vm626, %v476, 0
      %v667 = vsel %vm626, %v479, 0
      %v670 = vsel %vm626, %v482, 0
      %v673 = vsel %vm626, %v485, 0
      %675 = vmatpush.bf16.msra.mxu0 %v597
      %676 = vmatpush.bf16.msra.mxu0 %v596
      %677 = vmatpush.bf16.msra.mxu0 %v595
      %678 = vmatpush.bf16.msra.mxu0 %v594
      %679 = vmatpush.bf16.msra.mxu0 %v593
      %680 = vmatpush.bf16.msra.mxu0 %v592
      %681 = vmatpush.bf16.msra.mxu0 %v591
      %682 = vmatpush.bf16.msra.mxu0 %v590
      %683 = vmatmul.bf16.gmra.mxu0 %v438
      %v684 = vpop.f32.mrf.mxu0
      %v685 = vadd.f32 0.0, %v684
      %v686 = vpop.f32.mrf.mxu0
      %v687 = vadd.f32 0.0, %v686
      %688 = vmatmul.bf16.gmra.mxu0 %v441
      %v689 = vpop.f32.mrf.mxu0
      %v690 = vadd.f32 0.0, %v689
      %v691 = vpop.f32.mrf.mxu0
      %v692 = vadd.f32 0.0, %v691
      %693 = vmatmul.bf16.gmra.mxu0 %v444
      %v694 = vpop.f32.mrf.mxu0
      %v695 = vadd.f32 0.0, %v694
      %v696 = vpop.f32.mrf.mxu0
      %v697 = vadd.f32 0.0, %v696
      %698 = vmatmul.bf16.gmra.mxu0 %v447
      %v699 = vpop.f32.mrf.mxu0
      %v700 = vadd.f32 0.0, %v699
      %v701 = vpop.f32.mrf.mxu0
      %v702 = vadd.f32 0.0, %v701
      %703 = vmatmul.bf16.gmra.mxu0 %v450
      %v704 = vpop.f32.mrf.mxu0
      %v705 = vadd.f32 0.0, %v704
      %v706 = vpop.f32.mrf.mxu0
      %v707 = vadd.f32 0.0, %v706
      %708 = vmatmul.bf16.gmra.mxu0 %v453
      %v709 = vpop.f32.mrf.mxu0
      %v710 = vadd.f32 0.0, %v709
      %v711 = vpop.f32.mrf.mxu0
      %v712 = vadd.f32 0.0, %v711
      %713 = vmatmul.bf16.gmra.mxu0 %v456
      %v714 = vpop.f32.mrf.mxu0
      %v715 = vadd.f32 0.0, %v714
      %v716 = vpop.f32.mrf.mxu0
      %v717 = vadd.f32 0.0, %v716
      %718 = vmatmul.bf16.gmra.mxu0 %v459
      %v719 = vpop.f32.mrf.mxu0
      %v720 = vadd.f32 0.0, %v719
      %v721 = vpop.f32.mrf.mxu0
      %v722 = vadd.f32 0.0, %v721
      %723 = vmatmul.bf16.gmra.mxu0 %v462
      %v724 = vpop.f32.mrf.mxu0
      %v725 = vadd.f32 0.0, %v724
      %v726 = vpop.f32.mrf.mxu0
      %v727 = vadd.f32 0.0, %v726
      %728 = vmatmul.bf16.gmra.mxu0 %v465
      %v729 = vpop.f32.mrf.mxu0
      %v730 = vadd.f32 0.0, %v729
      %v731 = vpop.f32.mrf.mxu0
      %v732 = vadd.f32 0.0, %v731
      %733 = vmatmul.bf16.gmra.mxu0 %v468
      %v734 = vpop.f32.mrf.mxu0
      %v735 = vadd.f32 0.0, %v734
      %v736 = vpop.f32.mrf.mxu0
      %v737 = vadd.f32 0.0, %v736
      %738 = vmatmul.bf16.gmra.mxu0 %v471
      %v739 = vpop.f32.mrf.mxu0
      %v740 = vadd.f32 0.0, %v739
      %v741 = vpop.f32.mrf.mxu0
      %v742 = vadd.f32 0.0, %v741
      %743 = vmatmul.bf16.gmra.mxu0 %v474
      %v744 = vpop.f32.mrf.mxu0
      %v745 = vadd.f32 0.0, %v744
      %v746 = vpop.f32.mrf.mxu0
      %v747 = vadd.f32 0.0, %v746
      %748 = vmatmul.bf16.gmra.mxu0 %v477
      %v749 = vpop.f32.mrf.mxu0
      %v750 = vadd.f32 0.0, %v749
      %v751 = vpop.f32.mrf.mxu0
      %v752 = vadd.f32 0.0, %v751
      %753 = vmatmul.bf16.gmra.mxu0 %v480
      %v754 = vpop.f32.mrf.mxu0
      %v755 = vadd.f32 0.0, %v754
      %v756 = vpop.f32.mrf.mxu0
      %v757 = vadd.f32 0.0, %v756
      %758 = vmatmul.bf16.gmra.mxu0 %v483
      %v759 = vpop.f32.mrf.mxu0
      %v760 = vadd.f32 0.0, %v759
      %v761 = vpop.f32.mrf.mxu0
      %v762 = vadd.f32 0.0, %v761
      %763 = vdwg.mxu0
      %764 = vmatpush.bf16.msra.mxu0 %v605
      %765 = vmatpush.bf16.msra.mxu0 %v604
      %766 = vmatpush.bf16.msra.mxu0 %v603
      %767 = vmatpush.bf16.msra.mxu0 %v602
      %768 = vmatpush.bf16.msra.mxu0 %v601
      %769 = vmatpush.bf16.msra.mxu0 %v600
      %770 = vmatpush.bf16.msra.mxu0 %v599
      %771 = vmatpush.bf16.msra.mxu0 %v598
      %772 = vmatmul.bf16.gmra.mxu0 %v439
      %v773 = vpop.f32.mrf.mxu0
      %v774 = vadd.f32 %v685, %v773
      %v775 = vpop.f32.mrf.mxu0
      %v776 = vadd.f32 %v687, %v775
      %777 = vmatmul.bf16.gmra.mxu0 %v442
      %v778 = vpop.f32.mrf.mxu0
      %v779 = vadd.f32 %v690, %v778
      %v780 = vpop.f32.mrf.mxu0
      %v781 = vadd.f32 %v692, %v780
      %782 = vmatmul.bf16.gmra.mxu0 %v445
      %v783 = vpop.f32.mrf.mxu0
      %v784 = vadd.f32 %v695, %v783
      %v785 = vpop.f32.mrf.mxu0
      %v786 = vadd.f32 %v697, %v785
      %787 = vmatmul.bf16.gmra.mxu0 %v448
      %v788 = vpop.f32.mrf.mxu0
      %v789 = vadd.f32 %v700, %v788
      %v790 = vpop.f32.mrf.mxu0
      %v791 = vadd.f32 %v702, %v790
      %792 = vmatmul.bf16.gmra.mxu0 %v451
      %v793 = vpop.f32.mrf.mxu0
      %v794 = vadd.f32 %v705, %v793
      %v795 = vpop.f32.mrf.mxu0
      %v796 = vadd.f32 %v707, %v795
      %797 = vmatmul.bf16.gmra.mxu0 %v454
      %v798 = vpop.f32.mrf.mxu0
      %v799 = vadd.f32 %v710, %v798
      %v800 = vpop.f32.mrf.mxu0
      %v801 = vadd.f32 %v712, %v800
      %802 = vmatmul.bf16.gmra.mxu0 %v457
      %v803 = vpop.f32.mrf.mxu0
      %v804 = vadd.f32 %v715, %v803
      %v805 = vpop.f32.mrf.mxu0
      %v806 = vadd.f32 %v717, %v805
      %807 = vmatmul.bf16.gmra.mxu0 %v460
      %v808 = vpop.f32.mrf.mxu0
      %v809 = vadd.f32 %v720, %v808
      %v810 = vpop.f32.mrf.mxu0
      %v811 = vadd.f32 %v722, %v810
      %812 = vmatmul.bf16.gmra.mxu0 %v463
      %v813 = vpop.f32.mrf.mxu0
      %v814 = vadd.f32 %v725, %v813
      %v815 = vpop.f32.mrf.mxu0
      %v816 = vadd.f32 %v727, %v815
      %817 = vmatmul.bf16.gmra.mxu0 %v466
      %v818 = vpop.f32.mrf.mxu0
      %v819 = vadd.f32 %v730, %v818
      %v820 = vpop.f32.mrf.mxu0
      %v821 = vadd.f32 %v732, %v820
      %822 = vmatmul.bf16.gmra.mxu0 %v469
      %v823 = vpop.f32.mrf.mxu0
      %v824 = vadd.f32 %v735, %v823
      %v825 = vpop.f32.mrf.mxu0
      %v826 = vadd.f32 %v737, %v825
      %827 = vmatmul.bf16.gmra.mxu0 %v472
      %v828 = vpop.f32.mrf.mxu0
      %v829 = vadd.f32 %v740, %v828
      %v830 = vpop.f32.mrf.mxu0
      %v831 = vadd.f32 %v742, %v830
      %832 = vmatmul.bf16.gmra.mxu0 %v475
      %v833 = vpop.f32.mrf.mxu0
      %v834 = vadd.f32 %v745, %v833
      %v835 = vpop.f32.mrf.mxu0
      %v836 = vadd.f32 %v747, %v835
      %837 = vmatmul.bf16.gmra.mxu0 %v478
      %v838 = vpop.f32.mrf.mxu0
      %v839 = vadd.f32 %v750, %v838
      %v840 = vpop.f32.mrf.mxu0
      %v841 = vadd.f32 %v752, %v840
      %842 = vmatmul.bf16.gmra.mxu0 %v481
      %v843 = vpop.f32.mrf.mxu0
      %v844 = vadd.f32 %v755, %v843
      %v845 = vpop.f32.mrf.mxu0
      %v846 = vadd.f32 %v757, %v845
      %847 = vmatmul.bf16.gmra.mxu0 %v484
      %v848 = vpop.f32.mrf.mxu0
      %v849 = vadd.f32 %v760, %v848
      %v850 = vpop.f32.mrf.mxu0
      %v851 = vadd.f32 %v762, %v850
      %852 = vdwg.mxu0
      %853 = vmatpush.bf16.msra.mxu0 0
      %854 = vmatpush.bf16.msra.mxu0 0
      %855 = vmatpush.bf16.msra.mxu0 0
      %856 = vmatpush.bf16.msra.mxu0 0
      %857 = vmatpush.bf16.msra.mxu0 0
      %858 = vmatpush.bf16.msra.mxu0 0
      %859 = vmatpush.bf16.msra.mxu0 %v607
      %860 = vmatpush.bf16.msra.mxu0 %v606
      %861 = vmatmul.bf16.gmra.mxu0 %v628
      %v862 = vpop.f32.mrf.mxu0
      %v863 = vadd.f32 %v774, %v862
      %v864 = vpop.f32.mrf.mxu0
      %v865 = vadd.f32 %v776, %v864
      %866 = vmatmul.bf16.gmra.mxu0 %v631
      %v867 = vpop.f32.mrf.mxu0
      %v868 = vadd.f32 %v779, %v867
      %v869 = vpop.f32.mrf.mxu0
      %v870 = vadd.f32 %v781, %v869
      %871 = vmatmul.bf16.gmra.mxu0 %v634
      %v872 = vpop.f32.mrf.mxu0
      %v873 = vadd.f32 %v784, %v872
      %v874 = vpop.f32.mrf.mxu0
      %v875 = vadd.f32 %v786, %v874
      %876 = vmatmul.bf16.gmra.mxu0 %v637
      %v877 = vpop.f32.mrf.mxu0
      %v878 = vadd.f32 %v789, %v877
      %v879 = vpop.f32.mrf.mxu0
      %v880 = vadd.f32 %v791, %v879
      %881 = vmatmul.bf16.gmra.mxu0 %v640
      %v882 = vpop.f32.mrf.mxu0
      %v883 = vadd.f32 %v794, %v882
      %v884 = vpop.f32.mrf.mxu0
      %v885 = vadd.f32 %v796, %v884
      %886 = vmatmul.bf16.gmra.mxu0 %v643
      %v887 = vpop.f32.mrf.mxu0
      %v888 = vadd.f32 %v799, %v887
      %v889 = vpop.f32.mrf.mxu0
      %v890 = vadd.f32 %v801, %v889
      %891 = vmatmul.bf16.gmra.mxu0 %v646
      %v892 = vpop.f32.mrf.mxu0
      %v893 = vadd.f32 %v804, %v892
      %v894 = vpop.f32.mrf.mxu0
      %v895 = vadd.f32 %v806, %v894
      %896 = vmatmul.bf16.gmra.mxu0 %v649
      %v897 = vpop.f32.mrf.mxu0
      %v898 = vadd.f32 %v809, %v897
      %v899 = vpop.f32.mrf.mxu0
      %v900 = vadd.f32 %v811, %v899
      %901 = vmatmul.bf16.gmra.mxu0 %v652
      %v902 = vpop.f32.mrf.mxu0
      %v903 = vadd.f32 %v814, %v902
      %v904 = vpop.f32.mrf.mxu0
      %v905 = vadd.f32 %v816, %v904
      %906 = vmatmul.bf16.gmra.mxu0 %v655
      %v907 = vpop.f32.mrf.mxu0
      %v908 = vadd.f32 %v819, %v907
      %v909 = vpop.f32.mrf.mxu0
      %v910 = vadd.f32 %v821, %v909
      %911 = vmatmul.bf16.gmra.mxu0 %v658
      %v912 = vpop.f32.mrf.mxu0
      %v913 = vadd.f32 %v824, %v912
      %v914 = vpop.f32.mrf.mxu0
      %v915 = vadd.f32 %v826, %v914
      %916 = vmatmul.bf16.gmra.mxu0 %v661
      %v917 = vpop.f32.mrf.mxu0
      %v918 = vadd.f32 %v829, %v917
      %v919 = vpop.f32.mrf.mxu0
      %v920 = vadd.f32 %v831, %v919
      %921 = vmatmul.bf16.gmra.mxu0 %v664
      %v922 = vpop.f32.mrf.mxu0
      %v923 = vadd.f32 %v834, %v922
      %v924 = vpop.f32.mrf.mxu0
      %v925 = vadd.f32 %v836, %v924
      %926 = vmatmul.bf16.gmra.mxu0 %v667
      %v927 = vpop.f32.mrf.mxu0
      %v928 = vadd.f32 %v839, %v927
      %v929 = vpop.f32.mrf.mxu0
      %v930 = vadd.f32 %v841, %v929
      %931 = vmatmul.bf16.gmra.mxu0 %v670
      %v932 = vpop.f32.mrf.mxu0
      %v933 = vadd.f32 %v844, %v932
      %v934 = vpop.f32.mrf.mxu0
      %v935 = vadd.f32 %v846, %v934
      %936 = vmatmul.bf16.gmra.mxu0 %v673
      %v937 = vpop.f32.mrf.mxu0
      %v938 = vadd.f32 %v849, %v937
      %v939 = vpop.f32.mrf.mxu0
      %v940 = vadd.f32 %v851, %v939
      %941 = vdwg.mxu0
      %v942 = vld [vmem:[%s2] sm:$0x1]
      %v944 = vperm.slane %v942, 0
      %v946 = vmul.f32 %v863, %v944
      %v947 = vmul.f32 %v865, %v944
      %v948 = vmul.f32 %v868, %v944
      %v949 = vmul.f32 %v870, %v944
      %v950 = vmul.f32 %v873, %v944
      %v951 = vmul.f32 %v875, %v944
      %v952 = vmul.f32 %v878, %v944
      %v953 = vmul.f32 %v880, %v944
      %v954 = vmul.f32 %v883, %v944
      %v955 = vmul.f32 %v885, %v944
      %v956 = vmul.f32 %v888, %v944
      %v957 = vmul.f32 %v890, %v944
      %v958 = vmul.f32 %v893, %v944
      %v959 = vmul.f32 %v895, %v944
      %v960 = vmul.f32 %v898, %v944
      %v961 = vmul.f32 %v900, %v944
      %v962 = vmul.f32 %v903, %v944
      %v963 = vmul.f32 %v905, %v944
      %v964 = vmul.f32 %v908, %v944
      %v965 = vmul.f32 %v910, %v944
      %v966 = vmul.f32 %v913, %v944
      %v967 = vmul.f32 %v915, %v944
      %v968 = vmul.f32 %v918, %v944
      %v969 = vmul.f32 %v920, %v944
      %v970 = vmul.f32 %v923, %v944
      %v971 = vmul.f32 %v925, %v944
      %v972 = vmul.f32 %v928, %v944
      %v973 = vmul.f32 %v930, %v944
      %v974 = vmul.f32 %v933, %v944
      %v975 = vmul.f32 %v935, %v944
      %v976 = vmul.f32 %v938, %v944
      %v977 = vmul.f32 %v940, %v944
      %s978 = scalar_lea.vmem %s2, 1
      %v979 = vld [vmem:[%s978] sm:$0x1]
      %v981 = vperm.slane %v979, 0
      %v983 = vadd.f32 %v946, %v981
      %v984 = vadd.f32 %v947, %v981
      %v985 = vadd.f32 %v948, %v981
      %v986 = vadd.f32 %v949, %v981
      %v987 = vadd.f32 %v950, %v981
      %v988 = vadd.f32 %v951, %v981
      %v989 = vadd.f32 %v952, %v981
      %v990 = vadd.f32 %v953, %v981
      %v991 = vadd.f32 %v954, %v981
      %v992 = vadd.f32 %v955, %v981
      %v993 = vadd.f32 %v956, %v981
      %v994 = vadd.f32 %v957, %v981
      %v995 = vadd.f32 %v958, %v981
      %v996 = vadd.f32 %v959, %v981
      %v997 = vadd.f32 %v960, %v981
      %v998 = vadd.f32 %v961, %v981
      %v999 = vadd.f32 %v962, %v981
      %v1000 = vadd.f32 %v963, %v981
      %v1001 = vadd.f32 %v964, %v981
      %v1002 = vadd.f32 %v965, %v981
      %v1003 = vadd.f32 %v966, %v981
      %v1004 = vadd.f32 %v967, %v981
      %v1005 = vadd.f32 %v968, %v981
      %v1006 = vadd.f32 %v969, %v981
      %v1007 = vadd.f32 %v970, %v981
      %v1008 = vadd.f32 %v971, %v981
      %v1009 = vadd.f32 %v972, %v981
      %v1010 = vadd.f32 %v973, %v981
      %v1011 = vadd.f32 %v974, %v981
      %v1012 = vadd.f32 %v975, %v981
      %v1013 = vadd.f32 %v976, %v981
      %v1014 = vadd.f32 %v977, %v981
      %v1015 = vmax.f32 %v983, 0.0
      %v1016 = vmax.f32 %v984, 0.0
      %v1017 = vmax.f32 %v985, 0.0
      %v1018 = vmax.f32 %v986, 0.0
      %v1019 = vmax.f32 %v987, 0.0
      %v1020 = vmax.f32 %v988, 0.0
      %v1021 = vmax.f32 %v989, 0.0
      %v1022 = vmax.f32 %v990, 0.0
      %v1023 = vmax.f32 %v991, 0.0
      %v1024 = vmax.f32 %v992, 0.0
      %v1025 = vmax.f32 %v993, 0.0
      %v1026 = vmax.f32 %v994, 0.0
      %v1027 = vmax.f32 %v995, 0.0
      %v1028 = vmax.f32 %v996, 0.0
      %v1029 = vmax.f32 %v997, 0.0
      %v1030 = vmax.f32 %v998, 0.0
      %v1031 = vmax.f32 %v999, 0.0
      %v1032 = vmax.f32 %v1000, 0.0
      %v1033 = vmax.f32 %v1001, 0.0
      %v1034 = vmax.f32 %v1002, 0.0
      %v1035 = vmax.f32 %v1003, 0.0
      %v1036 = vmax.f32 %v1004, 0.0
      %v1037 = vmax.f32 %v1005, 0.0
      %v1038 = vmax.f32 %v1006, 0.0
      %v1039 = vmax.f32 %v1007, 0.0
      %v1040 = vmax.f32 %v1008, 0.0
      %v1041 = vmax.f32 %v1009, 0.0
      %v1042 = vmax.f32 %v1010, 0.0
      %v1043 = vmax.f32 %v1011, 0.0
      %v1044 = vmax.f32 %v1012, 0.0
      %v1045 = vmax.f32 %v1013, 0.0
      %v1046 = vmax.f32 %v1014, 0.0
      %1047 = vst [vmem:[%s175] sm:$0xff] %v1015
      %1048 = vst [vmem:[%s175 + $0x8] sm:$0xff] %v1016
      %1049 = vst [vmem:[%s175 + $0x10] sm:$0xff] %v1017
      %1050 = vst [vmem:[%s175 + $0x18] sm:$0xff] %v1018
      %1051 = vst [vmem:[%s175 + $0x20] sm:$0xff] %v1019
      %1052 = vst [vmem:[%s175 + $0x28] sm:$0xff] %v1020
      %1053 = vst [vmem:[%s175 + $0x30] sm:$0xff] %v1021
      %1054 = vst [vmem:[%s175 + $0x38] sm:$0xff] %v1022
      %1055 = vst [vmem:[%s175 + $0x40] sm:$0xff] %v1023
      %1056 = vst [vmem:[%s175 + $0x48] sm:$0xff] %v1024
      %1057 = vst [vmem:[%s175 + $0x50] sm:$0xff] %v1025
      %1058 = vst [vmem:[%s175 + $0x58] sm:$0xff] %v1026
      %1059 = vst [vmem:[%s175 + $0x60] sm:$0xff] %v1027
      %1060 = vst [vmem:[%s175 + $0x68] sm:$0xff] %v1028
      %1061 = vst [vmem:[%s175 + $0x70] sm:$0xff] %v1029
      %1062 = vst [vmem:[%s175 + $0x78] sm:$0xff] %v1030
      %1063 = vst [vmem:[%s175 + $0x80] sm:$0xff] %v1031
      %1064 = vst [vmem:[%s175 + $0x88] sm:$0xff] %v1032
      %1065 = vst [vmem:[%s175 + $0x90] sm:$0xff] %v1033
      %1066 = vst [vmem:[%s175 + $0x98] sm:$0xff] %v1034
      %1067 = vst [vmem:[%s175 + $0xa0] sm:$0xff] %v1035
      %1068 = vst [vmem:[%s175 + $0xa8] sm:$0xff] %v1036
      %1069 = vst [vmem:[%s175 + $0xb0] sm:$0xff] %v1037
      %1070 = vst [vmem:[%s175 + $0xb8] sm:$0xff] %v1038
      %1071 = vst [vmem:[%s175 + $0xc0] sm:$0xff] %v1039
      %1072 = vst [vmem:[%s175 + $0xc8] sm:$0xff] %v1040
      %1073 = vst [vmem:[%s175 + $0xd0] sm:$0xff] %v1041
      %1074 = vst [vmem:[%s175 + $0xd8] sm:$0xff] %v1042
      %1075 = vst [vmem:[%s175 + $0xe0] sm:$0xff] %v1043
      %1076 = vst [vmem:[%s175 + $0xe8] sm:$0xff] %v1044
      %1077 = vst [vmem:[%s175 + $0xf0] sm:$0xff] %v1045
      %1078 = vst [vmem:[%s175 + $0xf8] sm:$0xff] %v1046
      %s1079 = smul.u32 32, %s14
      %p1080 = scmp.lt.s32.totalorder %s1079, 63
      %s1081 = scalar_select %p1080, %s1079, 63
      %s1082 = smul.addr %s1081, 8
      %s1083 = scalar_lea.vmem %s3, %s1082
      // Predicated region
      $region33: #{multiscale_scconv2d.34} parent=31 // pred_check
        %p1084 = pneg %p100
      $region34: #{multiscale_scconv2d.34} parent=31 // pred_check_branch
        %1086 = sbr.rel (%p1084) target = $region36
      $region35: #{multiscale_scconv2d.34} parent=31 // pred_region
        %s1087 = smul.u32 32, %s14
      $region36: #{multiscale_scconv2d.34} parent=31 // pred_fallthru
        _
    $region32: #{multiscale_scconv2d.34} parent=5 // pred_fallthru
      _
    %p1088 = scmp.le.s32.totalorder 2, %s9
    // Predicated region
    $region37: #{multiscale_scconv2d.34} parent=5 // pred_check
      %p1089 = pneg %p1088
    $region38: #{multiscale_scconv2d.34} parent=5 // pred_check_branch
      %1091 = sbr.rel (%p1089) target = $region40
    $region39: #{multiscale_scconv2d.34} parent=5 // pred_region
      %s1092 = ssub.s32 %s9, 2
      // Predicated region
      $region41: #{multiscale_scconv2d.34} parent=39 // pred_check
        %p1093 = pneg %p106
      $region42: #{multiscale_scconv2d.34} parent=39 // pred_check_branch
        %1095 = sbr.rel (%p1093) target = $region44
      $region43: #{multiscale_scconv2d.34} parent=39 // pred_region
        %s1096 = smul.u32 32, %s15
        %p1097 = scmp.lt.s32.totalorder %s1096, 63
        %s1098 = scalar_select %p1097, %s1096, 63
        %s1099 = smul.addr %s1098, 8
        %s1100 = scalar_lea.vmem %s3, %s1099
      $region44: #{multiscale_scconv2d.34} parent=39 // pred_fallthru
        _
    $region40: #{multiscale_scconv2d.34} parent=5 // pred_fallthru
      _
  $region6: #{multiscale_scconv2d.34} parent=0 // loop_footer
    %s13 = sadd.s32 1, %s9
  $region7: #{multiscale_scconv2d.34} parent=0 // loop_footer_branch
    %8 = sbr.rel target = $region3
  $region8: #{multiscale_scconv2d.34} parent=0 // loop_exit
    _

// kernel: multiscale_scconv2d.37
$region0: #{multiscale_scconv2d.37}
  #allocation0 [shape = 'u32[]', space=smem, size = 0x4, offset = 0x4, fixed_abs, tag = 'smem constant byte address 0x4 - core index']
  #allocation1 [shape = 'u32[72,128]{1,0:T(1,128)}', space=vmem, size = 0x9000, scoped, tag = 'internal scratch']
  %s0 = inlined_call_operand.vmem [shape: bf16[32,144], index: 0, kind: input, shape index: {}]
  %s1 = inlined_call_operand.vmem [shape: bf16[144,16], index: 1, kind: input, shape index: {}]
  %s2 = inlined_call_operand.vmem [shape: f32[2,1,16], index: 2, kind: input, shape index: {}]
  %s3 = inlined_call_operand.vmem [shape: f32[32,16], index: 3, kind: output, shape index: {}]
  %s4 = sld [smem:[#allocation0]]
  $region22: #{multiscale_scconv2d.37} parent=0
    _
  %s6 = ssub.s32 1, %s4
  %s7 = scalar_select 0, %s6, %s4
  // Predicated region
  $region2: #{multiscale_scconv2d.37} parent=0 // pred_check
    _
  $region3: #{multiscale_scconv2d.37} parent=0 // pred_check_branch
    %9 = sbr.rel (0) target = $region5
  $region4: #{multiscale_scconv2d.37} parent=0 // pred_region
    _
  $region5: #{multiscale_scconv2d.37} parent=0 // pred_fallthru
    _
  // Predicated region
  $region6: #{multiscale_scconv2d.37} parent=0 // pred_check
    _
  $region7: #{multiscale_scconv2d.37} parent=0 // pred_check_branch
    %11 = sbr.rel (0) target = $region9
  $region8: #{multiscale_scconv2d.37} parent=0 // pred_region
    _
  $region9: #{multiscale_scconv2d.37} parent=0 // pred_fallthru
    _
  // Predicated region
  $region10: #{multiscale_scconv2d.37} parent=0 // pred_check
    _
  $region11: #{multiscale_scconv2d.37} parent=0 // pred_check_branch
    %13 = sbr.rel (0) target = $region13
  $region12: #{multiscale_scconv2d.37} parent=0 // pred_region
    _
  $region13: #{multiscale_scconv2d.37} parent=0 // pred_fallthru
    _
  %v15 = vld [vmem:[%s0] sm:$0xff]
  %v16 = vld [vmem:[%s0 + $0x8] sm:$0xff]
  %v17 = vld [vmem:[%s0 + $0x10] sm:$0xff]
  %v18 = vld [vmem:[%s0 + $0x18] sm:$0xff]
  %v19 = vld [vmem:[%s1] sm:$0xf]
  %v20 = vld [vmem:[%s1 + $0x4] sm:$0xf]
  %v21 = vld [vmem:[%s1 + $0x8] sm:$0xf]
  %v22 = vld [vmem:[%s1 + $0xc] sm:$0xf]
  %v23 = vld [vmem:[%s1 + $0x10] sm:$0xf]
  %v24 = vld [vmem:[%s1 + $0x14] sm:$0xf]
  %v25 = vld [vmem:[%s1 + $0x18] sm:$0xf]
  %v26 = vld [vmem:[%s1 + $0x1c] sm:$0xf]
  %v27 = vld [vmem:[%s1 + $0x20] sm:$0xf]
  %v28 = vld [vmem:[%s1 + $0x24] sm:$0xf]
  %v29 = vld [vmem:[%s1 + $0x28] sm:$0xf]
  %v30 = vld [vmem:[%s1 + $0x2c] sm:$0xf]
  %v31 = vld [vmem:[%s1 + $0x30] sm:$0xf]
  %v32 = vld [vmem:[%s1 + $0x34] sm:$0xf]
  %v33 = vld [vmem:[%s1 + $0x38] sm:$0xf]
  %v34 = vld [vmem:[%s1 + $0x3c] sm:$0xf]
  %v35 = vld [vmem:[%s1 + $0x40] sm:$0xf]
  %v36 = vld [vmem:[%s1 + $0x44] sm:$0xf]
  %v41 = vunpack.c.l.b16 %v15
  %v42 = vunpack.c.h.b16 %v15
  %v43 = vunpack.c.l.b16 %v16
  %v44 = vunpack.c.h.b16 %v16
  %v45 = vunpack.c.l.b16 %v17
  %v46 = vunpack.c.h.b16 %v17
  %v47 = vunpack.c.l.b16 %v18
  %v48 = vunpack.c.h.b16 %v18
  %v49 = vpack.c.b16 %v43, %v41
  %v50 = vpack.c.b16 %v44, %v42
  %v51 = vpack.c.b16 %v47, %v45
  %v52 = vpack.c.b16 %v48, %v46
  %v73 = vunpack.c.l.b16 %v19
  %v74 = vunpack.c.l.b16 %v20
  %v75 = vunpack.c.l.b16 %v21
  %v76 = vunpack.c.l.b16 %v22
  %v77 = vunpack.c.l.b16 %v23
  %v78 = vunpack.c.l.b16 %v24
  %v79 = vunpack.c.l.b16 %v25
  %v80 = vunpack.c.l.b16 %v26
  %v81 = vunpack.c.l.b16 %v27
  %v82 = vunpack.c.l.b16 %v28
  %v83 = vunpack.c.l.b16 %v29
  %v84 = vunpack.c.l.b16 %v30
  %v85 = vunpack.c.l.b16 %v31
  %v86 = vunpack.c.l.b16 %v32
  %v87 = vunpack.c.l.b16 %v33
  %v88 = vunpack.c.l.b16 %v34
  %v89 = vunpack.c.l.b16 %v35
  %v90 = vunpack.c.l.b16 %v36
  %v91 = vpack.c.b16 %v74, %v73
  %v92 = vpack.c.b16 %v76, %v75
  %v93 = vpack.c.b16 %v78, %v77
  %v94 = vpack.c.b16 %v80, %v79
  %v95 = vpack.c.b16 %v82, %v81
  %v96 = vpack.c.b16 %v84, %v83
  %v97 = vpack.c.b16 %v86, %v85
  %v98 = vpack.c.b16 %v88, %v87
  %v99 = vpack.c.b16 %v90, %v89
  %vm109 = vcmask 130048
  %v111 = vsel %vm109, %v50, 0
  %v114 = vsel %vm109, %v52, 0
  %116 = vmatpush.bf16.msra.mxu0 %v98
  %117 = vmatpush.bf16.msra.mxu0 %v97
  %118 = vmatpush.bf16.msra.mxu0 %v96
  %119 = vmatpush.bf16.msra.mxu0 %v95
  %120 = vmatpush.bf16.msra.mxu0 %v94
  %121 = vmatpush.bf16.msra.mxu0 %v93
  %122 = vmatpush.bf16.msra.mxu0 %v92
  %123 = vmatpush.bf16.msra.mxu0 %v91
  %124 = vmatmul.bf16.gmra.mxu0 %v49
  %v125 = vpop.f32.mrf.mxu0
  %v126 = vadd.f32 0.0, %v125
  %v127 = vpop.f32.mrf.mxu0
  %v128 = vadd.f32 0.0, %v127
  %129 = vmatmul.bf16.gmra.mxu0 %v51
  %v130 = vpop.f32.mrf.mxu0
  %v131 = vadd.f32 0.0, %v130
  %v132 = vpop.f32.mrf.mxu0
  %v133 = vadd.f32 0.0, %v132
  %134 = vdwg.mxu0
  %135 = vmatpush.bf16.msra.mxu0 0
  %136 = vmatpush.bf16.msra.mxu0 0
  %137 = vmatpush.bf16.msra.mxu0 0
  %138 = vmatpush.bf16.msra.mxu0 0
  %139 = vmatpush.bf16.msra.mxu0 0
  %140 = vmatpush.bf16.msra.mxu0 0
  %141 = vmatpush.bf16.msra.mxu0 0
  %142 = vmatpush.bf16.msra.mxu0 %v99
  %143 = vmatmul.bf16.gmra.mxu0 %v111
  %v144 = vpop.f32.mrf.mxu0
  %v145 = vadd.f32 %v126, %v144
  %v146 = vpop.f32.mrf.mxu0
  %v147 = vadd.f32 %v128, %v146
  %148 = vmatmul.bf16.gmra.mxu0 %v114
  %v149 = vpop.f32.mrf.mxu0
  %v150 = vadd.f32 %v131, %v149
  %v151 = vpop.f32.mrf.mxu0
  %v152 = vadd.f32 %v133, %v151
  %153 = vdwg.mxu0
  %v154 = vld [vmem:[%s2] sm:$0x1]
  %v156 = vperm.slane %v154, 0
  %v158 = vmul.f32 %v145, %v156
  %v159 = vmul.f32 %v147, %v156
  %v160 = vmul.f32 %v150, %v156
  %v161 = vmul.f32 %v152, %v156
  %s162 = scalar_lea.vmem %s2, 1
  %v163 = vld [vmem:[%s162] sm:$0x1]
  %v165 = vperm.slane %v163, 0
  %v167 = vadd.f32 %v158, %v165
  %v168 = vadd.f32 %v159, %v165
  %v169 = vadd.f32 %v160, %v165
  %v170 = vadd.f32 %v161, %v165
  %171 = vst.msk [vmem:[%s3] sm:$0xff] %vm109, %v167
  %172 = vst.msk [vmem:[%s3 + $0x8] sm:$0xff] %vm109, %v168
  %173 = vst.msk [vmem:[%s3 + $0x10] sm:$0xff] %vm109, %v169
  %174 = vst.msk [vmem:[%s3 + $0x18] sm:$0xff] %vm109, %v170
  // Predicated region
  $region14: #{multiscale_scconv2d.37} parent=0 // pred_check
    _
  $region15: #{multiscale_scconv2d.37} parent=0 // pred_check_branch
    %176 = sbr.rel (0) target = $region17
  $region16: #{multiscale_scconv2d.37} parent=0 // pred_region
    _
  $region17: #{multiscale_scconv2d.37} parent=0 // pred_fallthru
    _
  // Predicated region
  $region18: #{multiscale_scconv2d.37} parent=0 // pred_check
    _
  $region19: #{multiscale_scconv2d.37} parent=0 // pred_check_branch
    %178 = sbr.rel (0) target = $region21
  $region20: #{multiscale_scconv2d.37} parent=0 // pred_region
    _
  $region21: #{multiscale_scconv2d.37} parent=0 // pred_fallthru
    _

// kernel: multiscale_scconv2d.38
$region0: #{multiscale_scconv2d.38}
  #allocation0 [shape = 'u32[]', space=smem, size = 0x4, offset = 0x4, fixed_abs, tag = 'smem constant byte address 0x4 - core index']
  #allocation1 [shape = 'u32[72,128]{1,0:T(1,128)}', space=vmem, size = 0x9000, scoped, tag = 'internal scratch']
  %s0 = inlined_call_operand.vmem [shape: bf16[512,144], index: 0, kind: input, shape index: {}]
  %s1 = inlined_call_operand.vmem [shape: bf16[144,16], index: 1, kind: input, shape index: {}]
  %s2 = inlined_call_operand.vmem [shape: f32[2,1,16], index: 2, kind: input, shape index: {}]
  %s3 = inlined_call_operand.vmem [shape: f32[512,16], index: 3, kind: input, shape index: {}]
  %s4 = inlined_call_operand.vmem [shape: f32[512,16], index: 4, kind: output, shape index: {}]
  %s5 = sld [smem:[#allocation0]]
  $region49: #{multiscale_scconv2d.38} parent=0
    _
  %s7 = ssub.s32 1, %s5
  %s8 = scalar_select 0, %s7, %s5
  loop: start=0, step=1, limit=4
  $region2: #{multiscale_scconv2d.38} parent=0 // loop_pre_header
    _
  $region3: #{multiscale_scconv2d.38} parent=0 // loop_header
    %s10 = sphi 0, %s14
    %p11 = scmp.ge.s32.totalorder %s10, 4
    %s20 = sphi 0, %s22
    %s23 = sphi 0, %s20
    %s24 = sphi 0, %s23
    %s40 = sphi 0, %s24
    %s44 = sphi 0, %s44
    %s46 = sphi 0, %s44
    %s47 = sphi 0, %s46
    %s61 = sphi 0, %s47
    %s65 = sphi 0, %s65
    %s67 = sphi 0, %s65
    %s68 = sphi 0, %s67
    %s82 = sphi 0, %s68
    %s88 = sphi 0, %s90
    %s91 = sphi 0, %s88
    %s92 = sphi 0, %s91
    %s108 = sphi 0, %s92
    %s114 = sphi 0, %s116
    %s117 = sphi 0, %s114
    %s118 = sphi 0, %s117
    %s134 = sphi 0, %s118
  $region4: #{multiscale_scconv2d.38} parent=0 // loop_header_branch
    %13 = sbr.rel (%p11) target = $region8
  $region5: #{multiscale_scconv2d.38} parent=0 // loop_body
    %s15 = ssub.s32 %s10, 1
    %s16 = ssub.s32 %s10, 2
    %s17 = sadd.s32 %s10, 1
    %s18 = ssub.s32 %s10, %s17
    %p19 = scmp.eq.s32.totalorder %s18, 0
    %s21 = sadd.s32 %s20, 1
    %s22 = scalar_select %p19, %s20, %s21
    %p25 = pneg %p19
    %p26 = scmp.eq.s32.totalorder %s10, 1
    %p27 = por %p25, %p26
    %p28 = scmp.ne.s32.totalorder %s20, %s23
    %p29 = scmp.eq.s32.totalorder %s10, 0
    %p30 = por %p28, %p29
    %p31 = scmp.ne.s32.totalorder %s20, %s23
    %p32 = scmp.eq.s32.totalorder %s15, 1
    %p33 = por %p31, %p32
    %p34 = scmp.ne.s32.totalorder %s23, %s24
    %p35 = scmp.eq.s32.totalorder %s15, 0
    %p36 = por %p34, %p35
    %p37 = scmp.ne.s32.totalorder %s23, %s24
    %p38 = scmp.eq.s32.totalorder %s16, 1
    %p39 = por %p37, %p38
    %p41 = scmp.ne.s32.totalorder %s24, %s40
    %p42 = scmp.eq.s32.totalorder %s16, 0
    %p43 = por %p41, %p42
    %s45 = sadd.s32 %s44, 1
    %p48 = scmp.eq.s32.totalorder %s10, 1
    %p49 = scmp.ne.s32.totalorder %s44, %s46
    %p50 = scmp.eq.s32.totalorder %s10, 0
    %p51 = por %p49, %p50
    %p52 = scmp.ne.s32.totalorder %s44, %s46
    %p53 = scmp.eq.s32.totalorder %s15, 1
    %p54 = por %p52, %p53
    %p55 = scmp.ne.s32.totalorder %s46, %s47
    %p56 = scmp.eq.s32.totalorder %s15, 0
    %p57 = por %p55, %p56
    %p58 = scmp.ne.s32.totalorder %s46, %s47
    %p59 = scmp.eq.s32.totalorder %s16, 1
    %p60 = por %p58, %p59
    %p62 = scmp.ne.s32.totalorder %s47, %s61
    %p63 = scmp.eq.s32.totalorder %s16, 0
    %p64 = por %p62, %p63
    %s66 = sadd.s32 %s65, 1
    %p69 = scmp.eq.s32.totalorder %s10, 1
    %p70 = scmp.ne.s32.totalorder %s65, %s67
    %p71 = scmp.eq.s32.totalorder %s10, 0
    %p72 = por %p70, %p71
    %p73 = scmp.ne.s32.totalorder %s65, %s67
    %p74 = scmp.eq.s32.totalorder %s15, 1
    %p75 = por %p73, %p74
    %p76 = scmp.ne.s32.totalorder %s67, %s68
    %p77 = scmp.eq.s32.totalorder %s15, 0
    %p78 = por %p76, %p77
    %p79 = scmp.ne.s32.totalorder %s67, %s68
    %p80 = scmp.eq.s32.totalorder %s16, 1
    %p81 = por %p79, %p80
    %p83 = scmp.ne.s32.totalorder %s68, %s82
    %p84 = scmp.eq.s32.totalorder %s16, 0
    %p85 = por %p83, %p84
    %s86 = ssub.s32 %s10, %s17
    %p87 = scmp.eq.s32.totalorder %s86, 0
    %s89 = sadd.s32 %s88, 1
    %s90 = scalar_select %p87, %s88, %s89
    %p93 = pneg %p87
    %p94 = scmp.eq.s32.totalorder %s10, 1
    %p95 = por %p93, %p94
    %p96 = scmp.ne.s32.totalorder %s88, %s91
    %p97 = scmp.eq.s32.totalorder %s10, 0
    %p98 = por %p96, %p97
    %p99 = scmp.ne.s32.totalorder %s88, %s91
    %p100 = scmp.eq.s32.totalorder %s15, 1
    %p101 = por %p99, %p100
    %p102 = scmp.ne.s32.totalorder %s91, %s92
    %p103 = scmp.eq.s32.totalorder %s15, 0
    %p104 = por %p102, %p103
    %p105 = scmp.ne.s32.totalorder %s91, %s92
    %p106 = scmp.eq.s32.totalorder %s16, 1
    %p107 = por %p105, %p106
    %p109 = scmp.ne.s32.totalorder %s92, %s108
    %p110 = scmp.eq.s32.totalorder %s16, 0
    %p111 = por %p109, %p110
    %s112 = ssub.s32 %s10, %s17
    %p113 = scmp.eq.s32.totalorder %s112, 0
    %s115 = sadd.s32 %s114, 1
    %s116 = scalar_select %p113, %s114, %s115
    %p119 = pneg %p113
    %p120 = scmp.eq.s32.totalorder %s10, 1
    %p121 = por %p119, %p120
    %p122 = scmp.ne.s32.totalorder %s114, %s117
    %p123 = scmp.eq.s32.totalorder %s10, 0
    %p124 = por %p122, %p123
    %p125 = scmp.ne.s32.totalorder %s114, %s117
    %p126 = scmp.eq.s32.totalorder %s15, 1
    %p127 = por %p125, %p126
    %p128 = scmp.ne.s32.totalorder %s117, %s118
    %p129 = scmp.eq.s32.totalorder %s15, 0
    %p130 = por %p128, %p129
    %p131 = scmp.ne.s32.totalorder %s117, %s118
    %p132 = scmp.eq.s32.totalorder %s16, 1
    %p133 = por %p131, %p132
    %p135 = scmp.ne.s32.totalorder %s118, %s134
    %p136 = scmp.eq.s32.totalorder %s16, 0
    %p137 = por %p135, %p136
    %p138 = scmp.le.s32.totalorder 1, %s10
    %p139 = scmp.lt.s32.totalorder %s10, 3
    %p140 = pnand %p138, %p139
    %p141 = pneg %p140
    // Predicated region
    $region9: #{multiscale_scconv2d.38} parent=5 // pred_check
      _
    $region10: #{multiscale_scconv2d.38} parent=5 // pred_check_branch
      %143 = sbr.rel (%p140) target = $region12
    $region11: #{multiscale_scconv2d.38} parent=5 // pred_region
      %s144 = ssub.s32 %s10, 1
      // Predicated region
      $region13: #{multiscale_scconv2d.38} parent=11 // pred_check
        %p145 = pneg %p57
      $region14: #{multiscale_scconv2d.38} parent=11 // pred_check_branch
        %147 = sbr.rel (%p145) target = $region16
      $region15: #{multiscale_scconv2d.38} parent=11 // pred_region
        _
      $region16: #{multiscale_scconv2d.38} parent=11 // pred_fallthru
        _
      // Predicated region
      $region17: #{multiscale_scconv2d.38} parent=11 // pred_check
        %p148 = pneg %p78
      $region18: #{multiscale_scconv2d.38} parent=11 // pred_check_branch
        %150 = sbr.rel (%p148) target = $region20
      $region19: #{multiscale_scconv2d.38} parent=11 // pred_region
        _
      $region20: #{multiscale_scconv2d.38} parent=11 // pred_fallthru
        _
    $region12: #{multiscale_scconv2d.38} parent=5 // pred_fallthru
      _
    %p151 = scmp.lt.s32.totalorder %s10, 2
    // Predicated region
    $region21: #{multiscale_scconv2d.38} parent=5 // pred_check
      %p152 = pneg %p151
    $region22: #{multiscale_scconv2d.38} parent=5 // pred_check_branch
      %154 = sbr.rel (%p152) target = $region24
    $region23: #{multiscale_scconv2d.38} parent=5 // pred_region
      // Predicated region
      $region25: #{multiscale_scconv2d.38} parent=23 // pred_check
        %p155 = pneg %p30
      $region26: #{multiscale_scconv2d.38} parent=23 // pred_check_branch
        %157 = sbr.rel (%p155) target = $region28
      $region27: #{multiscale_scconv2d.38} parent=23 // pred_region
        %s158 = smul.u32 32, %s10
        %p159 = scmp.lt.s32.totalorder %s158, 63
        %s160 = scalar_select %p159, %s158, 63
        %s161 = smul.addr %s160, 2
        %s162 = smul.addr %s161, 4
        %s163 = scalar_lea.vmem %s0, %s162
        %s164 = smul.u32 32, %s10
      $region28: #{multiscale_scconv2d.38} parent=23 // pred_fallthru
        _
      // Predicated region
      $region29: #{multiscale_scconv2d.38} parent=23 // pred_check
        %p165 = pneg %p98
      $region30: #{multiscale_scconv2d.38} parent=23 // pred_check_branch
        %167 = sbr.rel (%p165) target = $region32
      $region31: #{multiscale_scconv2d.38} parent=23 // pred_region
        %s168 = smul.u32 32, %s10
        %p169 = scmp.lt.s32.totalorder %s168, 63
        %s170 = scalar_select %p169, %s168, 63
        %s171 = smul.addr %s170, 8
        %s172 = scalar_lea.vmem %s3, %s171
        %s173 = smul.u32 32, %s10
      $region32: #{multiscale_scconv2d.38} parent=23 // pred_fallthru
        _
    $region24: #{multiscale_scconv2d.38} parent=5 // pred_fallthru
      _
    %p174 = scmp.le.s32.totalorder 1, %s10
    %p175 = scmp.lt.s32.totalorder %s10, 3
    %p176 = pnand %p174, %p175
    %p177 = pneg %p176
    // Predicated region
    $region33: #{multiscale_scconv2d.38} parent=5 // pred_check
      _
    $region34: #{multiscale_scconv2d.38} parent=5 // pred_check_branch
      %179 = sbr.rel (%p176) target = $region36
    $region35: #{multiscale_scconv2d.38} parent=5 // pred_region
      %s180 = ssub.s32 %s10, 1
      %s181 = smul.u32 32, %s15
      %p182 = scmp.lt.s32.totalorder %s181, 63
      %s183 = scalar_select %p182, %s181, 63
      %s184 = smul.addr %s183, 2
      %s185 = smul.addr %s184, 4
      %s186 = scalar_lea.vmem %s0, %s185
      %p187 = pneg %p36
      %p188 = pneg %p33
      %p189 = pneg %p57
      %p190 = pneg %p54
      %p191 = pneg %p78
      %p192 = pneg %p75
      %s193 = smul.u32 32, %s15
      %p194 = scmp.lt.s32.totalorder %s193, 63
      %s195 = scalar_select %p194, %s193, 63
      %s196 = smul.addr %s195, 8
      %s197 = scalar_lea.vmem %s3, %s196
      %p198 = pneg %p104
      %p199 = pneg %p101
      %p200 = pneg %p130
      %p201 = pneg %p127
      %s202 = smul.u32 32, %s15
      %p203 = scmp.lt.s32.totalorder %s202, 63
      %s204 = scalar_select %p203, %s202, 63
      %s205 = smul.addr %s204, 8
      %s206 = scalar_lea.vmem %s4, %s205
      %s207 = smul.u32 32, %s15
      %p208 = scmp.lt.s32.totalorder %s207, 63
      %s209 = scalar_select %p208, %s207, 63
      %s210 = smul.addr %s209, 2
      %s211 = smul.addr %s210, 4
      %s212 = scalar_lea.vmem %s0, %s211
      %s213 = smul.u32 32, %s15
      %s214 = smul.u32 32, %s15
      %p215 = scmp.lt.s32.totalorder %s214, 63
      %s216 = scalar_select %p215, %s214, 63
      %s217 = smul.addr %s216, 8
      %s218 = scalar_lea.vmem %s3, %s217
      %s219 = smul.u32 32, %s15
      %s220 = smul.u32 32, %s15
      %p221 = scmp.lt.s32.totalorder %s220, 63
      %s222 = scalar_select %p221, %s220, 63
      %s223 = smul.addr %s222, 8
      %s224 = scalar_lea.vmem %s4, %s223
      %s225 = smul.u32 32, %s15
      %v227 = vld [vmem:[%s212] sm:$0xff]
      %v228 = vld [vmem:[%s212 + $0x8] sm:$0xff]
      %v229 = vld [vmem:[%s212 + $0x10] sm:$0xff]
      %v230 = vld [vmem:[%s212 + $0x18] sm:$0xff]
      %v231 = vld [vmem:[%s212 + $0x20] sm:$0xff]
      %v232 = vld [vmem:[%s212 + $0x28] sm:$0xff]
      %v233 = vld [vmem:[%s212 + $0x30] sm:$0xff]
      %v234 = vld [vmem:[%s212 + $0x38] sm:$0xff]
      %v235 = vld [vmem:[%s212 + $0x40] sm:$0xff]
      %v236 = vld [vmem:[%s212 + $0x48] sm:$0xff]
      %v237 = vld [vmem:[%s212 + $0x50] sm:$0xff]
      %v238 = vld [vmem:[%s212 + $0x58] sm:$0xff]
      %v239 = vld [vmem:[%s212 + $0x60] sm:$0xff]
      %v240 = vld [vmem:[%s212 + $0x68] sm:$0xff]
      %v241 = vld [vmem:[%s212 + $0x70] sm:$0xff]
      %v242 = vld [vmem:[%s212 + $0x78] sm:$0xff]
      %v243 = vld [vmem:[%s212 + $0x80] sm:$0xff]
      %v244 = vld [vmem:[%s212 + $0x88] sm:$0xff]
      %v245 = vld [vmem:[%s212 + $0x90] sm:$0xff]
      %v246 = vld [vmem:[%s212 + $0x98] sm:$0xff]
      %v247 = vld [vmem:[%s212 + $0xa0] sm:$0xff]
      %v248 = vld [vmem:[%s212 + $0xa8] sm:$0xff]
      %v249 = vld [vmem:[%s212 + $0xb0] sm:$0xff]
      %v250 = vld [vmem:[%s212 + $0xb8] sm:$0xff]
      %v251 = vld [vmem:[%s212 + $0xc0] sm:$0xff]
      %v252 = vld [vmem:[%s212 + $0xc8] sm:$0xff]
      %v253 = vld [vmem:[%s212 + $0xd0] sm:$0xff]
      %v254 = vld [vmem:[%s212 + $0xd8] sm:$0xff]
      %v255 = vld [vmem:[%s212 + $0xe0] sm:$0xff]
      %v256 = vld [vmem:[%s212 + $0xe8] sm:$0xff]
      %v257 = vld [vmem:[%s212 + $0xf0] sm:$0xff]
      %v258 = vld [vmem:[%s212 + $0xf8] sm:$0xff]
      %v259 = vld [vmem:[%s1] sm:$0xf]
      %v260 = vld [vmem:[%s1 + $0x4] sm:$0xf]
      %v261 = vld [vmem:[%s1 + $0x8] sm:$0xf]
      %v262 = vld [vmem:[%s1 + $0xc] sm:$0xf]
      %v263 = vld [vmem:[%s1 + $0x10] sm:$0xf]
      %v264 = vld [vmem:[%s1 + $0x14] sm:$0xf]
      %v265 = vld [vmem:[%s1 + $0x18] sm:$0xf]
      %v266 = vld [vmem:[%s1 + $0x1c] sm:$0xf]
      %v267 = vld [vmem:[%s1 + $0x20] sm:$0xf]
      %v268 = vld [vmem:[%s1 + $0x24] sm:$0xf]
      %v269 = vld [vmem:[%s1 + $0x28] sm:$0xf]
      %v270 = vld [vmem:[%s1 + $0x2c] sm:$0xf]
      %v271 = vld [vmem:[%s1 + $0x30] sm:$0xf]
      %v272 = vld [vmem:[%s1 + $0x34] sm:$0xf]
      %v273 = vld [vmem:[%s1 + $0x38] sm:$0xf]
      %v274 = vld [vmem:[%s1 + $0x3c] sm:$0xf]
      %v275 = vld [vmem:[%s1 + $0x40] sm:$0xf]
      %v276 = vld [vmem:[%s1 + $0x44] sm:$0xf]
      %v309 = vunpack.c.l.b16 %v227
      %v310 = vunpack.c.h.b16 %v227
      %v311 = vunpack.c.l.b16 %v228
      %v312 = vunpack.c.h.b16 %v228
      %v313 = vunpack.c.l.b16 %v229
      %v314 = vunpack.c.h.b16 %v229
      %v315 = vunpack.c.l.b16 %v230
      %v316 = vunpack.c.h.b16 %v230
      %v317 = vunpack.c.l.b16 %v231
      %v318 = vunpack.c.h.b16 %v231
      %v319 = vunpack.c.l.b16 %v232
      %v320 = vunpack.c.h.b16 %v232
      %v321 = vunpack.c.l.b16 %v233
      %v322 = vunpack.c.h.b16 %v233
      %v323 = vunpack.c.l.b16 %v234
      %v324 = vunpack.c.h.b16 %v234
      %v325 = vunpack.c.l.b16 %v235
      %v326 = vunpack.c.h.b16 %v235
      %v327 = vunpack.c.l.b16 %v236
      %v328 = vunpack.c.h.b16 %v236
      %v329 = vunpack.c.l.b16 %v237
      %v330 = vunpack.c.h.b16 %v237
      %v331 = vunpack.c.l.b16 %v238
      %v332 = vunpack.c.h.b16 %v238
      %v333 = vunpack.c.l.b16 %v239
      %v334 = vunpack.c.h.b16 %v239
      %v335 = vunpack.c.l.b16 %v240
      %v336 = vunpack.c.h.b16 %v240
      %v337 = vunpack.c.l.b16 %v241
      %v338 = vunpack.c.h.b16 %v241
      %v339 = vunpack.c.l.b16 %v242
      %v340 = vunpack.c.h.b16 %v242
      %v341 = vunpack.c.l.b16 %v243
      %v342 = vunpack.c.h.b16 %v243
      %v343 = vunpack.c.l.b16 %v244
      %v344 = vunpack.c.h.b16 %v244
      %v345 = vunpack.c.l.b16 %v245
      %v346 = vunpack.c.h.b16 %v245
      %v347 = vunpack.c.l.b16 %v246
      %v348 = vunpack.c.h.b16 %v246
      %v349 = vunpack.c.l.b16 %v247
      %v350 = vunpack.c.h.b16 %v247
      %v351 = vunpack.c.l.b16 %v248
      %v352 = vunpack.c.h.b16 %v248
      %v353 = vunpack.c.l.b16 %v249
      %v354 = vunpack.c.h.b16 %v249
      %v355 = vunpack.c.l.b16 %v250
      %v356 = vunpack.c.h.b16 %v250
      %v357 = vunpack.c.l.b16 %v251
      %v358 = vunpack.c.h.b16 %v251
      %v359 = vunpack.c.l.b16 %v252
      %v360 = vunpack.c.h.b16 %v252
      %v361 = vunpack.c.l.b16 %v253
      %v362 = vunpack.c.h.b16 %v253
      %v363 = vunpack.c.l.b16 %v254
      %v364 = vunpack.c.h.b16 %v254
      %v365 = vunpack.c.l.b16 %v255
      %v366 = vunpack.c.h.b16 %v255
      %v367 = vunpack.c.l.b16 %v256
      %v368 = vunpack.c.h.b16 %v256
      %v369 = vunpack.c.l.b16 %v257
      %v370 = vunpack.c.h.b16 %v257
      %v371 = vunpack.c.l.b16 %v258
      %v372 = vunpack.c.h.b16 %v258
      %v373 = vpack.c.b16 %v311, %v309
      %v374 = vpack.c.b16 %v312, %v310
      %v375 = vpack.c.b16 %v315, %v313
      %v376 = vpack.c.b16 %v316, %v314
      %v377 = vpack.c.b16 %v319, %v317
      %v378 = vpack.c.b16 %v320, %v318
      %v379 = vpack.c.b16 %v323, %v321
      %v380 = vpack.c.b16 %v324, %v322
      %v381 = vpack.c.b16 %v327, %v325
      %v382 = vpack.c.b16 %v328, %v326
      %v383 = vpack.c.b16 %v331, %v329
      %v384 = vpack.c.b16 %v332, %v330
      %v385 = vpack.c.b16 %v335, %v333
      %v386 = vpack.c.b16 %v336, %v334
      %v387 = vpack.c.b16 %v339, %v337
      %v388 = vpack.c.b16 %v340, %v338
      %v389 = vpack.c.b16 %v343, %v341
      %v390 = vpack.c.b16 %v344, %v342
      %v391 = vpack.c.b16 %v347, %v345
      %v392 = vpack.c.b16 %v348, %v346
      %v393 = vpack.c.b16 %v351, %v349
      %v394 = vpack.c.b16 %v352, %v350
      %v395 = vpack.c.b16 %v355, %v353
      %v396 = vpack.c.b16 %v356, %v354
      %v397 = vpack.c.b16 %v359, %v357
      %v398 = vpack.c.b16 %v360, %v358
      %v399 = vpack.c.b16 %v363, %v361
      %v400 = vpack.c.b16 %v364, %v362
      %v401 = vpack.c.b16 %v367, %v365
      %v402 = vpack.c.b16 %v368, %v366
      %v403 = vpack.c.b16 %v371, %v369
      %v404 = vpack.c.b16 %v372, %v370
      %v439 = vunpack.c.l.b16 %v259
      %v440 = vunpack.c.l.b16 %v260
      %v441 = vunpack.c.l.b16 %v261
      %v442 = vunpack.c.l.b16 %v262
      %v443 = vunpack.c.l.b16 %v263
      %v444 = vunpack.c.l.b16 %v264
      %v445 = vunpack.c.l.b16 %v265
      %v446 = vunpack.c.l.b16 %v266
      %v447 = vunpack.c.l.b16 %v267
      %v448 = vunpack.c.l.b16 %v268
      %v449 = vunpack.c.l.b16 %v269
      %v450 = vunpack.c.l.b16 %v270
      %v451 = vunpack.c.l.b16 %v271
      %v452 = vunpack.c.l.b16 %v272
      %v453 = vunpack.c.l.b16 %v273
      %v454 = vunpack.c.l.b16 %v274
      %v455 = vunpack.c.l.b16 %v275
      %v456 = vunpack.c.l.b16 %v276
      %v457 = vpack.c.b16 %v440, %v439
      %v458 = vpack.c.b16 %v442, %v441
      %v459 = vpack.c.b16 %v444, %v443
      %v460 = vpack.c.b16 %v446, %v445
      %v461 = vpack.c.b16 %v448, %v447
      %v462 = vpack.c.b16 %v450, %v449
      %v463 = vpack.c.b16 %v452, %v451
      %v464 = vpack.c.b16 %v454, %v453
      %v465 = vpack.c.b16 %v456, %v455
      %vm475 = vcmask 130048
      %v477 = vsel %vm475, %v374, 0
      %v480 = vsel %vm475, %v376, 0
      %v483 = vsel %vm475, %v378, 0
      %v486 = vsel %vm475, %v380, 0
      %v489 = vsel %vm475, %v382, 0
      %v492 = vsel %vm475, %v384, 0
      %v495 = vsel %vm475, %v386, 0
      %v498 = vsel %vm475, %v388, 0
      %v501 = vsel %vm475, %v390, 0
      %v504 = vsel %vm475, %v392, 0
      %v507 = vsel %vm475, %v394, 0
      %v510 = vsel %vm475, %v396, 0
      %v513 = vsel %vm475, %v398, 0
      %v516 = vsel %vm475, %v400, 0
      %v519 = vsel %vm475, %v402, 0
      %v522 = vsel %vm475, %v404, 0
      %524 = vmatpush.bf16.msra.mxu0 %v464
      %525 = vmatpush.bf16.msra.mxu0 %v463
      %526 = vmatpush.bf16.msra.mxu0 %v462
      %527 = vmatpush.bf16.msra.mxu0 %v461
      %528 = vmatpush.bf16.msra.mxu0 %v460
      %529 = vmatpush.bf16.msra.mxu0 %v459
      %530 = vmatpush.bf16.msra.mxu0 %v458
      %531 = vmatpush.bf16.msra.mxu0 %v457
      %532 = vmatmul.bf16.gmra.mxu0 %v373
      %v533 = vpop.f32.mrf.mxu0
      %v534 = vadd.f32 0.0, %v533
      %v535 = vpop.f32.mrf.mxu0
      %v536 = vadd.f32 0.0, %v535
      %537 = vmatmul.bf16.gmra.mxu0 %v375
      %v538 = vpop.f32.mrf.mxu0
      %v539 = vadd.f32 0.0, %v538
      %v540 = vpop.f32.mrf.mxu0
      %v541 = vadd.f32 0.0, %v540
      %542 = vmatmul.bf16.gmra.mxu0 %v377
      %v543 = vpop.f32.mrf.mxu0
      %v544 = vadd.f32 0.0, %v543
      %v545 = vpop.f32.mrf.mxu0
      %v546 = vadd.f32 0.0, %v545
      %547 = vmatmul.bf16.gmra.mxu0 %v379
      %v548 = vpop.f32.mrf.mxu0
      %v549 = vadd.f32 0.0, %v548
      %v550 = vpop.f32.mrf.mxu0
      %v551 = vadd.f32 0.0, %v550
      %552 = vmatmul.bf16.gmra.mxu0 %v381
      %v553 = vpop.f32.mrf.mxu0
      %v554 = vadd.f32 0.0, %v553
      %v555 = vpop.f32.mrf.mxu0
      %v556 = vadd.f32 0.0, %v555
      %557 = vmatmul.bf16.gmra.mxu0 %v383
      %v558 = vpop.f32.mrf.mxu0
      %v559 = vadd.f32 0.0, %v558
      %v560 = vpop.f32.mrf.mxu0
      %v561 = vadd.f32 0.0, %v560
      %562 = vmatmul.bf16.gmra.mxu0 %v385
      %v563 = vpop.f32.mrf.mxu0
      %v564 = vadd.f32 0.0, %v563
      %v565 = vpop.f32.mrf.mxu0
      %v566 = vadd.f32 0.0, %v565
      %567 = vmatmul.bf16.gmra.mxu0 %v387
      %v568 = vpop.f32.mrf.mxu0
      %v569 = vadd.f32 0.0, %v568
      %v570 = vpop.f32.mrf.mxu0
      %v571 = vadd.f32 0.0, %v570
      %572 = vmatmul.bf16.gmra.mxu0 %v389
      %v573 = vpop.f32.mrf.mxu0
      %v574 = vadd.f32 0.0, %v573
      %v575 = vpop.f32.mrf.mxu0
      %v576 = vadd.f32 0.0, %v575
      %577 = vmatmul.bf16.gmra.mxu0 %v391
      %v578 = vpop.f32.mrf.mxu0
      %v579 = vadd.f32 0.0, %v578
      %v580 = vpop.f32.mrf.mxu0
      %v581 = vadd.f32 0.0, %v580
      %582 = vmatmul.bf16.gmra.mxu0 %v393
      %v583 = vpop.f32.mrf.mxu0
      %v584 = vadd.f32 0.0, %v583
      %v585 = vpop.f32.mrf.mxu0
      %v586 = vadd.f32 0.0, %v585
      %587 = vmatmul.bf16.gmra.mxu0 %v395
      %v588 = vpop.f32.mrf.mxu0
      %v589 = vadd.f32 0.0, %v588
      %v590 = vpop.f32.mrf.mxu0
      %v591 = vadd.f32 0.0, %v590
      %592 = vmatmul.bf16.gmra.mxu0 %v397
      %v593 = vpop.f32.mrf.mxu0
      %v594 = vadd.f32 0.0, %v593
      %v595 = vpop.f32.mrf.mxu0
      %v596 = vadd.f32 0.0, %v595
      %597 = vmatmul.bf16.gmra.mxu0 %v399
      %v598 = vpop.f32.mrf.mxu0
      %v599 = vadd.f32 0.0, %v598
      %v600 = vpop.f32.mrf.mxu0
      %v601 = vadd.f32 0.0, %v600
      %602 = vmatmul.bf16.gmra.mxu0 %v401
      %v603 = vpop.f32.mrf.mxu0
      %v604 = vadd.f32 0.0, %v603
      %v605 = vpop.f32.mrf.mxu0
      %v606 = vadd.f32 0.0, %v605
      %607 = vmatmul.bf16.gmra.mxu0 %v403
      %v608 = vpop.f32.mrf.mxu0
      %v609 = vadd.f32 0.0, %v608
      %v610 = vpop.f32.mrf.mxu0
      %v611 = vadd.f32 0.0, %v610
      %612 = vdwg.mxu0
      %613 = vmatpush.bf16.msra.mxu0 0
      %614 = vmatpush.bf16.msra.mxu0 0
      %615 = vmatpush.bf16.msra.mxu0 0
      %616 = vmatpush.bf16.msra.mxu0 0
      %617 = vmatpush.bf16.msra.mxu0 0
      %618 = vmatpush.bf16.msra.mxu0 0
      %619 = vmatpush.bf16.msra.mxu0 0
      %620 = vmatpush.bf16.msra.mxu0 %v465
      %621 = vmatmul.bf16.gmra.mxu0 %v477
      %v622 = vpop.f32.mrf.mxu0
      %v623 = vadd.f32 %v534, %v622
      %v624 = vpop.f32.mrf.mxu0
      %v625 = vadd.f32 %v536, %v624
      %626 = vmatmul.bf16.gmra.mxu0 %v480
      %v627 = vpop.f32.mrf.mxu0
      %v628 = vadd.f32 %v539, %v627
      %v629 = vpop.f32.mrf.mxu0
      %v630 = vadd.f32 %v541, %v629
      %631 = vmatmul.bf16.gmra.mxu0 %v483
      %v632 = vpop.f32.mrf.mxu0
      %v633 = vadd.f32 %v544, %v632
      %v634 = vpop.f32.mrf.mxu0
      %v635 = vadd.f32 %v546, %v634
      %636 = vmatmul.bf16.gmra.mxu0 %v486
      %v637 = vpop.f32.mrf.mxu0
      %v638 = vadd.f32 %v549, %v637
      %v639 = vpop.f32.mrf.mxu0
      %v640 = vadd.f32 %v551, %v639
      %641 = vmatmul.bf16.gmra.mxu0 %v489
      %v642 = vpop.f32.mrf.mxu0
      %v643 = vadd.f32 %v554, %v642
      %v644 = vpop.f32.mrf.mxu0
      %v645 = vadd.f32 %v556, %v644
      %646 = vmatmul.bf16.gmra.mxu0 %v492
      %v647 = vpop.f32.mrf.mxu0
      %v648 = vadd.f32 %v559, %v647
      %v649 = vpop.f32.mrf.mxu0
      %v650 = vadd.f32 %v561, %v649
      %651 = vmatmul.bf16.gmra.mxu0 %v495
      %v652 = vpop.f32.mrf.mxu0
      %v653 = vadd.f32 %v564, %v652
      %v654 = vpop.f32.mrf.mxu0
      %v655 = vadd.f32 %v566, %v654
      %656 = vmatmul.bf16.gmra.mxu0 %v498
      %v657 = vpop.f32.mrf.mxu0
      %v658 = vadd.f32 %v569, %v657
      %v659 = vpop.f32.mrf.mxu0
      %v660 = vadd.f32 %v571, %v659
      %661 = vmatmul.bf16.gmra.mxu0 %v501
      %v662 = vpop.f32.mrf.mxu0
      %v663 = vadd.f32 %v574, %v662
      %v664 = vpop.f32.mrf.mxu0
      %v665 = vadd.f32 %v576, %v664
      %666 = vmatmul.bf16.gmra.mxu0 %v504
      %v667 = vpop.f32.mrf.mxu0
      %v668 = vadd.f32 %v579, %v667
      %v669 = vpop.f32.mrf.mxu0
      %v670 = vadd.f32 %v581, %v669
      %671 = vmatmul.bf16.gmra.mxu0 %v507
      %v672 = vpop.f32.mrf.mxu0
      %v673 = vadd.f32 %v584, %v672
      %v674 = vpop.f32.mrf.mxu0
      %v675 = vadd.f32 %v586, %v674
      %676 = vmatmul.bf16.gmra.mxu0 %v510
      %v677 = vpop.f32.mrf.mxu0
      %v678 = vadd.f32 %v589, %v677
      %v679 = vpop.f32.mrf.mxu0
      %v680 = vadd.f32 %v591, %v679
      %681 = vmatmul.bf16.gmra.mxu0 %v513
      %v682 = vpop.f32.mrf.mxu0
      %v683 = vadd.f32 %v594, %v682
      %v684 = vpop.f32.mrf.mxu0
      %v685 = vadd.f32 %v596, %v684
      %686 = vmatmul.bf16.gmra.mxu0 %v516
      %v687 = vpop.f32.mrf.mxu0
      %v688 = vadd.f32 %v599, %v687
      %v689 = vpop.f32.mrf.mxu0
      %v690 = vadd.f32 %v601, %v689
      %691 = vmatmul.bf16.gmra.mxu0 %v519
      %v692 = vpop.f32.mrf.mxu0
      %v693 = vadd.f32 %v604, %v692
      %v694 = vpop.f32.mrf.mxu0
      %v695 = vadd.f32 %v606, %v694
      %696 = vmatmul.bf16.gmra.mxu0 %v522
      %v697 = vpop.f32.mrf.mxu0
      %v698 = vadd.f32 %v609, %v697
      %v699 = vpop.f32.mrf.mxu0
      %v700 = vadd.f32 %v611, %v699
      %701 = vdwg.mxu0
      %v702 = vld [vmem:[%s2] sm:$0x1]
      %v704 = vperm.slane %v702, 0
      %v706 = vmul.f32 %v623, %v704
      %v707 = vmul.f32 %v625, %v704
      %v708 = vmul.f32 %v628, %v704
      %v709 = vmul.f32 %v630, %v704
      %v710 = vmul.f32 %v633, %v704
      %v711 = vmul.f32 %v635, %v704
      %v712 = vmul.f32 %v638, %v704
      %v713 = vmul.f32 %v640, %v704
      %v714 = vmul.f32 %v643, %v704
      %v715 = vmul.f32 %v645, %v704
      %v716 = vmul.f32 %v648, %v704
      %v717 = vmul.f32 %v650, %v704
      %v718 = vmul.f32 %v653, %v704
      %v719 = vmul.f32 %v655, %v704
      %v720 = vmul.f32 %v658, %v704
      %v721 = vmul.f32 %v660, %v704
      %v722 = vmul.f32 %v663, %v704
      %v723 = vmul.f32 %v665, %v704
      %v724 = vmul.f32 %v668, %v704
      %v725 = vmul.f32 %v670, %v704
      %v726 = vmul.f32 %v673, %v704
      %v727 = vmul.f32 %v675, %v704
      %v728 = vmul.f32 %v678, %v704
      %v729 = vmul.f32 %v680, %v704
      %v730 = vmul.f32 %v683, %v704
      %v731 = vmul.f32 %v685, %v704
      %v732 = vmul.f32 %v688, %v704
      %v733 = vmul.f32 %v690, %v704
      %v734 = vmul.f32 %v693, %v704
      %v735 = vmul.f32 %v695, %v704
      %v736 = vmul.f32 %v698, %v704
      %v737 = vmul.f32 %v700, %v704
      %s738 = scalar_lea.vmem %s2, 1
      %v739 = vld [vmem:[%s738] sm:$0x1]
      %v741 = vperm.slane %v739, 0
      %v743 = vadd.f32 %v706, %v741
      %v744 = vadd.f32 %v707, %v741
      %v745 = vadd.f32 %v708, %v741
      %v746 = vadd.f32 %v709, %v741
      %v747 = vadd.f32 %v710, %v741
      %v748 = vadd.f32 %v711, %v741
      %v749 = vadd.f32 %v712, %v741
      %v750 = vadd.f32 %v713, %v741
      %v751 = vadd.f32 %v714, %v741
      %v752 = vadd.f32 %v715, %v741
      %v753 = vadd.f32 %v716, %v741
      %v754 = vadd.f32 %v717, %v741
      %v755 = vadd.f32 %v718, %v741
      %v756 = vadd.f32 %v719, %v741
      %v757 = vadd.f32 %v720, %v741
      %v758 = vadd.f32 %v721, %v741
      %v759 = vadd.f32 %v722, %v741
      %v760 = vadd.f32 %v723, %v741
      %v761 = vadd.f32 %v724, %v741
      %v762 = vadd.f32 %v725, %v741
      %v763 = vadd.f32 %v726, %v741
      %v764 = vadd.f32 %v727, %v741
      %v765 = vadd.f32 %v728, %v741
      %v766 = vadd.f32 %v729, %v741
      %v767 = vadd.f32 %v730, %v741
      %v768 = vadd.f32 %v731, %v741
      %v769 = vadd.f32 %v732, %v741
      %v770 = vadd.f32 %v733, %v741
      %v771 = vadd.f32 %v734, %v741
      %v772 = vadd.f32 %v735, %v741
      %v773 = vadd.f32 %v736, %v741
      %v774 = vadd.f32 %v737, %v741
      %v775 = vld [vmem:[%s218] sm:$0xff]
      %v776 = vld [vmem:[%s218 + $0x8] sm:$0xff]
      %v777 = vld [vmem:[%s218 + $0x10] sm:$0xff]
      %v778 = vld [vmem:[%s218 + $0x18] sm:$0xff]
      %v779 = vld [vmem:[%s218 + $0x20] sm:$0xff]
      %v780 = vld [vmem:[%s218 + $0x28] sm:$0xff]
      %v781 = vld [vmem:[%s218 + $0x30] sm:$0xff]
      %v782 = vld [vmem:[%s218 + $0x38] sm:$0xff]
      %v783 = vld [vmem:[%s218 + $0x40] sm:$0xff]
      %v784 = vld [vmem:[%s218 + $0x48] sm:$0xff]
      %v785 = vld [vmem:[%s218 + $0x50] sm:$0xff]
      %v786 = vld [vmem:[%s218 + $0x58] sm:$0xff]
      %v787 = vld [vmem:[%s218 + $0x60] sm:$0xff]
      %v788 = vld [vmem:[%s218 + $0x68] sm:$0xff]
      %v789 = vld [vmem:[%s218 + $0x70] sm:$0xff]
      %v790 = vld [vmem:[%s218 + $0x78] sm:$0xff]
      %v791 = vld [vmem:[%s218 + $0x80] sm:$0xff]
      %v792 = vld [vmem:[%s218 + $0x88] sm:$0xff]
      %v793 = vld [vmem:[%s218 + $0x90] sm:$0xff]
      %v794 = vld [vmem:[%s218 + $0x98] sm:$0xff]
      %v795 = vld [vmem:[%s218 + $0xa0] sm:$0xff]
      %v796 = vld [vmem:[%s218 + $0xa8] sm:$0xff]
      %v797 = vld [vmem:[%s218 + $0xb0] sm:$0xff]
      %v798 = vld [vmem:[%s218 + $0xb8] sm:$0xff]
      %v799 = vld [vmem:[%s218 + $0xc0] sm:$0xff]
      %v800 = vld [vmem:[%s218 + $0xc8] sm:$0xff]
      %v801 = vld [vmem:[%s218 + $0xd0] sm:$0xff]
      %v802 = vld [vmem:[%s218 + $0xd8] sm:$0xff]
      %v803 = vld [vmem:[%s218 + $0xe0] sm:$0xff]
      %v804 = vld [vmem:[%s218 + $0xe8] sm:$0xff]
      %v805 = vld [vmem:[%s218 + $0xf0] sm:$0xff]
      %v806 = vld [vmem:[%s218 + $0xf8] sm:$0xff]
      %v807 = vsub.f32 0.0, %v775
      %v808 = vsub.f32 0.0, %v776
      %v809 = vsub.f32 0.0, %v777
      %v810 = vsub.f32 0.0, %v778
      %v811 = vsub.f32 0.0, %v779
      %v812 = vsub.f32 0.0, %v780
      %v813 = vsub.f32 0.0, %v781
      %v814 = vsub.f32 0.0, %v782
      %v815 = vsub.f32 0.0, %v783
      %v816 = vsub.f32 0.0, %v784
      %v817 = vsub.f32 0.0, %v785
      %v818 = vsub.f32 0.0, %v786
      %v819 = vsub.f32 0.0, %v787
      %v820 = vsub.f32 0.0, %v788
      %v821 = vsub.f32 0.0, %v789
      %v822 = vsub.f32 0.0, %v790
      %v823 = vsub.f32 0.0, %v791
      %v824 = vsub.f32 0.0, %v792
      %v825 = vsub.f32 0.0, %v793
      %v826 = vsub.f32 0.0, %v794
      %v827 = vsub.f32 0.0, %v795
      %v828 = vsub.f32 0.0, %v796
      %v829 = vsub.f32 0.0, %v797
      %v830 = vsub.f32 0.0, %v798
      %v831 = vsub.f32 0.0, %v799
      %v832 = vsub.f32 0.0, %v800
      %v833 = vsub.f32 0.0, %v801
      %v834 = vsub.f32 0.0, %v802
      %v835 = vsub.f32 0.0, %v803
      %v836 = vsub.f32 0.0, %v804
      %v837 = vsub.f32 0.0, %v805
      %v838 = vsub.f32 0.0, %v806
      %v839 = vmul.f32 %v807, 1.442695
      %v840 = vpow.pop %v839
      %v841 = vmul.f32 %v808, 1.442695
      %v842 = vpow.pop %v841
      %v843 = vmul.f32 %v809, 1.442695
      %v844 = vpow.pop %v843
      %v845 = vmul.f32 %v810, 1.442695
      %v846 = vpow.pop %v845
      %v847 = vmul.f32 %v811, 1.442695
      %v848 = vpow.pop %v847
      %v849 = vmul.f32 %v812, 1.442695
      %v850 = vpow.pop %v849
      %v851 = vmul.f32 %v813, 1.442695
      %v852 = vpow.pop %v851
      %v853 = vmul.f32 %v814, 1.442695
      %v854 = vpow.pop %v853
      %v855 = vmul.f32 %v815, 1.442695
      %v856 = vpow.pop %v855
      %v857 = vmul.f32 %v816, 1.442695
      %v858 = vpow.pop %v857
      %v859 = vmul.f32 %v817, 1.442695
      %v860 = vpow.pop %v859
      %v861 = vmul.f32 %v818, 1.442695
      %v862 = vpow.pop %v861
      %v863 = vmul.f32 %v819, 1.442695
      %v864 = vpow.pop %v863
      %v865 = vmul.f32 %v820, 1.442695
      %v866 = vpow.pop %v865
      %v867 = vmul.f32 %v821, 1.442695
      %v868 = vpow.pop %v867
      %v869 = vmul.f32 %v822, 1.442695
      %v870 = vpow.pop %v869
      %v871 = vmul.f32 %v823, 1.442695
      %v872 = vpow.pop %v871
      %v873 = vmul.f32 %v824, 1.442695
      %v874 = vpow.pop %v873
      %v875 = vmul.f32 %v825, 1.442695
      %v876 = vpow.pop %v875
      %v877 = vmul.f32 %v826, 1.442695
      %v878 = vpow.pop %v877
      %v879 = vmul.f32 %v827, 1.442695
      %v880 = vpow.pop %v879
      %v881 = vmul.f32 %v828, 1.442695
      %v882 = vpow.pop %v881
      %v883 = vmul.f32 %v829, 1.442695
      %v884 = vpow.pop %v883
      %v885 = vmul.f32 %v830, 1.442695
      %v886 = vpow.pop %v885
      %v887 = vmul.f32 %v831, 1.442695
      %v888 = vpow.pop %v887
      %v889 = vmul.f32 %v832, 1.442695
      %v890 = vpow.pop %v889
      %v891 = vmul.f32 %v833, 1.442695
      %v892 = vpow.pop %v891
      %v893 = vmul.f32 %v834, 1.442695
      %v894 = vpow.pop %v893
      %v895 = vmul.f32 %v835, 1.442695
      %v896 = vpow.pop %v895
      %v897 = vmul.f32 %v836, 1.442695
      %v898 = vpow.pop %v897
      %v899 = vmul.f32 %v837, 1.442695
      %v900 = vpow.pop %v899
      %v901 = vmul.f32 %v838, 1.442695
      %v902 = vpow.pop %v901
      %v903 = vadd.f32 %v840, 1.0
      %v904 = vadd.f32 %v842, 1.0
      %v905 = vadd.f32 %v844, 1.0
      %v906 = vadd.f32 %v846, 1.0
      %v907 = vadd.f32 %v848, 1.0
      %v908 = vadd.f32 %v850, 1.0
      %v909 = vadd.f32 %v852, 1.0
      %v910 = vadd.f32 %v854, 1.0
      %v911 = vadd.f32 %v856, 1.0
      %v912 = vadd.f32 %v858, 1.0
      %v913 = vadd.f32 %v860, 1.0
      %v914 = vadd.f32 %v862, 1.0
      %v915 = vadd.f32 %v864, 1.0
      %v916 = vadd.f32 %v866, 1.0
      %v917 = vadd.f32 %v868, 1.0
      %v918 = vadd.f32 %v870, 1.0
      %v919 = vadd.f32 %v872, 1.0
      %v920 = vadd.f32 %v874, 1.0
      %v921 = vadd.f32 %v876, 1.0
      %v922 = vadd.f32 %v878, 1.0
      %v923 = vadd.f32 %v880, 1.0
      %v924 = vadd.f32 %v882, 1.0
      %v925 = vadd.f32 %v884, 1.0
      %v926 = vadd.f32 %v886, 1.0
      %v927 = vadd.f32 %v888, 1.0
      %v928 = vadd.f32 %v890, 1.0
      %v929 = vadd.f32 %v892, 1.0
      %v930 = vadd.f32 %v894, 1.0
      %v931 = vadd.f32 %v896, 1.0
      %v932 = vadd.f32 %v898, 1.0
      %v933 = vadd.f32 %v900, 1.0
      %v934 = vadd.f32 %v902, 1.0
      %v935 = vrcp.pop %v903
      %v936 = vmul.f32 %v903, %v935
      %v937 = vsub.f32 1.0, %v936
      %v938 = vmul.f32 %v935, %v937
      %v939 = vadd.f32 %v935, %v938
      %vm940 = vweird.f32 %v903
      %vm941 = vweird.f32 %v935
      %vm942 = vmor %vm940, %vm941
      %v943 = vsel %vm942, %v935, %v939
      %v944 = vand.u32 2147483647, %v903
      %vm945 = vcmp.eq.f32.partialorder %v944, 8.507059e+37
      %v946 = vand.u32 %v903, 2147483648
      %v947 = vor.u32 1.1754944e-38, %v946
      %v948 = vsel %vm945, %v947, %v943
      %v949 = vmul.f32 1.0, %v948
      %v950 = vrcp.pop %v904
      %v951 = vmul.f32 %v904, %v950
      %v952 = vsub.f32 1.0, %v951
      %v953 = vmul.f32 %v950, %v952
      %v954 = vadd.f32 %v950, %v953
      %vm955 = vweird.f32 %v904
      %vm956 = vweird.f32 %v950
      %vm957 = vmor %vm955, %vm956
      %v958 = vsel %vm957, %v950, %v954
      %v959 = vand.u32 2147483647, %v904
      %vm960 = vcmp.eq.f32.partialorder %v959, 8.507059e+37
      %v961 = vand.u32 %v904, 2147483648
      %v962 = vor.u32 1.1754944e-38, %v961
      %v963 = vsel %vm960, %v962, %v958
      %v964 = vmul.f32 1.0, %v963
      %v965 = vrcp.pop %v905
      %v966 = vmul.f32 %v905, %v965
      %v967 = vsub.f32 1.0, %v966
      %v968 = vmul.f32 %v965, %v967
      %v969 = vadd.f32 %v965, %v968
      %vm970 = vweird.f32 %v905
      %vm971 = vweird.f32 %v965
      %vm972 = vmor %vm970, %vm971
      %v973 = vsel %vm972, %v965, %v969
      %v974 = vand.u32 2147483647, %v905
      %vm975 = vcmp.eq.f32.partialorder %v974, 8.507059e+37
      %v976 = vand.u32 %v905, 2147483648
      %v977 = vor.u32 1.1754944e-38, %v976
      %v978 = vsel %vm975, %v977, %v973
      %v979 = vmul.f32 1.0, %v978
      %v980 = vrcp.pop %v906
      %v981 = vmul.f32 %v906, %v980
      %v982 = vsub.f32 1.0, %v981
      %v983 = vmul.f32 %v980, %v982
      %v984 = vadd.f32 %v980, %v983
      %vm985 = vweird.f32 %v906
      %vm986 = vweird.f32 %v980
      %vm987 = vmor %vm985, %vm986
      %v988 = vsel %vm987, %v980, %v984
      %v989 = vand.u32 2147483647, %v906
      %vm990 = vcmp.eq.f32.partialorder %v989, 8.507059e+37
      %v991 = vand.u32 %v906, 2147483648
      %v992 = vor.u32 1.1754944e-38, %v991
      %v993 = vsel %vm990, %v992, %v988
      %v994 = vmul.f32 1.0, %v993
      %v995 = vrcp.pop %v907
      %v996 = vmul.f32 %v907, %v995
      %v997 = vsub.f32 1.0, %v996
      %v998 = vmul.f32 %v995, %v997
      %v999 = vadd.f32 %v995, %v998
      %vm1000 = vweird.f32 %v907
      %vm1001 = vweird.f32 %v995
      %vm1002 = vmor %vm1000, %vm1001
      %v1003 = vsel %vm1002, %v995, %v999
      %v1004 = vand.u32 2147483647, %v907
      %vm1005 = vcmp.eq.f32.partialorder %v1004, 8.507059e+37
      %v1006 = vand.u32 %v907, 2147483648
      %v1007 = vor.u32 1.1754944e-38, %v1006
      %v1008 = vsel %vm1005, %v1007, %v1003
      %v1009 = vmul.f32 1.0, %v1008
      %v1010 = vrcp.pop %v908
      %v1011 = vmul.f32 %v908, %v1010
      %v1012 = vsub.f32 1.0, %v1011
      %v1013 = vmul.f32 %v1010, %v1012
      %v1014 = vadd.f32 %v1010, %v1013
      %vm1015 = vweird.f32 %v908
      %vm1016 = vweird.f32 %v1010
      %vm1017 = vmor %vm1015, %vm1016
      %v1018 = vsel %vm1017, %v1010, %v1014
      %v1019 = vand.u32 2147483647, %v908
      %vm1020 = vcmp.eq.f32.partialorder %v1019, 8.507059e+37
      %v1021 = vand.u32 %v908, 2147483648
      %v1022 = vor.u32 1.1754944e-38, %v1021
      %v1023 = vsel %vm1020, %v1022, %v1018
      %v1024 = vmul.f32 1.0, %v1023
      %v1025 = vrcp.pop %v909
      %v1026 = vmul.f32 %v909, %v1025
      %v1027 = vsub.f32 1.0, %v1026
      %v1028 = vmul.f32 %v1025, %v1027
      %v1029 = vadd.f32 %v1025, %v1028
      %vm1030 = vweird.f32 %v909
      %vm1031 = vweird.f32 %v1025
      %vm1032 = vmor %vm1030, %vm1031
      %v1033 = vsel %vm1032, %v1025, %v1029
      %v1034 = vand.u32 2147483647, %v909
      %vm1035 = vcmp.eq.f32.partialorder %v1034, 8.507059e+37
      %v1036 = vand.u32 %v909, 2147483648
      %v1037 = vor.u32 1.1754944e-38, %v1036
      %v1038 = vsel %vm1035, %v1037, %v1033
      %v1039 = vmul.f32 1.0, %v1038
      %v1040 = vrcp.pop %v910
      %v1041 = vmul.f32 %v910, %v1040
      %v1042 = vsub.f32 1.0, %v1041
      %v1043 = vmul.f32 %v1040, %v1042
      %v1044 = vadd.f32 %v1040, %v1043
      %vm1045 = vweird.f32 %v910
      %vm1046 = vweird.f32 %v1040
      %vm1047 = vmor %vm1045, %vm1046
      %v1048 = vsel %vm1047, %v1040, %v1044
      %v1049 = vand.u32 2147483647, %v910
      %vm1050 = vcmp.eq.f32.partialorder %v1049, 8.507059e+37
      %v1051 = vand.u32 %v910, 2147483648
      %v1052 = vor.u32 1.1754944e-38, %v1051
      %v1053 = vsel %vm1050, %v1052, %v1048
      %v1054 = vmul.f32 1.0, %v1053
      %v1055 = vrcp.pop %v911
      %v1056 = vmul.f32 %v911, %v1055
      %v1057 = vsub.f32 1.0, %v1056
      %v1058 = vmul.f32 %v1055, %v1057
      %v1059 = vadd.f32 %v1055, %v1058
      %vm1060 = vweird.f32 %v911
      %vm1061 = vweird.f32 %v1055
      %vm1062 = vmor %vm1060, %vm1061
      %v1063 = vsel %vm1062, %v1055, %v1059
      %v1064 = vand.u32 2147483647, %v911
      %vm1065 = vcmp.eq.f32.partialorder %v1064, 8.507059e+37
      %v1066 = vand.u32 %v911, 2147483648
      %v1067 = vor.u32 1.1754944e-38, %v1066
      %v1068 = vsel %vm1065, %v1067, %v1063
      %v1069 = vmul.f32 1.0, %v1068
      %v1070 = vrcp.pop %v912
      %v1071 = vmul.f32 %v912, %v1070
      %v1072 = vsub.f32 1.0, %v1071
      %v1073 = vmul.f32 %v1070, %v1072
      %v1074 = vadd.f32 %v1070, %v1073
      %vm1075 = vweird.f32 %v912
      %vm1076 = vweird.f32 %v1070
      %vm1077 = vmor %vm1075, %vm1076
      %v1078 = vsel %vm1077, %v1070, %v1074
      %v1079 = vand.u32 2147483647, %v912
      %vm1080 = vcmp.eq.f32.partialorder %v1079, 8.507059e+37
      %v1081 = vand.u32 %v912, 2147483648
      %v1082 = vor.u32 1.1754944e-38, %v1081
      %v1083 = vsel %vm1080, %v1082, %v1078
      %v1084 = vmul.f32 1.0, %v1083
      %v1085 = vrcp.pop %v913
      %v1086 = vmul.f32 %v913, %v1085
      %v1087 = vsub.f32 1.0, %v1086
      %v1088 = vmul.f32 %v1085, %v1087
      %v1089 = vadd.f32 %v1085, %v1088
      %vm1090 = vweird.f32 %v913
      %vm1091 = vweird.f32 %v1085
      %vm1092 = vmor %vm1090, %vm1091
      %v1093 = vsel %vm1092, %v1085, %v1089
      %v1094 = vand.u32 2147483647, %v913
      %vm1095 = vcmp.eq.f32.partialorder %v1094, 8.507059e+37
      %v1096 = vand.u32 %v913, 2147483648
      %v1097 = vor.u32 1.1754944e-38, %v1096
      %v1098 = vsel %vm1095, %v1097, %v1093
      %v1099 = vmul.f32 1.0, %v1098
      %v1100 = vrcp.pop %v914
      %v1101 = vmul.f32 %v914, %v1100
      %v1102 = vsub.f32 1.0, %v1101
      %v1103 = vmul.f32 %v1100, %v1102
      %v1104 = vadd.f32 %v1100, %v1103
      %vm1105 = vweird.f32 %v914
      %vm1106 = vweird.f32 %v1100
      %vm1107 = vmor %vm1105, %vm1106
      %v1108 = vsel %vm1107, %v1100, %v1104
      %v1109 = vand.u32 2147483647, %v914
      %vm1110 = vcmp.eq.f32.partialorder %v1109, 8.507059e+37
      %v1111 = vand.u32 %v914, 2147483648
      %v1112 = vor.u32 1.1754944e-38, %v1111
      %v1113 = vsel %vm1110, %v1112, %v1108
      %v1114 = vmul.f32 1.0, %v1113
      %v1115 = vrcp.pop %v915
      %v1116 = vmul.f32 %v915, %v1115
      %v1117 = vsub.f32 1.0, %v1116
      %v1118 = vmul.f32 %v1115, %v1117
      %v1119 = vadd.f32 %v1115, %v1118
      %vm1120 = vweird.f32 %v915
      %vm1121 = vweird.f32 %v1115
      %vm1122 = vmor %vm1120, %vm1121
      %v1123 = vsel %vm1122, %v1115, %v1119
      %v1124 = vand.u32 2147483647, %v915
      %vm1125 = vcmp.eq.f32.partialorder %v1124, 8.507059e+37
      %v1126 = vand.u32 %v915, 2147483648
      %v1127 = vor.u32 1.1754944e-38, %v1126
      %v1128 = vsel %vm1125, %v1127, %v1123
      %v1129 = vmul.f32 1.0, %v1128
      %v1130 = vrcp.pop %v916
      %v1131 = vmul.f32 %v916, %v1130
      %v1132 = vsub.f32 1.0, %v1131
      %v1133 = vmul.f32 %v1130, %v1132
      %v1134 = vadd.f32 %v1130, %v1133
      %vm1135 = vweird.f32 %v916
      %vm1136 = vweird.f32 %v1130
      %vm1137 = vmor %vm1135, %vm1136
      %v1138 = vsel %vm1137, %v1130, %v1134
      %v1139 = vand.u32 2147483647, %v916
      %vm1140 = vcmp.eq.f32.partialorder %v1139, 8.507059e+37
      %v1141 = vand.u32 %v916, 2147483648
      %v1142 = vor.u32 1.1754944e-38, %v1141
      %v1143 = vsel %vm1140, %v1142, %v1138
      %v1144 = vmul.f32 1.0, %v1143
      %v1145 = vrcp.pop %v917
      %v1146 = vmul.f32 %v917, %v1145
      %v1147 = vsub.f32 1.0, %v1146
      %v1148 = vmul.f32 %v1145, %v1147
      %v1149 = vadd.f32 %v1145, %v1148
      %vm1150 = vweird.f32 %v917
      %vm1151 = vweird.f32 %v1145
      %vm1152 = vmor %vm1150, %vm1151
      %v1153 = vsel %vm1152, %v1145, %v1149
      %v1154 = vand.u32 2147483647, %v917
      %vm1155 = vcmp.eq.f32.partialorder %v1154, 8.507059e+37
      %v1156 = vand.u32 %v917, 2147483648
      %v1157 = vor.u32 1.1754944e-38, %v1156
      %v1158 = vsel %vm1155, %v1157, %v1153
      %v1159 = vmul.f32 1.0, %v1158
      %v1160 = vrcp.pop %v918
      %v1161 = vmul.f32 %v918, %v1160
      %v1162 = vsub.f32 1.0, %v1161
      %v1163 = vmul.f32 %v1160, %v1162
      %v1164 = vadd.f32 %v1160, %v1163
      %vm1165 = vweird.f32 %v918
      %vm1166 = vweird.f32 %v1160
      %vm1167 = vmor %vm1165, %vm1166
      %v1168 = vsel %vm1167, %v1160, %v1164
      %v1169 = vand.u32 2147483647, %v918
      %vm1170 = vcmp.eq.f32.partialorder %v1169, 8.507059e+37
      %v1171 = vand.u32 %v918, 2147483648
      %v1172 = vor.u32 1.1754944e-38, %v1171
      %v1173 = vsel %vm1170, %v1172, %v1168
      %v1174 = vmul.f32 1.0, %v1173
      %v1175 = vrcp.pop %v919
      %v1176 = vmul.f32 %v919, %v1175
      %v1177 = vsub.f32 1.0, %v1176
      %v1178 = vmul.f32 %v1175, %v1177
      %v1179 = vadd.f32 %v1175, %v1178
      %vm1180 = vweird.f32 %v919
      %vm1181 = vweird.f32 %v1175
      %vm1182 = vmor %vm1180, %vm1181
      %v1183 = vsel %vm1182, %v1175, %v1179
      %v1184 = vand.u32 2147483647, %v919
      %vm1185 = vcmp.eq.f32.partialorder %v1184, 8.507059e+37
      %v1186 = vand.u32 %v919, 2147483648
      %v1187 = vor.u32 1.1754944e-38, %v1186
      %v1188 = vsel %vm1185, %v1187, %v1183
      %v1189 = vmul.f32 1.0, %v1188
      %v1190 = vrcp.pop %v920
      %v1191 = vmul.f32 %v920, %v1190
      %v1192 = vsub.f32 1.0, %v1191
      %v1193 = vmul.f32 %v1190, %v1192
      %v1194 = vadd.f32 %v1190, %v1193
      %vm1195 = vweird.f32 %v920
      %vm1196 = vweird.f32 %v1190
      %vm1197 = vmor %vm1195, %vm1196
      %v1198 = vsel %vm1197, %v1190, %v1194
      %v1199 = vand.u32 2147483647, %v920
      %vm1200 = vcmp.eq.f32.partialorder %v1199, 8.507059e+37
      %v1201 = vand.u32 %v920, 2147483648
      %v1202 = vor.u32 1.1754944e-38, %v1201
      %v1203 = vsel %vm1200, %v1202, %v1198
      %v1204 = vmul.f32 1.0, %v1203
      %v1205 = vrcp.pop %v921
      %v1206 = vmul.f32 %v921, %v1205
      %v1207 = vsub.f32 1.0, %v1206
      %v1208 = vmul.f32 %v1205, %v1207
      %v1209 = vadd.f32 %v1205, %v1208
      %vm1210 = vweird.f32 %v921
      %vm1211 = vweird.f32 %v1205
      %vm1212 = vmor %vm1210, %vm1211
      %v1213 = vsel %vm1212, %v1205, %v1209
      %v1214 = vand.u32 2147483647, %v921
      %vm1215 = vcmp.eq.f32.partialorder %v1214, 8.507059e+37
      %v1216 = vand.u32 %v921, 2147483648
      %v1217 = vor.u32 1.1754944e-38, %v1216
      %v1218 = vsel %vm1215, %v1217, %v1213
      %v1219 = vmul.f32 1.0, %v1218
      %v1220 = vrcp.pop %v922
      %v1221 = vmul.f32 %v922, %v1220
      %v1222 = vsub.f32 1.0, %v1221
      %v1223 = vmul.f32 %v1220, %v1222
      %v1224 = vadd.f32 %v1220, %v1223
      %vm1225 = vweird.f32 %v922
      %vm1226 = vweird.f32 %v1220
      %vm1227 = vmor %vm1225, %vm1226
      %v1228 = vsel %vm1227, %v1220, %v1224
      %v1229 = vand.u32 2147483647, %v922
      %vm1230 = vcmp.eq.f32.partialorder %v1229, 8.507059e+37
      %v1231 = vand.u32 %v922, 2147483648
      %v1232 = vor.u32 1.1754944e-38, %v1231
      %v1233 = vsel %vm1230, %v1232, %v1228
      %v1234 = vmul.f32 1.0, %v1233
      %v1235 = vrcp.pop %v923
      %v1236 = vmul.f32 %v923, %v1235
      %v1237 = vsub.f32 1.0, %v1236
      %v1238 = vmul.f32 %v1235, %v1237
      %v1239 = vadd.f32 %v1235, %v1238
      %vm1240 = vweird.f32 %v923
      %vm1241 = vweird.f32 %v1235
      %vm1242 = vmor %vm1240, %vm1241
      %v1243 = vsel %vm1242, %v1235, %v1239
      %v1244 = vand.u32 2147483647, %v923
      %vm1245 = vcmp.eq.f32.partialorder %v1244, 8.507059e+37
      %v1246 = vand.u32 %v923, 2147483648
      %v1247 = vor.u32 1.1754944e-38, %v1246
      %v1248 = vsel %vm1245, %v1247, %v1243
      %v1249 = vmul.f32 1.0, %v1248
      %v1250 = vrcp.pop %v924
      %v1251 = vmul.f32 %v924, %v1250
      %v1252 = vsub.f32 1.0, %v1251
      %v1253 = vmul.f32 %v1250, %v1252
      %v1254 = vadd.f32 %v1250, %v1253
      %vm1255 = vweird.f32 %v924
      %vm1256 = vweird.f32 %v1250
      %vm1257 = vmor %vm1255, %vm1256
      %v1258 = vsel %vm1257, %v1250, %v1254
      %v1259 = vand.u32 2147483647, %v924
      %vm1260 = vcmp.eq.f32.partialorder %v1259, 8.507059e+37
      %v1261 = vand.u32 %v924, 2147483648
      %v1262 = vor.u32 1.1754944e-38, %v1261
      %v1263 = vsel %vm1260, %v1262, %v1258
      %v1264 = vmul.f32 1.0, %v1263
      %v1265 = vrcp.pop %v925
      %v1266 = vmul.f32 %v925, %v1265
      %v1267 = vsub.f32 1.0, %v1266
      %v1268 = vmul.f32 %v1265, %v1267
      %v1269 = vadd.f32 %v1265, %v1268
      %vm1270 = vweird.f32 %v925
      %vm1271 = vweird.f32 %v1265
      %vm1272 = vmor %vm1270, %vm1271
      %v1273 = vsel %vm1272, %v1265, %v1269
      %v1274 = vand.u32 2147483647, %v925
      %vm1275 = vcmp.eq.f32.partialorder %v1274, 8.507059e+37
      %v1276 = vand.u32 %v925, 2147483648
      %v1277 = vor.u32 1.1754944e-38, %v1276
      %v1278 = vsel %vm1275, %v1277, %v1273
      %v1279 = vmul.f32 1.0, %v1278
      %v1280 = vrcp.pop %v926
      %v1281 = vmul.f32 %v926, %v1280
      %v1282 = vsub.f32 1.0, %v1281
      %v1283 = vmul.f32 %v1280, %v1282
      %v1284 = vadd.f32 %v1280, %v1283
      %vm1285 = vweird.f32 %v926
      %vm1286 = vweird.f32 %v1280
      %vm1287 = vmor %vm1285, %vm1286
      %v1288 = vsel %vm1287, %v1280, %v1284
      %v1289 = vand.u32 2147483647, %v926
      %vm1290 = vcmp.eq.f32.partialorder %v1289, 8.507059e+37
      %v1291 = vand.u32 %v926, 2147483648
      %v1292 = vor.u32 1.1754944e-38, %v1291
      %v1293 = vsel %vm1290, %v1292, %v1288
      %v1294 = vmul.f32 1.0, %v1293
      %v1295 = vrcp.pop %v927
      %v1296 = vmul.f32 %v927, %v1295
      %v1297 = vsub.f32 1.0, %v1296
      %v1298 = vmul.f32 %v1295, %v1297
      %v1299 = vadd.f32 %v1295, %v1298
      %vm1300 = vweird.f32 %v927
      %vm1301 = vweird.f32 %v1295
      %vm1302 = vmor %vm1300, %vm1301
      %v1303 = vsel %vm1302, %v1295, %v1299
      %v1304 = vand.u32 2147483647, %v927
      %vm1305 = vcmp.eq.f32.partialorder %v1304, 8.507059e+37
      %v1306 = vand.u32 %v927, 2147483648
      %v1307 = vor.u32 1.1754944e-38, %v1306
      %v1308 = vsel %vm1305, %v1307, %v1303
      %v1309 = vmul.f32 1.0, %v1308
      %v1310 = vrcp.pop %v928
      %v1311 = vmul.f32 %v928, %v1310
      %v1312 = vsub.f32 1.0, %v1311
      %v1313 = vmul.f32 %v1310, %v1312
      %v1314 = vadd.f32 %v1310, %v1313
      %vm1315 = vweird.f32 %v928
      %vm1316 = vweird.f32 %v1310
      %vm1317 = vmor %vm1315, %vm1316
      %v1318 = vsel %vm1317, %v1310, %v1314
      %v1319 = vand.u32 2147483647, %v928
      %vm1320 = vcmp.eq.f32.partialorder %v1319, 8.507059e+37
      %v1321 = vand.u32 %v928, 2147483648
      %v1322 = vor.u32 1.1754944e-38, %v1321
      %v1323 = vsel %vm1320, %v1322, %v1318
      %v1324 = vmul.f32 1.0, %v1323
      %v1325 = vrcp.pop %v929
      %v1326 = vmul.f32 %v929, %v1325
      %v1327 = vsub.f32 1.0, %v1326
      %v1328 = vmul.f32 %v1325, %v1327
      %v1329 = vadd.f32 %v1325, %v1328
      %vm1330 = vweird.f32 %v929
      %vm1331 = vweird.f32 %v1325
      %vm1332 = vmor %vm1330, %vm1331
      %v1333 = vsel %vm1332, %v1325, %v1329
      %v1334 = vand.u32 2147483647, %v929
      %vm1335 = vcmp.eq.f32.partialorder %v1334, 8.507059e+37
      %v1336 = vand.u32 %v929, 2147483648
      %v1337 = vor.u32 1.1754944e-38, %v1336
      %v1338 = vsel %vm1335, %v1337, %v1333
      %v1339 = vmul.f32 1.0, %v1338
      %v1340 = vrcp.pop %v930
      %v1341 = vmul.f32 %v930, %v1340
      %v1342 = vsub.f32 1.0, %v1341
      %v1343 = vmul.f32 %v1340, %v1342
      %v1344 = vadd.f32 %v1340, %v1343
      %vm1345 = vweird.f32 %v930
      %vm1346 = vweird.f32 %v1340
      %vm1347 = vmor %vm1345, %vm1346
      %v1348 = vsel %vm1347, %v1340, %v1344
      %v1349 = vand.u32 2147483647, %v930
      %vm1350 = vcmp.eq.f32.partialorder %v1349, 8.507059e+37
      %v1351 = vand.u32 %v930, 2147483648
      %v1352 = vor.u32 1.1754944e-38, %v1351
      %v1353 = vsel %vm1350, %v1352, %v1348
      %v1354 = vmul.f32 1.0, %v1353
      %v1355 = vrcp.pop %v931
      %v1356 = vmul.f32 %v931, %v1355
      %v1357 = vsub.f32 1.0, %v1356
      %v1358 = vmul.f32 %v1355, %v1357
      %v1359 = vadd.f32 %v1355, %v1358
      %vm1360 = vweird.f32 %v931
      %vm1361 = vweird.f32 %v1355
      %vm1362 = vmor %vm1360, %vm1361
      %v1363 = vsel %vm1362, %v1355, %v1359
      %v1364 = vand.u32 2147483647, %v931
      %vm1365 = vcmp.eq.f32.partialorder %v1364, 8.507059e+37
      %v1366 = vand.u32 %v931, 2147483648
      %v1367 = vor.u32 1.1754944e-38, %v1366
      %v1368 = vsel %vm1365, %v1367, %v1363
      %v1369 = vmul.f32 1.0, %v1368
      %v1370 = vrcp.pop %v932
      %v1371 = vmul.f32 %v932, %v1370
      %v1372 = vsub.f32 1.0, %v1371
      %v1373 = vmul.f32 %v1370, %v1372
      %v1374 = vadd.f32 %v1370, %v1373
      %vm1375 = vweird.f32 %v932
      %vm1376 = vweird.f32 %v1370
      %vm1377 = vmor %vm1375, %vm1376
      %v1378 = vsel %vm1377, %v1370, %v1374
      %v1379 = vand.u32 2147483647, %v932
      %vm1380 = vcmp.eq.f32.partialorder %v1379, 8.507059e+37
      %v1381 = vand.u32 %v932, 2147483648
      %v1382 = vor.u32 1.1754944e-38, %v1381
      %v1383 = vsel %vm1380, %v1382, %v1378
      %v1384 = vmul.f32 1.0, %v1383
      %v1385 = vrcp.pop %v933
      %v1386 = vmul.f32 %v933, %v1385
      %v1387 = vsub.f32 1.0, %v1386
      %v1388 = vmul.f32 %v1385, %v1387
      %v1389 = vadd.f32 %v1385, %v1388
      %vm1390 = vweird.f32 %v933
      %vm1391 = vweird.f32 %v1385
      %vm1392 = vmor %vm1390, %vm1391
      %v1393 = vsel %vm1392, %v1385, %v1389
      %v1394 = vand.u32 2147483647, %v933
      %vm1395 = vcmp.eq.f32.partialorder %v1394, 8.507059e+37
      %v1396 = vand.u32 %v933, 2147483648
      %v1397 = vor.u32 1.1754944e-38, %v1396
      %v1398 = vsel %vm1395, %v1397, %v1393
      %v1399 = vmul.f32 1.0, %v1398
      %v1400 = vrcp.pop %v934
      %v1401 = vmul.f32 %v934, %v1400
      %v1402 = vsub.f32 1.0, %v1401
      %v1403 = vmul.f32 %v1400, %v1402
      %v1404 = vadd.f32 %v1400, %v1403
      %vm1405 = vweird.f32 %v934
      %vm1406 = vweird.f32 %v1400
      %vm1407 = vmor %vm1405, %vm1406
      %v1408 = vsel %vm1407, %v1400, %v1404
      %v1409 = vand.u32 2147483647, %v934
      %vm1410 = vcmp.eq.f32.partialorder %v1409, 8.507059e+37
      %v1411 = vand.u32 %v934, 2147483648
      %v1412 = vor.u32 1.1754944e-38, %v1411
      %v1413 = vsel %vm1410, %v1412, %v1408
      %v1414 = vmul.f32 1.0, %v1413
      %v1415 = vmul.f32 %v743, %v949
      %v1416 = vmul.f32 %v744, %v964
      %v1417 = vmul.f32 %v745, %v979
      %v1418 = vmul.f32 %v746, %v994
      %v1419 = vmul.f32 %v747, %v1009
      %v1420 = vmul.f32 %v748, %v1024
      %v1421 = vmul.f32 %v749, %v1039
      %v1422 = vmul.f32 %v750, %v1054
      %v1423 = vmul.f32 %v751, %v1069
      %v1424 = vmul.f32 %v752, %v1084
      %v1425 = vmul.f32 %v753, %v1099
      %v1426 = vmul.f32 %v754, %v1114
      %v1427 = vmul.f32 %v755, %v1129
      %v1428 = vmul.f32 %v756, %v1144
      %v1429 = vmul.f32 %v757, %v1159
      %v1430 = vmul.f32 %v758, %v1174
      %v1431 = vmul.f32 %v759, %v1189
      %v1432 = vmul.f32 %v760, %v1204
      %v1433 = vmul.f32 %v761, %v1219
      %v1434 = vmul.f32 %v762, %v1234
      %v1435 = vmul.f32 %v763, %v1249
      %v1436 = vmul.f32 %v764, %v1264
      %v1437 = vmul.f32 %v765, %v1279
      %v1438 = vmul.f32 %v766, %v1294
      %v1439 = vmul.f32 %v767, %v1309
      %v1440 = vmul.f32 %v768, %v1324
      %v1441 = vmul.f32 %v769, %v1339
      %v1442 = vmul.f32 %v770, %v1354
      %v1443 = vmul.f32 %v771, %v1369
      %v1444 = vmul.f32 %v772, %v1384
      %v1445 = vmul.f32 %v773, %v1399
      %v1446 = vmul.f32 %v774, %v1414
      %1447 = vst.msk [vmem:[%s224] sm:$0xff] %vm475, %v1415
      %1448 = vst.msk [vmem:[%s224 + $0x8] sm:$0xff] %vm475, %v1416
      %1449 = vst.msk [vmem:[%s224 + $0x10] sm:$0xff] %vm475, %v1417
      %1450 = vst.msk [vmem:[%s224 + $0x18] sm:$0xff] %vm475, %v1418
      %1451 = vst.msk [vmem:[%s224 + $0x20] sm:$0xff] %vm475, %v1419
      %1452 = vst.msk [vmem:[%s224 + $0x28] sm:$0xff] %vm475, %v1420
      %1453 = vst.msk [vmem:[%s224 + $0x30] sm:$0xff] %vm475, %v1421
      %1454 = vst.msk [vmem:[%s224 + $0x38] sm:$0xff] %vm475, %v1422
      %1455 = vst.msk [vmem:[%s224 + $0x40] sm:$0xff] %vm475, %v1423
      %1456 = vst.msk [vmem:[%s224 + $0x48] sm:$0xff] %vm475, %v1424
      %1457 = vst.msk [vmem:[%s224 + $0x50] sm:$0xff] %vm475, %v1425
      %1458 = vst.msk [vmem:[%s224 + $0x58] sm:$0xff] %vm475, %v1426
      %1459 = vst.msk [vmem:[%s224 + $0x60] sm:$0xff] %vm475, %v1427
      %1460 = vst.msk [vmem:[%s224 + $0x68] sm:$0xff] %vm475, %v1428
      %1461 = vst.msk [vmem:[%s224 + $0x70] sm:$0xff] %vm475, %v1429
      %1462 = vst.msk [vmem:[%s224 + $0x78] sm:$0xff] %vm475, %v1430
      %1463 = vst.msk [vmem:[%s224 + $0x80] sm:$0xff] %vm475, %v1431
      %1464 = vst.msk [vmem:[%s224 + $0x88] sm:$0xff] %vm475, %v1432
      %1465 = vst.msk [vmem:[%s224 + $0x90] sm:$0xff] %vm475, %v1433
      %1466 = vst.msk [vmem:[%s224 + $0x98] sm:$0xff] %vm475, %v1434
      %1467 = vst.msk [vmem:[%s224 + $0xa0] sm:$0xff] %vm475, %v1435
      %1468 = vst.msk [vmem:[%s224 + $0xa8] sm:$0xff] %vm475, %v1436
      %1469 = vst.msk [vmem:[%s224 + $0xb0] sm:$0xff] %vm475, %v1437
      %1470 = vst.msk [vmem:[%s224 + $0xb8] sm:$0xff] %vm475, %v1438
      %1471 = vst.msk [vmem:[%s224 + $0xc0] sm:$0xff] %vm475, %v1439
      %1472 = vst.msk [vmem:[%s224 + $0xc8] sm:$0xff] %vm475, %v1440
      %1473 = vst.msk [vmem:[%s224 + $0xd0] sm:$0xff] %vm475, %v1441
      %1474 = vst.msk [vmem:[%s224 + $0xd8] sm:$0xff] %vm475, %v1442
      %1475 = vst.msk [vmem:[%s224 + $0xe0] sm:$0xff] %vm475, %v1443
      %1476 = vst.msk [vmem:[%s224 + $0xe8] sm:$0xff] %vm475, %v1444
      %1477 = vst.msk [vmem:[%s224 + $0xf0] sm:$0xff] %vm475, %v1445
      %1478 = vst.msk [vmem:[%s224 + $0xf8] sm:$0xff] %vm475, %v1446
      %s1479 = smul.u32 32, %s15
      %p1480 = scmp.lt.s32.totalorder %s1479, 63
      %s1481 = scalar_select %p1480, %s1479, 63
      %s1482 = smul.addr %s1481, 8
      %s1483 = scalar_lea.vmem %s4, %s1482
      // Predicated region
      $region37: #{multiscale_scconv2d.38} parent=35 // pred_check
        %p1484 = pneg %p127
      $region38: #{multiscale_scconv2d.38} parent=35 // pred_check_branch
        %1486 = sbr.rel (%p1484) target = $region40
      $region39: #{multiscale_scconv2d.38} parent=35 // pred_region
        %s1487 = smul.u32 32, %s15
      $region40: #{multiscale_scconv2d.38} parent=35 // pred_fallthru
        _
    $region36: #{multiscale_scconv2d.38} parent=5 // pred_fallthru
      _
    %p1488 = scmp.le.s32.totalorder 2, %s10
    // Predicated region
    $region41: #{multiscale_scconv2d.38} parent=5 // pred_check
      %p1489 = pneg %p1488
    $region42: #{multiscale_scconv2d.38} parent=5 // pred_check_branch
      %1491 = sbr.rel (%p1489) target = $region44
    $region43: #{multiscale_scconv2d.38} parent=5 // pred_region
      %s1492 = ssub.s32 %s10, 2
      // Predicated region
      $region45: #{multiscale_scconv2d.38} parent=43 // pred_check
        %p1493 = pneg %p133
      $region46: #{multiscale_scconv2d.38} parent=43 // pred_check_branch
        %1495 = sbr.rel (%p1493) target = $region48
      $region47: #{multiscale_scconv2d.38} parent=43 // pred_region
        %s1496 = smul.u32 32, %s16
        %p1497 = scmp.lt.s32.totalorder %s1496, 63
        %s1498 = scalar_select %p1497, %s1496, 63
        %s1499 = smul.addr %s1498, 8
        %s1500 = scalar_lea.vmem %s4, %s1499
      $region48: #{multiscale_scconv2d.38} parent=43 // pred_fallthru
        _
    $region44: #{multiscale_scconv2d.38} parent=5 // pred_fallthru
      _
  $region6: #{multiscale_scconv2d.38} parent=0 // loop_footer
    %s14 = sadd.s32 1, %s10
  $region7: #{multiscale_scconv2d.38} parent=0 // loop_footer_branch
    %9 = sbr.rel target = $region3
  $region8: #{multiscale_scconv2d.38} parent=0 // loop_exit
    _

// kernel: multiscale_scconv2d.39
$region0: #{multiscale_scconv2d.39}
  #allocation0 [shape = 'u32[]', space=smem, size = 0x4, offset = 0x4, fixed_abs, tag = 'smem constant byte address 0x4 - core index']
  #allocation1 [shape = 'u32[72,128]{1,0:T(1,128)}', space=vmem, size = 0x9000, scoped, tag = 'internal scratch']
  %s0 = inlined_call_operand.vmem [shape: bf16[512,144], index: 0, kind: input, shape index: {}]
  %s1 = inlined_call_operand.vmem [shape: bf16[144,16], index: 1, kind: input, shape index: {}]
  %s2 = inlined_call_operand.vmem [shape: f32[2,1,16], index: 2, kind: input, shape index: {}]
  %s3 = inlined_call_operand.vmem [shape: f32[512,16], index: 3, kind: output, shape index: {}]
  %s4 = sld [smem:[#allocation0]]
  $region45: #{multiscale_scconv2d.39} parent=0
    _
  %s6 = ssub.s32 1, %s4
  %s7 = scalar_select 0, %s6, %s4
  loop: start=0, step=1, limit=4
  $region2: #{multiscale_scconv2d.39} parent=0 // loop_pre_header
    _
  $region3: #{multiscale_scconv2d.39} parent=0 // loop_header
    %s9 = sphi 0, %s13
    %p10 = scmp.ge.s32.totalorder %s9, 4
    %s19 = sphi 0, %s21
    %s22 = sphi 0, %s19
    %s23 = sphi 0, %s22
    %s39 = sphi 0, %s23
    %s43 = sphi 0, %s43
    %s45 = sphi 0, %s43
    %s46 = sphi 0, %s45
    %s60 = sphi 0, %s46
    %s64 = sphi 0, %s64
    %s66 = sphi 0, %s64
    %s67 = sphi 0, %s66
    %s81 = sphi 0, %s67
    %s87 = sphi 0, %s89
    %s90 = sphi 0, %s87
    %s91 = sphi 0, %s90
    %s107 = sphi 0, %s91
  $region4: #{multiscale_scconv2d.39} parent=0 // loop_header_branch
    %12 = sbr.rel (%p10) target = $region8
  $region5: #{multiscale_scconv2d.39} parent=0 // loop_body
    %s14 = ssub.s32 %s9, 1
    %s15 = ssub.s32 %s9, 2
    %s16 = sadd.s32 %s9, 1
    %s17 = ssub.s32 %s9, %s16
    %p18 = scmp.eq.s32.totalorder %s17, 0
    %s20 = sadd.s32 %s19, 1
    %s21 = scalar_select %p18, %s19, %s20
    %p24 = pneg %p18
    %p25 = scmp.eq.s32.totalorder %s9, 1
    %p26 = por %p24, %p25
    %p27 = scmp.ne.s32.totalorder %s19, %s22
    %p28 = scmp.eq.s32.totalorder %s9, 0
    %p29 = por %p27, %p28
    %p30 = scmp.ne.s32.totalorder %s19, %s22
    %p31 = scmp.eq.s32.totalorder %s14, 1
    %p32 = por %p30, %p31
    %p33 = scmp.ne.s32.totalorder %s22, %s23
    %p34 = scmp.eq.s32.totalorder %s14, 0
    %p35 = por %p33, %p34
    %p36 = scmp.ne.s32.totalorder %s22, %s23
    %p37 = scmp.eq.s32.totalorder %s15, 1
    %p38 = por %p36, %p37
    %p40 = scmp.ne.s32.totalorder %s23, %s39
    %p41 = scmp.eq.s32.totalorder %s15, 0
    %p42 = por %p40, %p41
    %s44 = sadd.s32 %s43, 1
    %p47 = scmp.eq.s32.totalorder %s9, 1
    %p48 = scmp.ne.s32.totalorder %s43, %s45
    %p49 = scmp.eq.s32.totalorder %s9, 0
    %p50 = por %p48, %p49
    %p51 = scmp.ne.s32.totalorder %s43, %s45
    %p52 = scmp.eq.s32.totalorder %s14, 1
    %p53 = por %p51, %p52
    %p54 = scmp.ne.s32.totalorder %s45, %s46
    %p55 = scmp.eq.s32.totalorder %s14, 0
    %p56 = por %p54, %p55
    %p57 = scmp.ne.s32.totalorder %s45, %s46
    %p58 = scmp.eq.s32.totalorder %s15, 1
    %p59 = por %p57, %p58
    %p61 = scmp.ne.s32.totalorder %s46, %s60
    %p62 = scmp.eq.s32.totalorder %s15, 0
    %p63 = por %p61, %p62
    %s65 = sadd.s32 %s64, 1
    %p68 = scmp.eq.s32.totalorder %s9, 1
    %p69 = scmp.ne.s32.totalorder %s64, %s66
    %p70 = scmp.eq.s32.totalorder %s9, 0
    %p71 = por %p69, %p70
    %p72 = scmp.ne.s32.totalorder %s64, %s66
    %p73 = scmp.eq.s32.totalorder %s14, 1
    %p74 = por %p72, %p73
    %p75 = scmp.ne.s32.totalorder %s66, %s67
    %p76 = scmp.eq.s32.totalorder %s14, 0
    %p77 = por %p75, %p76
    %p78 = scmp.ne.s32.totalorder %s66, %s67
    %p79 = scmp.eq.s32.totalorder %s15, 1
    %p80 = por %p78, %p79
    %p82 = scmp.ne.s32.totalorder %s67, %s81
    %p83 = scmp.eq.s32.totalorder %s15, 0
    %p84 = por %p82, %p83
    %s85 = ssub.s32 %s9, %s16
    %p86 = scmp.eq.s32.totalorder %s85, 0
    %s88 = sadd.s32 %s87, 1
    %s89 = scalar_select %p86, %s87, %s88
    %p92 = pneg %p86
    %p93 = scmp.eq.s32.totalorder %s9, 1
    %p94 = por %p92, %p93
    %p95 = scmp.ne.s32.totalorder %s87, %s90
    %p96 = scmp.eq.s32.totalorder %s9, 0
    %p97 = por %p95, %p96
    %p98 = scmp.ne.s32.totalorder %s87, %s90
    %p99 = scmp.eq.s32.totalorder %s14, 1
    %p100 = por %p98, %p99
    %p101 = scmp.ne.s32.totalorder %s90, %s91
    %p102 = scmp.eq.s32.totalorder %s14, 0
    %p103 = por %p101, %p102
    %p104 = scmp.ne.s32.totalorder %s90, %s91
    %p105 = scmp.eq.s32.totalorder %s15, 1
    %p106 = por %p104, %p105
    %p108 = scmp.ne.s32.totalorder %s91, %s107
    %p109 = scmp.eq.s32.totalorder %s15, 0
    %p110 = por %p108, %p109
    %p111 = scmp.le.s32.totalorder 1, %s9
    %p112 = scmp.lt.s32.totalorder %s9, 3
    %p113 = pnand %p111, %p112
    %p114 = pneg %p113
    // Predicated region
    $region9: #{multiscale_scconv2d.39} parent=5 // pred_check
      _
    $region10: #{multiscale_scconv2d.39} parent=5 // pred_check_branch
      %116 = sbr.rel (%p113) target = $region12
    $region11: #{multiscale_scconv2d.39} parent=5 // pred_region
      %s117 = ssub.s32 %s9, 1
      // Predicated region
      $region13: #{multiscale_scconv2d.39} parent=11 // pred_check
        %p118 = pneg %p56
      $region14: #{multiscale_scconv2d.39} parent=11 // pred_check_branch
        %120 = sbr.rel (%p118) target = $region16
      $region15: #{multiscale_scconv2d.39} parent=11 // pred_region
        _
      $region16: #{multiscale_scconv2d.39} parent=11 // pred_fallthru
        _
      // Predicated region
      $region17: #{multiscale_scconv2d.39} parent=11 // pred_check
        %p121 = pneg %p77
      $region18: #{multiscale_scconv2d.39} parent=11 // pred_check_branch
        %123 = sbr.rel (%p121) target = $region20
      $region19: #{multiscale_scconv2d.39} parent=11 // pred_region
        _
      $region20: #{multiscale_scconv2d.39} parent=11 // pred_fallthru
        _
    $region12: #{multiscale_scconv2d.39} parent=5 // pred_fallthru
      _
    %p124 = scmp.lt.s32.totalorder %s9, 2
    // Predicated region
    $region21: #{multiscale_scconv2d.39} parent=5 // pred_check
      %p125 = pneg %p124
    $region22: #{multiscale_scconv2d.39} parent=5 // pred_check_branch
      %127 = sbr.rel (%p125) target = $region24
    $region23: #{multiscale_scconv2d.39} parent=5 // pred_region
      // Predicated region
      $region25: #{multiscale_scconv2d.39} parent=23 // pred_check
        %p128 = pneg %p29
      $region26: #{multiscale_scconv2d.39} parent=23 // pred_check_branch
        %130 = sbr.rel (%p128) target = $region28
      $region27: #{multiscale_scconv2d.39} parent=23 // pred_region
        %s131 = smul.u32 32, %s9
        %p132 = scmp.lt.s32.totalorder %s131, 63
        %s133 = scalar_select %p132, %s131, 63
        %s134 = smul.addr %s133, 2
        %s135 = smul.addr %s134, 4
        %s136 = scalar_lea.vmem %s0, %s135
        %s137 = smul.u32 32, %s9
      $region28: #{multiscale_scconv2d.39} parent=23 // pred_fallthru
        _
    $region24: #{multiscale_scconv2d.39} parent=5 // pred_fallthru
      _
    %p138 = scmp.le.s32.totalorder 1, %s9
    %p139 = scmp.lt.s32.totalorder %s9, 3
    %p140 = pnand %p138, %p139
    %p141 = pneg %p140
    // Predicated region
    $region29: #{multiscale_scconv2d.39} parent=5 // pred_check
      _
    $region30: #{multiscale_scconv2d.39} parent=5 // pred_check_branch
      %143 = sbr.rel (%p140) target = $region32
    $region31: #{multiscale_scconv2d.39} parent=5 // pred_region
      %s144 = ssub.s32 %s9, 1
      %s145 = smul.u32 32, %s14
      %p146 = scmp.lt.s32.totalorder %s145, 63
      %s147 = scalar_select %p146, %s145, 63
      %s148 = smul.addr %s147, 2
      %s149 = smul.addr %s148, 4
      %s150 = scalar_lea.vmem %s0, %s149
      %p151 = pneg %p35
      %p152 = pneg %p32
      %p153 = pneg %p56
      %p154 = pneg %p53
      %p155 = pneg %p77
      %p156 = pneg %p74
      %p157 = pneg %p103
      %p158 = pneg %p100
      %s159 = smul.u32 32, %s14
      %p160 = scmp.lt.s32.totalorder %s159, 63
      %s161 = scalar_select %p160, %s159, 63
      %s162 = smul.addr %s161, 8
      %s163 = scalar_lea.vmem %s3, %s162
      %s164 = smul.u32 32, %s14
      %p165 = scmp.lt.s32.totalorder %s164, 63
      %s166 = scalar_select %p165, %s164, 63
      %s167 = smul.addr %s166, 2
      %s168 = smul.addr %s167, 4
      %s169 = scalar_lea.vmem %s0, %s168
      %s170 = smul.u32 32, %s14
      %s171 = smul.u32 32, %s14
      %p172 = scmp.lt.s32.totalorder %s171, 63
      %s173 = scalar_select %p172, %s171, 63
      %s174 = smul.addr %s173, 8
      %s175 = scalar_lea.vmem %s3, %s174
      %s176 = smul.u32 32, %s14
      %v178 = vld [vmem:[%s169] sm:$0xff]
      %v179 = vld [vmem:[%s169 + $0x8] sm:$0xff]
      %v180 = vld [vmem:[%s169 + $0x10] sm:$0xff]
      %v181 = vld [vmem:[%s169 + $0x18] sm:$0xff]
      %v182 = vld [vmem:[%s169 + $0x20] sm:$0xff]
      %v183 = vld [vmem:[%s169 + $0x28] sm:$0xff]
      %v184 = vld [vmem:[%s169 + $0x30] sm:$0xff]
      %v185 = vld [vmem:[%s169 + $0x38] sm:$0xff]
      %v186 = vld [vmem:[%s169 + $0x40] sm:$0xff]
      %v187 = vld [vmem:[%s169 + $0x48] sm:$0xff]
      %v188 = vld [vmem:[%s169 + $0x50] sm:$0xff]
      %v189 = vld [vmem:[%s169 + $0x58] sm:$0xff]
      %v190 = vld [vmem:[%s169 + $0x60] sm:$0xff]
      %v191 = vld [vmem:[%s169 + $0x68] sm:$0xff]
      %v192 = vld [vmem:[%s169 + $0x70] sm:$0xff]
      %v193 = vld [vmem:[%s169 + $0x78] sm:$0xff]
      %v194 = vld [vmem:[%s169 + $0x80] sm:$0xff]
      %v195 = vld [vmem:[%s169 + $0x88] sm:$0xff]
      %v196 = vld [vmem:[%s169 + $0x90] sm:$0xff]
      %v197 = vld [vmem:[%s169 + $0x98] sm:$0xff]
      %v198 = vld [vmem:[%s169 + $0xa0] sm:$0xff]
      %v199 = vld [vmem:[%s169 + $0xa8] sm:$0xff]
      %v200 = vld [vmem:[%s169 + $0xb0] sm:$0xff]
      %v201 = vld [vmem:[%s169 + $0xb8] sm:$0xff]
      %v202 = vld [vmem:[%s169 + $0xc0] sm:$0xff]
      %v203 = vld [vmem:[%s169 + $0xc8] sm:$0xff]
      %v204 = vld [vmem:[%s169 + $0xd0] sm:$0xff]
      %v205 = vld [vmem:[%s169 + $0xd8] sm:$0xff]
      %v206 = vld [vmem:[%s169 + $0xe0] sm:$0xff]
      %v207 = vld [vmem:[%s169 + $0xe8] sm:$0xff]
      %v208 = vld [vmem:[%s169 + $0xf0] sm:$0xff]
      %v209 = vld [vmem:[%s169 + $0xf8] sm:$0xff]
      %v210 = vld [vmem:[%s1] sm:$0xf]
      %v211 = vld [vmem:[%s1 + $0x4] sm:$0xf]
      %v212 = vld [vmem:[%s1 + $0x8] sm:$0xf]
      %v213 = vld [vmem:[%s1 + $0xc] sm:$0xf]
      %v214 = vld [vmem:[%s1 + $0x10] sm:$0xf]
      %v215 = vld [vmem:[%s1 + $0x14] sm:$0xf]
      %v216 = vld [vmem:[%s1 + $0x18] sm:$0xf]
      %v217 = vld [vmem:[%s1 + $0x1c] sm:$0xf]
      %v218 = vld [vmem:[%s1 + $0x20] sm:$0xf]
      %v219 = vld [vmem:[%s1 + $0x24] sm:$0xf]
      %v220 = vld [vmem:[%s1 + $0x28] sm:$0xf]
      %v221 = vld [vmem:[%s1 + $0x2c] sm:$0xf]
      %v222 = vld [vmem:[%s1 + $0x30] sm:$0xf]
      %v223 = vld [vmem:[%s1 + $0x34] sm:$0xf]
      %v224 = vld [vmem:[%s1 + $0x38] sm:$0xf]
      %v225 = vld [vmem:[%s1 + $0x3c] sm:$0xf]
      %v226 = vld [vmem:[%s1 + $0x40] sm:$0xf]
      %v227 = vld [vmem:[%s1 + $0x44] sm:$0xf]
      %v260 = vunpack.c.l.b16 %v178
      %v261 = vunpack.c.h.b16 %v178
      %v262 = vunpack.c.l.b16 %v179
      %v263 = vunpack.c.h.b16 %v179
      %v264 = vunpack.c.l.b16 %v180
      %v265 = vunpack.c.h.b16 %v180
      %v266 = vunpack.c.l.b16 %v181
      %v267 = vunpack.c.h.b16 %v181
      %v268 = vunpack.c.l.b16 %v182
      %v269 = vunpack.c.h.b16 %v182
      %v270 = vunpack.c.l.b16 %v183
      %v271 = vunpack.c.h.b16 %v183
      %v272 = vunpack.c.l.b16 %v184
      %v273 = vunpack.c.h.b16 %v184
      %v274 = vunpack.c.l.b16 %v185
      %v275 = vunpack.c.h.b16 %v185
      %v276 = vunpack.c.l.b16 %v186
      %v277 = vunpack.c.h.b16 %v186
      %v278 = vunpack.c.l.b16 %v187
      %v279 = vunpack.c.h.b16 %v187
      %v280 = vunpack.c.l.b16 %v188
      %v281 = vunpack.c.h.b16 %v188
      %v282 = vunpack.c.l.b16 %v189
      %v283 = vunpack.c.h.b16 %v189
      %v284 = vunpack.c.l.b16 %v190
      %v285 = vunpack.c.h.b16 %v190
      %v286 = vunpack.c.l.b16 %v191
      %v287 = vunpack.c.h.b16 %v191
      %v288 = vunpack.c.l.b16 %v192
      %v289 = vunpack.c.h.b16 %v192
      %v290 = vunpack.c.l.b16 %v193
      %v291 = vunpack.c.h.b16 %v193
      %v292 = vunpack.c.l.b16 %v194
      %v293 = vunpack.c.h.b16 %v194
      %v294 = vunpack.c.l.b16 %v195
      %v295 = vunpack.c.h.b16 %v195
      %v296 = vunpack.c.l.b16 %v196
      %v297 = vunpack.c.h.b16 %v196
      %v298 = vunpack.c.l.b16 %v197
      %v299 = vunpack.c.h.b16 %v197
      %v300 = vunpack.c.l.b16 %v198
      %v301 = vunpack.c.h.b16 %v198
      %v302 = vunpack.c.l.b16 %v199
      %v303 = vunpack.c.h.b16 %v199
      %v304 = vunpack.c.l.b16 %v200
      %v305 = vunpack.c.h.b16 %v200
      %v306 = vunpack.c.l.b16 %v201
      %v307 = vunpack.c.h.b16 %v201
      %v308 = vunpack.c.l.b16 %v202
      %v309 = vunpack.c.h.b16 %v202
      %v310 = vunpack.c.l.b16 %v203
      %v311 = vunpack.c.h.b16 %v203
      %v312 = vunpack.c.l.b16 %v204
      %v313 = vunpack.c.h.b16 %v204
      %v314 = vunpack.c.l.b16 %v205
      %v315 = vunpack.c.h.b16 %v205
      %v316 = vunpack.c.l.b16 %v206
      %v317 = vunpack.c.h.b16 %v206
      %v318 = vunpack.c.l.b16 %v207
      %v319 = vunpack.c.h.b16 %v207
      %v320 = vunpack.c.l.b16 %v208
      %v321 = vunpack.c.h.b16 %v208
      %v322 = vunpack.c.l.b16 %v209
      %v323 = vunpack.c.h.b16 %v209
      %v324 = vpack.c.b16 %v262, %v260
      %v325 = vpack.c.b16 %v263, %v261
      %v326 = vpack.c.b16 %v266, %v264
      %v327 = vpack.c.b16 %v267, %v265
      %v328 = vpack.c.b16 %v270, %v268
      %v329 = vpack.c.b16 %v271, %v269
      %v330 = vpack.c.b16 %v274, %v272
      %v331 = vpack.c.b16 %v275, %v273
      %v332 = vpack.c.b16 %v278, %v276
      %v333 = vpack.c.b16 %v279, %v277
      %v334 = vpack.c.b16 %v282, %v280
      %v335 = vpack.c.b16 %v283, %v281
      %v336 = vpack.c.b16 %v286, %v284
      %v337 = vpack.c.b16 %v287, %v285
      %v338 = vpack.c.b16 %v290, %v288
      %v339 = vpack.c.b16 %v291, %v289
      %v340 = vpack.c.b16 %v294, %v292
      %v341 = vpack.c.b16 %v295, %v293
      %v342 = vpack.c.b16 %v298, %v296
      %v343 = vpack.c.b16 %v299, %v297
      %v344 = vpack.c.b16 %v302, %v300
      %v345 = vpack.c.b16 %v303, %v301
      %v346 = vpack.c.b16 %v306, %v304
      %v347 = vpack.c.b16 %v307, %v305
      %v348 = vpack.c.b16 %v310, %v308
      %v349 = vpack.c.b16 %v311, %v309
      %v350 = vpack.c.b16 %v314, %v312
      %v351 = vpack.c.b16 %v315, %v313
      %v352 = vpack.c.b16 %v318, %v316
      %v353 = vpack.c.b16 %v319, %v317
      %v354 = vpack.c.b16 %v322, %v320
      %v355 = vpack.c.b16 %v323, %v321
      %v390 = vunpack.c.l.b16 %v210
      %v391 = vunpack.c.l.b16 %v211
      %v392 = vunpack.c.l.b16 %v212
      %v393 = vunpack.c.l.b16 %v213
      %v394 = vunpack.c.l.b16 %v214
      %v395 = vunpack.c.l.b16 %v215
      %v396 = vunpack.c.l.b16 %v216
      %v397 = vunpack.c.l.b16 %v217
      %v398 = vunpack.c.l.b16 %v218
      %v399 = vunpack.c.l.b16 %v219
      %v400 = vunpack.c.l.b16 %v220
      %v401 = vunpack.c.l.b16 %v221
      %v402 = vunpack.c.l.b16 %v222
      %v403 = vunpack.c.l.b16 %v223
      %v404 = vunpack.c.l.b16 %v224
      %v405 = vunpack.c.l.b16 %v225
      %v406 = vunpack.c.l.b16 %v226
      %v407 = vunpack.c.l.b16 %v227
      %v408 = vpack.c.b16 %v391, %v390
      %v409 = vpack.c.b16 %v393, %v392
      %v410 = vpack.c.b16 %v395, %v394
      %v411 = vpack.c.b16 %v397, %v396
      %v412 = vpack.c.b16 %v399, %v398
      %v413 = vpack.c.b16 %v401, %v400
      %v414 = vpack.c.b16 %v403, %v402
      %v415 = vpack.c.b16 %v405, %v404
      %v416 = vpack.c.b16 %v407, %v406
      %vm426 = vcmask 130048
      %v428 = vsel %vm426, %v325, 0
      %v431 = vsel %vm426, %v327, 0
      %v434 = vsel %vm426, %v329, 0
      %v437 = vsel %vm426, %v331, 0
      %v440 = vsel %vm426, %v333, 0
      %v443 = vsel %vm426, %v335, 0
      %v446 = vsel %vm426, %v337, 0
      %v449 = vsel %vm426, %v339, 0
      %v452 = vsel %vm426, %v341, 0
      %v455 = vsel %vm426, %v343, 0
      %v458 = vsel %vm426, %v345, 0
      %v461 = vsel %vm426, %v347, 0
      %v464 = vsel %vm426, %v349, 0
      %v467 = vsel %vm426, %v351, 0
      %v470 = vsel %vm426, %v353, 0
      %v473 = vsel %vm426, %v355, 0
      %475 = vmatpush.bf16.msra.mxu0 %v415
      %476 = vmatpush.bf16.msra.mxu0 %v414
      %477 = vmatpush.bf16.msra.mxu0 %v413
      %478 = vmatpush.bf16.msra.mxu0 %v412
      %479 = vmatpush.bf16.msra.mxu0 %v411
      %480 = vmatpush.bf16.msra.mxu0 %v410
      %481 = vmatpush.bf16.msra.mxu0 %v409
      %482 = vmatpush.bf16.msra.mxu0 %v408
      %483 = vmatmul.bf16.gmra.mxu0 %v324
      %v484 = vpop.f32.mrf.mxu0
      %v485 = vadd.f32 0.0, %v484
      %v486 = vpop.f32.mrf.mxu0
      %v487 = vadd.f32 0.0, %v486
      %488 = vmatmul.bf16.gmra.mxu0 %v326
      %v489 = vpop.f32.mrf.mxu0
      %v490 = vadd.f32 0.0, %v489
      %v491 = vpop.f32.mrf.mxu0
      %v492 = vadd.f32 0.0, %v491
      %493 = vmatmul.bf16.gmra.mxu0 %v328
      %v494 = vpop.f32.mrf.mxu0
      %v495 = vadd.f32 0.0, %v494
      %v496 = vpop.f32.mrf.mxu0
      %v497 = vadd.f32 0.0, %v496
      %498 = vmatmul.bf16.gmra.mxu0 %v330
      %v499 = vpop.f32.mrf.mxu0
      %v500 = vadd.f32 0.0, %v499
      %v501 = vpop.f32.mrf.mxu0
      %v502 = vadd.f32 0.0, %v501
      %503 = vmatmul.bf16.gmra.mxu0 %v332
      %v504 = vpop.f32.mrf.mxu0
      %v505 = vadd.f32 0.0, %v504
      %v506 = vpop.f32.mrf.mxu0
      %v507 = vadd.f32 0.0, %v506
      %508 = vmatmul.bf16.gmra.mxu0 %v334
      %v509 = vpop.f32.mrf.mxu0
      %v510 = vadd.f32 0.0, %v509
      %v511 = vpop.f32.mrf.mxu0
      %v512 = vadd.f32 0.0, %v511
      %513 = vmatmul.bf16.gmra.mxu0 %v336
      %v514 = vpop.f32.mrf.mxu0
      %v515 = vadd.f32 0.0, %v514
      %v516 = vpop.f32.mrf.mxu0
      %v517 = vadd.f32 0.0, %v516
      %518 = vmatmul.bf16.gmra.mxu0 %v338
      %v519 = vpop.f32.mrf.mxu0
      %v520 = vadd.f32 0.0, %v519
      %v521 = vpop.f32.mrf.mxu0
      %v522 = vadd.f32 0.0, %v521
      %523 = vmatmul.bf16.gmra.mxu0 %v340
      %v524 = vpop.f32.mrf.mxu0
      %v525 = vadd.f32 0.0, %v524
      %v526 = vpop.f32.mrf.mxu0
      %v527 = vadd.f32 0.0, %v526
      %528 = vmatmul.bf16.gmra.mxu0 %v342
      %v529 = vpop.f32.mrf.mxu0
      %v530 = vadd.f32 0.0, %v529
      %v531 = vpop.f32.mrf.mxu0
      %v532 = vadd.f32 0.0, %v531
      %533 = vmatmul.bf16.gmra.mxu0 %v344
      %v534 = vpop.f32.mrf.mxu0
      %v535 = vadd.f32 0.0, %v534
      %v536 = vpop.f32.mrf.mxu0
      %v537 = vadd.f32 0.0, %v536
      %538 = vmatmul.bf16.gmra.mxu0 %v346
      %v539 = vpop.f32.mrf.mxu0
      %v540 = vadd.f32 0.0, %v539
      %v541 = vpop.f32.mrf.mxu0
      %v542 = vadd.f32 0.0, %v541
      %543 = vmatmul.bf16.gmra.mxu0 %v348
      %v544 = vpop.f32.mrf.mxu0
      %v545 = vadd.f32 0.0, %v544
      %v546 = vpop.f32.mrf.mxu0
      %v547 = vadd.f32 0.0, %v546
      %548 = vmatmul.bf16.gmra.mxu0 %v350
      %v549 = vpop.f32.mrf.mxu0
      %v550 = vadd.f32 0.0, %v549
      %v551 = vpop.f32.mrf.mxu0
      %v552 = vadd.f32 0.0, %v551
      %553 = vmatmul.bf16.gmra.mxu0 %v352
      %v554 = vpop.f32.mrf.mxu0
      %v555 = vadd.f32 0.0, %v554
      %v556 = vpop.f32.mrf.mxu0
      %v557 = vadd.f32 0.0, %v556
      %558 = vmatmul.bf16.gmra.mxu0 %v354
      %v559 = vpop.f32.mrf.mxu0
      %v560 = vadd.f32 0.0, %v559
      %v561 = vpop.f32.mrf.mxu0
      %v562 = vadd.f32 0.0, %v561
      %563 = vdwg.mxu0
      %564 = vmatpush.bf16.msra.mxu0 0
      %565 = vmatpush.bf16.msra.mxu0 0
      %566 = vmatpush.bf16.msra.mxu0 0
      %567 = vmatpush.bf16.msra.mxu0 0
      %568 = vmatpush.bf16.msra.mxu0 0
      %569 = vmatpush.bf16.msra.mxu0 0
      %570 = vmatpush.bf16.msra.mxu0 0
      %571 = vmatpush.bf16.msra.mxu0 %v416
      %572 = vmatmul.bf16.gmra.mxu0 %v428
      %v573 = vpop.f32.mrf.mxu0
      %v574 = vadd.f32 %v485, %v573
      %v575 = vpop.f32.mrf.mxu0
      %v576 = vadd.f32 %v487, %v575
      %577 = vmatmul.bf16.gmra.mxu0 %v431
      %v578 = vpop.f32.mrf.mxu0
      %v579 = vadd.f32 %v490, %v578
      %v580 = vpop.f32.mrf.mxu0
      %v581 = vadd.f32 %v492, %v580
      %582 = vmatmul.bf16.gmra.mxu0 %v434
      %v583 = vpop.f32.mrf.mxu0
      %v584 = vadd.f32 %v495, %v583
      %v585 = vpop.f32.mrf.mxu0
      %v586 = vadd.f32 %v497, %v585
      %587 = vmatmul.bf16.gmra.mxu0 %v437
      %v588 = vpop.f32.mrf.mxu0
      %v589 = vadd.f32 %v500, %v588
      %v590 = vpop.f32.mrf.mxu0
      %v591 = vadd.f32 %v502, %v590
      %592 = vmatmul.bf16.gmra.mxu0 %v440
      %v593 = vpop.f32.mrf.mxu0
      %v594 = vadd.f32 %v505, %v593
      %v595 = vpop.f32.mrf.mxu0
      %v596 = vadd.f32 %v507, %v595
      %597 = vmatmul.bf16.gmra.mxu0 %v443
      %v598 = vpop.f32.mrf.mxu0
      %v599 = vadd.f32 %v510, %v598
      %v600 = vpop.f32.mrf.mxu0
      %v601 = vadd.f32 %v512, %v600
      %602 = vmatmul.bf16.gmra.mxu0 %v446
      %v603 = vpop.f32.mrf.mxu0
      %v604 = vadd.f32 %v515, %v603
      %v605 = vpop.f32.mrf.mxu0
      %v606 = vadd.f32 %v517, %v605
      %607 = vmatmul.bf16.gmra.mxu0 %v449
      %v608 = vpop.f32.mrf.mxu0
      %v609 = vadd.f32 %v520, %v608
      %v610 = vpop.f32.mrf.mxu0
      %v611 = vadd.f32 %v522, %v610
      %612 = vmatmul.bf16.gmra.mxu0 %v452
      %v613 = vpop.f32.mrf.mxu0
      %v614 = vadd.f32 %v525, %v613
      %v615 = vpop.f32.mrf.mxu0
      %v616 = vadd.f32 %v527, %v615
      %617 = vmatmul.bf16.gmra.mxu0 %v455
      %v618 = vpop.f32.mrf.mxu0
      %v619 = vadd.f32 %v530, %v618
      %v620 = vpop.f32.mrf.mxu0
      %v621 = vadd.f32 %v532, %v620
      %622 = vmatmul.bf16.gmra.mxu0 %v458
      %v623 = vpop.f32.mrf.mxu0
      %v624 = vadd.f32 %v535, %v623
      %v625 = vpop.f32.mrf.mxu0
      %v626 = vadd.f32 %v537, %v625
      %627 = vmatmul.bf16.gmra.mxu0 %v461
      %v628 = vpop.f32.mrf.mxu0
      %v629 = vadd.f32 %v540, %v628
      %v630 = vpop.f32.mrf.mxu0
      %v631 = vadd.f32 %v542, %v630
      %632 = vmatmul.bf16.gmra.mxu0 %v464
      %v633 = vpop.f32.mrf.mxu0
      %v634 = vadd.f32 %v545, %v633
      %v635 = vpop.f32.mrf.mxu0
      %v636 = vadd.f32 %v547, %v635
      %637 = vmatmul.bf16.gmra.mxu0 %v467
      %v638 = vpop.f32.mrf.mxu0
      %v639 = vadd.f32 %v550, %v638
      %v640 = vpop.f32.mrf.mxu0
      %v641 = vadd.f32 %v552, %v640
      %642 = vmatmul.bf16.gmra.mxu0 %v470
      %v643 = vpop.f32.mrf.mxu0
      %v644 = vadd.f32 %v555, %v643
      %v645 = vpop.f32.mrf.mxu0
      %v646 = vadd.f32 %v557, %v645
      %647 = vmatmul.bf16.gmra.mxu0 %v473
      %v648 = vpop.f32.mrf.mxu0
      %v649 = vadd.f32 %v560, %v648
      %v650 = vpop.f32.mrf.mxu0
      %v651 = vadd.f32 %v562, %v650
      %652 = vdwg.mxu0
      %v653 = vld [vmem:[%s2] sm:$0x1]
      %v655 = vperm.slane %v653, 0
      %v657 = vmul.f32 %v574, %v655
      %v658 = vmul.f32 %v576, %v655
      %v659 = vmul.f32 %v579, %v655
      %v660 = vmul.f32 %v581, %v655
      %v661 = vmul.f32 %v584, %v655
      %v662 = vmul.f32 %v586, %v655
      %v663 = vmul.f32 %v589, %v655
      %v664 = vmul.f32 %v591, %v655
      %v665 = vmul.f32 %v594, %v655
      %v666 = vmul.f32 %v596, %v655
      %v667 = vmul.f32 %v599, %v655
      %v668 = vmul.f32 %v601, %v655
      %v669 = vmul.f32 %v604, %v655
      %v670 = vmul.f32 %v606, %v655
      %v671 = vmul.f32 %v609, %v655
      %v672 = vmul.f32 %v611, %v655
      %v673 = vmul.f32 %v614, %v655
      %v674 = vmul.f32 %v616, %v655
      %v675 = vmul.f32 %v619, %v655
      %v676 = vmul.f32 %v621, %v655
      %v677 = vmul.f32 %v624, %v655
      %v678 = vmul.f32 %v626, %v655
      %v679 = vmul.f32 %v629, %v655
      %v680 = vmul.f32 %v631, %v655
      %v681 = vmul.f32 %v634, %v655
      %v682 = vmul.f32 %v636, %v655
      %v683 = vmul.f32 %v639, %v655
      %v684 = vmul.f32 %v641, %v655
      %v685 = vmul.f32 %v644, %v655
      %v686 = vmul.f32 %v646, %v655
      %v687 = vmul.f32 %v649, %v655
      %v688 = vmul.f32 %v651, %v655
      %s689 = scalar_lea.vmem %s2, 1
      %v690 = vld [vmem:[%s689] sm:$0x1]
      %v692 = vperm.slane %v690, 0
      %v694 = vadd.f32 %v657, %v692
      %v695 = vadd.f32 %v658, %v692
      %v696 = vadd.f32 %v659, %v692
      %v697 = vadd.f32 %v660, %v692
      %v698 = vadd.f32 %v661, %v692
      %v699 = vadd.f32 %v662, %v692
      %v700 = vadd.f32 %v663, %v692
      %v701 = vadd.f32 %v664, %v692
      %v702 = vadd.f32 %v665, %v692
      %v703 = vadd.f32 %v666, %v692
      %v704 = vadd.f32 %v667, %v692
      %v705 = vadd.f32 %v668, %v692
      %v706 = vadd.f32 %v669, %v692
      %v707 = vadd.f32 %v670, %v692
      %v708 = vadd.f32 %v671, %v692
      %v709 = vadd.f32 %v672, %v692
      %v710 = vadd.f32 %v673, %v692
      %v711 = vadd.f32 %v674, %v692
      %v712 = vadd.f32 %v675, %v692
      %v713 = vadd.f32 %v676, %v692
      %v714 = vadd.f32 %v677, %v692
      %v715 = vadd.f32 %v678, %v692
      %v716 = vadd.f32 %v679, %v692
      %v717 = vadd.f32 %v680, %v692
      %v718 = vadd.f32 %v681, %v692
      %v719 = vadd.f32 %v682, %v692
      %v720 = vadd.f32 %v683, %v692
      %v721 = vadd.f32 %v684, %v692
      %v722 = vadd.f32 %v685, %v692
      %v723 = vadd.f32 %v686, %v692
      %v724 = vadd.f32 %v687, %v692
      %v725 = vadd.f32 %v688, %v692
      %v726 = vmax.f32 %v694, 0.0
      %v727 = vmax.f32 %v695, 0.0
      %v728 = vmax.f32 %v696, 0.0
      %v729 = vmax.f32 %v697, 0.0
      %v730 = vmax.f32 %v698, 0.0
      %v731 = vmax.f32 %v699, 0.0
      %v732 = vmax.f32 %v700, 0.0
      %v733 = vmax.f32 %v701, 0.0
      %v734 = vmax.f32 %v702, 0.0
      %v735 = vmax.f32 %v703, 0.0
      %v736 = vmax.f32 %v704, 0.0
      %v737 = vmax.f32 %v705, 0.0
      %v738 = vmax.f32 %v706, 0.0
      %v739 = vmax.f32 %v707, 0.0
      %v740 = vmax.f32 %v708, 0.0
      %v741 = vmax.f32 %v709, 0.0
      %v742 = vmax.f32 %v710, 0.0
      %v743 = vmax.f32 %v711, 0.0
      %v744 = vmax.f32 %v712, 0.0
      %v745 = vmax.f32 %v713, 0.0
      %v746 = vmax.f32 %v714, 0.0
      %v747 = vmax.f32 %v715, 0.0
      %v748 = vmax.f32 %v716, 0.0
      %v749 = vmax.f32 %v717, 0.0
      %v750 = vmax.f32 %v718, 0.0
      %v751 = vmax.f32 %v719, 0.0
      %v752 = vmax.f32 %v720, 0.0
      %v753 = vmax.f32 %v721, 0.0
      %v754 = vmax.f32 %v722, 0.0
      %v755 = vmax.f32 %v723, 0.0
      %v756 = vmax.f32 %v724, 0.0
      %v757 = vmax.f32 %v725, 0.0
      %758 = vst.msk [vmem:[%s175] sm:$0xff] %vm426, %v726
      %759 = vst.msk [vmem:[%s175 + $0x8] sm:$0xff] %vm426, %v727
      %760 = vst.msk [vmem:[%s175 + $0x10] sm:$0xff] %vm426, %v728
      %761 = vst.msk [vmem:[%s175 + $0x18] sm:$0xff] %vm426, %v729
      %762 = vst.msk [vmem:[%s175 + $0x20] sm:$0xff] %vm426, %v730
      %763 = vst.msk [vmem:[%s175 + $0x28] sm:$0xff] %vm426, %v731
      %764 = vst.msk [vmem:[%s175 + $0x30] sm:$0xff] %vm426, %v732
      %765 = vst.msk [vmem:[%s175 + $0x38] sm:$0xff] %vm426, %v733
      %766 = vst.msk [vmem:[%s175 + $0x40] sm:$0xff] %vm426, %v734
      %767 = vst.msk [vmem:[%s175 + $0x48] sm:$0xff] %vm426, %v735
      %768 = vst.msk [vmem:[%s175 + $0x50] sm:$0xff] %vm426, %v736
      %769 = vst.msk [vmem:[%s175 + $0x58] sm:$0xff] %vm426, %v737
      %770 = vst.msk [vmem:[%s175 + $0x60] sm:$0xff] %vm426, %v738
      %771 = vst.msk [vmem:[%s175 + $0x68] sm:$0xff] %vm426, %v739
      %772 = vst.msk [vmem:[%s175 + $0x70] sm:$0xff] %vm426, %v740
      %773 = vst.msk [vmem:[%s175 + $0x78] sm:$0xff] %vm426, %v741
      %774 = vst.msk [vmem:[%s175 + $0x80] sm:$0xff] %vm426, %v742
      %775 = vst.msk [vmem:[%s175 + $0x88] sm:$0xff] %vm426, %v743
      %776 = vst.msk [vmem:[%s175 + $0x90] sm:$0xff] %vm426, %v744
      %777 = vst.msk [vmem:[%s175 + $0x98] sm:$0xff] %vm426, %v745
      %778 = vst.msk [vmem:[%s175 + $0xa0] sm:$0xff] %vm426, %v746
      %779 = vst.msk [vmem:[%s175 + $0xa8] sm:$0xff] %vm426, %v747
      %780 = vst.msk [vmem:[%s175 + $0xb0] sm:$0xff] %vm426, %v748
      %781 = vst.msk [vmem:[%s175 + $0xb8] sm:$0xff] %vm426, %v749
      %782 = vst.msk [vmem:[%s175 + $0xc0] sm:$0xff] %vm426, %v750
      %783 = vst.msk [vmem:[%s175 + $0xc8] sm:$0xff] %vm426, %v751
      %784 = vst.msk [vmem:[%s175 + $0xd0] sm:$0xff] %vm426, %v752
      %785 = vst.msk [vmem:[%s175 + $0xd8] sm:$0xff] %vm426, %v753
      %786 = vst.msk [vmem:[%s175 + $0xe0] sm:$0xff] %vm426, %v754
      %787 = vst.msk [vmem:[%s175 + $0xe8] sm:$0xff] %vm426, %v755
      %788 = vst.msk [vmem:[%s175 + $0xf0] sm:$0xff] %vm426, %v756
      %789 = vst.msk [vmem:[%s175 + $0xf8] sm:$0xff] %vm426, %v757
      %s790 = smul.u32 32, %s14
      %p791 = scmp.lt.s32.totalorder %s790, 63
      %s792 = scalar_select %p791, %s790, 63
      %s793 = smul.addr %s792, 8
      %s794 = scalar_lea.vmem %s3, %s793
      // Predicated region
      $region33: #{multiscale_scconv2d.39} parent=31 // pred_check
        %p795 = pneg %p100
      $region34: #{multiscale_scconv2d.39} parent=31 // pred_check_branch
        %797 = sbr.rel (%p795) target = $region36
      $region35: #{multiscale_scconv2d.39} parent=31 // pred_region
        %s798 = smul.u32 32, %s14
      $region36: #{multiscale_scconv2d.39} parent=31 // pred_fallthru
        _
    $region32: #{multiscale_scconv2d.39} parent=5 // pred_fallthru
      _
    %p799 = scmp.le.s32.totalorder 2, %s9
    // Predicated region
    $region37: #{multiscale_scconv2d.39} parent=5 // pred_check
      %p800 = pneg %p799
    $region38: #{multiscale_scconv2d.39} parent=5 // pred_check_branch
      %802 = sbr.rel (%p800) target = $region40
    $region39: #{multiscale_scconv2d.39} parent=5 // pred_region
      %s803 = ssub.s32 %s9, 2
      // Predicated region
      $region41: #{multiscale_scconv2d.39} parent=39 // pred_check
        %p804 = pneg %p106
      $region42: #{multiscale_scconv2d.39} parent=39 // pred_check_branch
        %806 = sbr.rel (%p804) target = $region44
      $region43: #{multiscale_scconv2d.39} parent=39 // pred_region
        %s807 = smul.u32 32, %s15
        %p808 = scmp.lt.s32.totalorder %s807, 63
        %s809 = scalar_select %p808, %s807, 63
        %s810 = smul.addr %s809, 8
        %s811 = scalar_lea.vmem %s3, %s810
      $region44: #{multiscale_scconv2d.39} parent=39 // pred_fallthru
        _
    $region40: #{multiscale_scconv2d.39} parent=5 // pred_fallthru
      _
  $region6: #{multiscale_scconv2d.39} parent=0 // loop_footer
    %s13 = sadd.s32 1, %s9
  $region7: #{multiscale_scconv2d.39} parent=0 // loop_footer_branch
    %8 = sbr.rel target = $region3
  $region8: #{multiscale_scconv2d.39} parent=0 // loop_exit
    _

// kernel: multiscale_scconv2d.40
$region0: #{multiscale_scconv2d.40}
  #allocation0 [shape = 'u32[]', space=smem, size = 0x4, offset = 0x4, fixed_abs, tag = 'smem constant byte address 0x4 - core index']
  #allocation1 [shape = 'u32[72,128]{1,0:T(1,128)}', space=vmem, size = 0x9000, scoped, tag = 'internal scratch']
  %s0 = inlined_call_operand.vmem [shape: bf16[512,32], index: 0, kind: input, shape index: {}]
  %s1 = inlined_call_operand.vmem [shape: bf16[32,128], index: 1, kind: input, shape index: {}]
  %s2 = inlined_call_operand.vmem [shape: f32[2,1,128], index: 2, kind: input, shape index: {}]
  %s3 = inlined_call_operand.vmem [shape: f32[512,128], index: 3, kind: input, shape index: {}]
  %s4 = inlined_call_operand.vmem [shape: f32[512,128], index: 4, kind: output, shape index: {}]
  %s5 = sld [smem:[#allocation0]]
  $region49: #{multiscale_scconv2d.40} parent=0
    _
  %s7 = ssub.s32 1, %s5
  %s8 = scalar_select 0, %s7, %s5
  loop: start=0, step=1, limit=4
  $region2: #{multiscale_scconv2d.40} parent=0 // loop_pre_header
    _
  $region3: #{multiscale_scconv2d.40} parent=0 // loop_header
    %s10 = sphi 0, %s14
    %p11 = scmp.ge.s32.totalorder %s10, 4
    %s20 = sphi 0, %s22
    %s23 = sphi 0, %s20
    %s24 = sphi 0, %s23
    %s40 = sphi 0, %s24
    %s44 = sphi 0, %s44
    %s46 = sphi 0, %s44
    %s47 = sphi 0, %s46
    %s61 = sphi 0, %s47
    %s65 = sphi 0, %s65
    %s67 = sphi 0, %s65
    %s68 = sphi 0, %s67
    %s82 = sphi 0, %s68
    %s88 = sphi 0, %s90
    %s91 = sphi 0, %s88
    %s92 = sphi 0, %s91
    %s108 = sphi 0, %s92
    %s114 = sphi 0, %s116
    %s117 = sphi 0, %s114
    %s118 = sphi 0, %s117
    %s134 = sphi 0, %s118
  $region4: #{multiscale_scconv2d.40} parent=0 // loop_header_branch
    %13 = sbr.rel (%p11) target = $region8
  $region5: #{multiscale_scconv2d.40} parent=0 // loop_body
    %s15 = ssub.s32 %s10, 1
    %s16 = ssub.s32 %s10, 2
    %s17 = sadd.s32 %s10, 1
    %s18 = ssub.s32 %s10, %s17
    %p19 = scmp.eq.s32.totalorder %s18, 0
    %s21 = sadd.s32 %s20, 1
    %s22 = scalar_select %p19, %s20, %s21
    %p25 = pneg %p19
    %p26 = scmp.eq.s32.totalorder %s10, 1
    %p27 = por %p25, %p26
    %p28 = scmp.ne.s32.totalorder %s20, %s23
    %p29 = scmp.eq.s32.totalorder %s10, 0
    %p30 = por %p28, %p29
    %p31 = scmp.ne.s32.totalorder %s20, %s23
    %p32 = scmp.eq.s32.totalorder %s15, 1
    %p33 = por %p31, %p32
    %p34 = scmp.ne.s32.totalorder %s23, %s24
    %p35 = scmp.eq.s32.totalorder %s15, 0
    %p36 = por %p34, %p35
    %p37 = scmp.ne.s32.totalorder %s23, %s24
    %p38 = scmp.eq.s32.totalorder %s16, 1
    %p39 = por %p37, %p38
    %p41 = scmp.ne.s32.totalorder %s24, %s40
    %p42 = scmp.eq.s32.totalorder %s16, 0
    %p43 = por %p41, %p42
    %s45 = sadd.s32 %s44, 1
    %p48 = scmp.eq.s32.totalorder %s10, 1
    %p49 = scmp.ne.s32.totalorder %s44, %s46
    %p50 = scmp.eq.s32.totalorder %s10, 0
    %p51 = por %p49, %p50
    %p52 = scmp.ne.s32.totalorder %s44, %s46
    %p53 = scmp.eq.s32.totalorder %s15, 1
    %p54 = por %p52, %p53
    %p55 = scmp.ne.s32.totalorder %s46, %s47
    %p56 = scmp.eq.s32.totalorder %s15, 0
    %p57 = por %p55, %p56
    %p58 = scmp.ne.s32.totalorder %s46, %s47
    %p59 = scmp.eq.s32.totalorder %s16, 1
    %p60 = por %p58, %p59
    %p62 = scmp.ne.s32.totalorder %s47, %s61
    %p63 = scmp.eq.s32.totalorder %s16, 0
    %p64 = por %p62, %p63
    %s66 = sadd.s32 %s65, 1
    %p69 = scmp.eq.s32.totalorder %s10, 1
    %p70 = scmp.ne.s32.totalorder %s65, %s67
    %p71 = scmp.eq.s32.totalorder %s10, 0
    %p72 = por %p70, %p71
    %p73 = scmp.ne.s32.totalorder %s65, %s67
    %p74 = scmp.eq.s32.totalorder %s15, 1
    %p75 = por %p73, %p74
    %p76 = scmp.ne.s32.totalorder %s67, %s68
    %p77 = scmp.eq.s32.totalorder %s15, 0
    %p78 = por %p76, %p77
    %p79 = scmp.ne.s32.totalorder %s67, %s68
    %p80 = scmp.eq.s32.totalorder %s16, 1
    %p81 = por %p79, %p80
    %p83 = scmp.ne.s32.totalorder %s68, %s82
    %p84 = scmp.eq.s32.totalorder %s16, 0
    %p85 = por %p83, %p84
    %s86 = ssub.s32 %s10, %s17
    %p87 = scmp.eq.s32.totalorder %s86, 0
    %s89 = sadd.s32 %s88, 1
    %s90 = scalar_select %p87, %s88, %s89
    %p93 = pneg %p87
    %p94 = scmp.eq.s32.totalorder %s10, 1
    %p95 = por %p93, %p94
    %p96 = scmp.ne.s32.totalorder %s88, %s91
    %p97 = scmp.eq.s32.totalorder %s10, 0
    %p98 = por %p96, %p97
    %p99 = scmp.ne.s32.totalorder %s88, %s91
    %p100 = scmp.eq.s32.totalorder %s15, 1
    %p101 = por %p99, %p100
    %p102 = scmp.ne.s32.totalorder %s91, %s92
    %p103 = scmp.eq.s32.totalorder %s15, 0
    %p104 = por %p102, %p103
    %p105 = scmp.ne.s32.totalorder %s91, %s92
    %p106 = scmp.eq.s32.totalorder %s16, 1
    %p107 = por %p105, %p106
    %p109 = scmp.ne.s32.totalorder %s92, %s108
    %p110 = scmp.eq.s32.totalorder %s16, 0
    %p111 = por %p109, %p110
    %s112 = ssub.s32 %s10, %s17
    %p113 = scmp.eq.s32.totalorder %s112, 0
    %s115 = sadd.s32 %s114, 1
    %s116 = scalar_select %p113, %s114, %s115
    %p119 = pneg %p113
    %p120 = scmp.eq.s32.totalorder %s10, 1
    %p121 = por %p119, %p120
    %p122 = scmp.ne.s32.totalorder %s114, %s117
    %p123 = scmp.eq.s32.totalorder %s10, 0
    %p124 = por %p122, %p123
    %p125 = scmp.ne.s32.totalorder %s114, %s117
    %p126 = scmp.eq.s32.totalorder %s15, 1
    %p127 = por %p125, %p126
    %p128 = scmp.ne.s32.totalorder %s117, %s118
    %p129 = scmp.eq.s32.totalorder %s15, 0
    %p130 = por %p128, %p129
    %p131 = scmp.ne.s32.totalorder %s117, %s118
    %p132 = scmp.eq.s32.totalorder %s16, 1
    %p133 = por %p131, %p132
    %p135 = scmp.ne.s32.totalorder %s118, %s134
    %p136 = scmp.eq.s32.totalorder %s16, 0
    %p137 = por %p135, %p136
    %p138 = scmp.le.s32.totalorder 1, %s10
    %p139 = scmp.lt.s32.totalorder %s10, 3
    %p140 = pnand %p138, %p139
    %p141 = pneg %p140
    // Predicated region
    $region9: #{multiscale_scconv2d.40} parent=5 // pred_check
      _
    $region10: #{multiscale_scconv2d.40} parent=5 // pred_check_branch
      %143 = sbr.rel (%p140) target = $region12
    $region11: #{multiscale_scconv2d.40} parent=5 // pred_region
      %s144 = ssub.s32 %s10, 1
      // Predicated region
      $region13: #{multiscale_scconv2d.40} parent=11 // pred_check
        %p145 = pneg %p57
      $region14: #{multiscale_scconv2d.40} parent=11 // pred_check_branch
        %147 = sbr.rel (%p145) target = $region16
      $region15: #{multiscale_scconv2d.40} parent=11 // pred_region
        _
      $region16: #{multiscale_scconv2d.40} parent=11 // pred_fallthru
        _
      // Predicated region
      $region17: #{multiscale_scconv2d.40} parent=11 // pred_check
        %p148 = pneg %p78
      $region18: #{multiscale_scconv2d.40} parent=11 // pred_check_branch
        %150 = sbr.rel (%p148) target = $region20
      $region19: #{multiscale_scconv2d.40} parent=11 // pred_region
        _
      $region20: #{multiscale_scconv2d.40} parent=11 // pred_fallthru
        _
    $region12: #{multiscale_scconv2d.40} parent=5 // pred_fallthru
      _
    %p151 = scmp.lt.s32.totalorder %s10, 2
    // Predicated region
    $region21: #{multiscale_scconv2d.40} parent=5 // pred_check
      %p152 = pneg %p151
    $region22: #{multiscale_scconv2d.40} parent=5 // pred_check_branch
      %154 = sbr.rel (%p152) target = $region24
    $region23: #{multiscale_scconv2d.40} parent=5 // pred_region
      // Predicated region
      $region25: #{multiscale_scconv2d.40} parent=23 // pred_check
        %p155 = pneg %p30
      $region26: #{multiscale_scconv2d.40} parent=23 // pred_check_branch
        %157 = sbr.rel (%p155) target = $region28
      $region27: #{multiscale_scconv2d.40} parent=23 // pred_region
        %s158 = smul.u32 32, %s10
        %p159 = scmp.lt.s32.totalorder %s158, 63
        %s160 = scalar_select %p159, %s158, 63
        %s161 = smul.addr %s160, 4
        %s162 = scalar_lea.vmem %s0, %s161
        %s163 = smul.u32 32, %s10
      $region28: #{multiscale_scconv2d.40} parent=23 // pred_fallthru
        _
      // Predicated region
      $region29: #{multiscale_scconv2d.40} parent=23 // pred_check
        %p164 = pneg %p98
      $region30: #{multiscale_scconv2d.40} parent=23 // pred_check_branch
        %166 = sbr.rel (%p164) target = $region32
      $region31: #{multiscale_scconv2d.40} parent=23 // pred_region
        %s167 = smul.u32 32, %s10
        %p168 = scmp.lt.s32.totalorder %s167, 63
        %s169 = scalar_select %p168, %s167, 63
        %s170 = smul.addr %s169, 8
        %s171 = scalar_lea.vmem %s3, %s170
        %s172 = smul.u32 32, %s10
      $region32: #{multiscale_scconv2d.40} parent=23 // pred_fallthru
        _
    $region24: #{multiscale_scconv2d.40} parent=5 // pred_fallthru
      _
    %p173 = scmp.le.s32.totalorder 1, %s10
    %p174 = scmp.lt.s32.totalorder %s10, 3
    %p175 = pnand %p173, %p174
    %p176 = pneg %p175
    // Predicated region
    $region33: #{multiscale_scconv2d.40} parent=5 // pred_check
      _
    $region34: #{multiscale_scconv2d.40} parent=5 // pred_check_branch
      %178 = sbr.rel (%p175) target = $region36
    $region35: #{multiscale_scconv2d.40} parent=5 // pred_region
      %s179 = ssub.s32 %s10, 1
      %s180 = smul.u32 32, %s15
      %p181 = scmp.lt.s32.totalorder %s180, 63
      %s182 = scalar_select %p181, %s180, 63
      %s183 = smul.addr %s182, 4
      %s184 = scalar_lea.vmem %s0, %s183
      %p185 = pneg %p36
      %p186 = pneg %p33
      %p187 = pneg %p57
      %p188 = pneg %p54
      %p189 = pneg %p78
      %p190 = pneg %p75
      %s191 = smul.u32 32, %s15
      %p192 = scmp.lt.s32.totalorder %s191, 63
      %s193 = scalar_select %p192, %s191, 63
      %s194 = smul.addr %s193, 8
      %s195 = scalar_lea.vmem %s3, %s194
      %p196 = pneg %p104
      %p197 = pneg %p101
      %p198 = pneg %p130
      %p199 = pneg %p127
      %s200 = smul.u32 32, %s15
      %p201 = scmp.lt.s32.totalorder %s200, 63
      %s202 = scalar_select %p201, %s200, 63
      %s203 = smul.addr %s202, 8
      %s204 = scalar_lea.vmem %s4, %s203
      %s205 = smul.u32 32, %s15
      %p206 = scmp.lt.s32.totalorder %s205, 63
      %s207 = scalar_select %p206, %s205, 63
      %s208 = smul.addr %s207, 4
      %s209 = scalar_lea.vmem %s0, %s208
      %s210 = smul.u32 32, %s15
      %s211 = smul.u32 32, %s15
      %p212 = scmp.lt.s32.totalorder %s211, 63
      %s213 = scalar_select %p212, %s211, 63
      %s214 = smul.addr %s213, 8
      %s215 = scalar_lea.vmem %s3, %s214
      %s216 = smul.u32 32, %s15
      %s217 = smul.u32 32, %s15
      %p218 = scmp.lt.s32.totalorder %s217, 63
      %s219 = scalar_select %p218, %s217, 63
      %s220 = smul.addr %s219, 8
      %s221 = scalar_lea.vmem %s4, %s220
      %s222 = smul.u32 32, %s15
      %v224 = vld [vmem:[%s209] sm:$0xf]
      %v225 = vld [vmem:[%s209 + $0x4] sm:$0xf]
      %v226 = vld [vmem:[%s209 + $0x8] sm:$0xf]
      %v227 = vld [vmem:[%s209 + $0xc] sm:$0xf]
      %v228 = vld [vmem:[%s209 + $0x10] sm:$0xf]
      %v229 = vld [vmem:[%s209 + $0x14] sm:$0xf]
      %v230 = vld [vmem:[%s209 + $0x18] sm:$0xf]
      %v231 = vld [vmem:[%s209 + $0x1c] sm:$0xf]
      %v232 = vld [vmem:[%s209 + $0x20] sm:$0xf]
      %v233 = vld [vmem:[%s209 + $0x24] sm:$0xf]
      %v234 = vld [vmem:[%s209 + $0x28] sm:$0xf]
      %v235 = vld [vmem:[%s209 + $0x2c] sm:$0xf]
      %v236 = vld [vmem:[%s209 + $0x30] sm:$0xf]
      %v237 = vld [vmem:[%s209 + $0x34] sm:$0xf]
      %v238 = vld [vmem:[%s209 + $0x38] sm:$0xf]
      %v239 = vld [vmem:[%s209 + $0x3c] sm:$0xf]
      %v240 = vld [vmem:[%s209 + $0x40] sm:$0xf]
      %v241 = vld [vmem:[%s209 + $0x44] sm:$0xf]
      %v242 = vld [vmem:[%s209 + $0x48] sm:$0xf]
      %v243 = vld [vmem:[%s209 + $0x4c] sm:$0xf]
      %v244 = vld [vmem:[%s209 + $0x50] sm:$0xf]
      %v245 = vld [vmem:[%s209 + $0x54] sm:$0xf]
      %v246 = vld [vmem:[%s209 + $0x58] sm:$0xf]
      %v247 = vld [vmem:[%s209 + $0x5c] sm:$0xf]
      %v248 = vld [vmem:[%s209 + $0x60] sm:$0xf]
      %v249 = vld [vmem:[%s209 + $0x64] sm:$0xf]
      %v250 = vld [vmem:[%s209 + $0x68] sm:$0xf]
      %v251 = vld [vmem:[%s209 + $0x6c] sm:$0xf]
      %v252 = vld [vmem:[%s209 + $0x70] sm:$0xf]
      %v253 = vld [vmem:[%s209 + $0x74] sm:$0xf]
      %v254 = vld [vmem:[%s209 + $0x78] sm:$0xf]
      %v255 = vld [vmem:[%s209 + $0x7c] sm:$0xf]
      %v256 = vld [vmem:[%s1] sm:$0xf]
      %v257 = vld [vmem:[%s1 + $0x4] sm:$0xf]
      %v258 = vld [vmem:[%s1 + $0x8] sm:$0xf]
      %v259 = vld [vmem:[%s1 + $0xc] sm:$0xf]
      %v292 = vunpack.c.l.b16 %v224
      %v293 = vunpack.c.l.b16 %v225
      %v294 = vunpack.c.l.b16 %v226
      %v295 = vunpack.c.l.b16 %v227
      %v296 = vunpack.c.l.b16 %v228
      %v297 = vunpack.c.l.b16 %v229
      %v298 = vunpack.c.l.b16 %v230
      %v299 = vunpack.c.l.b16 %v231
      %v300 = vunpack.c.l.b16 %v232
      %v301 = vunpack.c.l.b16 %v233
      %v302 = vunpack.c.l.b16 %v234
      %v303 = vunpack.c.l.b16 %v235
      %v304 = vunpack.c.l.b16 %v236
      %v305 = vunpack.c.l.b16 %v237
      %v306 = vunpack.c.l.b16 %v238
      %v307 = vunpack.c.l.b16 %v239
      %v308 = vunpack.c.l.b16 %v240
      %v309 = vunpack.c.l.b16 %v241
      %v310 = vunpack.c.l.b16 %v242
      %v311 = vunpack.c.l.b16 %v243
      %v312 = vunpack.c.l.b16 %v244
      %v313 = vunpack.c.l.b16 %v245
      %v314 = vunpack.c.l.b16 %v246
      %v315 = vunpack.c.l.b16 %v247
      %v316 = vunpack.c.l.b16 %v248
      %v317 = vunpack.c.l.b16 %v249
      %v318 = vunpack.c.l.b16 %v250
      %v319 = vunpack.c.l.b16 %v251
      %v320 = vunpack.c.l.b16 %v252
      %v321 = vunpack.c.l.b16 %v253
      %v322 = vunpack.c.l.b16 %v254
      %v323 = vunpack.c.l.b16 %v255
      %v324 = vpack.c.b16 %v293, %v292
      %v325 = vpack.c.b16 %v295, %v294
      %v326 = vpack.c.b16 %v297, %v296
      %v327 = vpack.c.b16 %v299, %v298
      %v328 = vpack.c.b16 %v301, %v300
      %v329 = vpack.c.b16 %v303, %v302
      %v330 = vpack.c.b16 %v305, %v304
      %v331 = vpack.c.b16 %v307, %v306
      %v332 = vpack.c.b16 %v309, %v308
      %v333 = vpack.c.b16 %v311, %v310
      %v334 = vpack.c.b16 %v313, %v312
      %v335 = vpack.c.b16 %v315, %v314
      %v336 = vpack.c.b16 %v317, %v316
      %v337 = vpack.c.b16 %v319, %v318
      %v338 = vpack.c.b16 %v321, %v320
      %v339 = vpack.c.b16 %v323, %v322
      %v344 = vunpack.c.l.b16 %v256
      %v345 = vunpack.c.l.b16 %v257
      %v346 = vunpack.c.l.b16 %v258
      %v347 = vunpack.c.l.b16 %v259
      %v348 = vpack.c.b16 %v345, %v344
      %v349 = vpack.c.b16 %v347, %v346
      %vm352 = vcmask 261120
      %v354 = vsel %vm352, %v324, 0
      %v357 = vsel %vm352, %v325, 0
      %v360 = vsel %vm352, %v326, 0
      %v363 = vsel %vm352, %v327, 0
      %v366 = vsel %vm352, %v328, 0
      %v369 = vsel %vm352, %v329, 0
      %v372 = vsel %vm352, %v330, 0
      %v375 = vsel %vm352, %v331, 0
      %v378 = vsel %vm352, %v332, 0
      %v381 = vsel %vm352, %v333, 0
      %v384 = vsel %vm352, %v334, 0
      %v387 = vsel %vm352, %v335, 0
      %v390 = vsel %vm352, %v336, 0
      %v393 = vsel %vm352, %v337, 0
      %v396 = vsel %vm352, %v338, 0
      %v399 = vsel %vm352, %v339, 0
      %401 = vmatpush.bf16.msra.mxu0 0
      %402 = vmatpush.bf16.msra.mxu0 0
      %403 = vmatpush.bf16.msra.mxu0 0
      %404 = vmatpush.bf16.msra.mxu0 0
      %405 = vmatpush.bf16.msra.mxu0 0
      %406 = vmatpush.bf16.msra.mxu0 0
      %407 = vmatpush.bf16.msra.mxu0 %v349
      %408 = vmatpush.bf16.msra.mxu0 %v348
      %409 = vmatmul.bf16.gmra.mxu0 %v354
      %v410 = vpop.f32.mrf.mxu0
      %v411 = vadd.f32 0.0, %v410
      %v412 = vpop.f32.mrf.mxu0
      %v413 = vadd.f32 0.0, %v412
      %414 = vmatmul.bf16.gmra.mxu0 %v357
      %v415 = vpop.f32.mrf.mxu0
      %v416 = vadd.f32 0.0, %v415
      %v417 = vpop.f32.mrf.mxu0
      %v418 = vadd.f32 0.0, %v417
      %419 = vmatmul.bf16.gmra.mxu0 %v360
      %v420 = vpop.f32.mrf.mxu0
      %v421 = vadd.f32 0.0, %v420
      %v422 = vpop.f32.mrf.mxu0
      %v423 = vadd.f32 0.0, %v422
      %424 = vmatmul.bf16.gmra.mxu0 %v363
      %v425 = vpop.f32.mrf.mxu0
      %v426 = vadd.f32 0.0, %v425
      %v427 = vpop.f32.mrf.mxu0
      %v428 = vadd.f32 0.0, %v427
      %429 = vmatmul.bf16.gmra.mxu0 %v366
      %v430 = vpop.f32.mrf.mxu0
      %v431 = vadd.f32 0.0, %v430
      %v432 = vpop.f32.mrf.mxu0
      %v433 = vadd.f32 0.0, %v432
      %434 = vmatmul.bf16.gmra.mxu0 %v369
      %v435 = vpop.f32.mrf.mxu0
      %v436 = vadd.f32 0.0, %v435
      %v437 = vpop.f32.mrf.mxu0
      %v438 = vadd.f32 0.0, %v437
      %439 = vmatmul.bf16.gmra.mxu0 %v372
      %v440 = vpop.f32.mrf.mxu0
      %v441 = vadd.f32 0.0, %v440
      %v442 = vpop.f32.mrf.mxu0
      %v443 = vadd.f32 0.0, %v442
      %444 = vmatmul.bf16.gmra.mxu0 %v375
      %v445 = vpop.f32.mrf.mxu0
      %v446 = vadd.f32 0.0, %v445
      %v447 = vpop.f32.mrf.mxu0
      %v448 = vadd.f32 0.0, %v447
      %449 = vmatmul.bf16.gmra.mxu0 %v378
      %v450 = vpop.f32.mrf.mxu0
      %v451 = vadd.f32 0.0, %v450
      %v452 = vpop.f32.mrf.mxu0
      %v453 = vadd.f32 0.0, %v452
      %454 = vmatmul.bf16.gmra.mxu0 %v381
      %v455 = vpop.f32.mrf.mxu0
      %v456 = vadd.f32 0.0, %v455
      %v457 = vpop.f32.mrf.mxu0
      %v458 = vadd.f32 0.0, %v457
      %459 = vmatmul.bf16.gmra.mxu0 %v384
      %v460 = vpop.f32.mrf.mxu0
      %v461 = vadd.f32 0.0, %v460
      %v462 = vpop.f32.mrf.mxu0
      %v463 = vadd.f32 0.0, %v462
      %464 = vmatmul.bf16.gmra.mxu0 %v387
      %v465 = vpop.f32.mrf.mxu0
      %v466 = vadd.f32 0.0, %v465
      %v467 = vpop.f32.mrf.mxu0
      %v468 = vadd.f32 0.0, %v467
      %469 = vmatmul.bf16.gmra.mxu0 %v390
      %v470 = vpop.f32.mrf.mxu0
      %v471 = vadd.f32 0.0, %v470
      %v472 = vpop.f32.mrf.mxu0
      %v473 = vadd.f32 0.0, %v472
      %474 = vmatmul.bf16.gmra.mxu0 %v393
      %v475 = vpop.f32.mrf.mxu0
      %v476 = vadd.f32 0.0, %v475
      %v477 = vpop.f32.mrf.mxu0
      %v478 = vadd.f32 0.0, %v477
      %479 = vmatmul.bf16.gmra.mxu0 %v396
      %v480 = vpop.f32.mrf.mxu0
      %v481 = vadd.f32 0.0, %v480
      %v482 = vpop.f32.mrf.mxu0
      %v483 = vadd.f32 0.0, %v482
      %484 = vmatmul.bf16.gmra.mxu0 %v399
      %v485 = vpop.f32.mrf.mxu0
      %v486 = vadd.f32 0.0, %v485
      %v487 = vpop.f32.mrf.mxu0
      %v488 = vadd.f32 0.0, %v487
      %489 = vdwg.mxu0
      %v490 = vld [vmem:[%s2] sm:$0x1]
      %v492 = vperm.slane %v490, 0
      %v494 = vmul.f32 %v411, %v492
      %v495 = vmul.f32 %v413, %v492
      %v496 = vmul.f32 %v416, %v492
      %v497 = vmul.f32 %v418, %v492
      %v498 = vmul.f32 %v421, %v492
      %v499 = vmul.f32 %v423, %v492
      %v500 = vmul.f32 %v426, %v492
      %v501 = vmul.f32 %v428, %v492
      %v502 = vmul.f32 %v431, %v492
      %v503 = vmul.f32 %v433, %v492
      %v504 = vmul.f32 %v436, %v492
      %v505 = vmul.f32 %v438, %v492
      %v506 = vmul.f32 %v441, %v492
      %v507 = vmul.f32 %v443, %v492
      %v508 = vmul.f32 %v446, %v492
      %v509 = vmul.f32 %v448, %v492
      %v510 = vmul.f32 %v451, %v492
      %v511 = vmul.f32 %v453, %v492
      %v512 = vmul.f32 %v456, %v492
      %v513 = vmul.f32 %v458, %v492
      %v514 = vmul.f32 %v461, %v492
      %v515 = vmul.f32 %v463, %v492
      %v516 = vmul.f32 %v466, %v492
      %v517 = vmul.f32 %v468, %v492
      %v518 = vmul.f32 %v471, %v492
      %v519 = vmul.f32 %v473, %v492
      %v520 = vmul.f32 %v476, %v492
      %v521 = vmul.f32 %v478, %v492
      %v522 = vmul.f32 %v481, %v492
      %v523 = vmul.f32 %v483, %v492
      %v524 = vmul.f32 %v486, %v492
      %v525 = vmul.f32 %v488, %v492
      %s526 = scalar_lea.vmem %s2, 1
      %v527 = vld [vmem:[%s526] sm:$0x1]
      %v529 = vperm.slane %v527, 0
      %v531 = vadd.f32 %v494, %v529
      %v532 = vadd.f32 %v495, %v529
      %v533 = vadd.f32 %v496, %v529
      %v534 = vadd.f32 %v497, %v529
      %v535 = vadd.f32 %v498, %v529
      %v536 = vadd.f32 %v499, %v529
      %v537 = vadd.f32 %v500, %v529
      %v538 = vadd.f32 %v501, %v529
      %v539 = vadd.f32 %v502, %v529
      %v540 = vadd.f32 %v503, %v529
      %v541 = vadd.f32 %v504, %v529
      %v542 = vadd.f32 %v505, %v529
      %v543 = vadd.f32 %v506, %v529
      %v544 = vadd.f32 %v507, %v529
      %v545 = vadd.f32 %v508, %v529
      %v546 = vadd.f32 %v509, %v529
      %v547 = vadd.f32 %v510, %v529
      %v548 = vadd.f32 %v511, %v529
      %v549 = vadd.f32 %v512, %v529
      %v550 = vadd.f32 %v513, %v529
      %v551 = vadd.f32 %v514, %v529
      %v552 = vadd.f32 %v515, %v529
      %v553 = vadd.f32 %v516, %v529
      %v554 = vadd.f32 %v517, %v529
      %v555 = vadd.f32 %v518, %v529
      %v556 = vadd.f32 %v519, %v529
      %v557 = vadd.f32 %v520, %v529
      %v558 = vadd.f32 %v521, %v529
      %v559 = vadd.f32 %v522, %v529
      %v560 = vadd.f32 %v523, %v529
      %v561 = vadd.f32 %v524, %v529
      %v562 = vadd.f32 %v525, %v529
      %v563 = vld [vmem:[%s215] sm:$0xff]
      %v564 = vld [vmem:[%s215 + $0x8] sm:$0xff]
      %v565 = vld [vmem:[%s215 + $0x10] sm:$0xff]
      %v566 = vld [vmem:[%s215 + $0x18] sm:$0xff]
      %v567 = vld [vmem:[%s215 + $0x20] sm:$0xff]
      %v568 = vld [vmem:[%s215 + $0x28] sm:$0xff]
      %v569 = vld [vmem:[%s215 + $0x30] sm:$0xff]
      %v570 = vld [vmem:[%s215 + $0x38] sm:$0xff]
      %v571 = vld [vmem:[%s215 + $0x40] sm:$0xff]
      %v572 = vld [vmem:[%s215 + $0x48] sm:$0xff]
      %v573 = vld [vmem:[%s215 + $0x50] sm:$0xff]
      %v574 = vld [vmem:[%s215 + $0x58] sm:$0xff]
      %v575 = vld [vmem:[%s215 + $0x60] sm:$0xff]
      %v576 = vld [vmem:[%s215 + $0x68] sm:$0xff]
      %v577 = vld [vmem:[%s215 + $0x70] sm:$0xff]
      %v578 = vld [vmem:[%s215 + $0x78] sm:$0xff]
      %v579 = vld [vmem:[%s215 + $0x80] sm:$0xff]
      %v580 = vld [vmem:[%s215 + $0x88] sm:$0xff]
      %v581 = vld [vmem:[%s215 + $0x90] sm:$0xff]
      %v582 = vld [vmem:[%s215 + $0x98] sm:$0xff]
      %v583 = vld [vmem:[%s215 + $0xa0] sm:$0xff]
      %v584 = vld [vmem:[%s215 + $0xa8] sm:$0xff]
      %v585 = vld [vmem:[%s215 + $0xb0] sm:$0xff]
      %v586 = vld [vmem:[%s215 + $0xb8] sm:$0xff]
      %v587 = vld [vmem:[%s215 + $0xc0] sm:$0xff]
      %v588 = vld [vmem:[%s215 + $0xc8] sm:$0xff]
      %v589 = vld [vmem:[%s215 + $0xd0] sm:$0xff]
      %v590 = vld [vmem:[%s215 + $0xd8] sm:$0xff]
      %v591 = vld [vmem:[%s215 + $0xe0] sm:$0xff]
      %v592 = vld [vmem:[%s215 + $0xe8] sm:$0xff]
      %v593 = vld [vmem:[%s215 + $0xf0] sm:$0xff]
      %v594 = vld [vmem:[%s215 + $0xf8] sm:$0xff]
      %v595 = vadd.f32 %v531, %v563
      %v596 = vadd.f32 %v532, %v564
      %v597 = vadd.f32 %v533, %v565
      %v598 = vadd.f32 %v534, %v566
      %v599 = vadd.f32 %v535, %v567
      %v600 = vadd.f32 %v536, %v568
      %v601 = vadd.f32 %v537, %v569
      %v602 = vadd.f32 %v538, %v570
      %v603 = vadd.f32 %v539, %v571
      %v604 = vadd.f32 %v540, %v572
      %v605 = vadd.f32 %v541, %v573
      %v606 = vadd.f32 %v542, %v574
      %v607 = vadd.f32 %v543, %v575
      %v608 = vadd.f32 %v544, %v576
      %v609 = vadd.f32 %v545, %v577
      %v610 = vadd.f32 %v546, %v578
      %v611 = vadd.f32 %v547, %v579
      %v612 = vadd.f32 %v548, %v580
      %v613 = vadd.f32 %v549, %v581
      %v614 = vadd.f32 %v550, %v582
      %v615 = vadd.f32 %v551, %v583
      %v616 = vadd.f32 %v552, %v584
      %v617 = vadd.f32 %v553, %v585
      %v618 = vadd.f32 %v554, %v586
      %v619 = vadd.f32 %v555, %v587
      %v620 = vadd.f32 %v556, %v588
      %v621 = vadd.f32 %v557, %v589
      %v622 = vadd.f32 %v558, %v590
      %v623 = vadd.f32 %v559, %v591
      %v624 = vadd.f32 %v560, %v592
      %v625 = vadd.f32 %v561, %v593
      %v626 = vadd.f32 %v562, %v594
      %v627 = vmax.f32 %v595, 0.0
      %v628 = vmax.f32 %v596, 0.0
      %v629 = vmax.f32 %v597, 0.0
      %v630 = vmax.f32 %v598, 0.0
      %v631 = vmax.f32 %v599, 0.0
      %v632 = vmax.f32 %v600, 0.0
      %v633 = vmax.f32 %v601, 0.0
      %v634 = vmax.f32 %v602, 0.0
      %v635 = vmax.f32 %v603, 0.0
      %v636 = vmax.f32 %v604, 0.0
      %v637 = vmax.f32 %v605, 0.0
      %v638 = vmax.f32 %v606, 0.0
      %v639 = vmax.f32 %v607, 0.0
      %v640 = vmax.f32 %v608, 0.0
      %v641 = vmax.f32 %v609, 0.0
      %v642 = vmax.f32 %v610, 0.0
      %v643 = vmax.f32 %v611, 0.0
      %v644 = vmax.f32 %v612, 0.0
      %v645 = vmax.f32 %v613, 0.0
      %v646 = vmax.f32 %v614, 0.0
      %v647 = vmax.f32 %v615, 0.0
      %v648 = vmax.f32 %v616, 0.0
      %v649 = vmax.f32 %v617, 0.0
      %v650 = vmax.f32 %v618, 0.0
      %v651 = vmax.f32 %v619, 0.0
      %v652 = vmax.f32 %v620, 0.0
      %v653 = vmax.f32 %v621, 0.0
      %v654 = vmax.f32 %v622, 0.0
      %v655 = vmax.f32 %v623, 0.0
      %v656 = vmax.f32 %v624, 0.0
      %v657 = vmax.f32 %v625, 0.0
      %v658 = vmax.f32 %v626, 0.0
      %659 = vst [vmem:[%s221] sm:$0xff] %v627
      %660 = vst [vmem:[%s221 + $0x8] sm:$0xff] %v628
      %661 = vst [vmem:[%s221 + $0x10] sm:$0xff] %v629
      %662 = vst [vmem:[%s221 + $0x18] sm:$0xff] %v630
      %663 = vst [vmem:[%s221 + $0x20] sm:$0xff] %v631
      %664 = vst [vmem:[%s221 + $0x28] sm:$0xff] %v632
      %665 = vst [vmem:[%s221 + $0x30] sm:$0xff] %v633
      %666 = vst [vmem:[%s221 + $0x38] sm:$0xff] %v634
      %667 = vst [vmem:[%s221 + $0x40] sm:$0xff] %v635
      %668 = vst [vmem:[%s221 + $0x48] sm:$0xff] %v636
      %669 = vst [vmem:[%s221 + $0x50] sm:$0xff] %v637
      %670 = vst [vmem:[%s221 + $0x58] sm:$0xff] %v638
      %671 = vst [vmem:[%s221 + $0x60] sm:$0xff] %v639
      %672 = vst [vmem:[%s221 + $0x68] sm:$0xff] %v640
      %673 = vst [vmem:[%s221 + $0x70] sm:$0xff] %v641
      %674 = vst [vmem:[%s221 + $0x78] sm:$0xff] %v642
      %675 = vst [vmem:[%s221 + $0x80] sm:$0xff] %v643
      %676 = vst [vmem:[%s221 + $0x88] sm:$0xff] %v644
      %677 = vst [vmem:[%s221 + $0x90] sm:$0xff] %v645
      %678 = vst [vmem:[%s221 + $0x98] sm:$0xff] %v646
      %679 = vst [vmem:[%s221 + $0xa0] sm:$0xff] %v647
      %680 = vst [vmem:[%s221 + $0xa8] sm:$0xff] %v648
      %681 = vst [vmem:[%s221 + $0xb0] sm:$0xff] %v649
      %682 = vst [vmem:[%s221 + $0xb8] sm:$0xff] %v650
      %683 = vst [vmem:[%s221 + $0xc0] sm:$0xff] %v651
      %684 = vst [vmem:[%s221 + $0xc8] sm:$0xff] %v652
      %685 = vst [vmem:[%s221 + $0xd0] sm:$0xff] %v653
      %686 = vst [vmem:[%s221 + $0xd8] sm:$0xff] %v654
      %687 = vst [vmem:[%s221 + $0xe0] sm:$0xff] %v655
      %688 = vst [vmem:[%s221 + $0xe8] sm:$0xff] %v656
      %689 = vst [vmem:[%s221 + $0xf0] sm:$0xff] %v657
      %690 = vst [vmem:[%s221 + $0xf8] sm:$0xff] %v658
      %s691 = smul.u32 32, %s15
      %p692 = scmp.lt.s32.totalorder %s691, 63
      %s693 = scalar_select %p692, %s691, 63
      %s694 = smul.addr %s693, 8
      %s695 = scalar_lea.vmem %s4, %s694
      // Predicated region
      $region37: #{multiscale_scconv2d.40} parent=35 // pred_check
        %p696 = pneg %p127
      $region38: #{multiscale_scconv2d.40} parent=35 // pred_check_branch
        %698 = sbr.rel (%p696) target = $region40
      $region39: #{multiscale_scconv2d.40} parent=35 // pred_region
        %s699 = smul.u32 32, %s15
      $region40: #{multiscale_scconv2d.40} parent=35 // pred_fallthru
        _
    $region36: #{multiscale_scconv2d.40} parent=5 // pred_fallthru
      _
    %p700 = scmp.le.s32.totalorder 2, %s10
    // Predicated region
    $region41: #{multiscale_scconv2d.40} parent=5 // pred_check
      %p701 = pneg %p700
    $region42: #{multiscale_scconv2d.40} parent=5 // pred_check_branch
      %703 = sbr.rel (%p701) target = $region44
    $region43: #{multiscale_scconv2d.40} parent=5 // pred_region
      %s704 = ssub.s32 %s10, 2
      // Predicated region
      $region45: #{multiscale_scconv2d.40} parent=43 // pred_check
        %p705 = pneg %p133
      $region46: #{multiscale_scconv2d.40} parent=43 // pred_check_branch
        %707 = sbr.rel (%p705) target = $region48
      $region47: #{multiscale_scconv2d.40} parent=43 // pred_region
        %s708 = smul.u32 32, %s16
        %p709 = scmp.lt.s32.totalorder %s708, 63
        %s710 = scalar_select %p709, %s708, 63
        %s711 = smul.addr %s710, 8
        %s712 = scalar_lea.vmem %s4, %s711
      $region48: #{multiscale_scconv2d.40} parent=43 // pred_fallthru
        _
    $region44: #{multiscale_scconv2d.40} parent=5 // pred_fallthru
      _
  $region6: #{multiscale_scconv2d.40} parent=0 // loop_footer
    %s14 = sadd.s32 1, %s10
  $region7: #{multiscale_scconv2d.40} parent=0 // loop_footer_branch
    %9 = sbr.rel target = $region3
  $region8: #{multiscale_scconv2d.40} parent=0 // loop_exit
    _

// kernel: multiscale_scconv2d.33
$region0: #{multiscale_scconv2d.33}
  #allocation0 [shape = 'u32[]', space=smem, size = 0x4, offset = 0x4, fixed_abs, tag = 'smem constant byte address 0x4 - core index']
  #allocation1 [shape = 'u32[72,128]{1,0:T(1,128)}', space=vmem, size = 0x9000, scoped, tag = 'internal scratch']
  %s0 = inlined_call_operand.vmem [shape: bf16[128,288], index: 0, kind: input, shape index: {}]
  %s1 = inlined_call_operand.vmem [shape: bf16[288,128], index: 1, kind: input, shape index: {}]
  %s2 = inlined_call_operand.vmem [shape: f32[2,1,128], index: 2, kind: input, shape index: {}]
  %s3 = inlined_call_operand.vmem [shape: f32[128,128], index: 3, kind: output, shape index: {}]
  %s4 = sld [smem:[#allocation0]]
  $region22: #{multiscale_scconv2d.33} parent=0
    _
  %s6 = ssub.s32 1, %s4
  %s7 = scalar_select 0, %s6, %s4
  // Predicated region
  $region2: #{multiscale_scconv2d.33} parent=0 // pred_check
    _
  $region3: #{multiscale_scconv2d.33} parent=0 // pred_check_branch
    %9 = sbr.rel (0) target = $region5
  $region4: #{multiscale_scconv2d.33} parent=0 // pred_region
    _
  $region5: #{multiscale_scconv2d.33} parent=0 // pred_fallthru
    _
  // Predicated region
  $region6: #{multiscale_scconv2d.33} parent=0 // pred_check
    _
  $region7: #{multiscale_scconv2d.33} parent=0 // pred_check_branch
    %11 = sbr.rel (0) target = $region9
  $region8: #{multiscale_scconv2d.33} parent=0 // pred_region
    _
  $region9: #{multiscale_scconv2d.33} parent=0 // pred_fallthru
    _
  // Predicated region
  $region10: #{multiscale_scconv2d.33} parent=0 // pred_check
    _
  $region11: #{multiscale_scconv2d.33} parent=0 // pred_check_branch
    %13 = sbr.rel (0) target = $region13
  $region12: #{multiscale_scconv2d.33} parent=0 // pred_region
    _
  $region13: #{multiscale_scconv2d.33} parent=0 // pred_fallthru
    _
  %v15 = vld [vmem:[%s0] sm:$0xff]
  %v16 = vld [vmem:[%s0 + $0x8] sm:$0xf]
  %v17 = vld [vmem:[%s0 + $0xc] sm:$0xff]
  %v18 = vld [vmem:[%s0 + $0x14] sm:$0xf]
  %v19 = vld [vmem:[%s0 + $0x18] sm:$0xff]
  %v20 = vld [vmem:[%s0 + $0x20] sm:$0xf]
  %v21 = vld [vmem:[%s0 + $0x24] sm:$0xff]
  %v22 = vld [vmem:[%s0 + $0x2c] sm:$0xf]
  %v23 = vld [vmem:[%s0 + $0x30] sm:$0xff]
  %v24 = vld [vmem:[%s0 + $0x38] sm:$0xf]
  %v25 = vld [vmem:[%s0 + $0x3c] sm:$0xff]
  %v26 = vld [vmem:[%s0 + $0x44] sm:$0xf]
  %v27 = vld [vmem:[%s0 + $0x48] sm:$0xff]
  %v28 = vld [vmem:[%s0 + $0x50] sm:$0xf]
  %v29 = vld [vmem:[%s0 + $0x54] sm:$0xff]
  %v30 = vld [vmem:[%s0 + $0x5c] sm:$0xf]
  %v31 = vld [vmem:[%s0 + $0x60] sm:$0xff]
  %v32 = vld [vmem:[%s0 + $0x68] sm:$0xf]
  %v33 = vld [vmem:[%s0 + $0x6c] sm:$0xff]
  %v34 = vld [vmem:[%s0 + $0x74] sm:$0xf]
  %v35 = vld [vmem:[%s0 + $0x78] sm:$0xff]
  %v36 = vld [vmem:[%s0 + $0x80] sm:$0xf]
  %v37 = vld [vmem:[%s0 + $0x84] sm:$0xff]
  %v38 = vld [vmem:[%s0 + $0x8c] sm:$0xf]
  %v39 = vld [vmem:[%s0 + $0x90] sm:$0xff]
  %v40 = vld [vmem:[%s0 + $0x98] sm:$0xf]
  %v41 = vld [vmem:[%s0 + $0x9c] sm:$0xff]
  %v42 = vld [vmem:[%s0 + $0xa4] sm:$0xf]
  %v43 = vld [vmem:[%s0 + $0xa8] sm:$0xff]
  %v44 = vld [vmem:[%s0 + $0xb0] sm:$0xf]
  %v45 = vld [vmem:[%s0 + $0xb4] sm:$0xff]
  %v46 = vld [vmem:[%s0 + $0xbc] sm:$0xf]
  %v47 = vld [vmem:[%s1] sm:$0xf]
  %v48 = vld [vmem:[%s1 + $0x4] sm:$0xf]
  %v49 = vld [vmem:[%s1 + $0x8] sm:$0xf]
  %v50 = vld [vmem:[%s1 + $0xc] sm:$0xf]
  %v51 = vld [vmem:[%s1 + $0x10] sm:$0xf]
  %v52 = vld [vmem:[%s1 + $0x14] sm:$0xf]
  %v53 = vld [vmem:[%s1 + $0x18] sm:$0xf]
  %v54 = vld [vmem:[%s1 + $0x1c] sm:$0xf]
  %v55 = vld [vmem:[%s1 + $0x20] sm:$0xf]
  %v56 = vld [vmem:[%s1 + $0x24] sm:$0xf]
  %v57 = vld [vmem:[%s1 + $0x28] sm:$0xf]
  %v58 = vld [vmem:[%s1 + $0x2c] sm:$0xf]
  %v59 = vld [vmem:[%s1 + $0x30] sm:$0xf]
  %v60 = vld [vmem:[%s1 + $0x34] sm:$0xf]
  %v61 = vld [vmem:[%s1 + $0x38] sm:$0xf]
  %v62 = vld [vmem:[%s1 + $0x3c] sm:$0xf]
  %v63 = vld [vmem:[%s1 + $0x40] sm:$0xf]
  %v64 = vld [vmem:[%s1 + $0x44] sm:$0xf]
  %v65 = vld [vmem:[%s1 + $0x48] sm:$0xf]
  %v66 = vld [vmem:[%s1 + $0x4c] sm:$0xf]
  %v67 = vld [vmem:[%s1 + $0x50] sm:$0xf]
  %v68 = vld [vmem:[%s1 + $0x54] sm:$0xf]
  %v69 = vld [vmem:[%s1 + $0x58] sm:$0xf]
  %v70 = vld [vmem:[%s1 + $0x5c] sm:$0xf]
  %v71 = vld [vmem:[%s1 + $0x60] sm:$0xf]
  %v72 = vld [vmem:[%s1 + $0x64] sm:$0xf]
  %v73 = vld [vmem:[%s1 + $0x68] sm:$0xf]
  %v74 = vld [vmem:[%s1 + $0x6c] sm:$0xf]
  %v75 = vld [vmem:[%s1 + $0x70] sm:$0xf]
  %v76 = vld [vmem:[%s1 + $0x74] sm:$0xf]
  %v77 = vld [vmem:[%s1 + $0x78] sm:$0xf]
  %v78 = vld [vmem:[%s1 + $0x7c] sm:$0xf]
  %v79 = vld [vmem:[%s1 + $0x80] sm:$0xf]
  %v80 = vld [vmem:[%s1 + $0x84] sm:$0xf]
  %v81 = vld [vmem:[%s1 + $0x88] sm:$0xf]
  %v82 = vld [vmem:[%s1 + $0x8c] sm:$0xf]
  %v115 = vunpack.c.l.b16 %v15
  %v116 = vunpack.c.h.b16 %v15
  %v117 = vunpack.c.l.b16 %v16
  %v118 = vunpack.c.l.b16 %v17
  %v119 = vunpack.c.h.b16 %v17
  %v120 = vunpack.c.l.b16 %v18
  %v121 = vunpack.c.l.b16 %v19
  %v122 = vunpack.c.h.b16 %v19
  %v123 = vunpack.c.l.b16 %v20
  %v124 = vunpack.c.l.b16 %v21
  %v125 = vunpack.c.h.b16 %v21
  %v126 = vunpack.c.l.b16 %v22
  %v127 = vunpack.c.l.b16 %v23
  %v128 = vunpack.c.h.b16 %v23
  %v129 = vunpack.c.l.b16 %v24
  %v130 = vunpack.c.l.b16 %v25
  %v131 = vunpack.c.h.b16 %v25
  %v132 = vunpack.c.l.b16 %v26
  %v133 = vunpack.c.l.b16 %v27
  %v134 = vunpack.c.h.b16 %v27
  %v135 = vunpack.c.l.b16 %v28
  %v136 = vunpack.c.l.b16 %v29
  %v137 = vunpack.c.h.b16 %v29
  %v138 = vunpack.c.l.b16 %v30
  %v139 = vunpack.c.l.b16 %v31
  %v140 = vunpack.c.h.b16 %v31
  %v141 = vunpack.c.l.b16 %v32
  %v142 = vunpack.c.l.b16 %v33
  %v143 = vunpack.c.h.b16 %v33
  %v144 = vunpack.c.l.b16 %v34
  %v145 = vunpack.c.l.b16 %v35
  %v146 = vunpack.c.h.b16 %v35
  %v147 = vunpack.c.l.b16 %v36
  %v148 = vunpack.c.l.b16 %v37
  %v149 = vunpack.c.h.b16 %v37
  %v150 = vunpack.c.l.b16 %v38
  %v151 = vunpack.c.l.b16 %v39
  %v152 = vunpack.c.h.b16 %v39
  %v153 = vunpack.c.l.b16 %v40
  %v154 = vunpack.c.l.b16 %v41
  %v155 = vunpack.c.h.b16 %v41
  %v156 = vunpack.c.l.b16 %v42
  %v157 = vunpack.c.l.b16 %v43
  %v158 = vunpack.c.h.b16 %v43
  %v159 = vunpack.c.l.b16 %v44
  %v160 = vunpack.c.l.b16 %v45
  %v161 = vunpack.c.h.b16 %v45
  %v162 = vunpack.c.l.b16 %v46
  %v163 = vpack.c.b16 %v118, %v115
  %v164 = vpack.c.b16 %v119, %v116
  %v165 = vpack.c.b16 %v120, %v117
  %v166 = vpack.c.b16 %v124, %v121
  %v167 = vpack.c.b16 %v125, %v122
  %v168 = vpack.c.b16 %v126, %v123
  %v169 = vpack.c.b16 %v130, %v127
  %v170 = vpack.c.b16 %v131, %v128
  %v171 = vpack.c.b16 %v132, %v129
  %v172 = vpack.c.b16 %v136, %v133
  %v173 = vpack.c.b16 %v137, %v134
  %v174 = vpack.c.b16 %v138, %v135
  %v175 = vpack.c.b16 %v142, %v139
  %v176 = vpack.c.b16 %v143, %v140
  %v177 = vpack.c.b16 %v144, %v141
  %v178 = vpack.c.b16 %v148, %v145
  %v179 = vpack.c.b16 %v149, %v146
  %v180 = vpack.c.b16 %v150, %v147
  %v181 = vpack.c.b16 %v154, %v151
  %v182 = vpack.c.b16 %v155, %v152
  %v183 = vpack.c.b16 %v156, %v153
  %v184 = vpack.c.b16 %v160, %v157
  %v185 = vpack.c.b16 %v161, %v158
  %v186 = vpack.c.b16 %v162, %v159
  %v239 = vunpack.c.l.b16 %v47
  %v240 = vunpack.c.l.b16 %v48
  %v241 = vunpack.c.l.b16 %v49
  %v242 = vunpack.c.l.b16 %v50
  %v243 = vunpack.c.l.b16 %v51
  %v244 = vunpack.c.l.b16 %v52
  %v245 = vunpack.c.l.b16 %v53
  %v246 = vunpack.c.l.b16 %v54
  %v247 = vunpack.c.l.b16 %v55
  %v248 = vunpack.c.l.b16 %v56
  %v249 = vunpack.c.l.b16 %v57
  %v250 = vunpack.c.l.b16 %v58
  %v251 = vunpack.c.l.b16 %v59
  %v252 = vunpack.c.l.b16 %v60
  %v253 = vunpack.c.l.b16 %v61
  %v254 = vunpack.c.l.b16 %v62
  %v255 = vunpack.c.l.b16 %v63
  %v256 = vunpack.c.l.b16 %v64
  %v257 = vunpack.c.l.b16 %v65
  %v258 = vunpack.c.l.b16 %v66
  %v259 = vunpack.c.l.b16 %v67
  %v260 = vunpack.c.l.b16 %v68
  %v261 = vunpack.c.l.b16 %v69
  %v262 = vunpack.c.l.b16 %v70
  %v263 = vunpack.c.l.b16 %v71
  %v264 = vunpack.c.l.b16 %v72
  %v265 = vunpack.c.l.b16 %v73
  %v266 = vunpack.c.l.b16 %v74
  %v267 = vunpack.c.l.b16 %v75
  %v268 = vunpack.c.l.b16 %v76
  %v269 = vunpack.c.l.b16 %v77
  %v270 = vunpack.c.l.b16 %v78
  %v271 = vunpack.c.l.b16 %v79
  %v272 = vunpack.c.l.b16 %v80
  %v273 = vunpack.c.l.b16 %v81
  %v274 = vunpack.c.l.b16 %v82
  %v275 = vpack.c.b16 %v240, %v239
  %v276 = vpack.c.b16 %v242, %v241
  %v277 = vpack.c.b16 %v244, %v243
  %v278 = vpack.c.b16 %v246, %v245
  %v279 = vpack.c.b16 %v248, %v247
  %v280 = vpack.c.b16 %v250, %v249
  %v281 = vpack.c.b16 %v252, %v251
  %v282 = vpack.c.b16 %v254, %v253
  %v283 = vpack.c.b16 %v256, %v255
  %v284 = vpack.c.b16 %v258, %v257
  %v285 = vpack.c.b16 %v260, %v259
  %v286 = vpack.c.b16 %v262, %v261
  %v287 = vpack.c.b16 %v264, %v263
  %v288 = vpack.c.b16 %v266, %v265
  %v289 = vpack.c.b16 %v268, %v267
  %v290 = vpack.c.b16 %v270, %v269
  %v291 = vpack.c.b16 %v272, %v271
  %v292 = vpack.c.b16 %v274, %v273
  %vm311 = vcmask 261120
  %v313 = vsel %vm311, %v165, 0
  %v316 = vsel %vm311, %v168, 0
  %v319 = vsel %vm311, %v171, 0
  %v322 = vsel %vm311, %v174, 0
  %v325 = vsel %vm311, %v177, 0
  %v328 = vsel %vm311, %v180, 0
  %v331 = vsel %vm311, %v183, 0
  %v334 = vsel %vm311, %v186, 0
  %336 = vmatpush.bf16.msra.mxu0 %v282
  %337 = vmatpush.bf16.msra.mxu0 %v281
  %338 = vmatpush.bf16.msra.mxu0 %v280
  %339 = vmatpush.bf16.msra.mxu0 %v279
  %340 = vmatpush.bf16.msra.mxu0 %v278
  %341 = vmatpush.bf16.msra.mxu0 %v277
  %342 = vmatpush.bf16.msra.mxu0 %v276
  %343 = vmatpush.bf16.msra.mxu0 %v275
  %344 = vmatmul.bf16.gmra.mxu0 %v163
  %v345 = vpop.f32.mrf.mxu0
  %v346 = vadd.f32 0.0, %v345
  %v347 = vpop.f32.mrf.mxu0
  %v348 = vadd.f32 0.0, %v347
  %349 = vmatmul.bf16.gmra.mxu0 %v166
  %v350 = vpop.f32.mrf.mxu0
  %v351 = vadd.f32 0.0, %v350
  %v352 = vpop.f32.mrf.mxu0
  %v353 = vadd.f32 0.0, %v352
  %354 = vmatmul.bf16.gmra.mxu0 %v169
  %v355 = vpop.f32.mrf.mxu0
  %v356 = vadd.f32 0.0, %v355
  %v357 = vpop.f32.mrf.mxu0
  %v358 = vadd.f32 0.0, %v357
  %359 = vmatmul.bf16.gmra.mxu0 %v172
  %v360 = vpop.f32.mrf.mxu0
  %v361 = vadd.f32 0.0, %v360
  %v362 = vpop.f32.mrf.mxu0
  %v363 = vadd.f32 0.0, %v362
  %364 = vmatmul.bf16.gmra.mxu0 %v175
  %v365 = vpop.f32.mrf.mxu0
  %v366 = vadd.f32 0.0, %v365
  %v367 = vpop.f32.mrf.mxu0
  %v368 = vadd.f32 0.0, %v367
  %369 = vmatmul.bf16.gmra.mxu0 %v178
  %v370 = vpop.f32.mrf.mxu0
  %v371 = vadd.f32 0.0, %v370
  %v372 = vpop.f32.mrf.mxu0
  %v373 = vadd.f32 0.0, %v372
  %374 = vmatmul.bf16.gmra.mxu0 %v181
  %v375 = vpop.f32.mrf.mxu0
  %v376 = vadd.f32 0.0, %v375
  %v377 = vpop.f32.mrf.mxu0
  %v378 = vadd.f32 0.0, %v377
  %379 = vmatmul.bf16.gmra.mxu0 %v184
  %v380 = vpop.f32.mrf.mxu0
  %v381 = vadd.f32 0.0, %v380
  %v382 = vpop.f32.mrf.mxu0
  %v383 = vadd.f32 0.0, %v382
  %384 = vdwg.mxu0
  %385 = vmatpush.bf16.msra.mxu0 %v290
  %386 = vmatpush.bf16.msra.mxu0 %v289
  %387 = vmatpush.bf16.msra.mxu0 %v288
  %388 = vmatpush.bf16.msra.mxu0 %v287
  %389 = vmatpush.bf16.msra.mxu0 %v286
  %390 = vmatpush.bf16.msra.mxu0 %v285
  %391 = vmatpush.bf16.msra.mxu0 %v284
  %392 = vmatpush.bf16.msra.mxu0 %v283
  %393 = vmatmul.bf16.gmra.mxu0 %v164
  %v394 = vpop.f32.mrf.mxu0
  %v395 = vadd.f32 %v346, %v394
  %v396 = vpop.f32.mrf.mxu0
  %v397 = vadd.f32 %v348, %v396
  %398 = vmatmul.bf16.gmra.mxu0 %v167
  %v399 = vpop.f32.mrf.mxu0
  %v400 = vadd.f32 %v351, %v399
  %v401 = vpop.f32.mrf.mxu0
  %v402 = vadd.f32 %v353, %v401
  %403 = vmatmul.bf16.gmra.mxu0 %v170
  %v404 = vpop.f32.mrf.mxu0
  %v405 = vadd.f32 %v356, %v404
  %v406 = vpop.f32.mrf.mxu0
  %v407 = vadd.f32 %v358, %v406
  %408 = vmatmul.bf16.gmra.mxu0 %v173
  %v409 = vpop.f32.mrf.mxu0
  %v410 = vadd.f32 %v361, %v409
  %v411 = vpop.f32.mrf.mxu0
  %v412 = vadd.f32 %v363, %v411
  %413 = vmatmul.bf16.gmra.mxu0 %v176
  %v414 = vpop.f32.mrf.mxu0
  %v415 = vadd.f32 %v366, %v414
  %v416 = vpop.f32.mrf.mxu0
  %v417 = vadd.f32 %v368, %v416
  %418 = vmatmul.bf16.gmra.mxu0 %v179
  %v419 = vpop.f32.mrf.mxu0
  %v420 = vadd.f32 %v371, %v419
  %v421 = vpop.f32.mrf.mxu0
  %v422 = vadd.f32 %v373, %v421
  %423 = vmatmul.bf16.gmra.mxu0 %v182
  %v424 = vpop.f32.mrf.mxu0
  %v425 = vadd.f32 %v376, %v424
  %v426 = vpop.f32.mrf.mxu0
  %v427 = vadd.f32 %v378, %v426
  %428 = vmatmul.bf16.gmra.mxu0 %v185
  %v429 = vpop.f32.mrf.mxu0
  %v430 = vadd.f32 %v381, %v429
  %v431 = vpop.f32.mrf.mxu0
  %v432 = vadd.f32 %v383, %v431
  %433 = vdwg.mxu0
  %434 = vmatpush.bf16.msra.mxu0 0
  %435 = vmatpush.bf16.msra.mxu0 0
  %436 = vmatpush.bf16.msra.mxu0 0
  %437 = vmatpush.bf16.msra.mxu0 0
  %438 = vmatpush.bf16.msra.mxu0 0
  %439 = vmatpush.bf16.msra.mxu0 0
  %440 = vmatpush.bf16.msra.mxu0 %v292
  %441 = vmatpush.bf16.msra.mxu0 %v291
  %442 = vmatmul.bf16.gmra.mxu0 %v313
  %v443 = vpop.f32.mrf.mxu0
  %v444 = vadd.f32 %v395, %v443
  %v445 = vpop.f32.mrf.mxu0
  %v446 = vadd.f32 %v397, %v445
  %447 = vmatmul.bf16.gmra.mxu0 %v316
  %v448 = vpop.f32.mrf.mxu0
  %v449 = vadd.f32 %v400, %v448
  %v450 = vpop.f32.mrf.mxu0
  %v451 = vadd.f32 %v402, %v450
  %452 = vmatmul.bf16.gmra.mxu0 %v319
  %v453 = vpop.f32.mrf.mxu0
  %v454 = vadd.f32 %v405, %v453
  %v455 = vpop.f32.mrf.mxu0
  %v456 = vadd.f32 %v407, %v455
  %457 = vmatmul.bf16.gmra.mxu0 %v322
  %v458 = vpop.f32.mrf.mxu0
  %v459 = vadd.f32 %v410, %v458
  %v460 = vpop.f32.mrf.mxu0
  %v461 = vadd.f32 %v412, %v460
  %462 = vmatmul.bf16.gmra.mxu0 %v325
  %v463 = vpop.f32.mrf.mxu0
  %v464 = vadd.f32 %v415, %v463
  %v465 = vpop.f32.mrf.mxu0
  %v466 = vadd.f32 %v417, %v465
  %467 = vmatmul.bf16.gmra.mxu0 %v328
  %v468 = vpop.f32.mrf.mxu0
  %v469 = vadd.f32 %v420, %v468
  %v470 = vpop.f32.mrf.mxu0
  %v471 = vadd.f32 %v422, %v470
  %472 = vmatmul.bf16.gmra.mxu0 %v331
  %v473 = vpop.f32.mrf.mxu0
  %v474 = vadd.f32 %v425, %v473
  %v475 = vpop.f32.mrf.mxu0
  %v476 = vadd.f32 %v427, %v475
  %477 = vmatmul.bf16.gmra.mxu0 %v334
  %v478 = vpop.f32.mrf.mxu0
  %v479 = vadd.f32 %v430, %v478
  %v480 = vpop.f32.mrf.mxu0
  %v481 = vadd.f32 %v432, %v480
  %482 = vdwg.mxu0
  %v483 = vld [vmem:[%s2] sm:$0x1]
  %v485 = vperm.slane %v483, 0
  %v487 = vmul.f32 %v444, %v485
  %v488 = vmul.f32 %v446, %v485
  %v489 = vmul.f32 %v449, %v485
  %v490 = vmul.f32 %v451, %v485
  %v491 = vmul.f32 %v454, %v485
  %v492 = vmul.f32 %v456, %v485
  %v493 = vmul.f32 %v459, %v485
  %v494 = vmul.f32 %v461, %v485
  %v495 = vmul.f32 %v464, %v485
  %v496 = vmul.f32 %v466, %v485
  %v497 = vmul.f32 %v469, %v485
  %v498 = vmul.f32 %v471, %v485
  %v499 = vmul.f32 %v474, %v485
  %v500 = vmul.f32 %v476, %v485
  %v501 = vmul.f32 %v479, %v485
  %v502 = vmul.f32 %v481, %v485
  %s503 = scalar_lea.vmem %s2, 1
  %v504 = vld [vmem:[%s503] sm:$0x1]
  %v506 = vperm.slane %v504, 0
  %v508 = vadd.f32 %v487, %v506
  %v509 = vadd.f32 %v488, %v506
  %v510 = vadd.f32 %v489, %v506
  %v511 = vadd.f32 %v490, %v506
  %v512 = vadd.f32 %v491, %v506
  %v513 = vadd.f32 %v492, %v506
  %v514 = vadd.f32 %v493, %v506
  %v515 = vadd.f32 %v494, %v506
  %v516 = vadd.f32 %v495, %v506
  %v517 = vadd.f32 %v496, %v506
  %v518 = vadd.f32 %v497, %v506
  %v519 = vadd.f32 %v498, %v506
  %v520 = vadd.f32 %v499, %v506
  %v521 = vadd.f32 %v500, %v506
  %v522 = vadd.f32 %v501, %v506
  %v523 = vadd.f32 %v502, %v506
  %v524 = vmax.f32 %v508, 0.0
  %v525 = vmax.f32 %v509, 0.0
  %v526 = vmax.f32 %v510, 0.0
  %v527 = vmax.f32 %v511, 0.0
  %v528 = vmax.f32 %v512, 0.0
  %v529 = vmax.f32 %v513, 0.0
  %v530 = vmax.f32 %v514, 0.0
  %v531 = vmax.f32 %v515, 0.0
  %v532 = vmax.f32 %v516, 0.0
  %v533 = vmax.f32 %v517, 0.0
  %v534 = vmax.f32 %v518, 0.0
  %v535 = vmax.f32 %v519, 0.0
  %v536 = vmax.f32 %v520, 0.0
  %v537 = vmax.f32 %v521, 0.0
  %v538 = vmax.f32 %v522, 0.0
  %v539 = vmax.f32 %v523, 0.0
  %540 = vst [vmem:[%s3] sm:$0xff] %v524
  %541 = vst [vmem:[%s3 + $0x8] sm:$0xff] %v525
  %542 = vst [vmem:[%s3 + $0x10] sm:$0xff] %v526
  %543 = vst [vmem:[%s3 + $0x18] sm:$0xff] %v527
  %544 = vst [vmem:[%s3 + $0x20] sm:$0xff] %v528
  %545 = vst [vmem:[%s3 + $0x28] sm:$0xff] %v529
  %546 = vst [vmem:[%s3 + $0x30] sm:$0xff] %v530
  %547 = vst [vmem:[%s3 + $0x38] sm:$0xff] %v531
  %548 = vst [vmem:[%s3 + $0x40] sm:$0xff] %v532
  %549 = vst [vmem:[%s3 + $0x48] sm:$0xff] %v533
  %550 = vst [vmem:[%s3 + $0x50] sm:$0xff] %v534
  %551 = vst [vmem:[%s3 + $0x58] sm:$0xff] %v535
  %552 = vst [vmem:[%s3 + $0x60] sm:$0xff] %v536
  %553 = vst [vmem:[%s3 + $0x68] sm:$0xff] %v537
  %554 = vst [vmem:[%s3 + $0x70] sm:$0xff] %v538
  %555 = vst [vmem:[%s3 + $0x78] sm:$0xff] %v539
  // Predicated region
  $region14: #{multiscale_scconv2d.33} parent=0 // pred_check
    _
  $region15: #{multiscale_scconv2d.33} parent=0 // pred_check_branch
    %557 = sbr.rel (0) target = $region17
  $region16: #{multiscale_scconv2d.33} parent=0 // pred_region
    _
  $region17: #{multiscale_scconv2d.33} parent=0 // pred_fallthru
    _
  // Predicated region
  $region18: #{multiscale_scconv2d.33} parent=0 // pred_check
    _
  $region19: #{multiscale_scconv2d.33} parent=0 // pred_check_branch
    %559 = sbr.rel (0) target = $region21
  $region20: #{multiscale_scconv2d.33} parent=0 // pred_region
    _
  $region21: #{multiscale_scconv2d.33} parent=0 // pred_fallthru
    _

// kernel: multiscale_scconv2d.41
$region0: #{multiscale_scconv2d.41}
  #allocation0 [shape = 'u32[]', space=smem, size = 0x4, offset = 0x4, fixed_abs, tag = 'smem constant byte address 0x4 - core index']
  #allocation1 [shape = 'u32[72,128]{1,0:T(1,128)}', space=vmem, size = 0x9000, scoped, tag = 'internal scratch']
  %s0 = inlined_call_operand.vmem [shape: bf16[128,128], index: 0, kind: input, shape index: {}]
  %s1 = inlined_call_operand.vmem [shape: bf16[128,32], index: 1, kind: input, shape index: {}]
  %s2 = inlined_call_operand.vmem [shape: f32[2,1,32], index: 2, kind: input, shape index: {}]
  %s3 = inlined_call_operand.vmem [shape: f32[128,32], index: 3, kind: output, shape index: {}]
  %s4 = sld [smem:[#allocation0]]
  $region22: #{multiscale_scconv2d.41} parent=0
    _
  %s6 = ssub.s32 1, %s4
  %s7 = scalar_select 0, %s6, %s4
  // Predicated region
  $region2: #{multiscale_scconv2d.41} parent=0 // pred_check
    _
  $region3: #{multiscale_scconv2d.41} parent=0 // pred_check_branch
    %9 = sbr.rel (0) target = $region5
  $region4: #{multiscale_scconv2d.41} parent=0 // pred_region
    _
  $region5: #{multiscale_scconv2d.41} parent=0 // pred_fallthru
    _
  // Predicated region
  $region6: #{multiscale_scconv2d.41} parent=0 // pred_check
    _
  $region7: #{multiscale_scconv2d.41} parent=0 // pred_check_branch
    %11 = sbr.rel (0) target = $region9
  $region8: #{multiscale_scconv2d.41} parent=0 // pred_region
    _
  $region9: #{multiscale_scconv2d.41} parent=0 // pred_fallthru
    _
  // Predicated region
  $region10: #{multiscale_scconv2d.41} parent=0 // pred_check
    _
  $region11: #{multiscale_scconv2d.41} parent=0 // pred_check_branch
    %13 = sbr.rel (0) target = $region13
  $region12: #{multiscale_scconv2d.41} parent=0 // pred_region
    _
  $region13: #{multiscale_scconv2d.41} parent=0 // pred_fallthru
    _
  %v14 = vld [vmem:[%s0] sm:$0xf]
  %v15 = vld [vmem:[%s0 + $0x4] sm:$0xf]
  %v16 = vld [vmem:[%s0 + $0x8] sm:$0xf]
  %v17 = vld [vmem:[%s0 + $0xc] sm:$0xf]
  %v18 = vld [vmem:[%s0 + $0x10] sm:$0xf]
  %v19 = vld [vmem:[%s0 + $0x14] sm:$0xf]
  %v20 = vld [vmem:[%s0 + $0x18] sm:$0xf]
  %v21 = vld [vmem:[%s0 + $0x1c] sm:$0xf]
  %v22 = vld [vmem:[%s0 + $0x20] sm:$0xf]
  %v23 = vld [vmem:[%s0 + $0x24] sm:$0xf]
  %v24 = vld [vmem:[%s0 + $0x28] sm:$0xf]
  %v25 = vld [vmem:[%s0 + $0x2c] sm:$0xf]
  %v26 = vld [vmem:[%s0 + $0x30] sm:$0xf]
  %v27 = vld [vmem:[%s0 + $0x34] sm:$0xf]
  %v28 = vld [vmem:[%s0 + $0x38] sm:$0xf]
  %v29 = vld [vmem:[%s0 + $0x3c] sm:$0xf]
  %v30 = vld [vmem:[%s1] sm:$0xf]
  %v31 = vld [vmem:[%s1 + $0x4] sm:$0xf]
  %v32 = vld [vmem:[%s1 + $0x8] sm:$0xf]
  %v33 = vld [vmem:[%s1 + $0xc] sm:$0xf]
  %v34 = vld [vmem:[%s1 + $0x10] sm:$0xf]
  %v35 = vld [vmem:[%s1 + $0x14] sm:$0xf]
  %v36 = vld [vmem:[%s1 + $0x18] sm:$0xf]
  %v37 = vld [vmem:[%s1 + $0x1c] sm:$0xf]
  %v38 = vld [vmem:[%s1 + $0x20] sm:$0xf]
  %v39 = vld [vmem:[%s1 + $0x24] sm:$0xf]
  %v40 = vld [vmem:[%s1 + $0x28] sm:$0xf]
  %v41 = vld [vmem:[%s1 + $0x2c] sm:$0xf]
  %v42 = vld [vmem:[%s1 + $0x30] sm:$0xf]
  %v43 = vld [vmem:[%s1 + $0x34] sm:$0xf]
  %v44 = vld [vmem:[%s1 + $0x38] sm:$0xf]
  %v45 = vld [vmem:[%s1 + $0x3c] sm:$0xf]
  %v62 = vunpack.c.l.b16 %v14
  %v63 = vunpack.c.l.b16 %v15
  %v64 = vunpack.c.l.b16 %v16
  %v65 = vunpack.c.l.b16 %v17
  %v66 = vunpack.c.l.b16 %v18
  %v67 = vunpack.c.l.b16 %v19
  %v68 = vunpack.c.l.b16 %v20
  %v69 = vunpack.c.l.b16 %v21
  %v70 = vunpack.c.l.b16 %v22
  %v71 = vunpack.c.l.b16 %v23
  %v72 = vunpack.c.l.b16 %v24
  %v73 = vunpack.c.l.b16 %v25
  %v74 = vunpack.c.l.b16 %v26
  %v75 = vunpack.c.l.b16 %v27
  %v76 = vunpack.c.l.b16 %v28
  %v77 = vunpack.c.l.b16 %v29
  %v78 = vpack.c.b16 %v63, %v62
  %v79 = vpack.c.b16 %v65, %v64
  %v80 = vpack.c.b16 %v67, %v66
  %v81 = vpack.c.b16 %v69, %v68
  %v82 = vpack.c.b16 %v71, %v70
  %v83 = vpack.c.b16 %v73, %v72
  %v84 = vpack.c.b16 %v75, %v74
  %v85 = vpack.c.b16 %v77, %v76
  %v110 = vunpack.c.l.b16 %v30
  %v111 = vunpack.c.l.b16 %v31
  %v112 = vunpack.c.l.b16 %v32
  %v113 = vunpack.c.l.b16 %v33
  %v114 = vunpack.c.l.b16 %v34
  %v115 = vunpack.c.l.b16 %v35
  %v116 = vunpack.c.l.b16 %v36
  %v117 = vunpack.c.l.b16 %v37
  %v118 = vunpack.c.l.b16 %v38
  %v119 = vunpack.c.l.b16 %v39
  %v120 = vunpack.c.l.b16 %v40
  %v121 = vunpack.c.l.b16 %v41
  %v122 = vunpack.c.l.b16 %v42
  %v123 = vunpack.c.l.b16 %v43
  %v124 = vunpack.c.l.b16 %v44
  %v125 = vunpack.c.l.b16 %v45
  %v126 = vpack.c.b16 %v111, %v110
  %v127 = vpack.c.b16 %v113, %v112
  %v128 = vpack.c.b16 %v115, %v114
  %v129 = vpack.c.b16 %v117, %v116
  %v130 = vpack.c.b16 %v119, %v118
  %v131 = vpack.c.b16 %v121, %v120
  %v132 = vpack.c.b16 %v123, %v122
  %v133 = vpack.c.b16 %v125, %v124
  %142 = vmatpush.bf16.msra.mxu0 %v133
  %143 = vmatpush.bf16.msra.mxu0 %v132
  %144 = vmatpush.bf16.msra.mxu0 %v131
  %145 = vmatpush.bf16.msra.mxu0 %v130
  %146 = vmatpush.bf16.msra.mxu0 %v129
  %147 = vmatpush.bf16.msra.mxu0 %v128
  %148 = vmatpush.bf16.msra.mxu0 %v127
  %149 = vmatpush.bf16.msra.mxu0 %v126
  %150 = vmatmul.bf16.gmra.mxu0 %v78
  %v151 = vpop.f32.mrf.mxu0
  %v152 = vadd.f32 0.0, %v151
  %v153 = vpop.f32.mrf.mxu0
  %v154 = vadd.f32 0.0, %v153
  %155 = vmatmul.bf16.gmra.mxu0 %v79
  %v156 = vpop.f32.mrf.mxu0
  %v157 = vadd.f32 0.0, %v156
  %v158 = vpop.f32.mrf.mxu0
  %v159 = vadd.f32 0.0, %v158
  %160 = vmatmul.bf16.gmra.mxu0 %v80
  %v161 = vpop.f32.mrf.mxu0
  %v162 = vadd.f32 0.0, %v161
  %v163 = vpop.f32.mrf.mxu0
  %v164 = vadd.f32 0.0, %v163
  %165 = vmatmul.bf16.gmra.mxu0 %v81
  %v166 = vpop.f32.mrf.mxu0
  %v167 = vadd.f32 0.0, %v166
  %v168 = vpop.f32.mrf.mxu0
  %v169 = vadd.f32 0.0, %v168
  %170 = vmatmul.bf16.gmra.mxu0 %v82
  %v171 = vpop.f32.mrf.mxu0
  %v172 = vadd.f32 0.0, %v171
  %v173 = vpop.f32.mrf.mxu0
  %v174 = vadd.f32 0.0, %v173
  %175 = vmatmul.bf16.gmra.mxu0 %v83
  %v176 = vpop.f32.mrf.mxu0
  %v177 = vadd.f32 0.0, %v176
  %v178 = vpop.f32.mrf.mxu0
  %v179 = vadd.f32 0.0, %v178
  %180 = vmatmul.bf16.gmra.mxu0 %v84
  %v181 = vpop.f32.mrf.mxu0
  %v182 = vadd.f32 0.0, %v181
  %v183 = vpop.f32.mrf.mxu0
  %v184 = vadd.f32 0.0, %v183
  %185 = vmatmul.bf16.gmra.mxu0 %v85
  %v186 = vpop.f32.mrf.mxu0
  %v187 = vadd.f32 0.0, %v186
  %v188 = vpop.f32.mrf.mxu0
  %v189 = vadd.f32 0.0, %v188
  %190 = vdwg.mxu0
  %v191 = vld [vmem:[%s2] sm:$0x1]
  %v193 = vperm.slane %v191, 0
  %v195 = vmul.f32 %v152, %v193
  %v196 = vmul.f32 %v154, %v193
  %v197 = vmul.f32 %v157, %v193
  %v198 = vmul.f32 %v159, %v193
  %v199 = vmul.f32 %v162, %v193
  %v200 = vmul.f32 %v164, %v193
  %v201 = vmul.f32 %v167, %v193
  %v202 = vmul.f32 %v169, %v193
  %v203 = vmul.f32 %v172, %v193
  %v204 = vmul.f32 %v174, %v193
  %v205 = vmul.f32 %v177, %v193
  %v206 = vmul.f32 %v179, %v193
  %v207 = vmul.f32 %v182, %v193
  %v208 = vmul.f32 %v184, %v193
  %v209 = vmul.f32 %v187, %v193
  %v210 = vmul.f32 %v189, %v193
  %s211 = scalar_lea.vmem %s2, 1
  %v212 = vld [vmem:[%s211] sm:$0x1]
  %v214 = vperm.slane %v212, 0
  %v216 = vadd.f32 %v195, %v214
  %v217 = vadd.f32 %v196, %v214
  %v218 = vadd.f32 %v197, %v214
  %v219 = vadd.f32 %v198, %v214
  %v220 = vadd.f32 %v199, %v214
  %v221 = vadd.f32 %v200, %v214
  %v222 = vadd.f32 %v201, %v214
  %v223 = vadd.f32 %v202, %v214
  %v224 = vadd.f32 %v203, %v214
  %v225 = vadd.f32 %v204, %v214
  %v226 = vadd.f32 %v205, %v214
  %v227 = vadd.f32 %v206, %v214
  %v228 = vadd.f32 %v207, %v214
  %v229 = vadd.f32 %v208, %v214
  %v230 = vadd.f32 %v209, %v214
  %v231 = vadd.f32 %v210, %v214
  %v232 = vmax.f32 %v216, 0.0
  %v233 = vmax.f32 %v217, 0.0
  %v234 = vmax.f32 %v218, 0.0
  %v235 = vmax.f32 %v219, 0.0
  %v236 = vmax.f32 %v220, 0.0
  %v237 = vmax.f32 %v221, 0.0
  %v238 = vmax.f32 %v222, 0.0
  %v239 = vmax.f32 %v223, 0.0
  %v240 = vmax.f32 %v224, 0.0
  %v241 = vmax.f32 %v225, 0.0
  %v242 = vmax.f32 %v226, 0.0
  %v243 = vmax.f32 %v227, 0.0
  %v244 = vmax.f32 %v228, 0.0
  %v245 = vmax.f32 %v229, 0.0
  %v246 = vmax.f32 %v230, 0.0
  %v247 = vmax.f32 %v231, 0.0
  %vm248 = vcmask 261120
  %249 = vst.msk [vmem:[%s3] sm:$0xff] %vm248, %v232
  %250 = vst.msk [vmem:[%s3 + $0x8] sm:$0xff] %vm248, %v233
  %251 = vst.msk [vmem:[%s3 + $0x10] sm:$0xff] %vm248, %v234
  %252 = vst.msk [vmem:[%s3 + $0x18] sm:$0xff] %vm248, %v235
  %253 = vst.msk [vmem:[%s3 + $0x20] sm:$0xff] %vm248, %v236
  %254 = vst.msk [vmem:[%s3 + $0x28] sm:$0xff] %vm248, %v237
  %255 = vst.msk [vmem:[%s3 + $0x30] sm:$0xff] %vm248, %v238
  %256 = vst.msk [vmem:[%s3 + $0x38] sm:$0xff] %vm248, %v239
  %257 = vst.msk [vmem:[%s3 + $0x40] sm:$0xff] %vm248, %v240
  %258 = vst.msk [vmem:[%s3 + $0x48] sm:$0xff] %vm248, %v241
  %259 = vst.msk [vmem:[%s3 + $0x50] sm:$0xff] %vm248, %v242
  %260 = vst.msk [vmem:[%s3 + $0x58] sm:$0xff] %vm248, %v243
  %261 = vst.msk [vmem:[%s3 + $0x60] sm:$0xff] %vm248, %v244
  %262 = vst.msk [vmem:[%s3 + $0x68] sm:$0xff] %vm248, %v245
  %263 = vst.msk [vmem:[%s3 + $0x70] sm:$0xff] %vm248, %v246
  %264 = vst.msk [vmem:[%s3 + $0x78] sm:$0xff] %vm248, %v247
  // Predicated region
  $region14: #{multiscale_scconv2d.41} parent=0 // pred_check
    _
  $region15: #{multiscale_scconv2d.41} parent=0 // pred_check_branch
    %266 = sbr.rel (0) target = $region17
  $region16: #{multiscale_scconv2d.41} parent=0 // pred_region
    _
  $region17: #{multiscale_scconv2d.41} parent=0 // pred_fallthru
    _
  // Predicated region
  $region18: #{multiscale_scconv2d.41} parent=0 // pred_check
    _
  $region19: #{multiscale_scconv2d.41} parent=0 // pred_check_branch
    %268 = sbr.rel (0) target = $region21
  $region20: #{multiscale_scconv2d.41} parent=0 // pred_region
    _
  $region21: #{multiscale_scconv2d.41} parent=0 // pred_fallthru
    _

// kernel: multiscale_scconv2d.43
$region0: #{multiscale_scconv2d.43}
  #allocation0 [shape = 'u32[]', space=smem, size = 0x4, offset = 0x4, fixed_abs, tag = 'smem constant byte address 0x4 - core index']
  #allocation1 [shape = 'u32[72,128]{1,0:T(1,128)}', space=vmem, size = 0x9000, scoped, tag = 'internal scratch']
  %s0 = inlined_call_operand.vmem [shape: bf16[8,144], index: 0, kind: input, shape index: {}]
  %s1 = inlined_call_operand.vmem [shape: bf16[144,16], index: 1, kind: input, shape index: {}]
  %s2 = inlined_call_operand.vmem [shape: f32[2,1,16], index: 2, kind: input, shape index: {}]
  %s3 = inlined_call_operand.vmem [shape: f32[8,16], index: 3, kind: output, shape index: {}]
  %s4 = sld [smem:[#allocation0]]
  $region22: #{multiscale_scconv2d.43} parent=0
    _
  %s6 = ssub.s32 1, %s4
  %s7 = scalar_select 0, %s6, %s4
  // Predicated region
  $region2: #{multiscale_scconv2d.43} parent=0 // pred_check
    _
  $region3: #{multiscale_scconv2d.43} parent=0 // pred_check_branch
    %9 = sbr.rel (0) target = $region5
  $region4: #{multiscale_scconv2d.43} parent=0 // pred_region
    _
  $region5: #{multiscale_scconv2d.43} parent=0 // pred_fallthru
    _
  // Predicated region
  $region6: #{multiscale_scconv2d.43} parent=0 // pred_check
    _
  $region7: #{multiscale_scconv2d.43} parent=0 // pred_check_branch
    %11 = sbr.rel (0) target = $region9
  $region8: #{multiscale_scconv2d.43} parent=0 // pred_region
    _
  $region9: #{multiscale_scconv2d.43} parent=0 // pred_fallthru
    _
  // Predicated region
  $region10: #{multiscale_scconv2d.43} parent=0 // pred_check
    _
  $region11: #{multiscale_scconv2d.43} parent=0 // pred_check_branch
    %13 = sbr.rel (0) target = $region13
  $region12: #{multiscale_scconv2d.43} parent=0 // pred_region
    _
  $region13: #{multiscale_scconv2d.43} parent=0 // pred_fallthru
    _
  %v15 = vld [vmem:[%s0] sm:$0xff]
  %v16 = vld [vmem:[%s1] sm:$0xf]
  %v17 = vld [vmem:[%s1 + $0x4] sm:$0xf]
  %v18 = vld [vmem:[%s1 + $0x8] sm:$0xf]
  %v19 = vld [vmem:[%s1 + $0xc] sm:$0xf]
  %v20 = vld [vmem:[%s1 + $0x10] sm:$0xf]
  %v21 = vld [vmem:[%s1 + $0x14] sm:$0xf]
  %v22 = vld [vmem:[%s1 + $0x18] sm:$0xf]
  %v23 = vld [vmem:[%s1 + $0x1c] sm:$0xf]
  %v24 = vld [vmem:[%s1 + $0x20] sm:$0xf]
  %v25 = vld [vmem:[%s1 + $0x24] sm:$0xf]
  %v26 = vld [vmem:[%s1 + $0x28] sm:$0xf]
  %v27 = vld [vmem:[%s1 + $0x2c] sm:$0xf]
  %v28 = vld [vmem:[%s1 + $0x30] sm:$0xf]
  %v29 = vld [vmem:[%s1 + $0x34] sm:$0xf]
  %v30 = vld [vmem:[%s1 + $0x38] sm:$0xf]
  %v31 = vld [vmem:[%s1 + $0x3c] sm:$0xf]
  %v32 = vld [vmem:[%s1 + $0x40] sm:$0xf]
  %v33 = vld [vmem:[%s1 + $0x44] sm:$0xf]
  %v35 = vunpack.c.l.b16 %v15
  %v36 = vunpack.c.h.b16 %v15
  %v37 = vpack.c.b16 %v35, %v35
  %v38 = vpack.c.b16 %v36, %v36
  %v58 = vunpack.c.l.b16 %v16
  %v59 = vunpack.c.l.b16 %v17
  %v60 = vunpack.c.l.b16 %v18
  %v61 = vunpack.c.l.b16 %v19
  %v62 = vunpack.c.l.b16 %v20
  %v63 = vunpack.c.l.b16 %v21
  %v64 = vunpack.c.l.b16 %v22
  %v65 = vunpack.c.l.b16 %v23
  %v66 = vunpack.c.l.b16 %v24
  %v67 = vunpack.c.l.b16 %v25
  %v68 = vunpack.c.l.b16 %v26
  %v69 = vunpack.c.l.b16 %v27
  %v70 = vunpack.c.l.b16 %v28
  %v71 = vunpack.c.l.b16 %v29
  %v72 = vunpack.c.l.b16 %v30
  %v73 = vunpack.c.l.b16 %v31
  %v74 = vunpack.c.l.b16 %v32
  %v75 = vunpack.c.l.b16 %v33
  %v76 = vpack.c.b16 %v59, %v58
  %v77 = vpack.c.b16 %v61, %v60
  %v78 = vpack.c.b16 %v63, %v62
  %v79 = vpack.c.b16 %v65, %v64
  %v80 = vpack.c.b16 %v67, %v66
  %v81 = vpack.c.b16 %v69, %v68
  %v82 = vpack.c.b16 %v71, %v70
  %v83 = vpack.c.b16 %v73, %v72
  %v84 = vpack.c.b16 %v75, %v74
  %vm94 = vcmask 130048
  %v96 = vsel %vm94, %v38, 0
  %98 = vmatpush.bf16.msra.mxu0 %v83
  %99 = vmatpush.bf16.msra.mxu0 %v82
  %100 = vmatpush.bf16.msra.mxu0 %v81
  %101 = vmatpush.bf16.msra.mxu0 %v80
  %102 = vmatpush.bf16.msra.mxu0 %v79
  %103 = vmatpush.bf16.msra.mxu0 %v78
  %104 = vmatpush.bf16.msra.mxu0 %v77
  %105 = vmatpush.bf16.msra.mxu0 %v76
  %106 = vmatmul.bf16.gmra.mxu0 %v37
  %v107 = vpop.f32.mrf.mxu0
  %v108 = vadd.f32 0.0, %v107
  %v109 = vpop.f32.mrf.mxu0
  %110 = vdwg.mxu0
  %111 = vmatpush.bf16.msra.mxu0 0
  %112 = vmatpush.bf16.msra.mxu0 0
  %113 = vmatpush.bf16.msra.mxu0 0
  %114 = vmatpush.bf16.msra.mxu0 0
  %115 = vmatpush.bf16.msra.mxu0 0
  %116 = vmatpush.bf16.msra.mxu0 0
  %117 = vmatpush.bf16.msra.mxu0 0
  %118 = vmatpush.bf16.msra.mxu0 %v84
  %119 = vmatmul.bf16.gmra.mxu0 %v96
  %v120 = vpop.f32.mrf.mxu0
  %v121 = vadd.f32 %v108, %v120
  %v122 = vpop.f32.mrf.mxu0
  %123 = vdwg.mxu0
  %v124 = vld [vmem:[%s2] sm:$0x1]
  %v126 = vperm.slane %v124, 0
  %v128 = vmul.f32 %v121, %v126
  %s129 = scalar_lea.vmem %s2, 1
  %v130 = vld [vmem:[%s129] sm:$0x1]
  %v132 = vperm.slane %v130, 0
  %v134 = vadd.f32 %v128, %v132
  %135 = vst.msk [vmem:[%s3] sm:$0xff] %vm94, %v134
  // Predicated region
  $region14: #{multiscale_scconv2d.43} parent=0 // pred_check
    _
  $region15: #{multiscale_scconv2d.43} parent=0 // pred_check_branch
    %137 = sbr.rel (0) target = $region17
  $region16: #{multiscale_scconv2d.43} parent=0 // pred_region
    _
  $region17: #{multiscale_scconv2d.43} parent=0 // pred_fallthru
    _
  // Predicated region
  $region18: #{multiscale_scconv2d.43} parent=0 // pred_check
    _
  $region19: #{multiscale_scconv2d.43} parent=0 // pred_check_branch
    %139 = sbr.rel (0) target = $region21
  $region20: #{multiscale_scconv2d.43} parent=0 // pred_region
    _
  $region21: #{multiscale_scconv2d.43} parent=0 // pred_fallthru
    _

// kernel: multiscale_scconv2d.44
$region0: #{multiscale_scconv2d.44}
  #allocation0 [shape = 'u32[]', space=smem, size = 0x4, offset = 0x4, fixed_abs, tag = 'smem constant byte address 0x4 - core index']
  #allocation1 [shape = 'u32[72,128]{1,0:T(1,128)}', space=vmem, size = 0x9000, scoped, tag = 'internal scratch']
  %s0 = inlined_call_operand.vmem [shape: bf16[128,144], index: 0, kind: input, shape index: {}]
  %s1 = inlined_call_operand.vmem [shape: bf16[144,16], index: 1, kind: input, shape index: {}]
  %s2 = inlined_call_operand.vmem [shape: f32[2,1,16], index: 2, kind: input, shape index: {}]
  %s3 = inlined_call_operand.vmem [shape: f32[128,16], index: 3, kind: input, shape index: {}]
  %s4 = inlined_call_operand.vmem [shape: f32[128,16], index: 4, kind: output, shape index: {}]
  %s5 = sld [smem:[#allocation0]]
  $region26: #{multiscale_scconv2d.44} parent=0
    _
  %s7 = ssub.s32 1, %s5
  %s8 = scalar_select 0, %s7, %s5
  // Predicated region
  $region2: #{multiscale_scconv2d.44} parent=0 // pred_check
    _
  $region3: #{multiscale_scconv2d.44} parent=0 // pred_check_branch
    %10 = sbr.rel (0) target = $region5
  $region4: #{multiscale_scconv2d.44} parent=0 // pred_region
    _
  $region5: #{multiscale_scconv2d.44} parent=0 // pred_fallthru
    _
  // Predicated region
  $region6: #{multiscale_scconv2d.44} parent=0 // pred_check
    _
  $region7: #{multiscale_scconv2d.44} parent=0 // pred_check_branch
    %12 = sbr.rel (0) target = $region9
  $region8: #{multiscale_scconv2d.44} parent=0 // pred_region
    _
  $region9: #{multiscale_scconv2d.44} parent=0 // pred_fallthru
    _
  // Predicated region
  $region10: #{multiscale_scconv2d.44} parent=0 // pred_check
    _
  $region11: #{multiscale_scconv2d.44} parent=0 // pred_check_branch
    %14 = sbr.rel (0) target = $region13
  $region12: #{multiscale_scconv2d.44} parent=0 // pred_region
    _
  $region13: #{multiscale_scconv2d.44} parent=0 // pred_fallthru
    _
  // Predicated region
  $region14: #{multiscale_scconv2d.44} parent=0 // pred_check
    _
  $region15: #{multiscale_scconv2d.44} parent=0 // pred_check_branch
    %16 = sbr.rel (0) target = $region17
  $region16: #{multiscale_scconv2d.44} parent=0 // pred_region
    _
  $region17: #{multiscale_scconv2d.44} parent=0 // pred_fallthru
    _
  %v18 = vld [vmem:[%s0] sm:$0xff]
  %v19 = vld [vmem:[%s0 + $0x8] sm:$0xff]
  %v20 = vld [vmem:[%s0 + $0x10] sm:$0xff]
  %v21 = vld [vmem:[%s0 + $0x18] sm:$0xff]
  %v22 = vld [vmem:[%s0 + $0x20] sm:$0xff]
  %v23 = vld [vmem:[%s0 + $0x28] sm:$0xff]
  %v24 = vld [vmem:[%s0 + $0x30] sm:$0xff]
  %v25 = vld [vmem:[%s0 + $0x38] sm:$0xff]
  %v26 = vld [vmem:[%s0 + $0x40] sm:$0xff]
  %v27 = vld [vmem:[%s0 + $0x48] sm:$0xff]
  %v28 = vld [vmem:[%s0 + $0x50] sm:$0xff]
  %v29 = vld [vmem:[%s0 + $0x58] sm:$0xff]
  %v30 = vld [vmem:[%s0 + $0x60] sm:$0xff]
  %v31 = vld [vmem:[%s0 + $0x68] sm:$0xff]
  %v32 = vld [vmem:[%s0 + $0x70] sm:$0xff]
  %v33 = vld [vmem:[%s0 + $0x78] sm:$0xff]
  %v34 = vld [vmem:[%s1] sm:$0xf]
  %v35 = vld [vmem:[%s1 + $0x4] sm:$0xf]
  %v36 = vld [vmem:[%s1 + $0x8] sm:$0xf]
  %v37 = vld [vmem:[%s1 + $0xc] sm:$0xf]
  %v38 = vld [vmem:[%s1 + $0x10] sm:$0xf]
  %v39 = vld [vmem:[%s1 + $0x14] sm:$0xf]
  %v40 = vld [vmem:[%s1 + $0x18] sm:$0xf]
  %v41 = vld [vmem:[%s1 + $0x1c] sm:$0xf]
  %v42 = vld [vmem:[%s1 + $0x20] sm:$0xf]
  %v43 = vld [vmem:[%s1 + $0x24] sm:$0xf]
  %v44 = vld [vmem:[%s1 + $0x28] sm:$0xf]
  %v45 = vld [vmem:[%s1 + $0x2c] sm:$0xf]
  %v46 = vld [vmem:[%s1 + $0x30] sm:$0xf]
  %v47 = vld [vmem:[%s1 + $0x34] sm:$0xf]
  %v48 = vld [vmem:[%s1 + $0x38] sm:$0xf]
  %v49 = vld [vmem:[%s1 + $0x3c] sm:$0xf]
  %v50 = vld [vmem:[%s1 + $0x40] sm:$0xf]
  %v51 = vld [vmem:[%s1 + $0x44] sm:$0xf]
  %v68 = vunpack.c.l.b16 %v18
  %v69 = vunpack.c.h.b16 %v18
  %v70 = vunpack.c.l.b16 %v19
  %v71 = vunpack.c.h.b16 %v19
  %v72 = vunpack.c.l.b16 %v20
  %v73 = vunpack.c.h.b16 %v20
  %v74 = vunpack.c.l.b16 %v21
  %v75 = vunpack.c.h.b16 %v21
  %v76 = vunpack.c.l.b16 %v22
  %v77 = vunpack.c.h.b16 %v22
  %v78 = vunpack.c.l.b16 %v23
  %v79 = vunpack.c.h.b16 %v23
  %v80 = vunpack.c.l.b16 %v24
  %v81 = vunpack.c.h.b16 %v24
  %v82 = vunpack.c.l.b16 %v25
  %v83 = vunpack.c.h.b16 %v25
  %v84 = vunpack.c.l.b16 %v26
  %v85 = vunpack.c.h.b16 %v26
  %v86 = vunpack.c.l.b16 %v27
  %v87 = vunpack.c.h.b16 %v27
  %v88 = vunpack.c.l.b16 %v28
  %v89 = vunpack.c.h.b16 %v28
  %v90 = vunpack.c.l.b16 %v29
  %v91 = vunpack.c.h.b16 %v29
  %v92 = vunpack.c.l.b16 %v30
  %v93 = vunpack.c.h.b16 %v30
  %v94 = vunpack.c.l.b16 %v31
  %v95 = vunpack.c.h.b16 %v31
  %v96 = vunpack.c.l.b16 %v32
  %v97 = vunpack.c.h.b16 %v32
  %v98 = vunpack.c.l.b16 %v33
  %v99 = vunpack.c.h.b16 %v33
  %v100 = vpack.c.b16 %v70, %v68
  %v101 = vpack.c.b16 %v71, %v69
  %v102 = vpack.c.b16 %v74, %v72
  %v103 = vpack.c.b16 %v75, %v73
  %v104 = vpack.c.b16 %v78, %v76
  %v105 = vpack.c.b16 %v79, %v77
  %v106 = vpack.c.b16 %v82, %v80
  %v107 = vpack.c.b16 %v83, %v81
  %v108 = vpack.c.b16 %v86, %v84
  %v109 = vpack.c.b16 %v87, %v85
  %v110 = vpack.c.b16 %v90, %v88
  %v111 = vpack.c.b16 %v91, %v89
  %v112 = vpack.c.b16 %v94, %v92
  %v113 = vpack.c.b16 %v95, %v93
  %v114 = vpack.c.b16 %v98, %v96
  %v115 = vpack.c.b16 %v99, %v97
  %v142 = vunpack.c.l.b16 %v34
  %v143 = vunpack.c.l.b16 %v35
  %v144 = vunpack.c.l.b16 %v36
  %v145 = vunpack.c.l.b16 %v37
  %v146 = vunpack.c.l.b16 %v38
  %v147 = vunpack.c.l.b16 %v39
  %v148 = vunpack.c.l.b16 %v40
  %v149 = vunpack.c.l.b16 %v41
  %v150 = vunpack.c.l.b16 %v42
  %v151 = vunpack.c.l.b16 %v43
  %v152 = vunpack.c.l.b16 %v44
  %v153 = vunpack.c.l.b16 %v45
  %v154 = vunpack.c.l.b16 %v46
  %v155 = vunpack.c.l.b16 %v47
  %v156 = vunpack.c.l.b16 %v48
  %v157 = vunpack.c.l.b16 %v49
  %v158 = vunpack.c.l.b16 %v50
  %v159 = vunpack.c.l.b16 %v51
  %v160 = vpack.c.b16 %v143, %v142
  %v161 = vpack.c.b16 %v145, %v144
  %v162 = vpack.c.b16 %v147, %v146
  %v163 = vpack.c.b16 %v149, %v148
  %v164 = vpack.c.b16 %v151, %v150
  %v165 = vpack.c.b16 %v153, %v152
  %v166 = vpack.c.b16 %v155, %v154
  %v167 = vpack.c.b16 %v157, %v156
  %v168 = vpack.c.b16 %v159, %v158
  %vm178 = vcmask 130048
  %v180 = vsel %vm178, %v101, 0
  %v183 = vsel %vm178, %v103, 0
  %v186 = vsel %vm178, %v105, 0
  %v189 = vsel %vm178, %v107, 0
  %v192 = vsel %vm178, %v109, 0
  %v195 = vsel %vm178, %v111, 0
  %v198 = vsel %vm178, %v113, 0
  %v201 = vsel %vm178, %v115, 0
  %203 = vmatpush.bf16.msra.mxu0 %v167
  %204 = vmatpush.bf16.msra.mxu0 %v166
  %205 = vmatpush.bf16.msra.mxu0 %v165
  %206 = vmatpush.bf16.msra.mxu0 %v164
  %207 = vmatpush.bf16.msra.mxu0 %v163
  %208 = vmatpush.bf16.msra.mxu0 %v162
  %209 = vmatpush.bf16.msra.mxu0 %v161
  %210 = vmatpush.bf16.msra.mxu0 %v160
  %211 = vmatmul.bf16.gmra.mxu0 %v100
  %v212 = vpop.f32.mrf.mxu0
  %v213 = vadd.f32 0.0, %v212
  %v214 = vpop.f32.mrf.mxu0
  %v215 = vadd.f32 0.0, %v214
  %216 = vmatmul.bf16.gmra.mxu0 %v102
  %v217 = vpop.f32.mrf.mxu0
  %v218 = vadd.f32 0.0, %v217
  %v219 = vpop.f32.mrf.mxu0
  %v220 = vadd.f32 0.0, %v219
  %221 = vmatmul.bf16.gmra.mxu0 %v104
  %v222 = vpop.f32.mrf.mxu0
  %v223 = vadd.f32 0.0, %v222
  %v224 = vpop.f32.mrf.mxu0
  %v225 = vadd.f32 0.0, %v224
  %226 = vmatmul.bf16.gmra.mxu0 %v106
  %v227 = vpop.f32.mrf.mxu0
  %v228 = vadd.f32 0.0, %v227
  %v229 = vpop.f32.mrf.mxu0
  %v230 = vadd.f32 0.0, %v229
  %231 = vmatmul.bf16.gmra.mxu0 %v108
  %v232 = vpop.f32.mrf.mxu0
  %v233 = vadd.f32 0.0, %v232
  %v234 = vpop.f32.mrf.mxu0
  %v235 = vadd.f32 0.0, %v234
  %236 = vmatmul.bf16.gmra.mxu0 %v110
  %v237 = vpop.f32.mrf.mxu0
  %v238 = vadd.f32 0.0, %v237
  %v239 = vpop.f32.mrf.mxu0
  %v240 = vadd.f32 0.0, %v239
  %241 = vmatmul.bf16.gmra.mxu0 %v112
  %v242 = vpop.f32.mrf.mxu0
  %v243 = vadd.f32 0.0, %v242
  %v244 = vpop.f32.mrf.mxu0
  %v245 = vadd.f32 0.0, %v244
  %246 = vmatmul.bf16.gmra.mxu0 %v114
  %v247 = vpop.f32.mrf.mxu0
  %v248 = vadd.f32 0.0, %v247
  %v249 = vpop.f32.mrf.mxu0
  %v250 = vadd.f32 0.0, %v249
  %251 = vdwg.mxu0
  %252 = vmatpush.bf16.msra.mxu0 0
  %253 = vmatpush.bf16.msra.mxu0 0
  %254 = vmatpush.bf16.msra.mxu0 0
  %255 = vmatpush.bf16.msra.mxu0 0
  %256 = vmatpush.bf16.msra.mxu0 0
  %257 = vmatpush.bf16.msra.mxu0 0
  %258 = vmatpush.bf16.msra.mxu0 0
  %259 = vmatpush.bf16.msra.mxu0 %v168
  %260 = vmatmul.bf16.gmra.mxu0 %v180
  %v261 = vpop.f32.mrf.mxu0
  %v262 = vadd.f32 %v213, %v261
  %v263 = vpop.f32.mrf.mxu0
  %v264 = vadd.f32 %v215, %v263
  %265 = vmatmul.bf16.gmra.mxu0 %v183
  %v266 = vpop.f32.mrf.mxu0
  %v267 = vadd.f32 %v218, %v266
  %v268 = vpop.f32.mrf.mxu0
  %v269 = vadd.f32 %v220, %v268
  %270 = vmatmul.bf16.gmra.mxu0 %v186
  %v271 = vpop.f32.mrf.mxu0
  %v272 = vadd.f32 %v223, %v271
  %v273 = vpop.f32.mrf.mxu0
  %v274 = vadd.f32 %v225, %v273
  %275 = vmatmul.bf16.gmra.mxu0 %v189
  %v276 = vpop.f32.mrf.mxu0
  %v277 = vadd.f32 %v228, %v276
  %v278 = vpop.f32.mrf.mxu0
  %v279 = vadd.f32 %v230, %v278
  %280 = vmatmul.bf16.gmra.mxu0 %v192
  %v281 = vpop.f32.mrf.mxu0
  %v282 = vadd.f32 %v233, %v281
  %v283 = vpop.f32.mrf.mxu0
  %v284 = vadd.f32 %v235, %v283
  %285 = vmatmul.bf16.gmra.mxu0 %v195
  %v286 = vpop.f32.mrf.mxu0
  %v287 = vadd.f32 %v238, %v286
  %v288 = vpop.f32.mrf.mxu0
  %v289 = vadd.f32 %v240, %v288
  %290 = vmatmul.bf16.gmra.mxu0 %v198
  %v291 = vpop.f32.mrf.mxu0
  %v292 = vadd.f32 %v243, %v291
  %v293 = vpop.f32.mrf.mxu0
  %v294 = vadd.f32 %v245, %v293
  %295 = vmatmul.bf16.gmra.mxu0 %v201
  %v296 = vpop.f32.mrf.mxu0
  %v297 = vadd.f32 %v248, %v296
  %v298 = vpop.f32.mrf.mxu0
  %v299 = vadd.f32 %v250, %v298
  %300 = vdwg.mxu0
  %v301 = vld [vmem:[%s2] sm:$0x1]
  %v303 = vperm.slane %v301, 0
  %v305 = vmul.f32 %v262, %v303
  %v306 = vmul.f32 %v264, %v303
  %v307 = vmul.f32 %v267, %v303
  %v308 = vmul.f32 %v269, %v303
  %v309 = vmul.f32 %v272, %v303
  %v310 = vmul.f32 %v274, %v303
  %v311 = vmul.f32 %v277, %v303
  %v312 = vmul.f32 %v279, %v303
  %v313 = vmul.f32 %v282, %v303
  %v314 = vmul.f32 %v284, %v303
  %v315 = vmul.f32 %v287, %v303
  %v316 = vmul.f32 %v289, %v303
  %v317 = vmul.f32 %v292, %v303
  %v318 = vmul.f32 %v294, %v303
  %v319 = vmul.f32 %v297, %v303
  %v320 = vmul.f32 %v299, %v303
  %s321 = scalar_lea.vmem %s2, 1
  %v322 = vld [vmem:[%s321] sm:$0x1]
  %v324 = vperm.slane %v322, 0
  %v326 = vadd.f32 %v305, %v324
  %v327 = vadd.f32 %v306, %v324
  %v328 = vadd.f32 %v307, %v324
  %v329 = vadd.f32 %v308, %v324
  %v330 = vadd.f32 %v309, %v324
  %v331 = vadd.f32 %v310, %v324
  %v332 = vadd.f32 %v311, %v324
  %v333 = vadd.f32 %v312, %v324
  %v334 = vadd.f32 %v313, %v324
  %v335 = vadd.f32 %v314, %v324
  %v336 = vadd.f32 %v315, %v324
  %v337 = vadd.f32 %v316, %v324
  %v338 = vadd.f32 %v317, %v324
  %v339 = vadd.f32 %v318, %v324
  %v340 = vadd.f32 %v319, %v324
  %v341 = vadd.f32 %v320, %v324
  %v342 = vld [vmem:[%s3] sm:$0xff]
  %v343 = vld [vmem:[%s3 + $0x8] sm:$0xff]
  %v344 = vld [vmem:[%s3 + $0x10] sm:$0xff]
  %v345 = vld [vmem:[%s3 + $0x18] sm:$0xff]
  %v346 = vld [vmem:[%s3 + $0x20] sm:$0xff]
  %v347 = vld [vmem:[%s3 + $0x28] sm:$0xff]
  %v348 = vld [vmem:[%s3 + $0x30] sm:$0xff]
  %v349 = vld [vmem:[%s3 + $0x38] sm:$0xff]
  %v350 = vld [vmem:[%s3 + $0x40] sm:$0xff]
  %v351 = vld [vmem:[%s3 + $0x48] sm:$0xff]
  %v352 = vld [vmem:[%s3 + $0x50] sm:$0xff]
  %v353 = vld [vmem:[%s3 + $0x58] sm:$0xff]
  %v354 = vld [vmem:[%s3 + $0x60] sm:$0xff]
  %v355 = vld [vmem:[%s3 + $0x68] sm:$0xff]
  %v356 = vld [vmem:[%s3 + $0x70] sm:$0xff]
  %v357 = vld [vmem:[%s3 + $0x78] sm:$0xff]
  %v358 = vsub.f32 0.0, %v342
  %v359 = vsub.f32 0.0, %v343
  %v360 = vsub.f32 0.0, %v344
  %v361 = vsub.f32 0.0, %v345
  %v362 = vsub.f32 0.0, %v346
  %v363 = vsub.f32 0.0, %v347
  %v364 = vsub.f32 0.0, %v348
  %v365 = vsub.f32 0.0, %v349
  %v366 = vsub.f32 0.0, %v350
  %v367 = vsub.f32 0.0, %v351
  %v368 = vsub.f32 0.0, %v352
  %v369 = vsub.f32 0.0, %v353
  %v370 = vsub.f32 0.0, %v354
  %v371 = vsub.f32 0.0, %v355
  %v372 = vsub.f32 0.0, %v356
  %v373 = vsub.f32 0.0, %v357
  %v374 = vmul.f32 %v358, 1.442695
  %v375 = vpow.pop %v374
  %v376 = vmul.f32 %v359, 1.442695
  %v377 = vpow.pop %v376
  %v378 = vmul.f32 %v360, 1.442695
  %v379 = vpow.pop %v378
  %v380 = vmul.f32 %v361, 1.442695
  %v381 = vpow.pop %v380
  %v382 = vmul.f32 %v362, 1.442695
  %v383 = vpow.pop %v382
  %v384 = vmul.f32 %v363, 1.442695
  %v385 = vpow.pop %v384
  %v386 = vmul.f32 %v364, 1.442695
  %v387 = vpow.pop %v386
  %v388 = vmul.f32 %v365, 1.442695
  %v389 = vpow.pop %v388
  %v390 = vmul.f32 %v366, 1.442695
  %v391 = vpow.pop %v390
  %v392 = vmul.f32 %v367, 1.442695
  %v393 = vpow.pop %v392
  %v394 = vmul.f32 %v368, 1.442695
  %v395 = vpow.pop %v394
  %v396 = vmul.f32 %v369, 1.442695
  %v397 = vpow.pop %v396
  %v398 = vmul.f32 %v370, 1.442695
  %v399 = vpow.pop %v398
  %v400 = vmul.f32 %v371, 1.442695
  %v401 = vpow.pop %v400
  %v402 = vmul.f32 %v372, 1.442695
  %v403 = vpow.pop %v402
  %v404 = vmul.f32 %v373, 1.442695
  %v405 = vpow.pop %v404
  %v406 = vadd.f32 %v375, 1.0
  %v407 = vadd.f32 %v377, 1.0
  %v408 = vadd.f32 %v379, 1.0
  %v409 = vadd.f32 %v381, 1.0
  %v410 = vadd.f32 %v383, 1.0
  %v411 = vadd.f32 %v385, 1.0
  %v412 = vadd.f32 %v387, 1.0
  %v413 = vadd.f32 %v389, 1.0
  %v414 = vadd.f32 %v391, 1.0
  %v415 = vadd.f32 %v393, 1.0
  %v416 = vadd.f32 %v395, 1.0
  %v417 = vadd.f32 %v397, 1.0
  %v418 = vadd.f32 %v399, 1.0
  %v419 = vadd.f32 %v401, 1.0
  %v420 = vadd.f32 %v403, 1.0
  %v421 = vadd.f32 %v405, 1.0
  %v422 = vrcp.pop %v406
  %v423 = vmul.f32 %v406, %v422
  %v424 = vsub.f32 1.0, %v423
  %v425 = vmul.f32 %v422, %v424
  %v426 = vadd.f32 %v422, %v425
  %vm427 = vweird.f32 %v406
  %vm428 = vweird.f32 %v422
  %vm429 = vmor %vm427, %vm428
  %v430 = vsel %vm429, %v422, %v426
  %v431 = vand.u32 2147483647, %v406
  %vm432 = vcmp.eq.f32.partialorder %v431, 8.507059e+37
  %v433 = vand.u32 %v406, 2147483648
  %v434 = vor.u32 1.1754944e-38, %v433
  %v435 = vsel %vm432, %v434, %v430
  %v436 = vmul.f32 1.0, %v435
  %v437 = vrcp.pop %v407
  %v438 = vmul.f32 %v407, %v437
  %v439 = vsub.f32 1.0, %v438
  %v440 = vmul.f32 %v437, %v439
  %v441 = vadd.f32 %v437, %v440
  %vm442 = vweird.f32 %v407
  %vm443 = vweird.f32 %v437
  %vm444 = vmor %vm442, %vm443
  %v445 = vsel %vm444, %v437, %v441
  %v446 = vand.u32 2147483647, %v407
  %vm447 = vcmp.eq.f32.partialorder %v446, 8.507059e+37
  %v448 = vand.u32 %v407, 2147483648
  %v449 = vor.u32 1.1754944e-38, %v448
  %v450 = vsel %vm447, %v449, %v445
  %v451 = vmul.f32 1.0, %v450
  %v452 = vrcp.pop %v408
  %v453 = vmul.f32 %v408, %v452
  %v454 = vsub.f32 1.0, %v453
  %v455 = vmul.f32 %v452, %v454
  %v456 = vadd.f32 %v452, %v455
  %vm457 = vweird.f32 %v408
  %vm458 = vweird.f32 %v452
  %vm459 = vmor %vm457, %vm458
  %v460 = vsel %vm459, %v452, %v456
  %v461 = vand.u32 2147483647, %v408
  %vm462 = vcmp.eq.f32.partialorder %v461, 8.507059e+37
  %v463 = vand.u32 %v408, 2147483648
  %v464 = vor.u32 1.1754944e-38, %v463
  %v465 = vsel %vm462, %v464, %v460
  %v466 = vmul.f32 1.0, %v465
  %v467 = vrcp.pop %v409
  %v468 = vmul.f32 %v409, %v467
  %v469 = vsub.f32 1.0, %v468
  %v470 = vmul.f32 %v467, %v469
  %v471 = vadd.f32 %v467, %v470
  %vm472 = vweird.f32 %v409
  %vm473 = vweird.f32 %v467
  %vm474 = vmor %vm472, %vm473
  %v475 = vsel %vm474, %v467, %v471
  %v476 = vand.u32 2147483647, %v409
  %vm477 = vcmp.eq.f32.partialorder %v476, 8.507059e+37
  %v478 = vand.u32 %v409, 2147483648
  %v479 = vor.u32 1.1754944e-38, %v478
  %v480 = vsel %vm477, %v479, %v475
  %v481 = vmul.f32 1.0, %v480
  %v482 = vrcp.pop %v410
  %v483 = vmul.f32 %v410, %v482
  %v484 = vsub.f32 1.0, %v483
  %v485 = vmul.f32 %v482, %v484
  %v486 = vadd.f32 %v482, %v485
  %vm487 = vweird.f32 %v410
  %vm488 = vweird.f32 %v482
  %vm489 = vmor %vm487, %vm488
  %v490 = vsel %vm489, %v482, %v486
  %v491 = vand.u32 2147483647, %v410
  %vm492 = vcmp.eq.f32.partialorder %v491, 8.507059e+37
  %v493 = vand.u32 %v410, 2147483648
  %v494 = vor.u32 1.1754944e-38, %v493
  %v495 = vsel %vm492, %v494, %v490
  %v496 = vmul.f32 1.0, %v495
  %v497 = vrcp.pop %v411
  %v498 = vmul.f32 %v411, %v497
  %v499 = vsub.f32 1.0, %v498
  %v500 = vmul.f32 %v497, %v499
  %v501 = vadd.f32 %v497, %v500
  %vm502 = vweird.f32 %v411
  %vm503 = vweird.f32 %v497
  %vm504 = vmor %vm502, %vm503
  %v505 = vsel %vm504, %v497, %v501
  %v506 = vand.u32 2147483647, %v411
  %vm507 = vcmp.eq.f32.partialorder %v506, 8.507059e+37
  %v508 = vand.u32 %v411, 2147483648
  %v509 = vor.u32 1.1754944e-38, %v508
  %v510 = vsel %vm507, %v509, %v505
  %v511 = vmul.f32 1.0, %v510
  %v512 = vrcp.pop %v412
  %v513 = vmul.f32 %v412, %v512
  %v514 = vsub.f32 1.0, %v513
  %v515 = vmul.f32 %v512, %v514
  %v516 = vadd.f32 %v512, %v515
  %vm517 = vweird.f32 %v412
  %vm518 = vweird.f32 %v512
  %vm519 = vmor %vm517, %vm518
  %v520 = vsel %vm519, %v512, %v516
  %v521 = vand.u32 2147483647, %v412
  %vm522 = vcmp.eq.f32.partialorder %v521, 8.507059e+37
  %v523 = vand.u32 %v412, 2147483648
  %v524 = vor.u32 1.1754944e-38, %v523
  %v525 = vsel %vm522, %v524, %v520
  %v526 = vmul.f32 1.0, %v525
  %v527 = vrcp.pop %v413
  %v528 = vmul.f32 %v413, %v527
  %v529 = vsub.f32 1.0, %v528
  %v530 = vmul.f32 %v527, %v529
  %v531 = vadd.f32 %v527, %v530
  %vm532 = vweird.f32 %v413
  %vm533 = vweird.f32 %v527
  %vm534 = vmor %vm532, %vm533
  %v535 = vsel %vm534, %v527, %v531
  %v536 = vand.u32 2147483647, %v413
  %vm537 = vcmp.eq.f32.partialorder %v536, 8.507059e+37
  %v538 = vand.u32 %v413, 2147483648
  %v539 = vor.u32 1.1754944e-38, %v538
  %v540 = vsel %vm537, %v539, %v535
  %v541 = vmul.f32 1.0, %v540
  %v542 = vrcp.pop %v414
  %v543 = vmul.f32 %v414, %v542
  %v544 = vsub.f32 1.0, %v543
  %v545 = vmul.f32 %v542, %v544
  %v546 = vadd.f32 %v542, %v545
  %vm547 = vweird.f32 %v414
  %vm548 = vweird.f32 %v542
  %vm549 = vmor %vm547, %vm548
  %v550 = vsel %vm549, %v542, %v546
  %v551 = vand.u32 2147483647, %v414
  %vm552 = vcmp.eq.f32.partialorder %v551, 8.507059e+37
  %v553 = vand.u32 %v414, 2147483648
  %v554 = vor.u32 1.1754944e-38, %v553
  %v555 = vsel %vm552, %v554, %v550
  %v556 = vmul.f32 1.0, %v555
  %v557 = vrcp.pop %v415
  %v558 = vmul.f32 %v415, %v557
  %v559 = vsub.f32 1.0, %v558
  %v560 = vmul.f32 %v557, %v559
  %v561 = vadd.f32 %v557, %v560
  %vm562 = vweird.f32 %v415
  %vm563 = vweird.f32 %v557
  %vm564 = vmor %vm562, %vm563
  %v565 = vsel %vm564, %v557, %v561
  %v566 = vand.u32 2147483647, %v415
  %vm567 = vcmp.eq.f32.partialorder %v566, 8.507059e+37
  %v568 = vand.u32 %v415, 2147483648
  %v569 = vor.u32 1.1754944e-38, %v568
  %v570 = vsel %vm567, %v569, %v565
  %v571 = vmul.f32 1.0, %v570
  %v572 = vrcp.pop %v416
  %v573 = vmul.f32 %v416, %v572
  %v574 = vsub.f32 1.0, %v573
  %v575 = vmul.f32 %v572, %v574
  %v576 = vadd.f32 %v572, %v575
  %vm577 = vweird.f32 %v416
  %vm578 = vweird.f32 %v572
  %vm579 = vmor %vm577, %vm578
  %v580 = vsel %vm579, %v572, %v576
  %v581 = vand.u32 2147483647, %v416
  %vm582 = vcmp.eq.f32.partialorder %v581, 8.507059e+37
  %v583 = vand.u32 %v416, 2147483648
  %v584 = vor.u32 1.1754944e-38, %v583
  %v585 = vsel %vm582, %v584, %v580
  %v586 = vmul.f32 1.0, %v585
  %v587 = vrcp.pop %v417
  %v588 = vmul.f32 %v417, %v587
  %v589 = vsub.f32 1.0, %v588
  %v590 = vmul.f32 %v587, %v589
  %v591 = vadd.f32 %v587, %v590
  %vm592 = vweird.f32 %v417
  %vm593 = vweird.f32 %v587
  %vm594 = vmor %vm592, %vm593
  %v595 = vsel %vm594, %v587, %v591
  %v596 = vand.u32 2147483647, %v417
  %vm597 = vcmp.eq.f32.partialorder %v596, 8.507059e+37
  %v598 = vand.u32 %v417, 2147483648
  %v599 = vor.u32 1.1754944e-38, %v598
  %v600 = vsel %vm597, %v599, %v595
  %v601 = vmul.f32 1.0, %v600
  %v602 = vrcp.pop %v418
  %v603 = vmul.f32 %v418, %v602
  %v604 = vsub.f32 1.0, %v603
  %v605 = vmul.f32 %v602, %v604
  %v606 = vadd.f32 %v602, %v605
  %vm607 = vweird.f32 %v418
  %vm608 = vweird.f32 %v602
  %vm609 = vmor %vm607, %vm608
  %v610 = vsel %vm609, %v602, %v606
  %v611 = vand.u32 2147483647, %v418
  %vm612 = vcmp.eq.f32.partialorder %v611, 8.507059e+37
  %v613 = vand.u32 %v418, 2147483648
  %v614 = vor.u32 1.1754944e-38, %v613
  %v615 = vsel %vm612, %v614, %v610
  %v616 = vmul.f32 1.0, %v615
  %v617 = vrcp.pop %v419
  %v618 = vmul.f32 %v419, %v617
  %v619 = vsub.f32 1.0, %v618
  %v620 = vmul.f32 %v617, %v619
  %v621 = vadd.f32 %v617, %v620
  %vm622 = vweird.f32 %v419
  %vm623 = vweird.f32 %v617
  %vm624 = vmor %vm622, %vm623
  %v625 = vsel %vm624, %v617, %v621
  %v626 = vand.u32 2147483647, %v419
  %vm627 = vcmp.eq.f32.partialorder %v626, 8.507059e+37
  %v628 = vand.u32 %v419, 2147483648
  %v629 = vor.u32 1.1754944e-38, %v628
  %v630 = vsel %vm627, %v629, %v625
  %v631 = vmul.f32 1.0, %v630
  %v632 = vrcp.pop %v420
  %v633 = vmul.f32 %v420, %v632
  %v634 = vsub.f32 1.0, %v633
  %v635 = vmul.f32 %v632, %v634
  %v636 = vadd.f32 %v632, %v635
  %vm637 = vweird.f32 %v420
  %vm638 = vweird.f32 %v632
  %vm639 = vmor %vm637, %vm638
  %v640 = vsel %vm639, %v632, %v636
  %v641 = vand.u32 2147483647, %v420
  %vm642 = vcmp.eq.f32.partialorder %v641, 8.507059e+37
  %v643 = vand.u32 %v420, 2147483648
  %v644 = vor.u32 1.1754944e-38, %v643
  %v645 = vsel %vm642, %v644, %v640
  %v646 = vmul.f32 1.0, %v645
  %v647 = vrcp.pop %v421
  %v648 = vmul.f32 %v421, %v647
  %v649 = vsub.f32 1.0, %v648
  %v650 = vmul.f32 %v647, %v649
  %v651 = vadd.f32 %v647, %v650
  %vm652 = vweird.f32 %v421
  %vm653 = vweird.f32 %v647
  %vm654 = vmor %vm652, %vm653
  %v655 = vsel %vm654, %v647, %v651
  %v656 = vand.u32 2147483647, %v421
  %vm657 = vcmp.eq.f32.partialorder %v656, 8.507059e+37
  %v658 = vand.u32 %v421, 2147483648
  %v659 = vor.u32 1.1754944e-38, %v658
  %v660 = vsel %vm657, %v659, %v655
  %v661 = vmul.f32 1.0, %v660
  %v662 = vmul.f32 %v326, %v436
  %v663 = vmul.f32 %v327, %v451
  %v664 = vmul.f32 %v328, %v466
  %v665 = vmul.f32 %v329, %v481
  %v666 = vmul.f32 %v330, %v496
  %v667 = vmul.f32 %v331, %v511
  %v668 = vmul.f32 %v332, %v526
  %v669 = vmul.f32 %v333, %v541
  %v670 = vmul.f32 %v334, %v556
  %v671 = vmul.f32 %v335, %v571
  %v672 = vmul.f32 %v336, %v586
  %v673 = vmul.f32 %v337, %v601
  %v674 = vmul.f32 %v338, %v616
  %v675 = vmul.f32 %v339, %v631
  %v676 = vmul.f32 %v340, %v646
  %v677 = vmul.f32 %v341, %v661
  %678 = vst.msk [vmem:[%s4] sm:$0xff] %vm178, %v662
  %679 = vst.msk [vmem:[%s4 + $0x8] sm:$0xff] %vm178, %v663
  %680 = vst.msk [vmem:[%s4 + $0x10] sm:$0xff] %vm178, %v664
  %681 = vst.msk [vmem:[%s4 + $0x18] sm:$0xff] %vm178, %v665
  %682 = vst.msk [vmem:[%s4 + $0x20] sm:$0xff] %vm178, %v666
  %683 = vst.msk [vmem:[%s4 + $0x28] sm:$0xff] %vm178, %v667
  %684 = vst.msk [vmem:[%s4 + $0x30] sm:$0xff] %vm178, %v668
  %685 = vst.msk [vmem:[%s4 + $0x38] sm:$0xff] %vm178, %v669
  %686 = vst.msk [vmem:[%s4 + $0x40] sm:$0xff] %vm178, %v670
  %687 = vst.msk [vmem:[%s4 + $0x48] sm:$0xff] %vm178, %v671
  %688 = vst.msk [vmem:[%s4 + $0x50] sm:$0xff] %vm178, %v672
  %689 = vst.msk [vmem:[%s4 + $0x58] sm:$0xff] %vm178, %v673
  %690 = vst.msk [vmem:[%s4 + $0x60] sm:$0xff] %vm178, %v674
  %691 = vst.msk [vmem:[%s4 + $0x68] sm:$0xff] %vm178, %v675
  %692 = vst.msk [vmem:[%s4 + $0x70] sm:$0xff] %vm178, %v676
  %693 = vst.msk [vmem:[%s4 + $0x78] sm:$0xff] %vm178, %v677
  // Predicated region
  $region18: #{multiscale_scconv2d.44} parent=0 // pred_check
    _
  $region19: #{multiscale_scconv2d.44} parent=0 // pred_check_branch
    %695 = sbr.rel (0) target = $region21
  $region20: #{multiscale_scconv2d.44} parent=0 // pred_region
    _
  $region21: #{multiscale_scconv2d.44} parent=0 // pred_fallthru
    _
  // Predicated region
  $region22: #{multiscale_scconv2d.44} parent=0 // pred_check
    _
  $region23: #{multiscale_scconv2d.44} parent=0 // pred_check_branch
    %697 = sbr.rel (0) target = $region25
  $region24: #{multiscale_scconv2d.44} parent=0 // pred_region
    _
  $region25: #{multiscale_scconv2d.44} parent=0 // pred_fallthru
    _

// kernel: multiscale_scconv2d.45
$region0: #{multiscale_scconv2d.45}
  #allocation0 [shape = 'u32[]', space=smem, size = 0x4, offset = 0x4, fixed_abs, tag = 'smem constant byte address 0x4 - core index']
  #allocation1 [shape = 'u32[72,128]{1,0:T(1,128)}', space=vmem, size = 0x9000, scoped, tag = 'internal scratch']
  %s0 = inlined_call_operand.vmem [shape: bf16[128,144], index: 0, kind: input, shape index: {}]
  %s1 = inlined_call_operand.vmem [shape: bf16[144,16], index: 1, kind: input, shape index: {}]
  %s2 = inlined_call_operand.vmem [shape: f32[2,1,16], index: 2, kind: input, shape index: {}]
  %s3 = inlined_call_operand.vmem [shape: f32[128,16], index: 3, kind: output, shape index: {}]
  %s4 = sld [smem:[#allocation0]]
  $region22: #{multiscale_scconv2d.45} parent=0
    _
  %s6 = ssub.s32 1, %s4
  %s7 = scalar_select 0, %s6, %s4
  // Predicated region
  $region2: #{multiscale_scconv2d.45} parent=0 // pred_check
    _
  $region3: #{multiscale_scconv2d.45} parent=0 // pred_check_branch
    %9 = sbr.rel (0) target = $region5
  $region4: #{multiscale_scconv2d.45} parent=0 // pred_region
    _
  $region5: #{multiscale_scconv2d.45} parent=0 // pred_fallthru
    _
  // Predicated region
  $region6: #{multiscale_scconv2d.45} parent=0 // pred_check
    _
  $region7: #{multiscale_scconv2d.45} parent=0 // pred_check_branch
    %11 = sbr.rel (0) target = $region9
  $region8: #{multiscale_scconv2d.45} parent=0 // pred_region
    _
  $region9: #{multiscale_scconv2d.45} parent=0 // pred_fallthru
    _
  // Predicated region
  $region10: #{multiscale_scconv2d.45} parent=0 // pred_check
    _
  $region11: #{multiscale_scconv2d.45} parent=0 // pred_check_branch
    %13 = sbr.rel (0) target = $region13
  $region12: #{multiscale_scconv2d.45} parent=0 // pred_region
    _
  $region13: #{multiscale_scconv2d.45} parent=0 // pred_fallthru
    _
  %v15 = vld [vmem:[%s0] sm:$0xff]
  %v16 = vld [vmem:[%s0 + $0x8] sm:$0xff]
  %v17 = vld [vmem:[%s0 + $0x10] sm:$0xff]
  %v18 = vld [vmem:[%s0 + $0x18] sm:$0xff]
  %v19 = vld [vmem:[%s0 + $0x20] sm:$0xff]
  %v20 = vld [vmem:[%s0 + $0x28] sm:$0xff]
  %v21 = vld [vmem:[%s0 + $0x30] sm:$0xff]
  %v22 = vld [vmem:[%s0 + $0x38] sm:$0xff]
  %v23 = vld [vmem:[%s0 + $0x40] sm:$0xff]
  %v24 = vld [vmem:[%s0 + $0x48] sm:$0xff]
  %v25 = vld [vmem:[%s0 + $0x50] sm:$0xff]
  %v26 = vld [vmem:[%s0 + $0x58] sm:$0xff]
  %v27 = vld [vmem:[%s0 + $0x60] sm:$0xff]
  %v28 = vld [vmem:[%s0 + $0x68] sm:$0xff]
  %v29 = vld [vmem:[%s0 + $0x70] sm:$0xff]
  %v30 = vld [vmem:[%s0 + $0x78] sm:$0xff]
  %v31 = vld [vmem:[%s1] sm:$0xf]
  %v32 = vld [vmem:[%s1 + $0x4] sm:$0xf]
  %v33 = vld [vmem:[%s1 + $0x8] sm:$0xf]
  %v34 = vld [vmem:[%s1 + $0xc] sm:$0xf]
  %v35 = vld [vmem:[%s1 + $0x10] sm:$0xf]
  %v36 = vld [vmem:[%s1 + $0x14] sm:$0xf]
  %v37 = vld [vmem:[%s1 + $0x18] sm:$0xf]
  %v38 = vld [vmem:[%s1 + $0x1c] sm:$0xf]
  %v39 = vld [vmem:[%s1 + $0x20] sm:$0xf]
  %v40 = vld [vmem:[%s1 + $0x24] sm:$0xf]
  %v41 = vld [vmem:[%s1 + $0x28] sm:$0xf]
  %v42 = vld [vmem:[%s1 + $0x2c] sm:$0xf]
  %v43 = vld [vmem:[%s1 + $0x30] sm:$0xf]
  %v44 = vld [vmem:[%s1 + $0x34] sm:$0xf]
  %v45 = vld [vmem:[%s1 + $0x38] sm:$0xf]
  %v46 = vld [vmem:[%s1 + $0x3c] sm:$0xf]
  %v47 = vld [vmem:[%s1 + $0x40] sm:$0xf]
  %v48 = vld [vmem:[%s1 + $0x44] sm:$0xf]
  %v65 = vunpack.c.l.b16 %v15
  %v66 = vunpack.c.h.b16 %v15
  %v67 = vunpack.c.l.b16 %v16
  %v68 = vunpack.c.h.b16 %v16
  %v69 = vunpack.c.l.b16 %v17
  %v70 = vunpack.c.h.b16 %v17
  %v71 = vunpack.c.l.b16 %v18
  %v72 = vunpack.c.h.b16 %v18
  %v73 = vunpack.c.l.b16 %v19
  %v74 = vunpack.c.h.b16 %v19
  %v75 = vunpack.c.l.b16 %v20
  %v76 = vunpack.c.h.b16 %v20
  %v77 = vunpack.c.l.b16 %v21
  %v78 = vunpack.c.h.b16 %v21
  %v79 = vunpack.c.l.b16 %v22
  %v80 = vunpack.c.h.b16 %v22
  %v81 = vunpack.c.l.b16 %v23
  %v82 = vunpack.c.h.b16 %v23
  %v83 = vunpack.c.l.b16 %v24
  %v84 = vunpack.c.h.b16 %v24
  %v85 = vunpack.c.l.b16 %v25
  %v86 = vunpack.c.h.b16 %v25
  %v87 = vunpack.c.l.b16 %v26
  %v88 = vunpack.c.h.b16 %v26
  %v89 = vunpack.c.l.b16 %v27
  %v90 = vunpack.c.h.b16 %v27
  %v91 = vunpack.c.l.b16 %v28
  %v92 = vunpack.c.h.b16 %v28
  %v93 = vunpack.c.l.b16 %v29
  %v94 = vunpack.c.h.b16 %v29
  %v95 = vunpack.c.l.b16 %v30
  %v96 = vunpack.c.h.b16 %v30
  %v97 = vpack.c.b16 %v67, %v65
  %v98 = vpack.c.b16 %v68, %v66
  %v99 = vpack.c.b16 %v71, %v69
  %v100 = vpack.c.b16 %v72, %v70
  %v101 = vpack.c.b16 %v75, %v73
  %v102 = vpack.c.b16 %v76, %v74
  %v103 = vpack.c.b16 %v79, %v77
  %v104 = vpack.c.b16 %v80, %v78
  %v105 = vpack.c.b16 %v83, %v81
  %v106 = vpack.c.b16 %v84, %v82
  %v107 = vpack.c.b16 %v87, %v85
  %v108 = vpack.c.b16 %v88, %v86
  %v109 = vpack.c.b16 %v91, %v89
  %v110 = vpack.c.b16 %v92, %v90
  %v111 = vpack.c.b16 %v95, %v93
  %v112 = vpack.c.b16 %v96, %v94
  %v139 = vunpack.c.l.b16 %v31
  %v140 = vunpack.c.l.b16 %v32
  %v141 = vunpack.c.l.b16 %v33
  %v142 = vunpack.c.l.b16 %v34
  %v143 = vunpack.c.l.b16 %v35
  %v144 = vunpack.c.l.b16 %v36
  %v145 = vunpack.c.l.b16 %v37
  %v146 = vunpack.c.l.b16 %v38
  %v147 = vunpack.c.l.b16 %v39
  %v148 = vunpack.c.l.b16 %v40
  %v149 = vunpack.c.l.b16 %v41
  %v150 = vunpack.c.l.b16 %v42
  %v151 = vunpack.c.l.b16 %v43
  %v152 = vunpack.c.l.b16 %v44
  %v153 = vunpack.c.l.b16 %v45
  %v154 = vunpack.c.l.b16 %v46
  %v155 = vunpack.c.l.b16 %v47
  %v156 = vunpack.c.l.b16 %v48
  %v157 = vpack.c.b16 %v140, %v139
  %v158 = vpack.c.b16 %v142, %v141
  %v159 = vpack.c.b16 %v144, %v143
  %v160 = vpack.c.b16 %v146, %v145
  %v161 = vpack.c.b16 %v148, %v147
  %v162 = vpack.c.b16 %v150, %v149
  %v163 = vpack.c.b16 %v152, %v151
  %v164 = vpack.c.b16 %v154, %v153
  %v165 = vpack.c.b16 %v156, %v155
  %vm175 = vcmask 130048
  %v177 = vsel %vm175, %v98, 0
  %v180 = vsel %vm175, %v100, 0
  %v183 = vsel %vm175, %v102, 0
  %v186 = vsel %vm175, %v104, 0
  %v189 = vsel %vm175, %v106, 0
  %v192 = vsel %vm175, %v108, 0
  %v195 = vsel %vm175, %v110, 0
  %v198 = vsel %vm175, %v112, 0
  %200 = vmatpush.bf16.msra.mxu0 %v164
  %201 = vmatpush.bf16.msra.mxu0 %v163
  %202 = vmatpush.bf16.msra.mxu0 %v162
  %203 = vmatpush.bf16.msra.mxu0 %v161
  %204 = vmatpush.bf16.msra.mxu0 %v160
  %205 = vmatpush.bf16.msra.mxu0 %v159
  %206 = vmatpush.bf16.msra.mxu0 %v158
  %207 = vmatpush.bf16.msra.mxu0 %v157
  %208 = vmatmul.bf16.gmra.mxu0 %v97
  %v209 = vpop.f32.mrf.mxu0
  %v210 = vadd.f32 0.0, %v209
  %v211 = vpop.f32.mrf.mxu0
  %v212 = vadd.f32 0.0, %v211
  %213 = vmatmul.bf16.gmra.mxu0 %v99
  %v214 = vpop.f32.mrf.mxu0
  %v215 = vadd.f32 0.0, %v214
  %v216 = vpop.f32.mrf.mxu0
  %v217 = vadd.f32 0.0, %v216
  %218 = vmatmul.bf16.gmra.mxu0 %v101
  %v219 = vpop.f32.mrf.mxu0
  %v220 = vadd.f32 0.0, %v219
  %v221 = vpop.f32.mrf.mxu0
  %v222 = vadd.f32 0.0, %v221
  %223 = vmatmul.bf16.gmra.mxu0 %v103
  %v224 = vpop.f32.mrf.mxu0
  %v225 = vadd.f32 0.0, %v224
  %v226 = vpop.f32.mrf.mxu0
  %v227 = vadd.f32 0.0, %v226
  %228 = vmatmul.bf16.gmra.mxu0 %v105
  %v229 = vpop.f32.mrf.mxu0
  %v230 = vadd.f32 0.0, %v229
  %v231 = vpop.f32.mrf.mxu0
  %v232 = vadd.f32 0.0, %v231
  %233 = vmatmul.bf16.gmra.mxu0 %v107
  %v234 = vpop.f32.mrf.mxu0
  %v235 = vadd.f32 0.0, %v234
  %v236 = vpop.f32.mrf.mxu0
  %v237 = vadd.f32 0.0, %v236
  %238 = vmatmul.bf16.gmra.mxu0 %v109
  %v239 = vpop.f32.mrf.mxu0
  %v240 = vadd.f32 0.0, %v239
  %v241 = vpop.f32.mrf.mxu0
  %v242 = vadd.f32 0.0, %v241
  %243 = vmatmul.bf16.gmra.mxu0 %v111
  %v244 = vpop.f32.mrf.mxu0
  %v245 = vadd.f32 0.0, %v244
  %v246 = vpop.f32.mrf.mxu0
  %v247 = vadd.f32 0.0, %v246
  %248 = vdwg.mxu0
  %249 = vmatpush.bf16.msra.mxu0 0
  %250 = vmatpush.bf16.msra.mxu0 0
  %251 = vmatpush.bf16.msra.mxu0 0
  %252 = vmatpush.bf16.msra.mxu0 0
  %253 = vmatpush.bf16.msra.mxu0 0
  %254 = vmatpush.bf16.msra.mxu0 0
  %255 = vmatpush.bf16.msra.mxu0 0
  %256 = vmatpush.bf16.msra.mxu0 %v165
  %257 = vmatmul.bf16.gmra.mxu0 %v177
  %v258 = vpop.f32.mrf.mxu0
  %v259 = vadd.f32 %v210, %v258
  %v260 = vpop.f32.mrf.mxu0
  %v261 = vadd.f32 %v212, %v260
  %262 = vmatmul.bf16.gmra.mxu0 %v180
  %v263 = vpop.f32.mrf.mxu0
  %v264 = vadd.f32 %v215, %v263
  %v265 = vpop.f32.mrf.mxu0
  %v266 = vadd.f32 %v217, %v265
  %267 = vmatmul.bf16.gmra.mxu0 %v183
  %v268 = vpop.f32.mrf.mxu0
  %v269 = vadd.f32 %v220, %v268
  %v270 = vpop.f32.mrf.mxu0
  %v271 = vadd.f32 %v222, %v270
  %272 = vmatmul.bf16.gmra.mxu0 %v186
  %v273 = vpop.f32.mrf.mxu0
  %v274 = vadd.f32 %v225, %v273
  %v275 = vpop.f32.mrf.mxu0
  %v276 = vadd.f32 %v227, %v275
  %277 = vmatmul.bf16.gmra.mxu0 %v189
  %v278 = vpop.f32.mrf.mxu0
  %v279 = vadd.f32 %v230, %v278
  %v280 = vpop.f32.mrf.mxu0
  %v281 = vadd.f32 %v232, %v280
  %282 = vmatmul.bf16.gmra.mxu0 %v192
  %v283 = vpop.f32.mrf.mxu0
  %v284 = vadd.f32 %v235, %v283
  %v285 = vpop.f32.mrf.mxu0
  %v286 = vadd.f32 %v237, %v285
  %287 = vmatmul.bf16.gmra.mxu0 %v195
  %v288 = vpop.f32.mrf.mxu0
  %v289 = vadd.f32 %v240, %v288
  %v290 = vpop.f32.mrf.mxu0
  %v291 = vadd.f32 %v242, %v290
  %292 = vmatmul.bf16.gmra.mxu0 %v198
  %v293 = vpop.f32.mrf.mxu0
  %v294 = vadd.f32 %v245, %v293
  %v295 = vpop.f32.mrf.mxu0
  %v296 = vadd.f32 %v247, %v295
  %297 = vdwg.mxu0
  %v298 = vld [vmem:[%s2] sm:$0x1]
  %v300 = vperm.slane %v298, 0
  %v302 = vmul.f32 %v259, %v300
  %v303 = vmul.f32 %v261, %v300
  %v304 = vmul.f32 %v264, %v300
  %v305 = vmul.f32 %v266, %v300
  %v306 = vmul.f32 %v269, %v300
  %v307 = vmul.f32 %v271, %v300
  %v308 = vmul.f32 %v274, %v300
  %v309 = vmul.f32 %v276, %v300
  %v310 = vmul.f32 %v279, %v300
  %v311 = vmul.f32 %v281, %v300
  %v312 = vmul.f32 %v284, %v300
  %v313 = vmul.f32 %v286, %v300
  %v314 = vmul.f32 %v289, %v300
  %v315 = vmul.f32 %v291, %v300
  %v316 = vmul.f32 %v294, %v300
  %v317 = vmul.f32 %v296, %v300
  %s318 = scalar_lea.vmem %s2, 1
  %v319 = vld [vmem:[%s318] sm:$0x1]
  %v321 = vperm.slane %v319, 0
  %v323 = vadd.f32 %v302, %v321
  %v324 = vadd.f32 %v303, %v321
  %v325 = vadd.f32 %v304, %v321
  %v326 = vadd.f32 %v305, %v321
  %v327 = vadd.f32 %v306, %v321
  %v328 = vadd.f32 %v307, %v321
  %v329 = vadd.f32 %v308, %v321
  %v330 = vadd.f32 %v309, %v321
  %v331 = vadd.f32 %v310, %v321
  %v332 = vadd.f32 %v311, %v321
  %v333 = vadd.f32 %v312, %v321
  %v334 = vadd.f32 %v313, %v321
  %v335 = vadd.f32 %v314, %v321
  %v336 = vadd.f32 %v315, %v321
  %v337 = vadd.f32 %v316, %v321
  %v338 = vadd.f32 %v317, %v321
  %v339 = vmax.f32 %v323, 0.0
  %v340 = vmax.f32 %v324, 0.0
  %v341 = vmax.f32 %v325, 0.0
  %v342 = vmax.f32 %v326, 0.0
  %v343 = vmax.f32 %v327, 0.0
  %v344 = vmax.f32 %v328, 0.0
  %v345 = vmax.f32 %v329, 0.0
  %v346 = vmax.f32 %v330, 0.0
  %v347 = vmax.f32 %v331, 0.0
  %v348 = vmax.f32 %v332, 0.0
  %v349 = vmax.f32 %v333, 0.0
  %v350 = vmax.f32 %v334, 0.0
  %v351 = vmax.f32 %v335, 0.0
  %v352 = vmax.f32 %v336, 0.0
  %v353 = vmax.f32 %v337, 0.0
  %v354 = vmax.f32 %v338, 0.0
  %355 = vst.msk [vmem:[%s3] sm:$0xff] %vm175, %v339
  %356 = vst.msk [vmem:[%s3 + $0x8] sm:$0xff] %vm175, %v340
  %357 = vst.msk [vmem:[%s3 + $0x10] sm:$0xff] %vm175, %v341
  %358 = vst.msk [vmem:[%s3 + $0x18] sm:$0xff] %vm175, %v342
  %359 = vst.msk [vmem:[%s3 + $0x20] sm:$0xff] %vm175, %v343
  %360 = vst.msk [vmem:[%s3 + $0x28] sm:$0xff] %vm175, %v344
  %361 = vst.msk [vmem:[%s3 + $0x30] sm:$0xff] %vm175, %v345
  %362 = vst.msk [vmem:[%s3 + $0x38] sm:$0xff] %vm175, %v346
  %363 = vst.msk [vmem:[%s3 + $0x40] sm:$0xff] %vm175, %v347
  %364 = vst.msk [vmem:[%s3 + $0x48] sm:$0xff] %vm175, %v348
  %365 = vst.msk [vmem:[%s3 + $0x50] sm:$0xff] %vm175, %v349
  %366 = vst.msk [vmem:[%s3 + $0x58] sm:$0xff] %vm175, %v350
  %367 = vst.msk [vmem:[%s3 + $0x60] sm:$0xff] %vm175, %v351
  %368 = vst.msk [vmem:[%s3 + $0x68] sm:$0xff] %vm175, %v352
  %369 = vst.msk [vmem:[%s3 + $0x70] sm:$0xff] %vm175, %v353
  %370 = vst.msk [vmem:[%s3 + $0x78] sm:$0xff] %vm175, %v354
  // Predicated region
  $region14: #{multiscale_scconv2d.45} parent=0 // pred_check
    _
  $region15: #{multiscale_scconv2d.45} parent=0 // pred_check_branch
    %372 = sbr.rel (0) target = $region17
  $region16: #{multiscale_scconv2d.45} parent=0 // pred_region
    _
  $region17: #{multiscale_scconv2d.45} parent=0 // pred_fallthru
    _
  // Predicated region
  $region18: #{multiscale_scconv2d.45} parent=0 // pred_check
    _
  $region19: #{multiscale_scconv2d.45} parent=0 // pred_check_branch
    %374 = sbr.rel (0) target = $region21
  $region20: #{multiscale_scconv2d.45} parent=0 // pred_region
    _
  $region21: #{multiscale_scconv2d.45} parent=0 // pred_fallthru
    _

// kernel: tile.13
$region0: #{tile.13}
  #allocation0 [shape = 's32[1]{0}', space=sflag, size = 0x4, scoped, tag = 'scoped memory for tile.13']
  %s0 = inlined_call_operand.vmem [shape: f32[128], index: 0, kind: input, shape index: {}]
  %s1 = inlined_call_operand.vmem [shape: f32[4,128], index: 1, kind: output, shape index: {}]
  // Predicated region
  $region2: #{tile.13} parent=0 // pred_check
    _
  $region3: #{tile.13} parent=0 // pred_check_branch
    %3 = sbr.rel (0) target = $region5
  $region4: #{tile.13} parent=0 // pred_region
    _
  $region5: #{tile.13} parent=0 // pred_fallthru
    _
  %v4 = vld [vmem:[%s0] ss:$0 sm:$0xff]
  %5 = vst [vmem:[%s1] sm:$0xf] %v4

// kernel: multiscale_scconv2d.46
$region0: #{multiscale_scconv2d.46}
  #allocation0 [shape = 'u32[]', space=smem, size = 0x4, offset = 0x4, fixed_abs, tag = 'smem constant byte address 0x4 - core index']
  #allocation1 [shape = 'u32[72,128]{1,0:T(1,128)}', space=vmem, size = 0x9000, scoped, tag = 'internal scratch']
  %s0 = inlined_call_operand.vmem [shape: bf16[128,32], index: 0, kind: input, shape index: {}]
  %s1 = inlined_call_operand.vmem [shape: bf16[32,128], index: 1, kind: input, shape index: {}]
  %s2 = inlined_call_operand.vmem [shape: f32[2,1,128], index: 2, kind: input, shape index: {}]
  %s3 = inlined_call_operand.vmem [shape: f32[128,128], index: 3, kind: input, shape index: {}]
  %s4 = inlined_call_operand.vmem [shape: f32[128,128], index: 4, kind: output, shape index: {}]
  %s5 = sld [smem:[#allocation0]]
  $region26: #{multiscale_scconv2d.46} parent=0
    _
  %s7 = ssub.s32 1, %s5
  %s8 = scalar_select 0, %s7, %s5
  // Predicated region
  $region2: #{multiscale_scconv2d.46} parent=0 // pred_check
    _
  $region3: #{multiscale_scconv2d.46} parent=0 // pred_check_branch
    %10 = sbr.rel (0) target = $region5
  $region4: #{multiscale_scconv2d.46} parent=0 // pred_region
    _
  $region5: #{multiscale_scconv2d.46} parent=0 // pred_fallthru
    _
  // Predicated region
  $region6: #{multiscale_scconv2d.46} parent=0 // pred_check
    _
  $region7: #{multiscale_scconv2d.46} parent=0 // pred_check_branch
    %12 = sbr.rel (0) target = $region9
  $region8: #{multiscale_scconv2d.46} parent=0 // pred_region
    _
  $region9: #{multiscale_scconv2d.46} parent=0 // pred_fallthru
    _
  // Predicated region
  $region10: #{multiscale_scconv2d.46} parent=0 // pred_check
    _
  $region11: #{multiscale_scconv2d.46} parent=0 // pred_check_branch
    %14 = sbr.rel (0) target = $region13
  $region12: #{multiscale_scconv2d.46} parent=0 // pred_region
    _
  $region13: #{multiscale_scconv2d.46} parent=0 // pred_fallthru
    _
  // Predicated region
  $region14: #{multiscale_scconv2d.46} parent=0 // pred_check
    _
  $region15: #{multiscale_scconv2d.46} parent=0 // pred_check_branch
    %16 = sbr.rel (0) target = $region17
  $region16: #{multiscale_scconv2d.46} parent=0 // pred_region
    _
  $region17: #{multiscale_scconv2d.46} parent=0 // pred_fallthru
    _
  %v18 = vld [vmem:[%s0] sm:$0xf]
  %v19 = vld [vmem:[%s0 + $0x4] sm:$0xf]
  %v20 = vld [vmem:[%s0 + $0x8] sm:$0xf]
  %v21 = vld [vmem:[%s0 + $0xc] sm:$0xf]
  %v22 = vld [vmem:[%s0 + $0x10] sm:$0xf]
  %v23 = vld [vmem:[%s0 + $0x14] sm:$0xf]
  %v24 = vld [vmem:[%s0 + $0x18] sm:$0xf]
  %v25 = vld [vmem:[%s0 + $0x1c] sm:$0xf]
  %v26 = vld [vmem:[%s0 + $0x20] sm:$0xf]
  %v27 = vld [vmem:[%s0 + $0x24] sm:$0xf]
  %v28 = vld [vmem:[%s0 + $0x28] sm:$0xf]
  %v29 = vld [vmem:[%s0 + $0x2c] sm:$0xf]
  %v30 = vld [vmem:[%s0 + $0x30] sm:$0xf]
  %v31 = vld [vmem:[%s0 + $0x34] sm:$0xf]
  %v32 = vld [vmem:[%s0 + $0x38] sm:$0xf]
  %v33 = vld [vmem:[%s0 + $0x3c] sm:$0xf]
  %v34 = vld [vmem:[%s1] sm:$0xf]
  %v35 = vld [vmem:[%s1 + $0x4] sm:$0xf]
  %v36 = vld [vmem:[%s1 + $0x8] sm:$0xf]
  %v37 = vld [vmem:[%s1 + $0xc] sm:$0xf]
  %v54 = vunpack.c.l.b16 %v18
  %v55 = vunpack.c.l.b16 %v19
  %v56 = vunpack.c.l.b16 %v20
  %v57 = vunpack.c.l.b16 %v21
  %v58 = vunpack.c.l.b16 %v22
  %v59 = vunpack.c.l.b16 %v23
  %v60 = vunpack.c.l.b16 %v24
  %v61 = vunpack.c.l.b16 %v25
  %v62 = vunpack.c.l.b16 %v26
  %v63 = vunpack.c.l.b16 %v27
  %v64 = vunpack.c.l.b16 %v28
  %v65 = vunpack.c.l.b16 %v29
  %v66 = vunpack.c.l.b16 %v30
  %v67 = vunpack.c.l.b16 %v31
  %v68 = vunpack.c.l.b16 %v32
  %v69 = vunpack.c.l.b16 %v33
  %v70 = vpack.c.b16 %v55, %v54
  %v71 = vpack.c.b16 %v57, %v56
  %v72 = vpack.c.b16 %v59, %v58
  %v73 = vpack.c.b16 %v61, %v60
  %v74 = vpack.c.b16 %v63, %v62
  %v75 = vpack.c.b16 %v65, %v64
  %v76 = vpack.c.b16 %v67, %v66
  %v77 = vpack.c.b16 %v69, %v68
  %v82 = vunpack.c.l.b16 %v34
  %v83 = vunpack.c.l.b16 %v35
  %v84 = vunpack.c.l.b16 %v36
  %v85 = vunpack.c.l.b16 %v37
  %v86 = vpack.c.b16 %v83, %v82
  %v87 = vpack.c.b16 %v85, %v84
  %vm90 = vcmask 261120
  %v92 = vsel %vm90, %v70, 0
  %v95 = vsel %vm90, %v71, 0
  %v98 = vsel %vm90, %v72, 0
  %v101 = vsel %vm90, %v73, 0
  %v104 = vsel %vm90, %v74, 0
  %v107 = vsel %vm90, %v75, 0
  %v110 = vsel %vm90, %v76, 0
  %v113 = vsel %vm90, %v77, 0
  %115 = vmatpush.bf16.msra.mxu0 0
  %116 = vmatpush.bf16.msra.mxu0 0
  %117 = vmatpush.bf16.msra.mxu0 0
  %118 = vmatpush.bf16.msra.mxu0 0
  %119 = vmatpush.bf16.msra.mxu0 0
  %120 = vmatpush.bf16.msra.mxu0 0
  %121 = vmatpush.bf16.msra.mxu0 %v87
  %122 = vmatpush.bf16.msra.mxu0 %v86
  %123 = vmatmul.bf16.gmra.mxu0 %v92
  %v124 = vpop.f32.mrf.mxu0
  %v125 = vadd.f32 0.0, %v124
  %v126 = vpop.f32.mrf.mxu0
  %v127 = vadd.f32 0.0, %v126
  %128 = vmatmul.bf16.gmra.mxu0 %v95
  %v129 = vpop.f32.mrf.mxu0
  %v130 = vadd.f32 0.0, %v129
  %v131 = vpop.f32.mrf.mxu0
  %v132 = vadd.f32 0.0, %v131
  %133 = vmatmul.bf16.gmra.mxu0 %v98
  %v134 = vpop.f32.mrf.mxu0
  %v135 = vadd.f32 0.0, %v134
  %v136 = vpop.f32.mrf.mxu0
  %v137 = vadd.f32 0.0, %v136
  %138 = vmatmul.bf16.gmra.mxu0 %v101
  %v139 = vpop.f32.mrf.mxu0
  %v140 = vadd.f32 0.0, %v139
  %v141 = vpop.f32.mrf.mxu0
  %v142 = vadd.f32 0.0, %v141
  %143 = vmatmul.bf16.gmra.mxu0 %v104
  %v144 = vpop.f32.mrf.mxu0
  %v145 = vadd.f32 0.0, %v144
  %v146 = vpop.f32.mrf.mxu0
  %v147 = vadd.f32 0.0, %v146
  %148 = vmatmul.bf16.gmra.mxu0 %v107
  %v149 = vpop.f32.mrf.mxu0
  %v150 = vadd.f32 0.0, %v149
  %v151 = vpop.f32.mrf.mxu0
  %v152 = vadd.f32 0.0, %v151
  %153 = vmatmul.bf16.gmra.mxu0 %v110
  %v154 = vpop.f32.mrf.mxu0
  %v155 = vadd.f32 0.0, %v154
  %v156 = vpop.f32.mrf.mxu0
  %v157 = vadd.f32 0.0, %v156
  %158 = vmatmul.bf16.gmra.mxu0 %v113
  %v159 = vpop.f32.mrf.mxu0
  %v160 = vadd.f32 0.0, %v159
  %v161 = vpop.f32.mrf.mxu0
  %v162 = vadd.f32 0.0, %v161
  %163 = vdwg.mxu0
  %v164 = vld [vmem:[%s2] sm:$0x1]
  %v166 = vperm.slane %v164, 0
  %v168 = vmul.f32 %v125, %v166
  %v169 = vmul.f32 %v127, %v166
  %v170 = vmul.f32 %v130, %v166
  %v171 = vmul.f32 %v132, %v166
  %v172 = vmul.f32 %v135, %v166
  %v173 = vmul.f32 %v137, %v166
  %v174 = vmul.f32 %v140, %v166
  %v175 = vmul.f32 %v142, %v166
  %v176 = vmul.f32 %v145, %v166
  %v177 = vmul.f32 %v147, %v166
  %v178 = vmul.f32 %v150, %v166
  %v179 = vmul.f32 %v152, %v166
  %v180 = vmul.f32 %v155, %v166
  %v181 = vmul.f32 %v157, %v166
  %v182 = vmul.f32 %v160, %v166
  %v183 = vmul.f32 %v162, %v166
  %s184 = scalar_lea.vmem %s2, 1
  %v185 = vld [vmem:[%s184] sm:$0x1]
  %v187 = vperm.slane %v185, 0
  %v189 = vadd.f32 %v168, %v187
  %v190 = vadd.f32 %v169, %v187
  %v191 = vadd.f32 %v170, %v187
  %v192 = vadd.f32 %v171, %v187
  %v193 = vadd.f32 %v172, %v187
  %v194 = vadd.f32 %v173, %v187
  %v195 = vadd.f32 %v174, %v187
  %v196 = vadd.f32 %v175, %v187
  %v197 = vadd.f32 %v176, %v187
  %v198 = vadd.f32 %v177, %v187
  %v199 = vadd.f32 %v178, %v187
  %v200 = vadd.f32 %v179, %v187
  %v201 = vadd.f32 %v180, %v187
  %v202 = vadd.f32 %v181, %v187
  %v203 = vadd.f32 %v182, %v187
  %v204 = vadd.f32 %v183, %v187
  %v205 = vld [vmem:[%s3] sm:$0xff]
  %v206 = vld [vmem:[%s3 + $0x8] sm:$0xff]
  %v207 = vld [vmem:[%s3 + $0x10] sm:$0xff]
  %v208 = vld [vmem:[%s3 + $0x18] sm:$0xff]
  %v209 = vld [vmem:[%s3 + $0x20] sm:$0xff]
  %v210 = vld [vmem:[%s3 + $0x28] sm:$0xff]
  %v211 = vld [vmem:[%s3 + $0x30] sm:$0xff]
  %v212 = vld [vmem:[%s3 + $0x38] sm:$0xff]
  %v213 = vld [vmem:[%s3 + $0x40] sm:$0xff]
  %v214 = vld [vmem:[%s3 + $0x48] sm:$0xff]
  %v215 = vld [vmem:[%s3 + $0x50] sm:$0xff]
  %v216 = vld [vmem:[%s3 + $0x58] sm:$0xff]
  %v217 = vld [vmem:[%s3 + $0x60] sm:$0xff]
  %v218 = vld [vmem:[%s3 + $0x68] sm:$0xff]
  %v219 = vld [vmem:[%s3 + $0x70] sm:$0xff]
  %v220 = vld [vmem:[%s3 + $0x78] sm:$0xff]
  %v221 = vadd.f32 %v189, %v205
  %v222 = vadd.f32 %v190, %v206
  %v223 = vadd.f32 %v191, %v207
  %v224 = vadd.f32 %v192, %v208
  %v225 = vadd.f32 %v193, %v209
  %v226 = vadd.f32 %v194, %v210
  %v227 = vadd.f32 %v195, %v211
  %v228 = vadd.f32 %v196, %v212
  %v229 = vadd.f32 %v197, %v213
  %v230 = vadd.f32 %v198, %v214
  %v231 = vadd.f32 %v199, %v215
  %v232 = vadd.f32 %v200, %v216
  %v233 = vadd.f32 %v201, %v217
  %v234 = vadd.f32 %v202, %v218
  %v235 = vadd.f32 %v203, %v219
  %v236 = vadd.f32 %v204, %v220
  %v237 = vmax.f32 %v221, 0.0
  %v238 = vmax.f32 %v222, 0.0
  %v239 = vmax.f32 %v223, 0.0
  %v240 = vmax.f32 %v224, 0.0
  %v241 = vmax.f32 %v225, 0.0
  %v242 = vmax.f32 %v226, 0.0
  %v243 = vmax.f32 %v227, 0.0
  %v244 = vmax.f32 %v228, 0.0
  %v245 = vmax.f32 %v229, 0.0
  %v246 = vmax.f32 %v230, 0.0
  %v247 = vmax.f32 %v231, 0.0
  %v248 = vmax.f32 %v232, 0.0
  %v249 = vmax.f32 %v233, 0.0
  %v250 = vmax.f32 %v234, 0.0
  %v251 = vmax.f32 %v235, 0.0
  %v252 = vmax.f32 %v236, 0.0
  %253 = vst [vmem:[%s4] sm:$0xff] %v237
  %254 = vst [vmem:[%s4 + $0x8] sm:$0xff] %v238
  %255 = vst [vmem:[%s4 + $0x10] sm:$0xff] %v239
  %256 = vst [vmem:[%s4 + $0x18] sm:$0xff] %v240
  %257 = vst [vmem:[%s4 + $0x20] sm:$0xff] %v241
  %258 = vst [vmem:[%s4 + $0x28] sm:$0xff] %v242
  %259 = vst [vmem:[%s4 + $0x30] sm:$0xff] %v243
  %260 = vst [vmem:[%s4 + $0x38] sm:$0xff] %v244
  %261 = vst [vmem:[%s4 + $0x40] sm:$0xff] %v245
  %262 = vst [vmem:[%s4 + $0x48] sm:$0xff] %v246
  %263 = vst [vmem:[%s4 + $0x50] sm:$0xff] %v247
  %264 = vst [vmem:[%s4 + $0x58] sm:$0xff] %v248
  %265 = vst [vmem:[%s4 + $0x60] sm:$0xff] %v249
  %266 = vst [vmem:[%s4 + $0x68] sm:$0xff] %v250
  %267 = vst [vmem:[%s4 + $0x70] sm:$0xff] %v251
  %268 = vst [vmem:[%s4 + $0x78] sm:$0xff] %v252
  // Predicated region
  $region18: #{multiscale_scconv2d.46} parent=0 // pred_check
    _
  $region19: #{multiscale_scconv2d.46} parent=0 // pred_check_branch
    %270 = sbr.rel (0) target = $region21
  $region20: #{multiscale_scconv2d.46} parent=0 // pred_region
    _
  $region21: #{multiscale_scconv2d.46} parent=0 // pred_fallthru
    _
  // Predicated region
  $region22: #{multiscale_scconv2d.46} parent=0 // pred_check
    _
  $region23: #{multiscale_scconv2d.46} parent=0 // pred_check_branch
    %272 = sbr.rel (0) target = $region25
  $region24: #{multiscale_scconv2d.46} parent=0 // pred_region
    _
  $region25: #{multiscale_scconv2d.46} parent=0 // pred_fallthru
    _

// kernel: multiscale_scconv2d.65
$region0: #{multiscale_scconv2d.65}
  #allocation0 [shape = 'u32[]', space=smem, size = 0x4, offset = 0x4, fixed_abs, tag = 'smem constant byte address 0x4 - core index']
  #allocation1 [shape = 'u32[72,128]{1,0:T(1,128)}', space=vmem, size = 0x9000, scoped, tag = 'internal scratch']
  %s0 = inlined_call_operand.vmem [shape: bf16[128,128], index: 0, kind: input, shape index: {}]
  %s1 = inlined_call_operand.vmem [shape: bf16[128,512], index: 1, kind: input, shape index: {}]
  %s2 = inlined_call_operand.vmem [shape: f32[2,1,512], index: 2, kind: input, shape index: {}]
  %s3 = inlined_call_operand.vmem [shape: f32[128,512], index: 3, kind: output, shape index: {}]
  %s4 = sld [smem:[#allocation0]]
  $region22: #{multiscale_scconv2d.65} parent=0
    _
  %s6 = ssub.s32 1, %s4
  %s7 = scalar_select 0, %s6, %s4
  // Predicated region
  $region2: #{multiscale_scconv2d.65} parent=0 // pred_check
    _
  $region3: #{multiscale_scconv2d.65} parent=0 // pred_check_branch
    %9 = sbr.rel (0) target = $region5
  $region4: #{multiscale_scconv2d.65} parent=0 // pred_region
    _
  $region5: #{multiscale_scconv2d.65} parent=0 // pred_fallthru
    _
  // Predicated region
  $region6: #{multiscale_scconv2d.65} parent=0 // pred_check
    _
  $region7: #{multiscale_scconv2d.65} parent=0 // pred_check_branch
    %11 = sbr.rel (0) target = $region9
  $region8: #{multiscale_scconv2d.65} parent=0 // pred_region
    _
  $region9: #{multiscale_scconv2d.65} parent=0 // pred_fallthru
    _
  // Predicated region
  $region10: #{multiscale_scconv2d.65} parent=0 // pred_check
    _
  $region11: #{multiscale_scconv2d.65} parent=0 // pred_check_branch
    %13 = sbr.rel (0) target = $region13
  $region12: #{multiscale_scconv2d.65} parent=0 // pred_region
    _
  $region13: #{multiscale_scconv2d.65} parent=0 // pred_fallthru
    _
  %v14 = vld [vmem:[%s0] sm:$0xf]
  %v15 = vld [vmem:[%s0 + $0x4] sm:$0xf]
  %v16 = vld [vmem:[%s0 + $0x8] sm:$0xf]
  %v17 = vld [vmem:[%s0 + $0xc] sm:$0xf]
  %v18 = vld [vmem:[%s0 + $0x10] sm:$0xf]
  %v19 = vld [vmem:[%s0 + $0x14] sm:$0xf]
  %v20 = vld [vmem:[%s0 + $0x18] sm:$0xf]
  %v21 = vld [vmem:[%s0 + $0x1c] sm:$0xf]
  %v22 = vld [vmem:[%s0 + $0x20] sm:$0xf]
  %v23 = vld [vmem:[%s0 + $0x24] sm:$0xf]
  %v24 = vld [vmem:[%s0 + $0x28] sm:$0xf]
  %v25 = vld [vmem:[%s0 + $0x2c] sm:$0xf]
  %v26 = vld [vmem:[%s0 + $0x30] sm:$0xf]
  %v27 = vld [vmem:[%s0 + $0x34] sm:$0xf]
  %v28 = vld [vmem:[%s0 + $0x38] sm:$0xf]
  %v29 = vld [vmem:[%s0 + $0x3c] sm:$0xf]
  %v30 = vld [vmem:[%s1] sm:$0xff]
  %v31 = vld [vmem:[%s1 + $0x8] sm:$0xff]
  %v32 = vld [vmem:[%s1 + $0x10] sm:$0xff]
  %v33 = vld [vmem:[%s1 + $0x18] sm:$0xff]
  %v34 = vld [vmem:[%s1 + $0x20] sm:$0xff]
  %v35 = vld [vmem:[%s1 + $0x28] sm:$0xff]
  %v36 = vld [vmem:[%s1 + $0x30] sm:$0xff]
  %v37 = vld [vmem:[%s1 + $0x38] sm:$0xff]
  %v38 = vld [vmem:[%s1 + $0x40] sm:$0xff]
  %v39 = vld [vmem:[%s1 + $0x48] sm:$0xff]
  %v40 = vld [vmem:[%s1 + $0x50] sm:$0xff]
  %v41 = vld [vmem:[%s1 + $0x58] sm:$0xff]
  %v42 = vld [vmem:[%s1 + $0x60] sm:$0xff]
  %v43 = vld [vmem:[%s1 + $0x68] sm:$0xff]
  %v44 = vld [vmem:[%s1 + $0x70] sm:$0xff]
  %v45 = vld [vmem:[%s1 + $0x78] sm:$0xff]
  %v46 = vld [vmem:[%s1 + $0x80] sm:$0xff]
  %v47 = vld [vmem:[%s1 + $0x88] sm:$0xff]
  %v48 = vld [vmem:[%s1 + $0x90] sm:$0xff]
  %v49 = vld [vmem:[%s1 + $0x98] sm:$0xff]
  %v50 = vld [vmem:[%s1 + $0xa0] sm:$0xff]
  %v51 = vld [vmem:[%s1 + $0xa8] sm:$0xff]
  %v52 = vld [vmem:[%s1 + $0xb0] sm:$0xff]
  %v53 = vld [vmem:[%s1 + $0xb8] sm:$0xff]
  %v54 = vld [vmem:[%s1 + $0xc0] sm:$0xff]
  %v55 = vld [vmem:[%s1 + $0xc8] sm:$0xff]
  %v56 = vld [vmem:[%s1 + $0xd0] sm:$0xff]
  %v57 = vld [vmem:[%s1 + $0xd8] sm:$0xff]
  %v58 = vld [vmem:[%s1 + $0xe0] sm:$0xff]
  %v59 = vld [vmem:[%s1 + $0xe8] sm:$0xff]
  %v60 = vld [vmem:[%s1 + $0xf0] sm:$0xff]
  %v61 = vld [vmem:[%s1 + $0xf8] sm:$0xff]
  %v78 = vunpack.c.l.b16 %v14
  %v79 = vunpack.c.l.b16 %v15
  %v80 = vunpack.c.l.b16 %v16
  %v81 = vunpack.c.l.b16 %v17
  %v82 = vunpack.c.l.b16 %v18
  %v83 = vunpack.c.l.b16 %v19
  %v84 = vunpack.c.l.b16 %v20
  %v85 = vunpack.c.l.b16 %v21
  %v86 = vunpack.c.l.b16 %v22
  %v87 = vunpack.c.l.b16 %v23
  %v88 = vunpack.c.l.b16 %v24
  %v89 = vunpack.c.l.b16 %v25
  %v90 = vunpack.c.l.b16 %v26
  %v91 = vunpack.c.l.b16 %v27
  %v92 = vunpack.c.l.b16 %v28
  %v93 = vunpack.c.l.b16 %v29
  %v94 = vpack.c.b16 %v79, %v78
  %v95 = vpack.c.b16 %v81, %v80
  %v96 = vpack.c.b16 %v83, %v82
  %v97 = vpack.c.b16 %v85, %v84
  %v98 = vpack.c.b16 %v87, %v86
  %v99 = vpack.c.b16 %v89, %v88
  %v100 = vpack.c.b16 %v91, %v90
  %v101 = vpack.c.b16 %v93, %v92
  %v142 = vunpack.c.l.b16 %v30
  %v143 = vunpack.c.h.b16 %v30
  %v144 = vunpack.c.l.b16 %v31
  %v145 = vunpack.c.h.b16 %v31
  %v146 = vunpack.c.l.b16 %v32
  %v147 = vunpack.c.h.b16 %v32
  %v148 = vunpack.c.l.b16 %v33
  %v149 = vunpack.c.h.b16 %v33
  %v150 = vunpack.c.l.b16 %v34
  %v151 = vunpack.c.h.b16 %v34
  %v152 = vunpack.c.l.b16 %v35
  %v153 = vunpack.c.h.b16 %v35
  %v154 = vunpack.c.l.b16 %v36
  %v155 = vunpack.c.h.b16 %v36
  %v156 = vunpack.c.l.b16 %v37
  %v157 = vunpack.c.h.b16 %v37
  %v158 = vunpack.c.l.b16 %v38
  %v159 = vunpack.c.h.b16 %v38
  %v160 = vunpack.c.l.b16 %v39
  %v161 = vunpack.c.h.b16 %v39
  %v162 = vunpack.c.l.b16 %v40
  %v163 = vunpack.c.h.b16 %v40
  %v164 = vunpack.c.l.b16 %v41
  %v165 = vunpack.c.h.b16 %v41
  %v166 = vunpack.c.l.b16 %v42
  %v167 = vunpack.c.h.b16 %v42
  %v168 = vunpack.c.l.b16 %v43
  %v169 = vunpack.c.h.b16 %v43
  %v170 = vunpack.c.l.b16 %v44
  %v171 = vunpack.c.h.b16 %v44
  %v172 = vunpack.c.l.b16 %v45
  %v173 = vunpack.c.h.b16 %v45
  %v174 = vunpack.c.l.b16 %v46
  %v175 = vunpack.c.h.b16 %v46
  %v176 = vunpack.c.l.b16 %v47
  %v177 = vunpack.c.h.b16 %v47
  %v178 = vunpack.c.l.b16 %v48
  %v179 = vunpack.c.h.b16 %v48
  %v180 = vunpack.c.l.b16 %v49
  %v181 = vunpack.c.h.b16 %v49
  %v182 = vunpack.c.l.b16 %v50
  %v183 = vunpack.c.h.b16 %v50
  %v184 = vunpack.c.l.b16 %v51
  %v185 = vunpack.c.h.b16 %v51
  %v186 = vunpack.c.l.b16 %v52
  %v187 = vunpack.c.h.b16 %v52
  %v188 = vunpack.c.l.b16 %v53
  %v189 = vunpack.c.h.b16 %v53
  %v190 = vunpack.c.l.b16 %v54
  %v191 = vunpack.c.h.b16 %v54
  %v192 = vunpack.c.l.b16 %v55
  %v193 = vunpack.c.h.b16 %v55
  %v194 = vunpack.c.l.b16 %v56
  %v195 = vunpack.c.h.b16 %v56
  %v196 = vunpack.c.l.b16 %v57
  %v197 = vunpack.c.h.b16 %v57
  %v198 = vunpack.c.l.b16 %v58
  %v199 = vunpack.c.h.b16 %v58
  %v200 = vunpack.c.l.b16 %v59
  %v201 = vunpack.c.h.b16 %v59
  %v202 = vunpack.c.l.b16 %v60
  %v203 = vunpack.c.h.b16 %v60
  %v204 = vunpack.c.l.b16 %v61
  %v205 = vunpack.c.h.b16 %v61
  %v206 = vpack.c.b16 %v146, %v142
  %v207 = vpack.c.b16 %v147, %v143
  %v208 = vpack.c.b16 %v148, %v144
  %v209 = vpack.c.b16 %v149, %v145
  %v210 = vpack.c.b16 %v154, %v150
  %v211 = vpack.c.b16 %v155, %v151
  %v212 = vpack.c.b16 %v156, %v152
  %v213 = vpack.c.b16 %v157, %v153
  %v214 = vpack.c.b16 %v162, %v158
  %v215 = vpack.c.b16 %v163, %v159
  %v216 = vpack.c.b16 %v164, %v160
  %v217 = vpack.c.b16 %v165, %v161
  %v218 = vpack.c.b16 %v170, %v166
  %v219 = vpack.c.b16 %v171, %v167
  %v220 = vpack.c.b16 %v172, %v168
  %v221 = vpack.c.b16 %v173, %v169
  %v222 = vpack.c.b16 %v178, %v174
  %v223 = vpack.c.b16 %v179, %v175
  %v224 = vpack.c.b16 %v180, %v176
  %v225 = vpack.c.b16 %v181, %v177
  %v226 = vpack.c.b16 %v186, %v182
  %v227 = vpack.c.b16 %v187, %v183
  %v228 = vpack.c.b16 %v188, %v184
  %v229 = vpack.c.b16 %v189, %v185
  %v230 = vpack.c.b16 %v194, %v190
  %v231 = vpack.c.b16 %v195, %v191
  %v232 = vpack.c.b16 %v196, %v192
  %v233 = vpack.c.b16 %v197, %v193
  %v234 = vpack.c.b16 %v202, %v198
  %v235 = vpack.c.b16 %v203, %v199
  %v236 = vpack.c.b16 %v204, %v200
  %v237 = vpack.c.b16 %v205, %v201
  %270 = vmatpush.bf16.msra.mxu0 %v234
  %271 = vmatpush.bf16.msra.mxu0 %v230
  %272 = vmatpush.bf16.msra.mxu0 %v226
  %273 = vmatpush.bf16.msra.mxu0 %v222
  %274 = vmatpush.bf16.msra.mxu0 %v218
  %275 = vmatpush.bf16.msra.mxu0 %v214
  %276 = vmatpush.bf16.msra.mxu0 %v210
  %277 = vmatpush.bf16.msra.mxu0 %v206
  %278 = vmatmul.bf16.gmra.mxu0 %v94
  %v279 = vpop.f32.mrf.mxu0
  %v280 = vadd.f32 0.0, %v279
  %v281 = vpop.f32.mrf.mxu0
  %v282 = vadd.f32 0.0, %v281
  %283 = vmatmul.bf16.gmra.mxu0 %v95
  %v284 = vpop.f32.mrf.mxu0
  %v285 = vadd.f32 0.0, %v284
  %v286 = vpop.f32.mrf.mxu0
  %v287 = vadd.f32 0.0, %v286
  %288 = vmatmul.bf16.gmra.mxu0 %v96
  %v289 = vpop.f32.mrf.mxu0
  %v290 = vadd.f32 0.0, %v289
  %v291 = vpop.f32.mrf.mxu0
  %v292 = vadd.f32 0.0, %v291
  %293 = vmatmul.bf16.gmra.mxu0 %v97
  %v294 = vpop.f32.mrf.mxu0
  %v295 = vadd.f32 0.0, %v294
  %v296 = vpop.f32.mrf.mxu0
  %v297 = vadd.f32 0.0, %v296
  %298 = vmatmul.bf16.gmra.mxu0 %v98
  %v299 = vpop.f32.mrf.mxu0
  %v300 = vadd.f32 0.0, %v299
  %v301 = vpop.f32.mrf.mxu0
  %v302 = vadd.f32 0.0, %v301
  %303 = vmatmul.bf16.gmra.mxu0 %v99
  %v304 = vpop.f32.mrf.mxu0
  %v305 = vadd.f32 0.0, %v304
  %v306 = vpop.f32.mrf.mxu0
  %v307 = vadd.f32 0.0, %v306
  %308 = vmatmul.bf16.gmra.mxu0 %v100
  %v309 = vpop.f32.mrf.mxu0
  %v310 = vadd.f32 0.0, %v309
  %v311 = vpop.f32.mrf.mxu0
  %v312 = vadd.f32 0.0, %v311
  %313 = vmatmul.bf16.gmra.mxu0 %v101
  %v314 = vpop.f32.mrf.mxu0
  %v315 = vadd.f32 0.0, %v314
  %v316 = vpop.f32.mrf.mxu0
  %v317 = vadd.f32 0.0, %v316
  %318 = vdwg.mxu0
  %319 = vmatpush.bf16.msra.mxu0 %v235
  %320 = vmatpush.bf16.msra.mxu0 %v231
  %321 = vmatpush.bf16.msra.mxu0 %v227
  %322 = vmatpush.bf16.msra.mxu0 %v223
  %323 = vmatpush.bf16.msra.mxu0 %v219
  %324 = vmatpush.bf16.msra.mxu0 %v215
  %325 = vmatpush.bf16.msra.mxu0 %v211
  %326 = vmatpush.bf16.msra.mxu0 %v207
  %327 = vmatmul.bf16.gmra.mxu0 %v94
  %v328 = vpop.f32.mrf.mxu0
  %v329 = vadd.f32 0.0, %v328
  %v330 = vpop.f32.mrf.mxu0
  %v331 = vadd.f32 0.0, %v330
  %332 = vmatmul.bf16.gmra.mxu0 %v95
  %v333 = vpop.f32.mrf.mxu0
  %v334 = vadd.f32 0.0, %v333
  %v335 = vpop.f32.mrf.mxu0
  %v336 = vadd.f32 0.0, %v335
  %337 = vmatmul.bf16.gmra.mxu0 %v96
  %v338 = vpop.f32.mrf.mxu0
  %v339 = vadd.f32 0.0, %v338
  %v340 = vpop.f32.mrf.mxu0
  %v341 = vadd.f32 0.0, %v340
  %342 = vmatmul.bf16.gmra.mxu0 %v97
  %v343 = vpop.f32.mrf.mxu0
  %v344 = vadd.f32 0.0, %v343
  %v345 = vpop.f32.mrf.mxu0
  %v346 = vadd.f32 0.0, %v345
  %347 = vmatmul.bf16.gmra.mxu0 %v98
  %v348 = vpop.f32.mrf.mxu0
  %v349 = vadd.f32 0.0, %v348
  %v350 = vpop.f32.mrf.mxu0
  %v351 = vadd.f32 0.0, %v350
  %352 = vmatmul.bf16.gmra.mxu0 %v99
  %v353 = vpop.f32.mrf.mxu0
  %v354 = vadd.f32 0.0, %v353
  %v355 = vpop.f32.mrf.mxu0
  %v356 = vadd.f32 0.0, %v355
  %357 = vmatmul.bf16.gmra.mxu0 %v100
  %v358 = vpop.f32.mrf.mxu0
  %v359 = vadd.f32 0.0, %v358
  %v360 = vpop.f32.mrf.mxu0
  %v361 = vadd.f32 0.0, %v360
  %362 = vmatmul.bf16.gmra.mxu0 %v101
  %v363 = vpop.f32.mrf.mxu0
  %v364 = vadd.f32 0.0, %v363
  %v365 = vpop.f32.mrf.mxu0
  %v366 = vadd.f32 0.0, %v365
  %367 = vdwg.mxu0
  %368 = vmatpush.bf16.msra.mxu0 %v236
  %369 = vmatpush.bf16.msra.mxu0 %v232
  %370 = vmatpush.bf16.msra.mxu0 %v228
  %371 = vmatpush.bf16.msra.mxu0 %v224
  %372 = vmatpush.bf16.msra.mxu0 %v220
  %373 = vmatpush.bf16.msra.mxu0 %v216
  %374 = vmatpush.bf16.msra.mxu0 %v212
  %375 = vmatpush.bf16.msra.mxu0 %v208
  %376 = vmatmul.bf16.gmra.mxu0 %v94
  %v377 = vpop.f32.mrf.mxu0
  %v378 = vadd.f32 0.0, %v377
  %v379 = vpop.f32.mrf.mxu0
  %v380 = vadd.f32 0.0, %v379
  %381 = vmatmul.bf16.gmra.mxu0 %v95
  %v382 = vpop.f32.mrf.mxu0
  %v383 = vadd.f32 0.0, %v382
  %v384 = vpop.f32.mrf.mxu0
  %v385 = vadd.f32 0.0, %v384
  %386 = vmatmul.bf16.gmra.mxu0 %v96
  %v387 = vpop.f32.mrf.mxu0
  %v388 = vadd.f32 0.0, %v387
  %v389 = vpop.f32.mrf.mxu0
  %v390 = vadd.f32 0.0, %v389
  %391 = vmatmul.bf16.gmra.mxu0 %v97
  %v392 = vpop.f32.mrf.mxu0
  %v393 = vadd.f32 0.0, %v392
  %v394 = vpop.f32.mrf.mxu0
  %v395 = vadd.f32 0.0, %v394
  %396 = vmatmul.bf16.gmra.mxu0 %v98
  %v397 = vpop.f32.mrf.mxu0
  %v398 = vadd.f32 0.0, %v397
  %v399 = vpop.f32.mrf.mxu0
  %v400 = vadd.f32 0.0, %v399
  %401 = vmatmul.bf16.gmra.mxu0 %v99
  %v402 = vpop.f32.mrf.mxu0
  %v403 = vadd.f32 0.0, %v402
  %v404 = vpop.f32.mrf.mxu0
  %v405 = vadd.f32 0.0, %v404
  %406 = vmatmul.bf16.gmra.mxu0 %v100
  %v407 = vpop.f32.mrf.mxu0
  %v408 = vadd.f32 0.0, %v407
  %v409 = vpop.f32.mrf.mxu0
  %v410 = vadd.f32 0.0, %v409
  %411 = vmatmul.bf16.gmra.mxu0 %v101
  %v412 = vpop.f32.mrf.mxu0
  %v413 = vadd.f32 0.0, %v412
  %v414 = vpop.f32.mrf.mxu0
  %v415 = vadd.f32 0.0, %v414
  %416 = vdwg.mxu0
  %417 = vmatpush.bf16.msra.mxu0 %v237
  %418 = vmatpush.bf16.msra.mxu0 %v233
  %419 = vmatpush.bf16.msra.mxu0 %v229
  %420 = vmatpush.bf16.msra.mxu0 %v225
  %421 = vmatpush.bf16.msra.mxu0 %v221
  %422 = vmatpush.bf16.msra.mxu0 %v217
  %423 = vmatpush.bf16.msra.mxu0 %v213
  %424 = vmatpush.bf16.msra.mxu0 %v209
  %425 = vmatmul.bf16.gmra.mxu0 %v94
  %v426 = vpop.f32.mrf.mxu0
  %v427 = vadd.f32 0.0, %v426
  %v428 = vpop.f32.mrf.mxu0
  %v429 = vadd.f32 0.0, %v428
  %430 = vmatmul.bf16.gmra.mxu0 %v95
  %v431 = vpop.f32.mrf.mxu0
  %v432 = vadd.f32 0.0, %v431
  %v433 = vpop.f32.mrf.mxu0
  %v434 = vadd.f32 0.0, %v433
  %435 = vmatmul.bf16.gmra.mxu0 %v96
  %v436 = vpop.f32.mrf.mxu0
  %v437 = vadd.f32 0.0, %v436
  %v438 = vpop.f32.mrf.mxu0
  %v439 = vadd.f32 0.0, %v438
  %440 = vmatmul.bf16.gmra.mxu0 %v97
  %v441 = vpop.f32.mrf.mxu0
  %v442 = vadd.f32 0.0, %v441
  %v443 = vpop.f32.mrf.mxu0
  %v444 = vadd.f32 0.0, %v443
  %445 = vmatmul.bf16.gmra.mxu0 %v98
  %v446 = vpop.f32.mrf.mxu0
  %v447 = vadd.f32 0.0, %v446
  %v448 = vpop.f32.mrf.mxu0
  %v449 = vadd.f32 0.0, %v448
  %450 = vmatmul.bf16.gmra.mxu0 %v99
  %v451 = vpop.f32.mrf.mxu0
  %v452 = vadd.f32 0.0, %v451
  %v453 = vpop.f32.mrf.mxu0
  %v454 = vadd.f32 0.0, %v453
  %455 = vmatmul.bf16.gmra.mxu0 %v100
  %v456 = vpop.f32.mrf.mxu0
  %v457 = vadd.f32 0.0, %v456
  %v458 = vpop.f32.mrf.mxu0
  %v459 = vadd.f32 0.0, %v458
  %460 = vmatmul.bf16.gmra.mxu0 %v101
  %v461 = vpop.f32.mrf.mxu0
  %v462 = vadd.f32 0.0, %v461
  %v463 = vpop.f32.mrf.mxu0
  %v464 = vadd.f32 0.0, %v463
  %465 = vdwg.mxu0
  %v466 = vld [vmem:[%s2] sm:$0xf]
  %v468 = vperm.slane %v466, 0
  %v469 = vperm.slane %v466, 1
  %v470 = vperm.slane %v466, 2
  %v471 = vperm.slane %v466, 3
  %v476 = vmul.f32 %v280, %v468
  %v477 = vmul.f32 %v329, %v469
  %v478 = vmul.f32 %v378, %v470
  %v479 = vmul.f32 %v427, %v471
  %v480 = vmul.f32 %v282, %v468
  %v481 = vmul.f32 %v331, %v469
  %v482 = vmul.f32 %v380, %v470
  %v483 = vmul.f32 %v429, %v471
  %v484 = vmul.f32 %v285, %v468
  %v485 = vmul.f32 %v334, %v469
  %v486 = vmul.f32 %v383, %v470
  %v487 = vmul.f32 %v432, %v471
  %v488 = vmul.f32 %v287, %v468
  %v489 = vmul.f32 %v336, %v469
  %v490 = vmul.f32 %v385, %v470
  %v491 = vmul.f32 %v434, %v471
  %v492 = vmul.f32 %v290, %v468
  %v493 = vmul.f32 %v339, %v469
  %v494 = vmul.f32 %v388, %v470
  %v495 = vmul.f32 %v437, %v471
  %v496 = vmul.f32 %v292, %v468
  %v497 = vmul.f32 %v341, %v469
  %v498 = vmul.f32 %v390, %v470
  %v499 = vmul.f32 %v439, %v471
  %v500 = vmul.f32 %v295, %v468
  %v501 = vmul.f32 %v344, %v469
  %v502 = vmul.f32 %v393, %v470
  %v503 = vmul.f32 %v442, %v471
  %v504 = vmul.f32 %v297, %v468
  %v505 = vmul.f32 %v346, %v469
  %v506 = vmul.f32 %v395, %v470
  %v507 = vmul.f32 %v444, %v471
  %v508 = vmul.f32 %v300, %v468
  %v509 = vmul.f32 %v349, %v469
  %v510 = vmul.f32 %v398, %v470
  %v511 = vmul.f32 %v447, %v471
  %v512 = vmul.f32 %v302, %v468
  %v513 = vmul.f32 %v351, %v469
  %v514 = vmul.f32 %v400, %v470
  %v515 = vmul.f32 %v449, %v471
  %v516 = vmul.f32 %v305, %v468
  %v517 = vmul.f32 %v354, %v469
  %v518 = vmul.f32 %v403, %v470
  %v519 = vmul.f32 %v452, %v471
  %v520 = vmul.f32 %v307, %v468
  %v521 = vmul.f32 %v356, %v469
  %v522 = vmul.f32 %v405, %v470
  %v523 = vmul.f32 %v454, %v471
  %v524 = vmul.f32 %v310, %v468
  %v525 = vmul.f32 %v359, %v469
  %v526 = vmul.f32 %v408, %v470
  %v527 = vmul.f32 %v457, %v471
  %v528 = vmul.f32 %v312, %v468
  %v529 = vmul.f32 %v361, %v469
  %v530 = vmul.f32 %v410, %v470
  %v531 = vmul.f32 %v459, %v471
  %v532 = vmul.f32 %v315, %v468
  %v533 = vmul.f32 %v364, %v469
  %v534 = vmul.f32 %v413, %v470
  %v535 = vmul.f32 %v462, %v471
  %v536 = vmul.f32 %v317, %v468
  %v537 = vmul.f32 %v366, %v469
  %v538 = vmul.f32 %v415, %v470
  %v539 = vmul.f32 %v464, %v471
  %s540 = scalar_lea.vmem %s2, 4
  %v541 = vld [vmem:[%s540] sm:$0xf]
  %v543 = vperm.slane %v541, 0
  %v544 = vperm.slane %v541, 1
  %v545 = vperm.slane %v541, 2
  %v546 = vperm.slane %v541, 3
  %v551 = vadd.f32 %v476, %v543
  %v552 = vadd.f32 %v477, %v544
  %v553 = vadd.f32 %v478, %v545
  %v554 = vadd.f32 %v479, %v546
  %v555 = vadd.f32 %v480, %v543
  %v556 = vadd.f32 %v481, %v544
  %v557 = vadd.f32 %v482, %v545
  %v558 = vadd.f32 %v483, %v546
  %v559 = vadd.f32 %v484, %v543
  %v560 = vadd.f32 %v485, %v544
  %v561 = vadd.f32 %v486, %v545
  %v562 = vadd.f32 %v487, %v546
  %v563 = vadd.f32 %v488, %v543
  %v564 = vadd.f32 %v489, %v544
  %v565 = vadd.f32 %v490, %v545
  %v566 = vadd.f32 %v491, %v546
  %v567 = vadd.f32 %v492, %v543
  %v568 = vadd.f32 %v493, %v544
  %v569 = vadd.f32 %v494, %v545
  %v570 = vadd.f32 %v495, %v546
  %v571 = vadd.f32 %v496, %v543
  %v572 = vadd.f32 %v497, %v544
  %v573 = vadd.f32 %v498, %v545
  %v574 = vadd.f32 %v499, %v546
  %v575 = vadd.f32 %v500, %v543
  %v576 = vadd.f32 %v501, %v544
  %v577 = vadd.f32 %v502, %v545
  %v578 = vadd.f32 %v503, %v546
  %v579 = vadd.f32 %v504, %v543
  %v580 = vadd.f32 %v505, %v544
  %v581 = vadd.f32 %v506, %v545
  %v582 = vadd.f32 %v507, %v546
  %v583 = vadd.f32 %v508, %v543
  %v584 = vadd.f32 %v509, %v544
  %v585 = vadd.f32 %v510, %v545
  %v586 = vadd.f32 %v511, %v546
  %v587 = vadd.f32 %v512, %v543
  %v588 = vadd.f32 %v513, %v544
  %v589 = vadd.f32 %v514, %v545
  %v590 = vadd.f32 %v515, %v546
  %v591 = vadd.f32 %v516, %v543
  %v592 = vadd.f32 %v517, %v544
  %v593 = vadd.f32 %v518, %v545
  %v594 = vadd.f32 %v519, %v546
  %v595 = vadd.f32 %v520, %v543
  %v596 = vadd.f32 %v521, %v544
  %v597 = vadd.f32 %v522, %v545
  %v598 = vadd.f32 %v523, %v546
  %v599 = vadd.f32 %v524, %v543
  %v600 = vadd.f32 %v525, %v544
  %v601 = vadd.f32 %v526, %v545
  %v602 = vadd.f32 %v527, %v546
  %v603 = vadd.f32 %v528, %v543
  %v604 = vadd.f32 %v529, %v544
  %v605 = vadd.f32 %v530, %v545
  %v606 = vadd.f32 %v531, %v546
  %v607 = vadd.f32 %v532, %v543
  %v608 = vadd.f32 %v533, %v544
  %v609 = vadd.f32 %v534, %v545
  %v610 = vadd.f32 %v535, %v546
  %v611 = vadd.f32 %v536, %v543
  %v612 = vadd.f32 %v537, %v544
  %v613 = vadd.f32 %v538, %v545
  %v614 = vadd.f32 %v539, %v546
  %v615 = vmax.f32 %v551, 0.0
  %v616 = vmax.f32 %v552, 0.0
  %v617 = vmax.f32 %v553, 0.0
  %v618 = vmax.f32 %v554, 0.0
  %v619 = vmax.f32 %v555, 0.0
  %v620 = vmax.f32 %v556, 0.0
  %v621 = vmax.f32 %v557, 0.0
  %v622 = vmax.f32 %v558, 0.0
  %v623 = vmax.f32 %v559, 0.0
  %v624 = vmax.f32 %v560, 0.0
  %v625 = vmax.f32 %v561, 0.0
  %v626 = vmax.f32 %v562, 0.0
  %v627 = vmax.f32 %v563, 0.0
  %v628 = vmax.f32 %v564, 0.0
  %v629 = vmax.f32 %v565, 0.0
  %v630 = vmax.f32 %v566, 0.0
  %v631 = vmax.f32 %v567, 0.0
  %v632 = vmax.f32 %v568, 0.0
  %v633 = vmax.f32 %v569, 0.0
  %v634 = vmax.f32 %v570, 0.0
  %v635 = vmax.f32 %v571, 0.0
  %v636 = vmax.f32 %v572, 0.0
  %v637 = vmax.f32 %v573, 0.0
  %v638 = vmax.f32 %v574, 0.0
  %v639 = vmax.f32 %v575, 0.0
  %v640 = vmax.f32 %v576, 0.0
  %v641 = vmax.f32 %v577, 0.0
  %v642 = vmax.f32 %v578, 0.0
  %v643 = vmax.f32 %v579, 0.0
  %v644 = vmax.f32 %v580, 0.0
  %v645 = vmax.f32 %v581, 0.0
  %v646 = vmax.f32 %v582, 0.0
  %v647 = vmax.f32 %v583, 0.0
  %v648 = vmax.f32 %v584, 0.0
  %v649 = vmax.f32 %v585, 0.0
  %v650 = vmax.f32 %v586, 0.0
  %v651 = vmax.f32 %v587, 0.0
  %v652 = vmax.f32 %v588, 0.0
  %v653 = vmax.f32 %v589, 0.0
  %v654 = vmax.f32 %v590, 0.0
  %v655 = vmax.f32 %v591, 0.0
  %v656 = vmax.f32 %v592, 0.0
  %v657 = vmax.f32 %v593, 0.0
  %v658 = vmax.f32 %v594, 0.0
  %v659 = vmax.f32 %v595, 0.0
  %v660 = vmax.f32 %v596, 0.0
  %v661 = vmax.f32 %v597, 0.0
  %v662 = vmax.f32 %v598, 0.0
  %v663 = vmax.f32 %v599, 0.0
  %v664 = vmax.f32 %v600, 0.0
  %v665 = vmax.f32 %v601, 0.0
  %v666 = vmax.f32 %v602, 0.0
  %v667 = vmax.f32 %v603, 0.0
  %v668 = vmax.f32 %v604, 0.0
  %v669 = vmax.f32 %v605, 0.0
  %v670 = vmax.f32 %v606, 0.0
  %v671 = vmax.f32 %v607, 0.0
  %v672 = vmax.f32 %v608, 0.0
  %v673 = vmax.f32 %v609, 0.0
  %v674 = vmax.f32 %v610, 0.0
  %v675 = vmax.f32 %v611, 0.0
  %v676 = vmax.f32 %v612, 0.0
  %v677 = vmax.f32 %v613, 0.0
  %v678 = vmax.f32 %v614, 0.0
  %679 = vst [vmem:[%s3] sm:$0xff] %v615
  %680 = vst [vmem:[%s3 + $0x8] sm:$0xff] %v616
  %681 = vst [vmem:[%s3 + $0x10] sm:$0xff] %v617
  %682 = vst [vmem:[%s3 + $0x18] sm:$0xff] %v618
  %683 = vst [vmem:[%s3 + $0x20] sm:$0xff] %v619
  %684 = vst [vmem:[%s3 + $0x28] sm:$0xff] %v620
  %685 = vst [vmem:[%s3 + $0x30] sm:$0xff] %v621
  %686 = vst [vmem:[%s3 + $0x38] sm:$0xff] %v622
  %687 = vst [vmem:[%s3 + $0x40] sm:$0xff] %v623
  %688 = vst [vmem:[%s3 + $0x48] sm:$0xff] %v624
  %689 = vst [vmem:[%s3 + $0x50] sm:$0xff] %v625
  %690 = vst [vmem:[%s3 + $0x58] sm:$0xff] %v626
  %691 = vst [vmem:[%s3 + $0x60] sm:$0xff] %v627
  %692 = vst [vmem:[%s3 + $0x68] sm:$0xff] %v628
  %693 = vst [vmem:[%s3 + $0x70] sm:$0xff] %v629
  %694 = vst [vmem:[%s3 + $0x78] sm:$0xff] %v630
  %695 = vst [vmem:[%s3 + $0x80] sm:$0xff] %v631
  %696 = vst [vmem:[%s3 + $0x88] sm:$0xff] %v632
  %697 = vst [vmem:[%s3 + $0x90] sm:$0xff] %v633
  %698 = vst [vmem:[%s3 + $0x98] sm:$0xff] %v634
  %699 = vst [vmem:[%s3 + $0xa0] sm:$0xff] %v635
  %700 = vst [vmem:[%s3 + $0xa8] sm:$0xff] %v636
  %701 = vst [vmem:[%s3 + $0xb0] sm:$0xff] %v637
  %702 = vst [vmem:[%s3 + $0xb8] sm:$0xff] %v638
  %703 = vst [vmem:[%s3 + $0xc0] sm:$0xff] %v639
  %704 = vst [vmem:[%s3 + $0xc8] sm:$0xff] %v640
  %705 = vst [vmem:[%s3 + $0xd0] sm:$0xff] %v641
  %706 = vst [vmem:[%s3 + $0xd8] sm:$0xff] %v642
  %707 = vst [vmem:[%s3 + $0xe0] sm:$0xff] %v643
  %708 = vst [vmem:[%s3 + $0xe8] sm:$0xff] %v644
  %709 = vst [vmem:[%s3 + $0xf0] sm:$0xff] %v645
  %710 = vst [vmem:[%s3 + $0xf8] sm:$0xff] %v646
  %711 = vst [vmem:[%s3 + $0x100] sm:$0xff] %v647
  %712 = vst [vmem:[%s3 + $0x108] sm:$0xff] %v648
  %713 = vst [vmem:[%s3 + $0x110] sm:$0xff] %v649
  %714 = vst [vmem:[%s3 + $0x118] sm:$0xff] %v650
  %715 = vst [vmem:[%s3 + $0x120] sm:$0xff] %v651
  %716 = vst [vmem:[%s3 + $0x128] sm:$0xff] %v652
  %717 = vst [vmem:[%s3 + $0x130] sm:$0xff] %v653
  %718 = vst [vmem:[%s3 + $0x138] sm:$0xff] %v654
  %719 = vst [vmem:[%s3 + $0x140] sm:$0xff] %v655
  %720 = vst [vmem:[%s3 + $0x148] sm:$0xff] %v656
  %721 = vst [vmem:[%s3 + $0x150] sm:$0xff] %v657
  %722 = vst [vmem:[%s3 + $0x158] sm:$0xff] %v658
  %723 = vst [vmem:[%s3 + $0x160] sm:$0xff] %v659
  %724 = vst [vmem:[%s3 + $0x168] sm:$0xff] %v660
  %725 = vst [vmem:[%s3 + $0x170] sm:$0xff] %v661
  %726 = vst [vmem:[%s3 + $0x178] sm:$0xff] %v662
  %727 = vst [vmem:[%s3 + $0x180] sm:$0xff] %v663
  %728 = vst [vmem:[%s3 + $0x188] sm:$0xff] %v664
  %729 = vst [vmem:[%s3 + $0x190] sm:$0xff] %v665
  %730 = vst [vmem:[%s3 + $0x198] sm:$0xff] %v666
  %731 = vst [vmem:[%s3 + $0x1a0] sm:$0xff] %v667
  %732 = vst [vmem:[%s3 + $0x1a8] sm:$0xff] %v668
  %733 = vst [vmem:[%s3 + $0x1b0] sm:$0xff] %v669
  %734 = vst [vmem:[%s3 + $0x1b8] sm:$0xff] %v670
  %735 = vst [vmem:[%s3 + $0x1c0] sm:$0xff] %v671
  %736 = vst [vmem:[%s3 + $0x1c8] sm:$0xff] %v672
  %737 = vst [vmem:[%s3 + $0x1d0] sm:$0xff] %v673
  %738 = vst [vmem:[%s3 + $0x1d8] sm:$0xff] %v674
  %739 = vst [vmem:[%s3 + $0x1e0] sm:$0xff] %v675
  %740 = vst [vmem:[%s3 + $0x1e8] sm:$0xff] %v676
  %741 = vst [vmem:[%s3 + $0x1f0] sm:$0xff] %v677
  %742 = vst [vmem:[%s3 + $0x1f8] sm:$0xff] %v678
  // Predicated region
  $region14: #{multiscale_scconv2d.65} parent=0 // pred_check
    _
  $region15: #{multiscale_scconv2d.65} parent=0 // pred_check_branch
    %744 = sbr.rel (0) target = $region17
  $region16: #{multiscale_scconv2d.65} parent=0 // pred_region
    _
  $region17: #{multiscale_scconv2d.65} parent=0 // pred_fallthru
    _
  // Predicated region
  $region18: #{multiscale_scconv2d.65} parent=0 // pred_check
    _
  $region19: #{multiscale_scconv2d.65} parent=0 // pred_check_branch
    %746 = sbr.rel (0) target = $region21
  $region20: #{multiscale_scconv2d.65} parent=0 // pred_region
    _
  $region21: #{multiscale_scconv2d.65} parent=0 // pred_fallthru
    _

</llo_original>
